<compile_context>
chip_gen: v6e
topology: v6e:2x2x1
jax: 0.10.0
libtpu: 0.0.40
codegen_flags: <defaults>
</compile_context>

<pallas_src>
import functools

import jax
import jax.numpy as jnp
from jax import lax
from jax.experimental import pallas as pl
from jax.experimental.pallas import tpu as pltpu

_VMEM = pl.BlockSpec(memory_space=pltpu.MemorySpace.VMEM)

# MXU operands in bf16, accumulation in f32 (accuracy-preserving on all gens;
# native MXU dtype on v5e/v6e/v7x).
_MXU_DTYPE = jnp.bfloat16


# ---------------------------- in-kernel helpers ----------------------------

def _mxu_dot(a, b):
    """MXU matmul: bf16 operands, f32 accumulation."""
    return jnp.dot(a.astype(_MXU_DTYPE), b.astype(_MXU_DTYPE),
                   preferred_element_type=jnp.float32)


def _layer_norm(x, g, b, eps=1e-5):
    # x: (N, D); g, b: (1, D).  Kept fully in f32 (VPU/EUP path).
    mu = jnp.mean(x, axis=-1, keepdims=True)
    var = jnp.mean(jnp.square(x - mu), axis=-1, keepdims=True)
    return (x - mu) * lax.rsqrt(var + eps) * g + b


def _mha_heads(q3, k3, v3, mask_add, wo, n_head, dh):
    """Multi-head attention core + output projection (bias excluded).

    q3: (B, Lq, D), k3/v3: (B, Lk, D), mask_add: (B, 1, Lk) additive mask
    already scaled by 1/sqrt(dh) (-1e9/sqrt(dh) on pad keys, 0 elsewhere),
    wo: (D, D) value.  Returns (B*Lq, D) in f32.

    The 1/sqrt(dh) scale is folded into Q, and the per-head context is folded
    into the output projection by accumulating ctx_h @ wo[rows_h]; the result
    stays lane-dense (width D) with no head transpose/concat.
    """
    B, Lq, D = q3.shape
    scale = 1.0 / (dh ** 0.5)
    acc = None
    for h in range(n_head):                            # static unroll
        sl = slice(h * dh, (h + 1) * dh)
        qh = (q3[:, :, sl] * scale).astype(_MXU_DTYPE)  # (B, Lq, dh)
        kh = k3[:, :, sl].astype(_MXU_DTYPE)
        vh = v3[:, :, sl].astype(_MXU_DTYPE)
        s = jnp.einsum('bqd,bkd->bqk', qh, kh,
                       preferred_element_type=jnp.float32)
        s = s + mask_add                               # single add per head
        s = s - jnp.max(s, axis=-1, keepdims=True)
        e = jnp.exp(s)
        # approx reciprocal -> EUP slot; ~2^-12 rel. error vs exact softmax.
        p = e * pl.reciprocal(jnp.sum(e, axis=-1, keepdims=True), approx=True)
        ctx = jnp.einsum('bqk,bkd->bqd', p.astype(_MXU_DTYPE), vh,
                         preferred_element_type=jnp.float32)       # (B,Lq,dh)
        contrib = _mxu_dot(ctx.reshape(B * Lq, dh), wo[sl, :])     # (B*Lq, D)
        acc = contrib if acc is None else acc + contrib
    return acc


# ---------------------------- Pallas kernels ----------------------------

def _encoder_kernel(x_ref, pos_ref, mask_ref,
                    ln1_g_ref, ln1_b_ref,
                    wqkv_ref, bqkv_ref, wo_ref, bo_ref,
                    ln2_g_ref, ln2_b_ref,
                    w1_ref, b1_ref, w2_ref, b2_ref,
                    lnf_g_ref, lnf_b_ref,
                    o_ref, *, n_head, n_layers, embed_scale):
    """Whole encoder in one call: embed-scale + pos-enc -> L x (LN1 -> fused
    QKV -> MHA -> out-proj -> residual -> LN2 -> FFN -> residual) -> final LN.
    Per-layer params are stacked on a leading L axis; the activation never
    leaves VMEM/vregs between layers."""
    B, S, D = x_ref.shape
    dh = D // n_head

    mask_add = mask_ref[...]                           # (B, 1, S)
    xf = (x_ref[...] * embed_scale + pos_ref[...]).reshape(B * S, D)

    for l in range(n_layers):                          # static unroll over layers
        # ---- self-attention sublayer (pre-norm) ----
        xn = _layer_norm(xf, ln1_g_ref[l], ln1_b_ref[l])
        qkv = _mxu_dot(xn, wqkv_ref[l]) + bqkv_ref[l]  # (B*S, 3D)
        q3 = qkv[:, 0:D].reshape(B, S, D)
        k3 = qkv[:, D:2 * D].reshape(B, S, D)
        v3 = qkv[:, 2 * D:3 * D].reshape(B, S, D)
        attn = _mha_heads(q3, k3, v3, mask_add, wo_ref[l], n_head, dh) + bo_ref[l]
        xf = xf + attn                                 # residual (in VMEM)

        # ---- position-wise FFN sublayer (pre-norm) ----
        xn2 = _layer_norm(xf, ln2_g_ref[l], ln2_b_ref[l])
        hid = jnp.maximum(_mxu_dot(xn2, w1_ref[l]) + b1_ref[l], 0.0)
        xf = xf + _mxu_dot(hid, w2_ref[l]) + b2_ref[l]  # residual (in VMEM)

    # fused final encoder LayerNorm
    xf = _layer_norm(xf, lnf_g_ref[...], lnf_b_ref[...])
    o_ref[...] = xf.reshape(B, S, D)


def _decoder_kernel(x_ref, enc_ref, mask_ref,
                    wih_ref, whh_ref, b_ref,
                    wq_ref, bq_ref, wkv_ref, bkv_ref, wo_ref, bo_ref,
                    wv_ref, bv_ref,
                    o_ref, *, n_head, n_lstm_layers):
    """Whole decoder in one call: stacked LSTM -> cross-attention -> (padded,
    lane-dense) vocab projection.  Only the (B,H)@(H,4H) recurrent matmul +
    gate nonlinearities are on the serial path; the hidden sequence is
    accumulated in registers and materialized once per layer."""
    B, T, D = x_ref.shape
    S = enc_ref.shape[1]
    H = D
    dh = D // n_head
    Vp = wv_ref.shape[1]                               # padded vocab (mult of 128)

    # ---- stacked LSTM (all layers fused, batch_first semantics) ----
    cur = x_ref[...]                                   # (B, T, D)
    for l in range(n_lstm_layers):                     # static unroll over layers
        wih_b = wih_ref[l].astype(_MXU_DTYPE)
        whh_b = whh_ref[l].astype(_MXU_DTYPE)
        # Hoisted input projection: one (B*T, D)@(D, 4H) matmul for all steps.
        xproj = (jnp.dot(cur.reshape(B * T, D).astype(_MXU_DTYPE), wih_b,
                         preferred_element_type=jnp.float32)
                 + b_ref[l]).reshape(B, T, 4 * H)
        h = jnp.zeros((B, H), jnp.float32)
        c = jnp.zeros((B, H), jnp.float32)
        hs = []
        for t in range(T):                             # static unroll over time
            gates = xproj[:, t, :] + jnp.dot(
                h.astype(_MXU_DTYPE), whh_b,
                preferred_element_type=jnp.float32)    # (B, 4H)
            i_g = jax.nn.sigmoid(gates[:, 0 * H:1 * H])
            f_g = jax.nn.sigmoid(gates[:, 1 * H:2 * H])
            g_g = jnp.tanh(gates[:, 2 * H:3 * H])
            o_g = jax.nn.sigmoid(gates[:, 3 * H:4 * H])
            c = f_g * c + i_g * g_g
            h = o_g * jnp.tanh(c)
            hs.append(h)                               # register accumulation
        # single materialization per layer, OFF the serial recurrence path
        cur = jnp.concatenate([hh[:, None, :] for hh in hs], axis=1)  # (B,T,H)

    # ---- cross-attention: q = LSTM states, k = v = encoder output ----
    q3 = (_mxu_dot(cur.reshape(B * T, D), wq_ref[...])
          + bq_ref[...]).reshape(B, T, D)
    kv = (_mxu_dot(enc_ref[...].reshape(B * S, D), wkv_ref[...])
          + bkv_ref[...])                              # (B*S, 2D) fused K|V
    k3 = kv[:, 0:D].reshape(B, S, D)
    v3 = kv[:, D:2 * D].reshape(B, S, D)
    attn = _mha_heads(q3, k3, v3, mask_ref[...], wo_ref[...],
                      n_head, dh) + bo_ref[...]        # (B*T, D)

    # ---- fused, lane-dense (padded) vocab projection ----
    logits = _mxu_dot(attn, wv_ref[...]) + bv_ref[...]
    o_ref[...] = logits.reshape(B, T, Vp)


# ---------------------------- wrappers ----------------------------

def encoder_forward(enc_params, src_tokens, mask_add, cfg):
    D, n_head = cfg['d_model'], cfg['n_head']
    B, S = src_tokens.shape
    # TODO(synk): fold the embedding gather into the kernel via scalar-prefetch
    #             of token ids to remove the separate XLA gather op.
    x = jnp.take(enc_params['emb'], src_tokens, axis=0)          # (B, S, D)
    pos = enc_params['pos_enc'][:S, :][None, :, :]               # (1, S, D)
    L = enc_params['wqkv'].shape[0]
    kern = functools.partial(_encoder_kernel, n_head=n_head, n_layers=L,
                             embed_scale=float(D) ** 0.5)
    return pl.pallas_call(
        kern,
        out_shape=jax.ShapeDtypeStruct((B, S, D), jnp.float32),
        in_specs=[_VMEM] * 17,
        out_specs=_VMEM,
    )(x, pos, mask_add,
      enc_params['ln1_g'], enc_params['ln1_b'],
      enc_params['wqkv'], enc_params['bqkv'],
      enc_params['wo'], enc_params['bo'],
      enc_params['ln2_g'], enc_params['ln2_b'],
      enc_params['ffn_w1'], enc_params['ffn_b1'],
      enc_params['ffn_w2'], enc_params['ffn_b2'],
      enc_params['ln_g'], enc_params['ln_b'])


def decoder_forward(dec_params, prev_tgt_tokens, enc_out, mask_add, cfg,
                    vocab_w_pad, vocab_b_pad):
    D, n_head = cfg['d_model'], cfg['n_head']
    x = jnp.take(dec_params['emb'], prev_tgt_tokens, axis=0)     # (B, T, D)
    B, T, _ = x.shape
    Vp = vocab_w_pad.shape[1]
    L = dec_params['lstm_wih'].shape[0]
    kern = functools.partial(_decoder_kernel, n_head=n_head, n_lstm_layers=L)
    return pl.pallas_call(
        kern,
        out_shape=jax.ShapeDtypeStruct((B, T, Vp), jnp.float32),
        in_specs=[_VMEM] * 14,
        out_specs=_VMEM,
    )(x, enc_out, mask_add,
      dec_params['lstm_wih'], dec_params['lstm_whh'], dec_params['lstm_b'],
      dec_params['attn_wq'], dec_params['attn_bq'],
      dec_params['attn_wkv'], dec_params['attn_bkv'],
      dec_params['attn_wo'], dec_params['attn_bo'],
      vocab_w_pad, vocab_b_pad)


def transformer_lstm_forward(params, src_tokens, prev_tgt_tokens, cfg):
    D, n_head = cfg['d_model'], cfg['n_head']
    dh = D // n_head
    # Additive mask, pre-scaled by 1/sqrt(dh) (scale is folded into Q inside
    # the kernels): -1e9/sqrt(dh) on pad keys, 0 elsewhere.  Shape (B, 1, S).
    pad = (src_tokens == cfg['src_pdx']).astype(jnp.float32)
    mask_add = (pad * (-1e9 / (dh ** 0.5)))[:, None, :]
    enc_out = encoder_forward(params['encoder'], src_tokens, mask_add, cfg)
    logits_padded = decoder_forward(params['decoder'], prev_tgt_tokens, enc_out,
                                    mask_add, cfg,
                                    params['vocab_w'], params['vocab_b'])
    # vocab was padded to a 128-lane multiple for lane-dense stores; slice back
    return logits_padded[:, :, :cfg['n_tgt_words']]


# ---------------------------- deterministic init ----------------------------

def positional_encoding(max_len, d_model):
    pos = jnp.arange(max_len, dtype=jnp.float32)[:, None]
    i = jnp.arange(d_model)[None, :]
    angle = pos / (10000.0 ** (2.0 * (i // 2).astype(jnp.float32) / d_model))
    return jnp.where(i % 2 == 0, jnp.sin(angle), jnp.cos(angle)).astype(jnp.float32)


def _xavier(key, shape):
    fan_in, fan_out = shape[-2], shape[-1]
    lim = (6.0 / (fan_in + fan_out)) ** 0.5
    return jax.random.uniform(key, shape, jnp.float32, -lim, lim)


def init_params(key, cfg):
    D, d_ff, L = cfg['d_model'], cfg['d_ff'], cfg['n_layers']
    V = cfg['n_tgt_words']
    Vp = ((V + 127) // 128) * 128                      # lane-dense padded vocab
    keys = iter(jax.random.split(key, 256))

    def stack_xavier(shape):
        return jnp.stack([_xavier(next(keys), shape) for _ in range(L)])

    encoder = {
        'emb': _xavier(next(keys), (cfg['n_src_words'], D)),
        'pos_enc': positional_encoding(cfg['max_seq_len'], D),
        # per-layer params stacked along a leading L axis (single fused call)
        'ln1_g': jnp.ones((L, 1, D), jnp.float32),
        'ln1_b': jnp.zeros((L, 1, D), jnp.float32),
        'wqkv': stack_xavier((D, 3 * D)),
        'bqkv': jnp.zeros((L, 1, 3 * D), jnp.float32),
        'wo': stack_xavier((D, D)),
        'bo': jnp.zeros((L, 1, D), jnp.float32),
        'ln2_g': jnp.ones((L, 1, D), jnp.float32),
        'ln2_b': jnp.zeros((L, 1, D), jnp.float32),
        'ffn_w1': stack_xavier((D, d_ff)),
        'ffn_b1': jnp.zeros((L, 1, d_ff), jnp.float32),
        'ffn_w2': stack_xavier((d_ff, D)),
        'ffn_b2': jnp.zeros((L, 1, D), jnp.float32),
        'ln_g': jnp.ones((1, D), jnp.float32),
        'ln_b': jnp.zeros((1, D), jnp.float32),
    }

    decoder = {
        'emb': _xavier(next(keys), (V, D)),
        'lstm_wih': stack_xavier((D, 4 * D)),
        'lstm_whh': stack_xavier((D, 4 * D)),
        'lstm_b': jnp.zeros((L, 1, 4 * D), jnp.float32),   # b_ih + b_hh folded
        'attn_wq': _xavier(next(keys), (D, D)),
        'attn_bq': jnp.zeros((1, D), jnp.float32),
        'attn_wkv': _xavier(next(keys), (D, 2 * D)),
        'attn_bkv': jnp.zeros((1, 2 * D), jnp.float32),
        'attn_wo': _xavier(next(keys), (D, D)),
        'attn_bo': jnp.zeros((1, D), jnp.float32),
    }

    vocab_w = jnp.pad(_xavier(next(keys), (D, V)), ((0, 0), (0, Vp - V)))
    vocab_b = jnp.zeros((1, Vp), jnp.float32)

    return {'encoder': encoder, 'decoder': decoder,
            'vocab_w': vocab_w, 'vocab_b': vocab_b}


# ---------------------------- main ----------------------------

if __name__ == "__main__":
    cfg = dict(n_src_words=50, n_tgt_words=48, src_pdx=0, tgt_pdx=0,
               d_model=32, d_ff=64, n_head=4, n_layers=2, max_seq_len=64)
    B, src_len, tgt_len = 2, 8, 8

    key = jax.random.PRNGKey(0)
    k_p, k_src, k_tgt = jax.random.split(key, 3)
    params = init_params(k_p, cfg)

    src_tokens = jax.random.randint(k_src, (B, src_len), 0, cfg['n_src_words'],
                                    dtype=jnp.int32)
    src_tokens = src_tokens.at[:, -1].set(cfg['src_pdx'])   # exercise the pad mask
    prev_tgt_tokens = jax.random.randint(k_tgt, (B, tgt_len), 0, cfg['n_tgt_words'],
                                         dtype=jnp.int32)

    fwd = jax.jit(functools.partial(transformer_lstm_forward, cfg=cfg))
    out = fwd(params, src_tokens, prev_tgt_tokens)
    out = jax.block_until_ready(out)

    assert out.shape == (B, tgt_len, cfg['n_tgt_words']), out.shape
    assert bool(jnp.all(jnp.isfinite(out)))
    print("KERNEL_OK")
</pallas_src>

<mosaic_0001>
module attributes {stable_mosaic.version = 11 : i64} {
  func.func @_encoder_kernel(%arg0: memref<2x8x32xf32, #tpu.memory_space<vmem>>, %arg1: memref<1x8x32xf32, #tpu.memory_space<vmem>>, %arg2: memref<2x1x8xf32, #tpu.memory_space<vmem>>, %arg3: memref<2x1x32xf32, #tpu.memory_space<vmem>>, %arg4: memref<2x1x32xf32, #tpu.memory_space<vmem>>, %arg5: memref<2x32x96xf32, #tpu.memory_space<vmem>>, %arg6: memref<2x1x96xf32, #tpu.memory_space<vmem>>, %arg7: memref<2x32x32xf32, #tpu.memory_space<vmem>>, %arg8: memref<2x1x32xf32, #tpu.memory_space<vmem>>, %arg9: memref<2x1x32xf32, #tpu.memory_space<vmem>>, %arg10: memref<2x1x32xf32, #tpu.memory_space<vmem>>, %arg11: memref<2x32x64xf32, #tpu.memory_space<vmem>>, %arg12: memref<2x1x64xf32, #tpu.memory_space<vmem>>, %arg13: memref<2x64x32xf32, #tpu.memory_space<vmem>>, %arg14: memref<2x1x32xf32, #tpu.memory_space<vmem>>, %arg15: memref<1x32xf32, #tpu.memory_space<vmem>>, %arg16: memref<1x32xf32, #tpu.memory_space<vmem>>, %arg17: memref<2x8x32xf32, #tpu.memory_space<vmem>>) attributes {dimension_semantics = [], scalar_prefetch = 0 : i64, scratch_operands = 0 : i64, tpu.core_type = #tpu.core_type<tc>} {
    %c0 = arith.constant 0 : index
    %c0_0 = arith.constant 0 : index
    %c0_1 = arith.constant 0 : index
    %0 = vector.load %arg2[%c0, %c0_0, %c0_1] : memref<2x1x8xf32, #tpu.memory_space<vmem>>, vector<2x1x8xf32>
    %c0_2 = arith.constant 0 : index
    %c0_3 = arith.constant 0 : index
    %c0_4 = arith.constant 0 : index
    %1 = vector.load %arg0[%c0_2, %c0_3, %c0_4] : memref<2x8x32xf32, #tpu.memory_space<vmem>>, vector<2x8x32xf32>
    %cst = arith.constant 5.65685415 : f32
    %2 = vector.broadcast %cst : f32 to vector<2x8x32xf32>
    %3 = arith.mulf %1, %2 : vector<2x8x32xf32>
    %c0_5 = arith.constant 0 : index
    %c0_6 = arith.constant 0 : index
    %c0_7 = arith.constant 0 : index
    %4 = vector.load %arg1[%c0_5, %c0_6, %c0_7] : memref<1x8x32xf32, #tpu.memory_space<vmem>>, vector<1x8x32xf32>
    %5 = vector.broadcast %4 : vector<1x8x32xf32> to vector<2x8x32xf32>
    %6 = arith.addf %3, %5 : vector<2x8x32xf32>
    %7 = vector.shape_cast %6 : vector<2x8x32xf32> to vector<16x32xf32>
    %c0_8 = arith.constant 0 : index
    %c0_9 = arith.constant 0 : index
    %c0_10 = arith.constant 0 : index
    %8 = vector.load %arg3[%c0_8, %c0_9, %c0_10] : memref<2x1x32xf32, #tpu.memory_space<vmem>>, vector<1x1x32xf32>
    %9 = vector.shape_cast %8 : vector<1x1x32xf32> to vector<1x32xf32>
    %c0_11 = arith.constant 0 : index
    %c0_12 = arith.constant 0 : index
    %c0_13 = arith.constant 0 : index
    %10 = vector.load %arg4[%c0_11, %c0_12, %c0_13] : memref<2x1x32xf32, #tpu.memory_space<vmem>>, vector<1x1x32xf32>
    %11 = vector.shape_cast %10 : vector<1x1x32xf32> to vector<1x32xf32>
    %cst_14 = arith.constant dense<0.000000e+00> : vector<16xf32>
    %12 = vector.multi_reduction <add>, %7, %cst_14 [1] : vector<16x32xf32> to vector<16xf32>
    %13 = vector.shape_cast %12 : vector<16xf32> to vector<16x1xf32>
    %cst_15 = arith.constant 3.200000e+01 : f32
    %14 = vector.broadcast %cst_15 : f32 to vector<16x1xf32>
    %15 = arith.divf %13, %14 : vector<16x1xf32>
    %16 = vector.broadcast %15 : vector<16x1xf32> to vector<16x32xf32>
    %17 = arith.subf %7, %16 : vector<16x32xf32>
    %18 = arith.mulf %17, %17 : vector<16x32xf32>
    %cst_16 = arith.constant dense<0.000000e+00> : vector<16xf32>
    %19 = vector.multi_reduction <add>, %18, %cst_16 [1] : vector<16x32xf32> to vector<16xf32>
    %20 = vector.shape_cast %19 : vector<16xf32> to vector<16x1xf32>
    %cst_17 = arith.constant 3.200000e+01 : f32
    %21 = vector.broadcast %cst_17 : f32 to vector<16x1xf32>
    %22 = arith.divf %20, %21 : vector<16x1xf32>
    %23 = vector.broadcast %15 : vector<16x1xf32> to vector<16x32xf32>
    %24 = arith.subf %7, %23 : vector<16x32xf32>
    %cst_18 = arith.constant 9.99999974E-6 : f32
    %25 = vector.broadcast %cst_18 : f32 to vector<16x1xf32>
    %26 = arith.addf %22, %25 : vector<16x1xf32>
    %27 = math.rsqrt %26 : vector<16x1xf32>
    %28 = vector.broadcast %27 : vector<16x1xf32> to vector<16x32xf32>
    %29 = arith.mulf %24, %28 : vector<16x32xf32>
    %30 = vector.broadcast %9 : vector<1x32xf32> to vector<16x32xf32>
    %31 = arith.mulf %29, %30 : vector<16x32xf32>
    %32 = vector.broadcast %11 : vector<1x32xf32> to vector<16x32xf32>
    %33 = arith.addf %31, %32 : vector<16x32xf32>
    %c0_19 = arith.constant 0 : index
    %c0_20 = arith.constant 0 : index
    %c0_21 = arith.constant 0 : index
    %34 = vector.load %arg5[%c0_19, %c0_20, %c0_21] : memref<2x32x96xf32, #tpu.memory_space<vmem>>, vector<1x32x96xf32>
    %35 = vector.shape_cast %34 : vector<1x32x96xf32> to vector<32x96xf32>
    %36 = arith.truncf %33 : vector<16x32xf32> to vector<16x32xbf16>
    %37 = arith.truncf %35 : vector<32x96xf32> to vector<32x96xbf16>
    %cst_22 = arith.constant dense<0.000000e+00> : vector<16x96xf32>
    %38 = tpu.matmul %36, %37, %cst_22 {dimension_numbers = #tpu.dot_dimension_numbers<[1], [0], [0], [1], [0, 0, 1, 1], [], []>} : vector<16x32xbf16>, vector<32x96xbf16>, vector<16x96xf32> -> vector<16x96xf32>
    %c0_23 = arith.constant 0 : index
    %c0_24 = arith.constant 0 : index
    %c0_25 = arith.constant 0 : index
    %39 = vector.load %arg6[%c0_23, %c0_24, %c0_25] : memref<2x1x96xf32, #tpu.memory_space<vmem>>, vector<1x1x96xf32>
    %40 = vector.shape_cast %39 : vector<1x1x96xf32> to vector<1x96xf32>
    %41 = vector.broadcast %40 : vector<1x96xf32> to vector<16x96xf32>
    %42 = arith.addf %38, %41 : vector<16x96xf32>
    %43 = vector.extract_strided_slice %42 {offsets = [0, 0], sizes = [16, 32], strides = [1, 1]} : vector<16x96xf32> to vector<16x32xf32>
    %44 = vector.shape_cast %43 : vector<16x32xf32> to vector<2x8x32xf32>
    %45 = vector.extract_strided_slice %42 {offsets = [0, 32], sizes = [16, 32], strides = [1, 1]} : vector<16x96xf32> to vector<16x32xf32>
    %46 = vector.shape_cast %45 : vector<16x32xf32> to vector<2x8x32xf32>
    %47 = vector.extract_strided_slice %42 {offsets = [0, 64], sizes = [16, 32], strides = [1, 1]} : vector<16x96xf32> to vector<16x32xf32>
    %48 = vector.shape_cast %47 : vector<16x32xf32> to vector<2x8x32xf32>
    %c0_26 = arith.constant 0 : index
    %c0_27 = arith.constant 0 : index
    %c0_28 = arith.constant 0 : index
    %49 = vector.load %arg7[%c0_26, %c0_27, %c0_28] : memref<2x32x32xf32, #tpu.memory_space<vmem>>, vector<1x32x32xf32>
    %50 = vector.shape_cast %49 : vector<1x32x32xf32> to vector<32x32xf32>
    %51 = vector.extract_strided_slice %44 {offsets = [0, 0, 0], sizes = [2, 8, 8], strides = [1, 1, 1]} : vector<2x8x32xf32> to vector<2x8x8xf32>
    %cst_29 = arith.constant 0.353553385 : f32
    %52 = vector.broadcast %cst_29 : f32 to vector<2x8x8xf32>
    %53 = arith.mulf %51, %52 : vector<2x8x8xf32>
    %54 = arith.truncf %53 : vector<2x8x8xf32> to vector<2x8x8xbf16>
    %55 = vector.extract_strided_slice %46 {offsets = [0, 0, 0], sizes = [2, 8, 8], strides = [1, 1, 1]} : vector<2x8x32xf32> to vector<2x8x8xf32>
    %56 = arith.truncf %55 : vector<2x8x8xf32> to vector<2x8x8xbf16>
    %57 = vector.extract_strided_slice %48 {offsets = [0, 0, 0], sizes = [2, 8, 8], strides = [1, 1, 1]} : vector<2x8x32xf32> to vector<2x8x8xf32>
    %58 = arith.truncf %57 : vector<2x8x8xf32> to vector<2x8x8xbf16>
    "tpu.trace_start"() <{level = 10 : i32, message = "bqd,bkd->bqk"}> : () -> ()
    %cst_30 = arith.constant dense<0.000000e+00> : vector<2x8x8xf32>
    %59 = tpu.matmul %54, %56, %cst_30 {dimension_numbers = #tpu.dot_dimension_numbers<[2], [2], [1], [1], [0, 0, 0, 1, 1, 1], [0], [0]>} : vector<2x8x8xbf16>, vector<2x8x8xbf16>, vector<2x8x8xf32> -> vector<2x8x8xf32>
    "tpu.trace_stop"() : () -> ()
    %60 = vector.broadcast %0 : vector<2x1x8xf32> to vector<2x8x8xf32>
    %61 = arith.addf %59, %60 : vector<2x8x8xf32>
    %cst_31 = arith.constant dense<0xFF800000> : vector<2x8xf32>
    %62 = vector.multi_reduction <maximumf>, %61, %cst_31 [2] : vector<2x8x8xf32> to vector<2x8xf32>
    %63 = vector.shape_cast %62 : vector<2x8xf32> to vector<2x8x1xf32>
    %64 = vector.broadcast %63 : vector<2x8x1xf32> to vector<2x8x8xf32>
    %65 = arith.subf %61, %64 : vector<2x8x8xf32>
    %66 = math.exp %65 : vector<2x8x8xf32>
    %cst_32 = arith.constant dense<0.000000e+00> : vector<2x8xf32>
    %67 = vector.multi_reduction <add>, %66, %cst_32 [2] : vector<2x8x8xf32> to vector<2x8xf32>
    %68 = vector.shape_cast %67 : vector<2x8xf32> to vector<2x8x1xf32>
    %69 = tpu.reciprocal %68 {approx = true} : vector<2x8x1xf32> -> vector<2x8x1xf32>
    %70 = vector.broadcast %69 : vector<2x8x1xf32> to vector<2x8x8xf32>
    %71 = arith.mulf %66, %70 : vector<2x8x8xf32>
    %72 = arith.truncf %71 : vector<2x8x8xf32> to vector<2x8x8xbf16>
    "tpu.trace_start"() <{level = 10 : i32, message = "bqk,bkd->bqd"}> : () -> ()
    %cst_33 = arith.constant dense<0.000000e+00> : vector<2x8x8xf32>
    %73 = tpu.matmul %72, %58, %cst_33 {dimension_numbers = #tpu.dot_dimension_numbers<[2], [1], [1], [2], [0, 0, 0, 1, 1, 2], [0], [0]>} : vector<2x8x8xbf16>, vector<2x8x8xbf16>, vector<2x8x8xf32> -> vector<2x8x8xf32>
    "tpu.trace_stop"() : () -> ()
    %74 = vector.shape_cast %73 : vector<2x8x8xf32> to vector<16x8xf32>
    %75 = vector.extract_strided_slice %50 {offsets = [0, 0], sizes = [8, 32], strides = [1, 1]} : vector<32x32xf32> to vector<8x32xf32>
    %76 = arith.truncf %74 : vector<16x8xf32> to vector<16x8xbf16>
    %77 = arith.truncf %75 : vector<8x32xf32> to vector<8x32xbf16>
    %cst_34 = arith.constant dense<0.000000e+00> : vector<16x32xf32>
    %78 = tpu.matmul %76, %77, %cst_34 {dimension_numbers = #tpu.dot_dimension_numbers<[1], [0], [0], [1], [0, 0, 1, 1], [], []>} : vector<16x8xbf16>, vector<8x32xbf16>, vector<16x32xf32> -> vector<16x32xf32>
    %79 = vector.extract_strided_slice %44 {offsets = [0, 0, 8], sizes = [2, 8, 8], strides = [1, 1, 1]} : vector<2x8x32xf32> to vector<2x8x8xf32>
    %cst_35 = arith.constant 0.353553385 : f32
    %80 = vector.broadcast %cst_35 : f32 to vector<2x8x8xf32>
    %81 = arith.mulf %79, %80 : vector<2x8x8xf32>
    %82 = arith.truncf %81 : vector<2x8x8xf32> to vector<2x8x8xbf16>
    %83 = vector.extract_strided_slice %46 {offsets = [0, 0, 8], sizes = [2, 8, 8], strides = [1, 1, 1]} : vector<2x8x32xf32> to vector<2x8x8xf32>
    %84 = arith.truncf %83 : vector<2x8x8xf32> to vector<2x8x8xbf16>
    %85 = vector.extract_strided_slice %48 {offsets = [0, 0, 8], sizes = [2, 8, 8], strides = [1, 1, 1]} : vector<2x8x32xf32> to vector<2x8x8xf32>
    %86 = arith.truncf %85 : vector<2x8x8xf32> to vector<2x8x8xbf16>
    "tpu.trace_start"() <{level = 10 : i32, message = "bqd,bkd->bqk"}> : () -> ()
    %cst_36 = arith.constant dense<0.000000e+00> : vector<2x8x8xf32>
    %87 = tpu.matmul %82, %84, %cst_36 {dimension_numbers = #tpu.dot_dimension_numbers<[2], [2], [1], [1], [0, 0, 0, 1, 1, 1], [0], [0]>} : vector<2x8x8xbf16>, vector<2x8x8xbf16>, vector<2x8x8xf32> -> vector<2x8x8xf32>
    "tpu.trace_stop"() : () -> ()
    %88 = vector.broadcast %0 : vector<2x1x8xf32> to vector<2x8x8xf32>
    %89 = arith.addf %87, %88 : vector<2x8x8xf32>
    %cst_37 = arith.constant dense<0xFF800000> : vector<2x8xf32>
    %90 = vector.multi_reduction <maximumf>, %89, %cst_37 [2] : vector<2x8x8xf32> to vector<2x8xf32>
    %91 = vector.shape_cast %90 : vector<2x8xf32> to vector<2x8x1xf32>
    %92 = vector.broadcast %91 : vector<2x8x1xf32> to vector<2x8x8xf32>
    %93 = arith.subf %89, %92 : vector<2x8x8xf32>
    %94 = math.exp %93 : vector<2x8x8xf32>
    %cst_38 = arith.constant dense<0.000000e+00> : vector<2x8xf32>
    %95 = vector.multi_reduction <add>, %94, %cst_38 [2] : vector<2x8x8xf32> to vector<2x8xf32>
    %96 = vector.shape_cast %95 : vector<2x8xf32> to vector<2x8x1xf32>
    %97 = tpu.reciprocal %96 {approx = true} : vector<2x8x1xf32> -> vector<2x8x1xf32>
    %98 = vector.broadcast %97 : vector<2x8x1xf32> to vector<2x8x8xf32>
    %99 = arith.mulf %94, %98 : vector<2x8x8xf32>
    %100 = arith.truncf %99 : vector<2x8x8xf32> to vector<2x8x8xbf16>
    "tpu.trace_start"() <{level = 10 : i32, message = "bqk,bkd->bqd"}> : () -> ()
    %cst_39 = arith.constant dense<0.000000e+00> : vector<2x8x8xf32>
    %101 = tpu.matmul %100, %86, %cst_39 {dimension_numbers = #tpu.dot_dimension_numbers<[2], [1], [1], [2], [0, 0, 0, 1, 1, 2], [0], [0]>} : vector<2x8x8xbf16>, vector<2x8x8xbf16>, vector<2x8x8xf32> -> vector<2x8x8xf32>
    "tpu.trace_stop"() : () -> ()
    %102 = vector.shape_cast %101 : vector<2x8x8xf32> to vector<16x8xf32>
    %103 = vector.extract_strided_slice %50 {offsets = [8, 0], sizes = [8, 32], strides = [1, 1]} : vector<32x32xf32> to vector<8x32xf32>
    %104 = arith.truncf %102 : vector<16x8xf32> to vector<16x8xbf16>
    %105 = arith.truncf %103 : vector<8x32xf32> to vector<8x32xbf16>
    %cst_40 = arith.constant dense<0.000000e+00> : vector<16x32xf32>
    %106 = tpu.matmul %104, %105, %cst_40 {dimension_numbers = #tpu.dot_dimension_numbers<[1], [0], [0], [1], [0, 0, 1, 1], [], []>} : vector<16x8xbf16>, vector<8x32xbf16>, vector<16x32xf32> -> vector<16x32xf32>
    %107 = arith.addf %78, %106 : vector<16x32xf32>
    %108 = vector.extract_strided_slice %44 {offsets = [0, 0, 16], sizes = [2, 8, 8], strides = [1, 1, 1]} : vector<2x8x32xf32> to vector<2x8x8xf32>
    %cst_41 = arith.constant 0.353553385 : f32
    %109 = vector.broadcast %cst_41 : f32 to vector<2x8x8xf32>
    %110 = arith.mulf %108, %109 : vector<2x8x8xf32>
    %111 = arith.truncf %110 : vector<2x8x8xf32> to vector<2x8x8xbf16>
    %112 = vector.extract_strided_slice %46 {offsets = [0, 0, 16], sizes = [2, 8, 8], strides = [1, 1, 1]} : vector<2x8x32xf32> to vector<2x8x8xf32>
    %113 = arith.truncf %112 : vector<2x8x8xf32> to vector<2x8x8xbf16>
    %114 = vector.extract_strided_slice %48 {offsets = [0, 0, 16], sizes = [2, 8, 8], strides = [1, 1, 1]} : vector<2x8x32xf32> to vector<2x8x8xf32>
    %115 = arith.truncf %114 : vector<2x8x8xf32> to vector<2x8x8xbf16>
    "tpu.trace_start"() <{level = 10 : i32, message = "bqd,bkd->bqk"}> : () -> ()
    %cst_42 = arith.constant dense<0.000000e+00> : vector<2x8x8xf32>
    %116 = tpu.matmul %111, %113, %cst_42 {dimension_numbers = #tpu.dot_dimension_numbers<[2], [2], [1], [1], [0, 0, 0, 1, 1, 1], [0], [0]>} : vector<2x8x8xbf16>, vector<2x8x8xbf16>, vector<2x8x8xf32> -> vector<2x8x8xf32>
    "tpu.trace_stop"() : () -> ()
    %117 = vector.broadcast %0 : vector<2x1x8xf32> to vector<2x8x8xf32>
    %118 = arith.addf %116, %117 : vector<2x8x8xf32>
    %cst_43 = arith.constant dense<0xFF800000> : vector<2x8xf32>
    %119 = vector.multi_reduction <maximumf>, %118, %cst_43 [2] : vector<2x8x8xf32> to vector<2x8xf32>
    %120 = vector.shape_cast %119 : vector<2x8xf32> to vector<2x8x1xf32>
    %121 = vector.broadcast %120 : vector<2x8x1xf32> to vector<2x8x8xf32>
    %122 = arith.subf %118, %121 : vector<2x8x8xf32>
    %123 = math.exp %122 : vector<2x8x8xf32>
    %cst_44 = arith.constant dense<0.000000e+00> : vector<2x8xf32>
    %124 = vector.multi_reduction <add>, %123, %cst_44 [2] : vector<2x8x8xf32> to vector<2x8xf32>
    %125 = vector.shape_cast %124 : vector<2x8xf32> to vector<2x8x1xf32>
    %126 = tpu.reciprocal %125 {approx = true} : vector<2x8x1xf32> -> vector<2x8x1xf32>
    %127 = vector.broadcast %126 : vector<2x8x1xf32> to vector<2x8x8xf32>
    %128 = arith.mulf %123, %127 : vector<2x8x8xf32>
    %129 = arith.truncf %128 : vector<2x8x8xf32> to vector<2x8x8xbf16>
    "tpu.trace_start"() <{level = 10 : i32, message = "bqk,bkd->bqd"}> : () -> ()
    %cst_45 = arith.constant dense<0.000000e+00> : vector<2x8x8xf32>
    %130 = tpu.matmul %129, %115, %cst_45 {dimension_numbers = #tpu.dot_dimension_numbers<[2], [1], [1], [2], [0, 0, 0, 1, 1, 2], [0], [0]>} : vector<2x8x8xbf16>, vector<2x8x8xbf16>, vector<2x8x8xf32> -> vector<2x8x8xf32>
    "tpu.trace_stop"() : () -> ()
    %131 = vector.shape_cast %130 : vector<2x8x8xf32> to vector<16x8xf32>
    %132 = vector.extract_strided_slice %50 {offsets = [16, 0], sizes = [8, 32], strides = [1, 1]} : vector<32x32xf32> to vector<8x32xf32>
    %133 = arith.truncf %131 : vector<16x8xf32> to vector<16x8xbf16>
    %134 = arith.truncf %132 : vector<8x32xf32> to vector<8x32xbf16>
    %cst_46 = arith.constant dense<0.000000e+00> : vector<16x32xf32>
    %135 = tpu.matmul %133, %134, %cst_46 {dimension_numbers = #tpu.dot_dimension_numbers<[1], [0], [0], [1], [0, 0, 1, 1], [], []>} : vector<16x8xbf16>, vector<8x32xbf16>, vector<16x32xf32> -> vector<16x32xf32>
    %136 = arith.addf %107, %135 : vector<16x32xf32>
    %137 = vector.extract_strided_slice %44 {offsets = [0, 0, 24], sizes = [2, 8, 8], strides = [1, 1, 1]} : vector<2x8x32xf32> to vector<2x8x8xf32>
    %cst_47 = arith.constant 0.353553385 : f32
    %138 = vector.broadcast %cst_47 : f32 to vector<2x8x8xf32>
    %139 = arith.mulf %137, %138 : vector<2x8x8xf32>
    %140 = arith.truncf %139 : vector<2x8x8xf32> to vector<2x8x8xbf16>
    %141 = vector.extract_strided_slice %46 {offsets = [0, 0, 24], sizes = [2, 8, 8], strides = [1, 1, 1]} : vector<2x8x32xf32> to vector<2x8x8xf32>
    %142 = arith.truncf %141 : vector<2x8x8xf32> to vector<2x8x8xbf16>
    %143 = vector.extract_strided_slice %48 {offsets = [0, 0, 24], sizes = [2, 8, 8], strides = [1, 1, 1]} : vector<2x8x32xf32> to vector<2x8x8xf32>
    %144 = arith.truncf %143 : vector<2x8x8xf32> to vector<2x8x8xbf16>
    "tpu.trace_start"() <{level = 10 : i32, message = "bqd,bkd->bqk"}> : () -> ()
    %cst_48 = arith.constant dense<0.000000e+00> : vector<2x8x8xf32>
    %145 = tpu.matmul %140, %142, %cst_48 {dimension_numbers = #tpu.dot_dimension_numbers<[2], [2], [1], [1], [0, 0, 0, 1, 1, 1], [0], [0]>} : vector<2x8x8xbf16>, vector<2x8x8xbf16>, vector<2x8x8xf32> -> vector<2x8x8xf32>
    "tpu.trace_stop"() : () -> ()
    %146 = vector.broadcast %0 : vector<2x1x8xf32> to vector<2x8x8xf32>
    %147 = arith.addf %145, %146 : vector<2x8x8xf32>
    %cst_49 = arith.constant dense<0xFF800000> : vector<2x8xf32>
    %148 = vector.multi_reduction <maximumf>, %147, %cst_49 [2] : vector<2x8x8xf32> to vector<2x8xf32>
    %149 = vector.shape_cast %148 : vector<2x8xf32> to vector<2x8x1xf32>
    %150 = vector.broadcast %149 : vector<2x8x1xf32> to vector<2x8x8xf32>
    %151 = arith.subf %147, %150 : vector<2x8x8xf32>
    %152 = math.exp %151 : vector<2x8x8xf32>
    %cst_50 = arith.constant dense<0.000000e+00> : vector<2x8xf32>
    %153 = vector.multi_reduction <add>, %152, %cst_50 [2] : vector<2x8x8xf32> to vector<2x8xf32>
    %154 = vector.shape_cast %153 : vector<2x8xf32> to vector<2x8x1xf32>
    %155 = tpu.reciprocal %154 {approx = true} : vector<2x8x1xf32> -> vector<2x8x1xf32>
    %156 = vector.broadcast %155 : vector<2x8x1xf32> to vector<2x8x8xf32>
    %157 = arith.mulf %152, %156 : vector<2x8x8xf32>
    %158 = arith.truncf %157 : vector<2x8x8xf32> to vector<2x8x8xbf16>
    "tpu.trace_start"() <{level = 10 : i32, message = "bqk,bkd->bqd"}> : () -> ()
    %cst_51 = arith.constant dense<0.000000e+00> : vector<2x8x8xf32>
    %159 = tpu.matmul %158, %144, %cst_51 {dimension_numbers = #tpu.dot_dimension_numbers<[2], [1], [1], [2], [0, 0, 0, 1, 1, 2], [0], [0]>} : vector<2x8x8xbf16>, vector<2x8x8xbf16>, vector<2x8x8xf32> -> vector<2x8x8xf32>
    "tpu.trace_stop"() : () -> ()
    %160 = vector.shape_cast %159 : vector<2x8x8xf32> to vector<16x8xf32>
    %161 = vector.extract_strided_slice %50 {offsets = [24, 0], sizes = [8, 32], strides = [1, 1]} : vector<32x32xf32> to vector<8x32xf32>
    %162 = arith.truncf %160 : vector<16x8xf32> to vector<16x8xbf16>
    %163 = arith.truncf %161 : vector<8x32xf32> to vector<8x32xbf16>
    %cst_52 = arith.constant dense<0.000000e+00> : vector<16x32xf32>
    %164 = tpu.matmul %162, %163, %cst_52 {dimension_numbers = #tpu.dot_dimension_numbers<[1], [0], [0], [1], [0, 0, 1, 1], [], []>} : vector<16x8xbf16>, vector<8x32xbf16>, vector<16x32xf32> -> vector<16x32xf32>
    %165 = arith.addf %136, %164 : vector<16x32xf32>
    %c0_53 = arith.constant 0 : index
    %c0_54 = arith.constant 0 : index
    %c0_55 = arith.constant 0 : index
    %166 = vector.load %arg8[%c0_53, %c0_54, %c0_55] : memref<2x1x32xf32, #tpu.memory_space<vmem>>, vector<1x1x32xf32>
    %167 = vector.shape_cast %166 : vector<1x1x32xf32> to vector<1x32xf32>
    %168 = vector.broadcast %167 : vector<1x32xf32> to vector<16x32xf32>
    %169 = arith.addf %165, %168 : vector<16x32xf32>
    %170 = arith.addf %7, %169 : vector<16x32xf32>
    %c0_56 = arith.constant 0 : index
    %c0_57 = arith.constant 0 : index
    %c0_58 = arith.constant 0 : index
    %171 = vector.load %arg9[%c0_56, %c0_57, %c0_58] : memref<2x1x32xf32, #tpu.memory_space<vmem>>, vector<1x1x32xf32>
    %172 = vector.shape_cast %171 : vector<1x1x32xf32> to vector<1x32xf32>
    %c0_59 = arith.constant 0 : index
    %c0_60 = arith.constant 0 : index
    %c0_61 = arith.constant 0 : index
    %173 = vector.load %arg10[%c0_59, %c0_60, %c0_61] : memref<2x1x32xf32, #tpu.memory_space<vmem>>, vector<1x1x32xf32>
    %174 = vector.shape_cast %173 : vector<1x1x32xf32> to vector<1x32xf32>
    %cst_62 = arith.constant dense<0.000000e+00> : vector<16xf32>
    %175 = vector.multi_reduction <add>, %170, %cst_62 [1] : vector<16x32xf32> to vector<16xf32>
    %176 = vector.shape_cast %175 : vector<16xf32> to vector<16x1xf32>
    %cst_63 = arith.constant 3.200000e+01 : f32
    %177 = vector.broadcast %cst_63 : f32 to vector<16x1xf32>
    %178 = arith.divf %176, %177 : vector<16x1xf32>
    %179 = vector.broadcast %178 : vector<16x1xf32> to vector<16x32xf32>
    %180 = arith.subf %170, %179 : vector<16x32xf32>
    %181 = arith.mulf %180, %180 : vector<16x32xf32>
    %cst_64 = arith.constant dense<0.000000e+00> : vector<16xf32>
    %182 = vector.multi_reduction <add>, %181, %cst_64 [1] : vector<16x32xf32> to vector<16xf32>
    %183 = vector.shape_cast %182 : vector<16xf32> to vector<16x1xf32>
    %cst_65 = arith.constant 3.200000e+01 : f32
    %184 = vector.broadcast %cst_65 : f32 to vector<16x1xf32>
    %185 = arith.divf %183, %184 : vector<16x1xf32>
    %186 = vector.broadcast %178 : vector<16x1xf32> to vector<16x32xf32>
    %187 = arith.subf %170, %186 : vector<16x32xf32>
    %cst_66 = arith.constant 9.99999974E-6 : f32
    %188 = vector.broadcast %cst_66 : f32 to vector<16x1xf32>
    %189 = arith.addf %185, %188 : vector<16x1xf32>
    %190 = math.rsqrt %189 : vector<16x1xf32>
    %191 = vector.broadcast %190 : vector<16x1xf32> to vector<16x32xf32>
    %192 = arith.mulf %187, %191 : vector<16x32xf32>
    %193 = vector.broadcast %172 : vector<1x32xf32> to vector<16x32xf32>
    %194 = arith.mulf %192, %193 : vector<16x32xf32>
    %195 = vector.broadcast %174 : vector<1x32xf32> to vector<16x32xf32>
    %196 = arith.addf %194, %195 : vector<16x32xf32>
    %c0_67 = arith.constant 0 : index
    %c0_68 = arith.constant 0 : index
    %c0_69 = arith.constant 0 : index
    %197 = vector.load %arg11[%c0_67, %c0_68, %c0_69] : memref<2x32x64xf32, #tpu.memory_space<vmem>>, vector<1x32x64xf32>
    %198 = vector.shape_cast %197 : vector<1x32x64xf32> to vector<32x64xf32>
    %199 = arith.truncf %196 : vector<16x32xf32> to vector<16x32xbf16>
    %200 = arith.truncf %198 : vector<32x64xf32> to vector<32x64xbf16>
    %cst_70 = arith.constant dense<0.000000e+00> : vector<16x64xf32>
    %201 = tpu.matmul %199, %200, %cst_70 {dimension_numbers = #tpu.dot_dimension_numbers<[1], [0], [0], [1], [0, 0, 1, 1], [], []>} : vector<16x32xbf16>, vector<32x64xbf16>, vector<16x64xf32> -> vector<16x64xf32>
    %c0_71 = arith.constant 0 : index
    %c0_72 = arith.constant 0 : index
    %c0_73 = arith.constant 0 : index
    %202 = vector.load %arg12[%c0_71, %c0_72, %c0_73] : memref<2x1x64xf32, #tpu.memory_space<vmem>>, vector<1x1x64xf32>
    %203 = vector.shape_cast %202 : vector<1x1x64xf32> to vector<1x64xf32>
    %204 = vector.broadcast %203 : vector<1x64xf32> to vector<16x64xf32>
    %205 = arith.addf %201, %204 : vector<16x64xf32>
    %cst_74 = arith.constant 0.000000e+00 : f32
    %206 = vector.broadcast %cst_74 : f32 to vector<16x64xf32>
    %207 = arith.maximumf %205, %206 : vector<16x64xf32>
    %c0_75 = arith.constant 0 : index
    %c0_76 = arith.constant 0 : index
    %c0_77 = arith.constant 0 : index
    %208 = vector.load %arg13[%c0_75, %c0_76, %c0_77] : memref<2x64x32xf32, #tpu.memory_space<vmem>>, vector<1x64x32xf32>
    %209 = vector.shape_cast %208 : vector<1x64x32xf32> to vector<64x32xf32>
    %210 = arith.truncf %207 : vector<16x64xf32> to vector<16x64xbf16>
    %211 = arith.truncf %209 : vector<64x32xf32> to vector<64x32xbf16>
    %cst_78 = arith.constant dense<0.000000e+00> : vector<16x32xf32>
    %212 = tpu.matmul %210, %211, %cst_78 {dimension_numbers = #tpu.dot_dimension_numbers<[1], [0], [0], [1], [0, 0, 1, 1], [], []>} : vector<16x64xbf16>, vector<64x32xbf16>, vector<16x32xf32> -> vector<16x32xf32>
    %213 = arith.addf %170, %212 : vector<16x32xf32>
    %c0_79 = arith.constant 0 : index
    %c0_80 = arith.constant 0 : index
    %c0_81 = arith.constant 0 : index
    %214 = vector.load %arg14[%c0_79, %c0_80, %c0_81] : memref<2x1x32xf32, #tpu.memory_space<vmem>>, vector<1x1x32xf32>
    %215 = vector.shape_cast %214 : vector<1x1x32xf32> to vector<1x32xf32>
    %216 = vector.broadcast %215 : vector<1x32xf32> to vector<16x32xf32>
    %217 = arith.addf %213, %216 : vector<16x32xf32>
    %c1 = arith.constant 1 : index
    %c0_82 = arith.constant 0 : index
    %c0_83 = arith.constant 0 : index
    %218 = vector.load %arg3[%c1, %c0_82, %c0_83] : memref<2x1x32xf32, #tpu.memory_space<vmem>>, vector<1x1x32xf32>
    %219 = vector.shape_cast %218 : vector<1x1x32xf32> to vector<1x32xf32>
    %c1_84 = arith.constant 1 : index
    %c0_85 = arith.constant 0 : index
    %c0_86 = arith.constant 0 : index
    %220 = vector.load %arg4[%c1_84, %c0_85, %c0_86] : memref<2x1x32xf32, #tpu.memory_space<vmem>>, vector<1x1x32xf32>
    %221 = vector.shape_cast %220 : vector<1x1x32xf32> to vector<1x32xf32>
    %cst_87 = arith.constant dense<0.000000e+00> : vector<16xf32>
    %222 = vector.multi_reduction <add>, %217, %cst_87 [1] : vector<16x32xf32> to vector<16xf32>
    %223 = vector.shape_cast %222 : vector<16xf32> to vector<16x1xf32>
    %cst_88 = arith.constant 3.200000e+01 : f32
    %224 = vector.broadcast %cst_88 : f32 to vector<16x1xf32>
    %225 = arith.divf %223, %224 : vector<16x1xf32>
    %226 = vector.broadcast %225 : vector<16x1xf32> to vector<16x32xf32>
    %227 = arith.subf %217, %226 : vector<16x32xf32>
    %228 = arith.mulf %227, %227 : vector<16x32xf32>
    %cst_89 = arith.constant dense<0.000000e+00> : vector<16xf32>
    %229 = vector.multi_reduction <add>, %228, %cst_89 [1] : vector<16x32xf32> to vector<16xf32>
    %230 = vector.shape_cast %229 : vector<16xf32> to vector<16x1xf32>
    %cst_90 = arith.constant 3.200000e+01 : f32
    %231 = vector.broadcast %cst_90 : f32 to vector<16x1xf32>
    %232 = arith.divf %230, %231 : vector<16x1xf32>
    %233 = vector.broadcast %225 : vector<16x1xf32> to vector<16x32xf32>
    %234 = arith.subf %217, %233 : vector<16x32xf32>
    %cst_91 = arith.constant 9.99999974E-6 : f32
    %235 = vector.broadcast %cst_91 : f32 to vector<16x1xf32>
    %236 = arith.addf %232, %235 : vector<16x1xf32>
    %237 = math.rsqrt %236 : vector<16x1xf32>
    %238 = vector.broadcast %237 : vector<16x1xf32> to vector<16x32xf32>
    %239 = arith.mulf %234, %238 : vector<16x32xf32>
    %240 = vector.broadcast %219 : vector<1x32xf32> to vector<16x32xf32>
    %241 = arith.mulf %239, %240 : vector<16x32xf32>
    %242 = vector.broadcast %221 : vector<1x32xf32> to vector<16x32xf32>
    %243 = arith.addf %241, %242 : vector<16x32xf32>
    %c1_92 = arith.constant 1 : index
    %c0_93 = arith.constant 0 : index
    %c0_94 = arith.constant 0 : index
    %244 = vector.load %arg5[%c1_92, %c0_93, %c0_94] : memref<2x32x96xf32, #tpu.memory_space<vmem>>, vector<1x32x96xf32>
    %245 = vector.shape_cast %244 : vector<1x32x96xf32> to vector<32x96xf32>
    %246 = arith.truncf %243 : vector<16x32xf32> to vector<16x32xbf16>
    %247 = arith.truncf %245 : vector<32x96xf32> to vector<32x96xbf16>
    %cst_95 = arith.constant dense<0.000000e+00> : vector<16x96xf32>
    %248 = tpu.matmul %246, %247, %cst_95 {dimension_numbers = #tpu.dot_dimension_numbers<[1], [0], [0], [1], [0, 0, 1, 1], [], []>} : vector<16x32xbf16>, vector<32x96xbf16>, vector<16x96xf32> -> vector<16x96xf32>
    %c1_96 = arith.constant 1 : index
    %c0_97 = arith.constant 0 : index
    %c0_98 = arith.constant 0 : index
    %249 = vector.load %arg6[%c1_96, %c0_97, %c0_98] : memref<2x1x96xf32, #tpu.memory_space<vmem>>, vector<1x1x96xf32>
    %250 = vector.shape_cast %249 : vector<1x1x96xf32> to vector<1x96xf32>
    %251 = vector.broadcast %250 : vector<1x96xf32> to vector<16x96xf32>
    %252 = arith.addf %248, %251 : vector<16x96xf32>
    %253 = vector.extract_strided_slice %252 {offsets = [0, 0], sizes = [16, 32], strides = [1, 1]} : vector<16x96xf32> to vector<16x32xf32>
    %254 = vector.shape_cast %253 : vector<16x32xf32> to vector<2x8x32xf32>
    %255 = vector.extract_strided_slice %252 {offsets = [0, 32], sizes = [16, 32], strides = [1, 1]} : vector<16x96xf32> to vector<16x32xf32>
    %256 = vector.shape_cast %255 : vector<16x32xf32> to vector<2x8x32xf32>
    %257 = vector.extract_strided_slice %252 {offsets = [0, 64], sizes = [16, 32], strides = [1, 1]} : vector<16x96xf32> to vector<16x32xf32>
    %258 = vector.shape_cast %257 : vector<16x32xf32> to vector<2x8x32xf32>
    %c1_99 = arith.constant 1 : index
    %c0_100 = arith.constant 0 : index
    %c0_101 = arith.constant 0 : index
    %259 = vector.load %arg7[%c1_99, %c0_100, %c0_101] : memref<2x32x32xf32, #tpu.memory_space<vmem>>, vector<1x32x32xf32>
    %260 = vector.shape_cast %259 : vector<1x32x32xf32> to vector<32x32xf32>
    %261 = vector.extract_strided_slice %254 {offsets = [0, 0, 0], sizes = [2, 8, 8], strides = [1, 1, 1]} : vector<2x8x32xf32> to vector<2x8x8xf32>
    %cst_102 = arith.constant 0.353553385 : f32
    %262 = vector.broadcast %cst_102 : f32 to vector<2x8x8xf32>
    %263 = arith.mulf %261, %262 : vector<2x8x8xf32>
    %264 = arith.truncf %263 : vector<2x8x8xf32> to vector<2x8x8xbf16>
    %265 = vector.extract_strided_slice %256 {offsets = [0, 0, 0], sizes = [2, 8, 8], strides = [1, 1, 1]} : vector<2x8x32xf32> to vector<2x8x8xf32>
    %266 = arith.truncf %265 : vector<2x8x8xf32> to vector<2x8x8xbf16>
    %267 = vector.extract_strided_slice %258 {offsets = [0, 0, 0], sizes = [2, 8, 8], strides = [1, 1, 1]} : vector<2x8x32xf32> to vector<2x8x8xf32>
    %268 = arith.truncf %267 : vector<2x8x8xf32> to vector<2x8x8xbf16>
    "tpu.trace_start"() <{level = 10 : i32, message = "bqd,bkd->bqk"}> : () -> ()
    %cst_103 = arith.constant dense<0.000000e+00> : vector<2x8x8xf32>
    %269 = tpu.matmul %264, %266, %cst_103 {dimension_numbers = #tpu.dot_dimension_numbers<[2], [2], [1], [1], [0, 0, 0, 1, 1, 1], [0], [0]>} : vector<2x8x8xbf16>, vector<2x8x8xbf16>, vector<2x8x8xf32> -> vector<2x8x8xf32>
    "tpu.trace_stop"() : () -> ()
    %270 = vector.broadcast %0 : vector<2x1x8xf32> to vector<2x8x8xf32>
    %271 = arith.addf %269, %270 : vector<2x8x8xf32>
    %cst_104 = arith.constant dense<0xFF800000> : vector<2x8xf32>
    %272 = vector.multi_reduction <maximumf>, %271, %cst_104 [2] : vector<2x8x8xf32> to vector<2x8xf32>
    %273 = vector.shape_cast %272 : vector<2x8xf32> to vector<2x8x1xf32>
    %274 = vector.broadcast %273 : vector<2x8x1xf32> to vector<2x8x8xf32>
    %275 = arith.subf %271, %274 : vector<2x8x8xf32>
    %276 = math.exp %275 : vector<2x8x8xf32>
    %cst_105 = arith.constant dense<0.000000e+00> : vector<2x8xf32>
    %277 = vector.multi_reduction <add>, %276, %cst_105 [2] : vector<2x8x8xf32> to vector<2x8xf32>
    %278 = vector.shape_cast %277 : vector<2x8xf32> to vector<2x8x1xf32>
    %279 = tpu.reciprocal %278 {approx = true} : vector<2x8x1xf32> -> vector<2x8x1xf32>
    %280 = vector.broadcast %279 : vector<2x8x1xf32> to vector<2x8x8xf32>
    %281 = arith.mulf %276, %280 : vector<2x8x8xf32>
    %282 = arith.truncf %281 : vector<2x8x8xf32> to vector<2x8x8xbf16>
    "tpu.trace_start"() <{level = 10 : i32, message = "bqk,bkd->bqd"}> : () -> ()
    %cst_106 = arith.constant dense<0.000000e+00> : vector<2x8x8xf32>
    %283 = tpu.matmul %282, %268, %cst_106 {dimension_numbers = #tpu.dot_dimension_numbers<[2], [1], [1], [2], [0, 0, 0, 1, 1, 2], [0], [0]>} : vector<2x8x8xbf16>, vector<2x8x8xbf16>, vector<2x8x8xf32> -> vector<2x8x8xf32>
    "tpu.trace_stop"() : () -> ()
    %284 = vector.shape_cast %283 : vector<2x8x8xf32> to vector<16x8xf32>
    %285 = vector.extract_strided_slice %260 {offsets = [0, 0], sizes = [8, 32], strides = [1, 1]} : vector<32x32xf32> to vector<8x32xf32>
    %286 = arith.truncf %284 : vector<16x8xf32> to vector<16x8xbf16>
    %287 = arith.truncf %285 : vector<8x32xf32> to vector<8x32xbf16>
    %cst_107 = arith.constant dense<0.000000e+00> : vector<16x32xf32>
    %288 = tpu.matmul %286, %287, %cst_107 {dimension_numbers = #tpu.dot_dimension_numbers<[1], [0], [0], [1], [0, 0, 1, 1], [], []>} : vector<16x8xbf16>, vector<8x32xbf16>, vector<16x32xf32> -> vector<16x32xf32>
    %289 = vector.extract_strided_slice %254 {offsets = [0, 0, 8], sizes = [2, 8, 8], strides = [1, 1, 1]} : vector<2x8x32xf32> to vector<2x8x8xf32>
    %cst_108 = arith.constant 0.353553385 : f32
    %290 = vector.broadcast %cst_108 : f32 to vector<2x8x8xf32>
    %291 = arith.mulf %289, %290 : vector<2x8x8xf32>
    %292 = arith.truncf %291 : vector<2x8x8xf32> to vector<2x8x8xbf16>
    %293 = vector.extract_strided_slice %256 {offsets = [0, 0, 8], sizes = [2, 8, 8], strides = [1, 1, 1]} : vector<2x8x32xf32> to vector<2x8x8xf32>
    %294 = arith.truncf %293 : vector<2x8x8xf32> to vector<2x8x8xbf16>
    %295 = vector.extract_strided_slice %258 {offsets = [0, 0, 8], sizes = [2, 8, 8], strides = [1, 1, 1]} : vector<2x8x32xf32> to vector<2x8x8xf32>
    %296 = arith.truncf %295 : vector<2x8x8xf32> to vector<2x8x8xbf16>
    "tpu.trace_start"() <{level = 10 : i32, message = "bqd,bkd->bqk"}> : () -> ()
    %cst_109 = arith.constant dense<0.000000e+00> : vector<2x8x8xf32>
    %297 = tpu.matmul %292, %294, %cst_109 {dimension_numbers = #tpu.dot_dimension_numbers<[2], [2], [1], [1], [0, 0, 0, 1, 1, 1], [0], [0]>} : vector<2x8x8xbf16>, vector<2x8x8xbf16>, vector<2x8x8xf32> -> vector<2x8x8xf32>
    "tpu.trace_stop"() : () -> ()
    %298 = vector.broadcast %0 : vector<2x1x8xf32> to vector<2x8x8xf32>
    %299 = arith.addf %297, %298 : vector<2x8x8xf32>
    %cst_110 = arith.constant dense<0xFF800000> : vector<2x8xf32>
    %300 = vector.multi_reduction <maximumf>, %299, %cst_110 [2] : vector<2x8x8xf32> to vector<2x8xf32>
    %301 = vector.shape_cast %300 : vector<2x8xf32> to vector<2x8x1xf32>
    %302 = vector.broadcast %301 : vector<2x8x1xf32> to vector<2x8x8xf32>
    %303 = arith.subf %299, %302 : vector<2x8x8xf32>
    %304 = math.exp %303 : vector<2x8x8xf32>
    %cst_111 = arith.constant dense<0.000000e+00> : vector<2x8xf32>
    %305 = vector.multi_reduction <add>, %304, %cst_111 [2] : vector<2x8x8xf32> to vector<2x8xf32>
    %306 = vector.shape_cast %305 : vector<2x8xf32> to vector<2x8x1xf32>
    %307 = tpu.reciprocal %306 {approx = true} : vector<2x8x1xf32> -> vector<2x8x1xf32>
    %308 = vector.broadcast %307 : vector<2x8x1xf32> to vector<2x8x8xf32>
    %309 = arith.mulf %304, %308 : vector<2x8x8xf32>
    %310 = arith.truncf %309 : vector<2x8x8xf32> to vector<2x8x8xbf16>
    "tpu.trace_start"() <{level = 10 : i32, message = "bqk,bkd->bqd"}> : () -> ()
    %cst_112 = arith.constant dense<0.000000e+00> : vector<2x8x8xf32>
    %311 = tpu.matmul %310, %296, %cst_112 {dimension_numbers = #tpu.dot_dimension_numbers<[2], [1], [1], [2], [0, 0, 0, 1, 1, 2], [0], [0]>} : vector<2x8x8xbf16>, vector<2x8x8xbf16>, vector<2x8x8xf32> -> vector<2x8x8xf32>
    "tpu.trace_stop"() : () -> ()
    %312 = vector.shape_cast %311 : vector<2x8x8xf32> to vector<16x8xf32>
    %313 = vector.extract_strided_slice %260 {offsets = [8, 0], sizes = [8, 32], strides = [1, 1]} : vector<32x32xf32> to vector<8x32xf32>
    %314 = arith.truncf %312 : vector<16x8xf32> to vector<16x8xbf16>
    %315 = arith.truncf %313 : vector<8x32xf32> to vector<8x32xbf16>
    %cst_113 = arith.constant dense<0.000000e+00> : vector<16x32xf32>
    %316 = tpu.matmul %314, %315, %cst_113 {dimension_numbers = #tpu.dot_dimension_numbers<[1], [0], [0], [1], [0, 0, 1, 1], [], []>} : vector<16x8xbf16>, vector<8x32xbf16>, vector<16x32xf32> -> vector<16x32xf32>
    %317 = arith.addf %288, %316 : vector<16x32xf32>
    %318 = vector.extract_strided_slice %254 {offsets = [0, 0, 16], sizes = [2, 8, 8], strides = [1, 1, 1]} : vector<2x8x32xf32> to vector<2x8x8xf32>
    %cst_114 = arith.constant 0.353553385 : f32
    %319 = vector.broadcast %cst_114 : f32 to vector<2x8x8xf32>
    %320 = arith.mulf %318, %319 : vector<2x8x8xf32>
    %321 = arith.truncf %320 : vector<2x8x8xf32> to vector<2x8x8xbf16>
    %322 = vector.extract_strided_slice %256 {offsets = [0, 0, 16], sizes = [2, 8, 8], strides = [1, 1, 1]} : vector<2x8x32xf32> to vector<2x8x8xf32>
    %323 = arith.truncf %322 : vector<2x8x8xf32> to vector<2x8x8xbf16>
    %324 = vector.extract_strided_slice %258 {offsets = [0, 0, 16], sizes = [2, 8, 8], strides = [1, 1, 1]} : vector<2x8x32xf32> to vector<2x8x8xf32>
    %325 = arith.truncf %324 : vector<2x8x8xf32> to vector<2x8x8xbf16>
    "tpu.trace_start"() <{level = 10 : i32, message = "bqd,bkd->bqk"}> : () -> ()
    %cst_115 = arith.constant dense<0.000000e+00> : vector<2x8x8xf32>
    %326 = tpu.matmul %321, %323, %cst_115 {dimension_numbers = #tpu.dot_dimension_numbers<[2], [2], [1], [1], [0, 0, 0, 1, 1, 1], [0], [0]>} : vector<2x8x8xbf16>, vector<2x8x8xbf16>, vector<2x8x8xf32> -> vector<2x8x8xf32>
    "tpu.trace_stop"() : () -> ()
    %327 = vector.broadcast %0 : vector<2x1x8xf32> to vector<2x8x8xf32>
    %328 = arith.addf %326, %327 : vector<2x8x8xf32>
    %cst_116 = arith.constant dense<0xFF800000> : vector<2x8xf32>
    %329 = vector.multi_reduction <maximumf>, %328, %cst_116 [2] : vector<2x8x8xf32> to vector<2x8xf32>
    %330 = vector.shape_cast %329 : vector<2x8xf32> to vector<2x8x1xf32>
    %331 = vector.broadcast %330 : vector<2x8x1xf32> to vector<2x8x8xf32>
    %332 = arith.subf %328, %331 : vector<2x8x8xf32>
    %333 = math.exp %332 : vector<2x8x8xf32>
    %cst_117 = arith.constant dense<0.000000e+00> : vector<2x8xf32>
    %334 = vector.multi_reduction <add>, %333, %cst_117 [2] : vector<2x8x8xf32> to vector<2x8xf32>
    %335 = vector.shape_cast %334 : vector<2x8xf32> to vector<2x8x1xf32>
    %336 = tpu.reciprocal %335 {approx = true} : vector<2x8x1xf32> -> vector<2x8x1xf32>
    %337 = vector.broadcast %336 : vector<2x8x1xf32> to vector<2x8x8xf32>
    %338 = arith.mulf %333, %337 : vector<2x8x8xf32>
    %339 = arith.truncf %338 : vector<2x8x8xf32> to vector<2x8x8xbf16>
    "tpu.trace_start"() <{level = 10 : i32, message = "bqk,bkd->bqd"}> : () -> ()
    %cst_118 = arith.constant dense<0.000000e+00> : vector<2x8x8xf32>
    %340 = tpu.matmul %339, %325, %cst_118 {dimension_numbers = #tpu.dot_dimension_numbers<[2], [1], [1], [2], [0, 0, 0, 1, 1, 2], [0], [0]>} : vector<2x8x8xbf16>, vector<2x8x8xbf16>, vector<2x8x8xf32> -> vector<2x8x8xf32>
    "tpu.trace_stop"() : () -> ()
    %341 = vector.shape_cast %340 : vector<2x8x8xf32> to vector<16x8xf32>
    %342 = vector.extract_strided_slice %260 {offsets = [16, 0], sizes = [8, 32], strides = [1, 1]} : vector<32x32xf32> to vector<8x32xf32>
    %343 = arith.truncf %341 : vector<16x8xf32> to vector<16x8xbf16>
    %344 = arith.truncf %342 : vector<8x32xf32> to vector<8x32xbf16>
    %cst_119 = arith.constant dense<0.000000e+00> : vector<16x32xf32>
    %345 = tpu.matmul %343, %344, %cst_119 {dimension_numbers = #tpu.dot_dimension_numbers<[1], [0], [0], [1], [0, 0, 1, 1], [], []>} : vector<16x8xbf16>, vector<8x32xbf16>, vector<16x32xf32> -> vector<16x32xf32>
    %346 = arith.addf %317, %345 : vector<16x32xf32>
    %347 = vector.extract_strided_slice %254 {offsets = [0, 0, 24], sizes = [2, 8, 8], strides = [1, 1, 1]} : vector<2x8x32xf32> to vector<2x8x8xf32>
    %cst_120 = arith.constant 0.353553385 : f32
    %348 = vector.broadcast %cst_120 : f32 to vector<2x8x8xf32>
    %349 = arith.mulf %347, %348 : vector<2x8x8xf32>
    %350 = arith.truncf %349 : vector<2x8x8xf32> to vector<2x8x8xbf16>
    %351 = vector.extract_strided_slice %256 {offsets = [0, 0, 24], sizes = [2, 8, 8], strides = [1, 1, 1]} : vector<2x8x32xf32> to vector<2x8x8xf32>
    %352 = arith.truncf %351 : vector<2x8x8xf32> to vector<2x8x8xbf16>
    %353 = vector.extract_strided_slice %258 {offsets = [0, 0, 24], sizes = [2, 8, 8], strides = [1, 1, 1]} : vector<2x8x32xf32> to vector<2x8x8xf32>
    %354 = arith.truncf %353 : vector<2x8x8xf32> to vector<2x8x8xbf16>
    "tpu.trace_start"() <{level = 10 : i32, message = "bqd,bkd->bqk"}> : () -> ()
    %cst_121 = arith.constant dense<0.000000e+00> : vector<2x8x8xf32>
    %355 = tpu.matmul %350, %352, %cst_121 {dimension_numbers = #tpu.dot_dimension_numbers<[2], [2], [1], [1], [0, 0, 0, 1, 1, 1], [0], [0]>} : vector<2x8x8xbf16>, vector<2x8x8xbf16>, vector<2x8x8xf32> -> vector<2x8x8xf32>
    "tpu.trace_stop"() : () -> ()
    %356 = vector.broadcast %0 : vector<2x1x8xf32> to vector<2x8x8xf32>
    %357 = arith.addf %355, %356 : vector<2x8x8xf32>
    %cst_122 = arith.constant dense<0xFF800000> : vector<2x8xf32>
    %358 = vector.multi_reduction <maximumf>, %357, %cst_122 [2] : vector<2x8x8xf32> to vector<2x8xf32>
    %359 = vector.shape_cast %358 : vector<2x8xf32> to vector<2x8x1xf32>
    %360 = vector.broadcast %359 : vector<2x8x1xf32> to vector<2x8x8xf32>
    %361 = arith.subf %357, %360 : vector<2x8x8xf32>
    %362 = math.exp %361 : vector<2x8x8xf32>
    %cst_123 = arith.constant dense<0.000000e+00> : vector<2x8xf32>
    %363 = vector.multi_reduction <add>, %362, %cst_123 [2] : vector<2x8x8xf32> to vector<2x8xf32>
    %364 = vector.shape_cast %363 : vector<2x8xf32> to vector<2x8x1xf32>
    %365 = tpu.reciprocal %364 {approx = true} : vector<2x8x1xf32> -> vector<2x8x1xf32>
    %366 = vector.broadcast %365 : vector<2x8x1xf32> to vector<2x8x8xf32>
    %367 = arith.mulf %362, %366 : vector<2x8x8xf32>
    %368 = arith.truncf %367 : vector<2x8x8xf32> to vector<2x8x8xbf16>
    "tpu.trace_start"() <{level = 10 : i32, message = "bqk,bkd->bqd"}> : () -> ()
    %cst_124 = arith.constant dense<0.000000e+00> : vector<2x8x8xf32>
    %369 = tpu.matmul %368, %354, %cst_124 {dimension_numbers = #tpu.dot_dimension_numbers<[2], [1], [1], [2], [0, 0, 0, 1, 1, 2], [0], [0]>} : vector<2x8x8xbf16>, vector<2x8x8xbf16>, vector<2x8x8xf32> -> vector<2x8x8xf32>
    "tpu.trace_stop"() : () -> ()
    %370 = vector.shape_cast %369 : vector<2x8x8xf32> to vector<16x8xf32>
    %371 = vector.extract_strided_slice %260 {offsets = [24, 0], sizes = [8, 32], strides = [1, 1]} : vector<32x32xf32> to vector<8x32xf32>
    %372 = arith.truncf %370 : vector<16x8xf32> to vector<16x8xbf16>
    %373 = arith.truncf %371 : vector<8x32xf32> to vector<8x32xbf16>
    %cst_125 = arith.constant dense<0.000000e+00> : vector<16x32xf32>
    %374 = tpu.matmul %372, %373, %cst_125 {dimension_numbers = #tpu.dot_dimension_numbers<[1], [0], [0], [1], [0, 0, 1, 1], [], []>} : vector<16x8xbf16>, vector<8x32xbf16>, vector<16x32xf32> -> vector<16x32xf32>
    %375 = arith.addf %346, %374 : vector<16x32xf32>
    %c1_126 = arith.constant 1 : index
    %c0_127 = arith.constant 0 : index
    %c0_128 = arith.constant 0 : index
    %376 = vector.load %arg8[%c1_126, %c0_127, %c0_128] : memref<2x1x32xf32, #tpu.memory_space<vmem>>, vector<1x1x32xf32>
    %377 = vector.shape_cast %376 : vector<1x1x32xf32> to vector<1x32xf32>
    %378 = vector.broadcast %377 : vector<1x32xf32> to vector<16x32xf32>
    %379 = arith.addf %375, %378 : vector<16x32xf32>
    %380 = arith.addf %217, %379 : vector<16x32xf32>
    %c1_129 = arith.constant 1 : index
    %c0_130 = arith.constant 0 : index
    %c0_131 = arith.constant 0 : index
    %381 = vector.load %arg9[%c1_129, %c0_130, %c0_131] : memref<2x1x32xf32, #tpu.memory_space<vmem>>, vector<1x1x32xf32>
    %382 = vector.shape_cast %381 : vector<1x1x32xf32> to vector<1x32xf32>
    %c1_132 = arith.constant 1 : index
    %c0_133 = arith.constant 0 : index
    %c0_134 = arith.constant 0 : index
    %383 = vector.load %arg10[%c1_132, %c0_133, %c0_134] : memref<2x1x32xf32, #tpu.memory_space<vmem>>, vector<1x1x32xf32>
    %384 = vector.shape_cast %383 : vector<1x1x32xf32> to vector<1x32xf32>
    %cst_135 = arith.constant dense<0.000000e+00> : vector<16xf32>
    %385 = vector.multi_reduction <add>, %380, %cst_135 [1] : vector<16x32xf32> to vector<16xf32>
    %386 = vector.shape_cast %385 : vector<16xf32> to vector<16x1xf32>
    %cst_136 = arith.constant 3.200000e+01 : f32
    %387 = vector.broadcast %cst_136 : f32 to vector<16x1xf32>
    %388 = arith.divf %386, %387 : vector<16x1xf32>
    %389 = vector.broadcast %388 : vector<16x1xf32> to vector<16x32xf32>
    %390 = arith.subf %380, %389 : vector<16x32xf32>
    %391 = arith.mulf %390, %390 : vector<16x32xf32>
    %cst_137 = arith.constant dense<0.000000e+00> : vector<16xf32>
    %392 = vector.multi_reduction <add>, %391, %cst_137 [1] : vector<16x32xf32> to vector<16xf32>
    %393 = vector.shape_cast %392 : vector<16xf32> to vector<16x1xf32>
    %cst_138 = arith.constant 3.200000e+01 : f32
    %394 = vector.broadcast %cst_138 : f32 to vector<16x1xf32>
    %395 = arith.divf %393, %394 : vector<16x1xf32>
    %396 = vector.broadcast %388 : vector<16x1xf32> to vector<16x32xf32>
    %397 = arith.subf %380, %396 : vector<16x32xf32>
    %cst_139 = arith.constant 9.99999974E-6 : f32
    %398 = vector.broadcast %cst_139 : f32 to vector<16x1xf32>
    %399 = arith.addf %395, %398 : vector<16x1xf32>
    %400 = math.rsqrt %399 : vector<16x1xf32>
    %401 = vector.broadcast %400 : vector<16x1xf32> to vector<16x32xf32>
    %402 = arith.mulf %397, %401 : vector<16x32xf32>
    %403 = vector.broadcast %382 : vector<1x32xf32> to vector<16x32xf32>
    %404 = arith.mulf %402, %403 : vector<16x32xf32>
    %405 = vector.broadcast %384 : vector<1x32xf32> to vector<16x32xf32>
    %406 = arith.addf %404, %405 : vector<16x32xf32>
    %c1_140 = arith.constant 1 : index
    %c0_141 = arith.constant 0 : index
    %c0_142 = arith.constant 0 : index
    %407 = vector.load %arg11[%c1_140, %c0_141, %c0_142] : memref<2x32x64xf32, #tpu.memory_space<vmem>>, vector<1x32x64xf32>
    %408 = vector.shape_cast %407 : vector<1x32x64xf32> to vector<32x64xf32>
    %409 = arith.truncf %406 : vector<16x32xf32> to vector<16x32xbf16>
    %410 = arith.truncf %408 : vector<32x64xf32> to vector<32x64xbf16>
    %cst_143 = arith.constant dense<0.000000e+00> : vector<16x64xf32>
    %411 = tpu.matmul %409, %410, %cst_143 {dimension_numbers = #tpu.dot_dimension_numbers<[1], [0], [0], [1], [0, 0, 1, 1], [], []>} : vector<16x32xbf16>, vector<32x64xbf16>, vector<16x64xf32> -> vector<16x64xf32>
    %c1_144 = arith.constant 1 : index
    %c0_145 = arith.constant 0 : index
    %c0_146 = arith.constant 0 : index
    %412 = vector.load %arg12[%c1_144, %c0_145, %c0_146] : memref<2x1x64xf32, #tpu.memory_space<vmem>>, vector<1x1x64xf32>
    %413 = vector.shape_cast %412 : vector<1x1x64xf32> to vector<1x64xf32>
    %414 = vector.broadcast %413 : vector<1x64xf32> to vector<16x64xf32>
    %415 = arith.addf %411, %414 : vector<16x64xf32>
    %cst_147 = arith.constant 0.000000e+00 : f32
    %416 = vector.broadcast %cst_147 : f32 to vector<16x64xf32>
    %417 = arith.maximumf %415, %416 : vector<16x64xf32>
    %c1_148 = arith.constant 1 : index
    %c0_149 = arith.constant 0 : index
    %c0_150 = arith.constant 0 : index
    %418 = vector.load %arg13[%c1_148, %c0_149, %c0_150] : memref<2x64x32xf32, #tpu.memory_space<vmem>>, vector<1x64x32xf32>
    %419 = vector.shape_cast %418 : vector<1x64x32xf32> to vector<64x32xf32>
    %420 = arith.truncf %417 : vector<16x64xf32> to vector<16x64xbf16>
    %421 = arith.truncf %419 : vector<64x32xf32> to vector<64x32xbf16>
    %cst_151 = arith.constant dense<0.000000e+00> : vector<16x32xf32>
    %422 = tpu.matmul %420, %421, %cst_151 {dimension_numbers = #tpu.dot_dimension_numbers<[1], [0], [0], [1], [0, 0, 1, 1], [], []>} : vector<16x64xbf16>, vector<64x32xbf16>, vector<16x32xf32> -> vector<16x32xf32>
    %423 = arith.addf %380, %422 : vector<16x32xf32>
    %c1_152 = arith.constant 1 : index
    %c0_153 = arith.constant 0 : index
    %c0_154 = arith.constant 0 : index
    %424 = vector.load %arg14[%c1_152, %c0_153, %c0_154] : memref<2x1x32xf32, #tpu.memory_space<vmem>>, vector<1x1x32xf32>
    %425 = vector.shape_cast %424 : vector<1x1x32xf32> to vector<1x32xf32>
    %426 = vector.broadcast %425 : vector<1x32xf32> to vector<16x32xf32>
    %427 = arith.addf %423, %426 : vector<16x32xf32>
    %c0_155 = arith.constant 0 : index
    %c0_156 = arith.constant 0 : index
    %428 = vector.load %arg15[%c0_155, %c0_156] : memref<1x32xf32, #tpu.memory_space<vmem>>, vector<1x32xf32>
    %c0_157 = arith.constant 0 : index
    %c0_158 = arith.constant 0 : index
    %429 = vector.load %arg16[%c0_157, %c0_158] : memref<1x32xf32, #tpu.memory_space<vmem>>, vector<1x32xf32>
    %cst_159 = arith.constant dense<0.000000e+00> : vector<16xf32>
    %430 = vector.multi_reduction <add>, %427, %cst_159 [1] : vector<16x32xf32> to vector<16xf32>
    %431 = vector.shape_cast %430 : vector<16xf32> to vector<16x1xf32>
    %cst_160 = arith.constant 3.200000e+01 : f32
    %432 = vector.broadcast %cst_160 : f32 to vector<16x1xf32>
    %433 = arith.divf %431, %432 : vector<16x1xf32>
    %434 = vector.broadcast %433 : vector<16x1xf32> to vector<16x32xf32>
    %435 = arith.subf %427, %434 : vector<16x32xf32>
    %436 = arith.mulf %435, %435 : vector<16x32xf32>
    %cst_161 = arith.constant dense<0.000000e+00> : vector<16xf32>
    %437 = vector.multi_reduction <add>, %436, %cst_161 [1] : vector<16x32xf32> to vector<16xf32>
    %438 = vector.shape_cast %437 : vector<16xf32> to vector<16x1xf32>
    %cst_162 = arith.constant 3.200000e+01 : f32
    %439 = vector.broadcast %cst_162 : f32 to vector<16x1xf32>
    %440 = arith.divf %438, %439 : vector<16x1xf32>
    %441 = vector.broadcast %433 : vector<16x1xf32> to vector<16x32xf32>
    %442 = arith.subf %427, %441 : vector<16x32xf32>
    %cst_163 = arith.constant 9.99999974E-6 : f32
    %443 = vector.broadcast %cst_163 : f32 to vector<16x1xf32>
    %444 = arith.addf %440, %443 : vector<16x1xf32>
    %445 = math.rsqrt %444 : vector<16x1xf32>
    %446 = vector.broadcast %445 : vector<16x1xf32> to vector<16x32xf32>
    %447 = arith.mulf %442, %446 : vector<16x32xf32>
    %448 = vector.broadcast %428 : vector<1x32xf32> to vector<16x32xf32>
    %449 = arith.mulf %447, %448 : vector<16x32xf32>
    %450 = vector.broadcast %429 : vector<1x32xf32> to vector<16x32xf32>
    %451 = arith.addf %449, %450 : vector<16x32xf32>
    %452 = vector.shape_cast %451 : vector<16x32xf32> to vector<2x8x32xf32>
    %c0_164 = arith.constant 0 : index
    %c0_165 = arith.constant 0 : index
    %c0_166 = arith.constant 0 : index
    %453 = vector.load %arg17[%c0_164, %c0_165, %c0_166] : memref<2x8x32xf32, #tpu.memory_space<vmem>>, vector<2x8x32xf32>
    tpu.vector_store %arg17[%c0_164, %c0_165, %c0_166], %452 {strides = array<i32>} : memref<2x8x32xf32, #tpu.memory_space<vmem>>, vector<2x8x32xf32>,
    return
  }
}

module attributes {stable_mosaic.version = 11 : i64} {
  func.func @_decoder_kernel(%arg0: memref<2x8x32xf32, #tpu.memory_space<vmem>>, %arg1: memref<2x8x32xf32, #tpu.memory_space<vmem>>, %arg2: memref<2x1x8xf32, #tpu.memory_space<vmem>>, %arg3: memref<2x32x128xf32, #tpu.memory_space<vmem>>, %arg4: memref<2x32x128xf32, #tpu.memory_space<vmem>>, %arg5: memref<2x1x128xf32, #tpu.memory_space<vmem>>, %arg6: memref<32x32xf32, #tpu.memory_space<vmem>>, %arg7: memref<1x32xf32, #tpu.memory_space<vmem>>, %arg8: memref<32x64xf32, #tpu.memory_space<vmem>>, %arg9: memref<1x64xf32, #tpu.memory_space<vmem>>, %arg10: memref<32x32xf32, #tpu.memory_space<vmem>>, %arg11: memref<1x32xf32, #tpu.memory_space<vmem>>, %arg12: memref<32x128xf32, #tpu.memory_space<vmem>>, %arg13: memref<1x128xf32, #tpu.memory_space<vmem>>, %arg14: memref<2x8x128xf32, #tpu.memory_space<vmem>>) attributes {dimension_semantics = [], scalar_prefetch = 0 : i64, scratch_operands = 0 : i64, tpu.core_type = #tpu.core_type<tc>} {
    %c0 = arith.constant 0 : index
    %c0_0 = arith.constant 0 : index
    %c0_1 = arith.constant 0 : index
    %0 = vector.load %arg0[%c0, %c0_0, %c0_1] : memref<2x8x32xf32, #tpu.memory_space<vmem>>, vector<2x8x32xf32>
    %c0_2 = arith.constant 0 : index
    %c0_3 = arith.constant 0 : index
    %c0_4 = arith.constant 0 : index
    %1 = vector.load %arg3[%c0_2, %c0_3, %c0_4] : memref<2x32x128xf32, #tpu.memory_space<vmem>>, vector<1x32x128xf32>
    %2 = vector.shape_cast %1 : vector<1x32x128xf32> to vector<32x128xf32>
    %3 = arith.truncf %2 : vector<32x128xf32> to vector<32x128xbf16>
    %c0_5 = arith.constant 0 : index
    %c0_6 = arith.constant 0 : index
    %c0_7 = arith.constant 0 : index
    %4 = vector.load %arg4[%c0_5, %c0_6, %c0_7] : memref<2x32x128xf32, #tpu.memory_space<vmem>>, vector<1x32x128xf32>
    %5 = vector.shape_cast %4 : vector<1x32x128xf32> to vector<32x128xf32>
    %6 = arith.truncf %5 : vector<32x128xf32> to vector<32x128xbf16>
    %7 = vector.shape_cast %0 : vector<2x8x32xf32> to vector<16x32xf32>
    %8 = arith.truncf %7 : vector<16x32xf32> to vector<16x32xbf16>
    %cst = arith.constant dense<0.000000e+00> : vector<16x128xf32>
    %9 = tpu.matmul %8, %3, %cst {dimension_numbers = #tpu.dot_dimension_numbers<[1], [0], [0], [1], [0, 0, 1, 1], [], []>} : vector<16x32xbf16>, vector<32x128xbf16>, vector<16x128xf32> -> vector<16x128xf32>
    %c0_8 = arith.constant 0 : index
    %c0_9 = arith.constant 0 : index
    %c0_10 = arith.constant 0 : index
    %10 = vector.load %arg5[%c0_8, %c0_9, %c0_10] : memref<2x1x128xf32, #tpu.memory_space<vmem>>, vector<1x1x128xf32>
    %11 = vector.shape_cast %10 : vector<1x1x128xf32> to vector<1x128xf32>
    %12 = vector.broadcast %11 : vector<1x128xf32> to vector<16x128xf32>
    %13 = arith.addf %9, %12 : vector<16x128xf32>
    %14 = vector.shape_cast %13 : vector<16x128xf32> to vector<2x8x128xf32>
    %cst_11 = arith.constant 0.000000e+00 : f32
    %15 = vector.broadcast %cst_11 : f32 to vector<2x32xf32>
    %cst_12 = arith.constant 0.000000e+00 : f32
    %16 = vector.broadcast %cst_12 : f32 to vector<2x32xf32>
    %17 = vector.extract_strided_slice %14 {offsets = [0, 0, 0], sizes = [2, 1, 128], strides = [1, 1, 1]} : vector<2x8x128xf32> to vector<2x1x128xf32>
    %18 = vector.shape_cast %17 : vector<2x1x128xf32> to vector<2x128xf32>
    %19 = arith.truncf %15 : vector<2x32xf32> to vector<2x32xbf16>
    %cst_13 = arith.constant dense<0.000000e+00> : vector<2x128xf32>
    %20 = tpu.matmul %19, %6, %cst_13 {dimension_numbers = #tpu.dot_dimension_numbers<[1], [0], [0], [1], [0, 0, 1, 1], [], []>} : vector<2x32xbf16>, vector<32x128xbf16>, vector<2x128xf32> -> vector<2x128xf32>
    %21 = arith.addf %18, %20 : vector<2x128xf32>
    %22 = vector.extract_strided_slice %21 {offsets = [0, 0], sizes = [2, 32], strides = [1, 1]} : vector<2x128xf32> to vector<2x32xf32>
    %23 = arith.negf %22 : vector<2x32xf32>
    %24 = math.exp %23 : vector<2x32xf32>
    %cst_14 = arith.constant 1.000000e+00 : f32
    %25 = vector.broadcast %cst_14 : f32 to vector<2x32xf32>
    %26 = arith.addf %25, %24 : vector<2x32xf32>
    %27 = arith.divf %25, %26 : vector<2x32xf32>
    %28 = vector.extract_strided_slice %21 {offsets = [0, 32], sizes = [2, 32], strides = [1, 1]} : vector<2x128xf32> to vector<2x32xf32>
    %29 = arith.negf %28 : vector<2x32xf32>
    %30 = math.exp %29 : vector<2x32xf32>
    %cst_15 = arith.constant 1.000000e+00 : f32
    %31 = vector.broadcast %cst_15 : f32 to vector<2x32xf32>
    %32 = arith.addf %31, %30 : vector<2x32xf32>
    %33 = arith.divf %31, %32 : vector<2x32xf32>
    %34 = vector.extract_strided_slice %21 {offsets = [0, 64], sizes = [2, 32], strides = [1, 1]} : vector<2x128xf32> to vector<2x32xf32>
    %35 = math.tanh %34 : vector<2x32xf32>
    %36 = vector.extract_strided_slice %21 {offsets = [0, 96], sizes = [2, 32], strides = [1, 1]} : vector<2x128xf32> to vector<2x32xf32>
    %37 = arith.negf %36 : vector<2x32xf32>
    %38 = math.exp %37 : vector<2x32xf32>
    %cst_16 = arith.constant 1.000000e+00 : f32
    %39 = vector.broadcast %cst_16 : f32 to vector<2x32xf32>
    %40 = arith.addf %39, %38 : vector<2x32xf32>
    %41 = arith.divf %39, %40 : vector<2x32xf32>
    %42 = arith.mulf %33, %16 : vector<2x32xf32>
    %43 = arith.mulf %27, %35 : vector<2x32xf32>
    %44 = arith.addf %42, %43 : vector<2x32xf32>
    %45 = math.tanh %44 : vector<2x32xf32>
    %46 = arith.mulf %41, %45 : vector<2x32xf32>
    %47 = vector.extract_strided_slice %14 {offsets = [0, 1, 0], sizes = [2, 1, 128], strides = [1, 1, 1]} : vector<2x8x128xf32> to vector<2x1x128xf32>
    %48 = vector.shape_cast %47 : vector<2x1x128xf32> to vector<2x128xf32>
    %49 = arith.truncf %46 : vector<2x32xf32> to vector<2x32xbf16>
    %cst_17 = arith.constant dense<0.000000e+00> : vector<2x128xf32>
    %50 = tpu.matmul %49, %6, %cst_17 {dimension_numbers = #tpu.dot_dimension_numbers<[1], [0], [0], [1], [0, 0, 1, 1], [], []>} : vector<2x32xbf16>, vector<32x128xbf16>, vector<2x128xf32> -> vector<2x128xf32>
    %51 = arith.addf %48, %50 : vector<2x128xf32>
    %52 = vector.extract_strided_slice %51 {offsets = [0, 0], sizes = [2, 32], strides = [1, 1]} : vector<2x128xf32> to vector<2x32xf32>
    %53 = arith.negf %52 : vector<2x32xf32>
    %54 = math.exp %53 : vector<2x32xf32>
    %cst_18 = arith.constant 1.000000e+00 : f32
    %55 = vector.broadcast %cst_18 : f32 to vector<2x32xf32>
    %56 = arith.addf %55, %54 : vector<2x32xf32>
    %57 = arith.divf %55, %56 : vector<2x32xf32>
    %58 = vector.extract_strided_slice %51 {offsets = [0, 32], sizes = [2, 32], strides = [1, 1]} : vector<2x128xf32> to vector<2x32xf32>
    %59 = arith.negf %58 : vector<2x32xf32>
    %60 = math.exp %59 : vector<2x32xf32>
    %cst_19 = arith.constant 1.000000e+00 : f32
    %61 = vector.broadcast %cst_19 : f32 to vector<2x32xf32>
    %62 = arith.addf %61, %60 : vector<2x32xf32>
    %63 = arith.divf %61, %62 : vector<2x32xf32>
    %64 = vector.extract_strided_slice %51 {offsets = [0, 64], sizes = [2, 32], strides = [1, 1]} : vector<2x128xf32> to vector<2x32xf32>
    %65 = math.tanh %64 : vector<2x32xf32>
    %66 = vector.extract_strided_slice %51 {offsets = [0, 96], sizes = [2, 32], strides = [1, 1]} : vector<2x128xf32> to vector<2x32xf32>
    %67 = arith.negf %66 : vector<2x32xf32>
    %68 = math.exp %67 : vector<2x32xf32>
    %cst_20 = arith.constant 1.000000e+00 : f32
    %69 = vector.broadcast %cst_20 : f32 to vector<2x32xf32>
    %70 = arith.addf %69, %68 : vector<2x32xf32>
    %71 = arith.divf %69, %70 : vector<2x32xf32>
    %72 = arith.mulf %63, %44 : vector<2x32xf32>
    %73 = arith.mulf %57, %65 : vector<2x32xf32>
    %74 = arith.addf %72, %73 : vector<2x32xf32>
    %75 = math.tanh %74 : vector<2x32xf32>
    %76 = arith.mulf %71, %75 : vector<2x32xf32>
    %77 = vector.extract_strided_slice %14 {offsets = [0, 2, 0], sizes = [2, 1, 128], strides = [1, 1, 1]} : vector<2x8x128xf32> to vector<2x1x128xf32>
    %78 = vector.shape_cast %77 : vector<2x1x128xf32> to vector<2x128xf32>
    %79 = arith.truncf %76 : vector<2x32xf32> to vector<2x32xbf16>
    %cst_21 = arith.constant dense<0.000000e+00> : vector<2x128xf32>
    %80 = tpu.matmul %79, %6, %cst_21 {dimension_numbers = #tpu.dot_dimension_numbers<[1], [0], [0], [1], [0, 0, 1, 1], [], []>} : vector<2x32xbf16>, vector<32x128xbf16>, vector<2x128xf32> -> vector<2x128xf32>
    %81 = arith.addf %78, %80 : vector<2x128xf32>
    %82 = vector.extract_strided_slice %81 {offsets = [0, 0], sizes = [2, 32], strides = [1, 1]} : vector<2x128xf32> to vector<2x32xf32>
    %83 = arith.negf %82 : vector<2x32xf32>
    %84 = math.exp %83 : vector<2x32xf32>
    %cst_22 = arith.constant 1.000000e+00 : f32
    %85 = vector.broadcast %cst_22 : f32 to vector<2x32xf32>
    %86 = arith.addf %85, %84 : vector<2x32xf32>
    %87 = arith.divf %85, %86 : vector<2x32xf32>
    %88 = vector.extract_strided_slice %81 {offsets = [0, 32], sizes = [2, 32], strides = [1, 1]} : vector<2x128xf32> to vector<2x32xf32>
    %89 = arith.negf %88 : vector<2x32xf32>
    %90 = math.exp %89 : vector<2x32xf32>
    %cst_23 = arith.constant 1.000000e+00 : f32
    %91 = vector.broadcast %cst_23 : f32 to vector<2x32xf32>
    %92 = arith.addf %91, %90 : vector<2x32xf32>
    %93 = arith.divf %91, %92 : vector<2x32xf32>
    %94 = vector.extract_strided_slice %81 {offsets = [0, 64], sizes = [2, 32], strides = [1, 1]} : vector<2x128xf32> to vector<2x32xf32>
    %95 = math.tanh %94 : vector<2x32xf32>
    %96 = vector.extract_strided_slice %81 {offsets = [0, 96], sizes = [2, 32], strides = [1, 1]} : vector<2x128xf32> to vector<2x32xf32>
    %97 = arith.negf %96 : vector<2x32xf32>
    %98 = math.exp %97 : vector<2x32xf32>
    %cst_24 = arith.constant 1.000000e+00 : f32
    %99 = vector.broadcast %cst_24 : f32 to vector<2x32xf32>
    %100 = arith.addf %99, %98 : vector<2x32xf32>
    %101 = arith.divf %99, %100 : vector<2x32xf32>
    %102 = arith.mulf %93, %74 : vector<2x32xf32>
    %103 = arith.mulf %87, %95 : vector<2x32xf32>
    %104 = arith.addf %102, %103 : vector<2x32xf32>
    %105 = math.tanh %104 : vector<2x32xf32>
    %106 = arith.mulf %101, %105 : vector<2x32xf32>
    %107 = vector.extract_strided_slice %14 {offsets = [0, 3, 0], sizes = [2, 1, 128], strides = [1, 1, 1]} : vector<2x8x128xf32> to vector<2x1x128xf32>
    %108 = vector.shape_cast %107 : vector<2x1x128xf32> to vector<2x128xf32>
    %109 = arith.truncf %106 : vector<2x32xf32> to vector<2x32xbf16>
    %cst_25 = arith.constant dense<0.000000e+00> : vector<2x128xf32>
    %110 = tpu.matmul %109, %6, %cst_25 {dimension_numbers = #tpu.dot_dimension_numbers<[1], [0], [0], [1], [0, 0, 1, 1], [], []>} : vector<2x32xbf16>, vector<32x128xbf16>, vector<2x128xf32> -> vector<2x128xf32>
    %111 = arith.addf %108, %110 : vector<2x128xf32>
    %112 = vector.extract_strided_slice %111 {offsets = [0, 0], sizes = [2, 32], strides = [1, 1]} : vector<2x128xf32> to vector<2x32xf32>
    %113 = arith.negf %112 : vector<2x32xf32>
    %114 = math.exp %113 : vector<2x32xf32>
    %cst_26 = arith.constant 1.000000e+00 : f32
    %115 = vector.broadcast %cst_26 : f32 to vector<2x32xf32>
    %116 = arith.addf %115, %114 : vector<2x32xf32>
    %117 = arith.divf %115, %116 : vector<2x32xf32>
    %118 = vector.extract_strided_slice %111 {offsets = [0, 32], sizes = [2, 32], strides = [1, 1]} : vector<2x128xf32> to vector<2x32xf32>
    %119 = arith.negf %118 : vector<2x32xf32>
    %120 = math.exp %119 : vector<2x32xf32>
    %cst_27 = arith.constant 1.000000e+00 : f32
    %121 = vector.broadcast %cst_27 : f32 to vector<2x32xf32>
    %122 = arith.addf %121, %120 : vector<2x32xf32>
    %123 = arith.divf %121, %122 : vector<2x32xf32>
    %124 = vector.extract_strided_slice %111 {offsets = [0, 64], sizes = [2, 32], strides = [1, 1]} : vector<2x128xf32> to vector<2x32xf32>
    %125 = math.tanh %124 : vector<2x32xf32>
    %126 = vector.extract_strided_slice %111 {offsets = [0, 96], sizes = [2, 32], strides = [1, 1]} : vector<2x128xf32> to vector<2x32xf32>
    %127 = arith.negf %126 : vector<2x32xf32>
    %128 = math.exp %127 : vector<2x32xf32>
    %cst_28 = arith.constant 1.000000e+00 : f32
    %129 = vector.broadcast %cst_28 : f32 to vector<2x32xf32>
    %130 = arith.addf %129, %128 : vector<2x32xf32>
    %131 = arith.divf %129, %130 : vector<2x32xf32>
    %132 = arith.mulf %123, %104 : vector<2x32xf32>
    %133 = arith.mulf %117, %125 : vector<2x32xf32>
    %134 = arith.addf %132, %133 : vector<2x32xf32>
    %135 = math.tanh %134 : vector<2x32xf32>
    %136 = arith.mulf %131, %135 : vector<2x32xf32>
    %137 = vector.extract_strided_slice %14 {offsets = [0, 4, 0], sizes = [2, 1, 128], strides = [1, 1, 1]} : vector<2x8x128xf32> to vector<2x1x128xf32>
    %138 = vector.shape_cast %137 : vector<2x1x128xf32> to vector<2x128xf32>
    %139 = arith.truncf %136 : vector<2x32xf32> to vector<2x32xbf16>
    %cst_29 = arith.constant dense<0.000000e+00> : vector<2x128xf32>
    %140 = tpu.matmul %139, %6, %cst_29 {dimension_numbers = #tpu.dot_dimension_numbers<[1], [0], [0], [1], [0, 0, 1, 1], [], []>} : vector<2x32xbf16>, vector<32x128xbf16>, vector<2x128xf32> -> vector<2x128xf32>
    %141 = arith.addf %138, %140 : vector<2x128xf32>
    %142 = vector.extract_strided_slice %141 {offsets = [0, 0], sizes = [2, 32], strides = [1, 1]} : vector<2x128xf32> to vector<2x32xf32>
    %143 = arith.negf %142 : vector<2x32xf32>
    %144 = math.exp %143 : vector<2x32xf32>
    %cst_30 = arith.constant 1.000000e+00 : f32
    %145 = vector.broadcast %cst_30 : f32 to vector<2x32xf32>
    %146 = arith.addf %145, %144 : vector<2x32xf32>
    %147 = arith.divf %145, %146 : vector<2x32xf32>
    %148 = vector.extract_strided_slice %141 {offsets = [0, 32], sizes = [2, 32], strides = [1, 1]} : vector<2x128xf32> to vector<2x32xf32>
    %149 = arith.negf %148 : vector<2x32xf32>
    %150 = math.exp %149 : vector<2x32xf32>
    %cst_31 = arith.constant 1.000000e+00 : f32
    %151 = vector.broadcast %cst_31 : f32 to vector<2x32xf32>
    %152 = arith.addf %151, %150 : vector<2x32xf32>
    %153 = arith.divf %151, %152 : vector<2x32xf32>
    %154 = vector.extract_strided_slice %141 {offsets = [0, 64], sizes = [2, 32], strides = [1, 1]} : vector<2x128xf32> to vector<2x32xf32>
    %155 = math.tanh %154 : vector<2x32xf32>
    %156 = vector.extract_strided_slice %141 {offsets = [0, 96], sizes = [2, 32], strides = [1, 1]} : vector<2x128xf32> to vector<2x32xf32>
    %157 = arith.negf %156 : vector<2x32xf32>
    %158 = math.exp %157 : vector<2x32xf32>
    %cst_32 = arith.constant 1.000000e+00 : f32
    %159 = vector.broadcast %cst_32 : f32 to vector<2x32xf32>
    %160 = arith.addf %159, %158 : vector<2x32xf32>
    %161 = arith.divf %159, %160 : vector<2x32xf32>
    %162 = arith.mulf %153, %134 : vector<2x32xf32>
    %163 = arith.mulf %147, %155 : vector<2x32xf32>
    %164 = arith.addf %162, %163 : vector<2x32xf32>
    %165 = math.tanh %164 : vector<2x32xf32>
    %166 = arith.mulf %161, %165 : vector<2x32xf32>
    %167 = vector.extract_strided_slice %14 {offsets = [0, 5, 0], sizes = [2, 1, 128], strides = [1, 1, 1]} : vector<2x8x128xf32> to vector<2x1x128xf32>
    %168 = vector.shape_cast %167 : vector<2x1x128xf32> to vector<2x128xf32>
    %169 = arith.truncf %166 : vector<2x32xf32> to vector<2x32xbf16>
    %cst_33 = arith.constant dense<0.000000e+00> : vector<2x128xf32>
    %170 = tpu.matmul %169, %6, %cst_33 {dimension_numbers = #tpu.dot_dimension_numbers<[1], [0], [0], [1], [0, 0, 1, 1], [], []>} : vector<2x32xbf16>, vector<32x128xbf16>, vector<2x128xf32> -> vector<2x128xf32>
    %171 = arith.addf %168, %170 : vector<2x128xf32>
    %172 = vector.extract_strided_slice %171 {offsets = [0, 0], sizes = [2, 32], strides = [1, 1]} : vector<2x128xf32> to vector<2x32xf32>
    %173 = arith.negf %172 : vector<2x32xf32>
    %174 = math.exp %173 : vector<2x32xf32>
    %cst_34 = arith.constant 1.000000e+00 : f32
    %175 = vector.broadcast %cst_34 : f32 to vector<2x32xf32>
    %176 = arith.addf %175, %174 : vector<2x32xf32>
    %177 = arith.divf %175, %176 : vector<2x32xf32>
    %178 = vector.extract_strided_slice %171 {offsets = [0, 32], sizes = [2, 32], strides = [1, 1]} : vector<2x128xf32> to vector<2x32xf32>
    %179 = arith.negf %178 : vector<2x32xf32>
    %180 = math.exp %179 : vector<2x32xf32>
    %cst_35 = arith.constant 1.000000e+00 : f32
    %181 = vector.broadcast %cst_35 : f32 to vector<2x32xf32>
    %182 = arith.addf %181, %180 : vector<2x32xf32>
    %183 = arith.divf %181, %182 : vector<2x32xf32>
    %184 = vector.extract_strided_slice %171 {offsets = [0, 64], sizes = [2, 32], strides = [1, 1]} : vector<2x128xf32> to vector<2x32xf32>
    %185 = math.tanh %184 : vector<2x32xf32>
    %186 = vector.extract_strided_slice %171 {offsets = [0, 96], sizes = [2, 32], strides = [1, 1]} : vector<2x128xf32> to vector<2x32xf32>
    %187 = arith.negf %186 : vector<2x32xf32>
    %188 = math.exp %187 : vector<2x32xf32>
    %cst_36 = arith.constant 1.000000e+00 : f32
    %189 = vector.broadcast %cst_36 : f32 to vector<2x32xf32>
    %190 = arith.addf %189, %188 : vector<2x32xf32>
    %191 = arith.divf %189, %190 : vector<2x32xf32>
    %192 = arith.mulf %183, %164 : vector<2x32xf32>
    %193 = arith.mulf %177, %185 : vector<2x32xf32>
    %194 = arith.addf %192, %193 : vector<2x32xf32>
    %195 = math.tanh %194 : vector<2x32xf32>
    %196 = arith.mulf %191, %195 : vector<2x32xf32>
    %197 = vector.extract_strided_slice %14 {offsets = [0, 6, 0], sizes = [2, 1, 128], strides = [1, 1, 1]} : vector<2x8x128xf32> to vector<2x1x128xf32>
    %198 = vector.shape_cast %197 : vector<2x1x128xf32> to vector<2x128xf32>
    %199 = arith.truncf %196 : vector<2x32xf32> to vector<2x32xbf16>
    %cst_37 = arith.constant dense<0.000000e+00> : vector<2x128xf32>
    %200 = tpu.matmul %199, %6, %cst_37 {dimension_numbers = #tpu.dot_dimension_numbers<[1], [0], [0], [1], [0, 0, 1, 1], [], []>} : vector<2x32xbf16>, vector<32x128xbf16>, vector<2x128xf32> -> vector<2x128xf32>
    %201 = arith.addf %198, %200 : vector<2x128xf32>
    %202 = vector.extract_strided_slice %201 {offsets = [0, 0], sizes = [2, 32], strides = [1, 1]} : vector<2x128xf32> to vector<2x32xf32>
    %203 = arith.negf %202 : vector<2x32xf32>
    %204 = math.exp %203 : vector<2x32xf32>
    %cst_38 = arith.constant 1.000000e+00 : f32
    %205 = vector.broadcast %cst_38 : f32 to vector<2x32xf32>
    %206 = arith.addf %205, %204 : vector<2x32xf32>
    %207 = arith.divf %205, %206 : vector<2x32xf32>
    %208 = vector.extract_strided_slice %201 {offsets = [0, 32], sizes = [2, 32], strides = [1, 1]} : vector<2x128xf32> to vector<2x32xf32>
    %209 = arith.negf %208 : vector<2x32xf32>
    %210 = math.exp %209 : vector<2x32xf32>
    %cst_39 = arith.constant 1.000000e+00 : f32
    %211 = vector.broadcast %cst_39 : f32 to vector<2x32xf32>
    %212 = arith.addf %211, %210 : vector<2x32xf32>
    %213 = arith.divf %211, %212 : vector<2x32xf32>
    %214 = vector.extract_strided_slice %201 {offsets = [0, 64], sizes = [2, 32], strides = [1, 1]} : vector<2x128xf32> to vector<2x32xf32>
    %215 = math.tanh %214 : vector<2x32xf32>
    %216 = vector.extract_strided_slice %201 {offsets = [0, 96], sizes = [2, 32], strides = [1, 1]} : vector<2x128xf32> to vector<2x32xf32>
    %217 = arith.negf %216 : vector<2x32xf32>
    %218 = math.exp %217 : vector<2x32xf32>
    %cst_40 = arith.constant 1.000000e+00 : f32
    %219 = vector.broadcast %cst_40 : f32 to vector<2x32xf32>
    %220 = arith.addf %219, %218 : vector<2x32xf32>
    %221 = arith.divf %219, %220 : vector<2x32xf32>
    %222 = arith.mulf %213, %194 : vector<2x32xf32>
    %223 = arith.mulf %207, %215 : vector<2x32xf32>
    %224 = arith.addf %222, %223 : vector<2x32xf32>
    %225 = math.tanh %224 : vector<2x32xf32>
    %226 = arith.mulf %221, %225 : vector<2x32xf32>
    %227 = vector.extract_strided_slice %14 {offsets = [0, 7, 0], sizes = [2, 1, 128], strides = [1, 1, 1]} : vector<2x8x128xf32> to vector<2x1x128xf32>
    %228 = vector.shape_cast %227 : vector<2x1x128xf32> to vector<2x128xf32>
    %229 = arith.truncf %226 : vector<2x32xf32> to vector<2x32xbf16>
    %cst_41 = arith.constant dense<0.000000e+00> : vector<2x128xf32>
    %230 = tpu.matmul %229, %6, %cst_41 {dimension_numbers = #tpu.dot_dimension_numbers<[1], [0], [0], [1], [0, 0, 1, 1], [], []>} : vector<2x32xbf16>, vector<32x128xbf16>, vector<2x128xf32> -> vector<2x128xf32>
    %231 = arith.addf %228, %230 : vector<2x128xf32>
    %232 = vector.extract_strided_slice %231 {offsets = [0, 0], sizes = [2, 32], strides = [1, 1]} : vector<2x128xf32> to vector<2x32xf32>
    %233 = arith.negf %232 : vector<2x32xf32>
    %234 = math.exp %233 : vector<2x32xf32>
    %cst_42 = arith.constant 1.000000e+00 : f32
    %235 = vector.broadcast %cst_42 : f32 to vector<2x32xf32>
    %236 = arith.addf %235, %234 : vector<2x32xf32>
    %237 = arith.divf %235, %236 : vector<2x32xf32>
    %238 = vector.extract_strided_slice %231 {offsets = [0, 32], sizes = [2, 32], strides = [1, 1]} : vector<2x128xf32> to vector<2x32xf32>
    %239 = arith.negf %238 : vector<2x32xf32>
    %240 = math.exp %239 : vector<2x32xf32>
    %cst_43 = arith.constant 1.000000e+00 : f32
    %241 = vector.broadcast %cst_43 : f32 to vector<2x32xf32>
    %242 = arith.addf %241, %240 : vector<2x32xf32>
    %243 = arith.divf %241, %242 : vector<2x32xf32>
    %244 = vector.extract_strided_slice %231 {offsets = [0, 64], sizes = [2, 32], strides = [1, 1]} : vector<2x128xf32> to vector<2x32xf32>
    %245 = math.tanh %244 : vector<2x32xf32>
    %246 = vector.extract_strided_slice %231 {offsets = [0, 96], sizes = [2, 32], strides = [1, 1]} : vector<2x128xf32> to vector<2x32xf32>
    %247 = arith.negf %246 : vector<2x32xf32>
    %248 = math.exp %247 : vector<2x32xf32>
    %cst_44 = arith.constant 1.000000e+00 : f32
    %249 = vector.broadcast %cst_44 : f32 to vector<2x32xf32>
    %250 = arith.addf %249, %248 : vector<2x32xf32>
    %251 = arith.divf %249, %250 : vector<2x32xf32>
    %252 = arith.mulf %243, %224 : vector<2x32xf32>
    %253 = arith.mulf %237, %245 : vector<2x32xf32>
    %254 = arith.addf %252, %253 : vector<2x32xf32>
    %255 = math.tanh %254 : vector<2x32xf32>
    %256 = arith.mulf %251, %255 : vector<2x32xf32>
    %257 = vector.shape_cast %46 : vector<2x32xf32> to vector<2x1x32xf32>
    %258 = vector.shape_cast %76 : vector<2x32xf32> to vector<2x1x32xf32>
    %259 = vector.shape_cast %106 : vector<2x32xf32> to vector<2x1x32xf32>
    %260 = vector.shape_cast %136 : vector<2x32xf32> to vector<2x1x32xf32>
    %261 = vector.shape_cast %166 : vector<2x32xf32> to vector<2x1x32xf32>
    %262 = vector.shape_cast %196 : vector<2x32xf32> to vector<2x1x32xf32>
    %263 = vector.shape_cast %226 : vector<2x32xf32> to vector<2x1x32xf32>
    %264 = vector.shape_cast %256 : vector<2x32xf32> to vector<2x1x32xf32>
    %265 = tpu.concatenate %257, %258, %259, %260, %261, %262, %263, %264 in 1 : vector<2x1x32xf32>, vector<2x1x32xf32>, vector<2x1x32xf32>, vector<2x1x32xf32>, vector<2x1x32xf32>, vector<2x1x32xf32>, vector<2x1x32xf32>, vector<2x1x32xf32> -> vector<2x8x32xf32>
    %c1 = arith.constant 1 : index
    %c0_45 = arith.constant 0 : index
    %c0_46 = arith.constant 0 : index
    %266 = vector.load %arg3[%c1, %c0_45, %c0_46] : memref<2x32x128xf32, #tpu.memory_space<vmem>>, vector<1x32x128xf32>
    %267 = vector.shape_cast %266 : vector<1x32x128xf32> to vector<32x128xf32>
    %268 = arith.truncf %267 : vector<32x128xf32> to vector<32x128xbf16>
    %c1_47 = arith.constant 1 : index
    %c0_48 = arith.constant 0 : index
    %c0_49 = arith.constant 0 : index
    %269 = vector.load %arg4[%c1_47, %c0_48, %c0_49] : memref<2x32x128xf32, #tpu.memory_space<vmem>>, vector<1x32x128xf32>
    %270 = vector.shape_cast %269 : vector<1x32x128xf32> to vector<32x128xf32>
    %271 = arith.truncf %270 : vector<32x128xf32> to vector<32x128xbf16>
    %272 = vector.shape_cast %265 : vector<2x8x32xf32> to vector<16x32xf32>
    %273 = arith.truncf %272 : vector<16x32xf32> to vector<16x32xbf16>
    %cst_50 = arith.constant dense<0.000000e+00> : vector<16x128xf32>
    %274 = tpu.matmul %273, %268, %cst_50 {dimension_numbers = #tpu.dot_dimension_numbers<[1], [0], [0], [1], [0, 0, 1, 1], [], []>} : vector<16x32xbf16>, vector<32x128xbf16>, vector<16x128xf32> -> vector<16x128xf32>
    %c1_51 = arith.constant 1 : index
    %c0_52 = arith.constant 0 : index
    %c0_53 = arith.constant 0 : index
    %275 = vector.load %arg5[%c1_51, %c0_52, %c0_53] : memref<2x1x128xf32, #tpu.memory_space<vmem>>, vector<1x1x128xf32>
    %276 = vector.shape_cast %275 : vector<1x1x128xf32> to vector<1x128xf32>
    %277 = vector.broadcast %276 : vector<1x128xf32> to vector<16x128xf32>
    %278 = arith.addf %274, %277 : vector<16x128xf32>
    %279 = vector.shape_cast %278 : vector<16x128xf32> to vector<2x8x128xf32>
    %cst_54 = arith.constant 0.000000e+00 : f32
    %280 = vector.broadcast %cst_54 : f32 to vector<2x32xf32>
    %cst_55 = arith.constant 0.000000e+00 : f32
    %281 = vector.broadcast %cst_55 : f32 to vector<2x32xf32>
    %282 = vector.extract_strided_slice %279 {offsets = [0, 0, 0], sizes = [2, 1, 128], strides = [1, 1, 1]} : vector<2x8x128xf32> to vector<2x1x128xf32>
    %283 = vector.shape_cast %282 : vector<2x1x128xf32> to vector<2x128xf32>
    %284 = arith.truncf %280 : vector<2x32xf32> to vector<2x32xbf16>
    %cst_56 = arith.constant dense<0.000000e+00> : vector<2x128xf32>
    %285 = tpu.matmul %284, %271, %cst_56 {dimension_numbers = #tpu.dot_dimension_numbers<[1], [0], [0], [1], [0, 0, 1, 1], [], []>} : vector<2x32xbf16>, vector<32x128xbf16>, vector<2x128xf32> -> vector<2x128xf32>
    %286 = arith.addf %283, %285 : vector<2x128xf32>
    %287 = vector.extract_strided_slice %286 {offsets = [0, 0], sizes = [2, 32], strides = [1, 1]} : vector<2x128xf32> to vector<2x32xf32>
    %288 = arith.negf %287 : vector<2x32xf32>
    %289 = math.exp %288 : vector<2x32xf32>
    %cst_57 = arith.constant 1.000000e+00 : f32
    %290 = vector.broadcast %cst_57 : f32 to vector<2x32xf32>
    %291 = arith.addf %290, %289 : vector<2x32xf32>
    %292 = arith.divf %290, %291 : vector<2x32xf32>
    %293 = vector.extract_strided_slice %286 {offsets = [0, 32], sizes = [2, 32], strides = [1, 1]} : vector<2x128xf32> to vector<2x32xf32>
    %294 = arith.negf %293 : vector<2x32xf32>
    %295 = math.exp %294 : vector<2x32xf32>
    %cst_58 = arith.constant 1.000000e+00 : f32
    %296 = vector.broadcast %cst_58 : f32 to vector<2x32xf32>
    %297 = arith.addf %296, %295 : vector<2x32xf32>
    %298 = arith.divf %296, %297 : vector<2x32xf32>
    %299 = vector.extract_strided_slice %286 {offsets = [0, 64], sizes = [2, 32], strides = [1, 1]} : vector<2x128xf32> to vector<2x32xf32>
    %300 = math.tanh %299 : vector<2x32xf32>
    %301 = vector.extract_strided_slice %286 {offsets = [0, 96], sizes = [2, 32], strides = [1, 1]} : vector<2x128xf32> to vector<2x32xf32>
    %302 = arith.negf %301 : vector<2x32xf32>
    %303 = math.exp %302 : vector<2x32xf32>
    %cst_59 = arith.constant 1.000000e+00 : f32
    %304 = vector.broadcast %cst_59 : f32 to vector<2x32xf32>
    %305 = arith.addf %304, %303 : vector<2x32xf32>
    %306 = arith.divf %304, %305 : vector<2x32xf32>
    %307 = arith.mulf %298, %281 : vector<2x32xf32>
    %308 = arith.mulf %292, %300 : vector<2x32xf32>
    %309 = arith.addf %307, %308 : vector<2x32xf32>
    %310 = math.tanh %309 : vector<2x32xf32>
    %311 = arith.mulf %306, %310 : vector<2x32xf32>
    %312 = vector.extract_strided_slice %279 {offsets = [0, 1, 0], sizes = [2, 1, 128], strides = [1, 1, 1]} : vector<2x8x128xf32> to vector<2x1x128xf32>
    %313 = vector.shape_cast %312 : vector<2x1x128xf32> to vector<2x128xf32>
    %314 = arith.truncf %311 : vector<2x32xf32> to vector<2x32xbf16>
    %cst_60 = arith.constant dense<0.000000e+00> : vector<2x128xf32>
    %315 = tpu.matmul %314, %271, %cst_60 {dimension_numbers = #tpu.dot_dimension_numbers<[1], [0], [0], [1], [0, 0, 1, 1], [], []>} : vector<2x32xbf16>, vector<32x128xbf16>, vector<2x128xf32> -> vector<2x128xf32>
    %316 = arith.addf %313, %315 : vector<2x128xf32>
    %317 = vector.extract_strided_slice %316 {offsets = [0, 0], sizes = [2, 32], strides = [1, 1]} : vector<2x128xf32> to vector<2x32xf32>
    %318 = arith.negf %317 : vector<2x32xf32>
    %319 = math.exp %318 : vector<2x32xf32>
    %cst_61 = arith.constant 1.000000e+00 : f32
    %320 = vector.broadcast %cst_61 : f32 to vector<2x32xf32>
    %321 = arith.addf %320, %319 : vector<2x32xf32>
    %322 = arith.divf %320, %321 : vector<2x32xf32>
    %323 = vector.extract_strided_slice %316 {offsets = [0, 32], sizes = [2, 32], strides = [1, 1]} : vector<2x128xf32> to vector<2x32xf32>
    %324 = arith.negf %323 : vector<2x32xf32>
    %325 = math.exp %324 : vector<2x32xf32>
    %cst_62 = arith.constant 1.000000e+00 : f32
    %326 = vector.broadcast %cst_62 : f32 to vector<2x32xf32>
    %327 = arith.addf %326, %325 : vector<2x32xf32>
    %328 = arith.divf %326, %327 : vector<2x32xf32>
    %329 = vector.extract_strided_slice %316 {offsets = [0, 64], sizes = [2, 32], strides = [1, 1]} : vector<2x128xf32> to vector<2x32xf32>
    %330 = math.tanh %329 : vector<2x32xf32>
    %331 = vector.extract_strided_slice %316 {offsets = [0, 96], sizes = [2, 32], strides = [1, 1]} : vector<2x128xf32> to vector<2x32xf32>
    %332 = arith.negf %331 : vector<2x32xf32>
    %333 = math.exp %332 : vector<2x32xf32>
    %cst_63 = arith.constant 1.000000e+00 : f32
    %334 = vector.broadcast %cst_63 : f32 to vector<2x32xf32>
    %335 = arith.addf %334, %333 : vector<2x32xf32>
    %336 = arith.divf %334, %335 : vector<2x32xf32>
    %337 = arith.mulf %328, %309 : vector<2x32xf32>
    %338 = arith.mulf %322, %330 : vector<2x32xf32>
    %339 = arith.addf %337, %338 : vector<2x32xf32>
    %340 = math.tanh %339 : vector<2x32xf32>
    %341 = arith.mulf %336, %340 : vector<2x32xf32>
    %342 = vector.extract_strided_slice %279 {offsets = [0, 2, 0], sizes = [2, 1, 128], strides = [1, 1, 1]} : vector<2x8x128xf32> to vector<2x1x128xf32>
    %343 = vector.shape_cast %342 : vector<2x1x128xf32> to vector<2x128xf32>
    %344 = arith.truncf %341 : vector<2x32xf32> to vector<2x32xbf16>
    %cst_64 = arith.constant dense<0.000000e+00> : vector<2x128xf32>
    %345 = tpu.matmul %344, %271, %cst_64 {dimension_numbers = #tpu.dot_dimension_numbers<[1], [0], [0], [1], [0, 0, 1, 1], [], []>} : vector<2x32xbf16>, vector<32x128xbf16>, vector<2x128xf32> -> vector<2x128xf32>
    %346 = arith.addf %343, %345 : vector<2x128xf32>
    %347 = vector.extract_strided_slice %346 {offsets = [0, 0], sizes = [2, 32], strides = [1, 1]} : vector<2x128xf32> to vector<2x32xf32>
    %348 = arith.negf %347 : vector<2x32xf32>
    %349 = math.exp %348 : vector<2x32xf32>
    %cst_65 = arith.constant 1.000000e+00 : f32
    %350 = vector.broadcast %cst_65 : f32 to vector<2x32xf32>
    %351 = arith.addf %350, %349 : vector<2x32xf32>
    %352 = arith.divf %350, %351 : vector<2x32xf32>
    %353 = vector.extract_strided_slice %346 {offsets = [0, 32], sizes = [2, 32], strides = [1, 1]} : vector<2x128xf32> to vector<2x32xf32>
    %354 = arith.negf %353 : vector<2x32xf32>
    %355 = math.exp %354 : vector<2x32xf32>
    %cst_66 = arith.constant 1.000000e+00 : f32
    %356 = vector.broadcast %cst_66 : f32 to vector<2x32xf32>
    %357 = arith.addf %356, %355 : vector<2x32xf32>
    %358 = arith.divf %356, %357 : vector<2x32xf32>
    %359 = vector.extract_strided_slice %346 {offsets = [0, 64], sizes = [2, 32], strides = [1, 1]} : vector<2x128xf32> to vector<2x32xf32>
    %360 = math.tanh %359 : vector<2x32xf32>
    %361 = vector.extract_strided_slice %346 {offsets = [0, 96], sizes = [2, 32], strides = [1, 1]} : vector<2x128xf32> to vector<2x32xf32>
    %362 = arith.negf %361 : vector<2x32xf32>
    %363 = math.exp %362 : vector<2x32xf32>
    %cst_67 = arith.constant 1.000000e+00 : f32
    %364 = vector.broadcast %cst_67 : f32 to vector<2x32xf32>
    %365 = arith.addf %364, %363 : vector<2x32xf32>
    %366 = arith.divf %364, %365 : vector<2x32xf32>
    %367 = arith.mulf %358, %339 : vector<2x32xf32>
    %368 = arith.mulf %352, %360 : vector<2x32xf32>
    %369 = arith.addf %367, %368 : vector<2x32xf32>
    %370 = math.tanh %369 : vector<2x32xf32>
    %371 = arith.mulf %366, %370 : vector<2x32xf32>
    %372 = vector.extract_strided_slice %279 {offsets = [0, 3, 0], sizes = [2, 1, 128], strides = [1, 1, 1]} : vector<2x8x128xf32> to vector<2x1x128xf32>
    %373 = vector.shape_cast %372 : vector<2x1x128xf32> to vector<2x128xf32>
    %374 = arith.truncf %371 : vector<2x32xf32> to vector<2x32xbf16>
    %cst_68 = arith.constant dense<0.000000e+00> : vector<2x128xf32>
    %375 = tpu.matmul %374, %271, %cst_68 {dimension_numbers = #tpu.dot_dimension_numbers<[1], [0], [0], [1], [0, 0, 1, 1], [], []>} : vector<2x32xbf16>, vector<32x128xbf16>, vector<2x128xf32> -> vector<2x128xf32>
    %376 = arith.addf %373, %375 : vector<2x128xf32>
    %377 = vector.extract_strided_slice %376 {offsets = [0, 0], sizes = [2, 32], strides = [1, 1]} : vector<2x128xf32> to vector<2x32xf32>
    %378 = arith.negf %377 : vector<2x32xf32>
    %379 = math.exp %378 : vector<2x32xf32>
    %cst_69 = arith.constant 1.000000e+00 : f32
    %380 = vector.broadcast %cst_69 : f32 to vector<2x32xf32>
    %381 = arith.addf %380, %379 : vector<2x32xf32>
    %382 = arith.divf %380, %381 : vector<2x32xf32>
    %383 = vector.extract_strided_slice %376 {offsets = [0, 32], sizes = [2, 32], strides = [1, 1]} : vector<2x128xf32> to vector<2x32xf32>
    %384 = arith.negf %383 : vector<2x32xf32>
    %385 = math.exp %384 : vector<2x32xf32>
    %cst_70 = arith.constant 1.000000e+00 : f32
    %386 = vector.broadcast %cst_70 : f32 to vector<2x32xf32>
    %387 = arith.addf %386, %385 : vector<2x32xf32>
    %388 = arith.divf %386, %387 : vector<2x32xf32>
    %389 = vector.extract_strided_slice %376 {offsets = [0, 64], sizes = [2, 32], strides = [1, 1]} : vector<2x128xf32> to vector<2x32xf32>
    %390 = math.tanh %389 : vector<2x32xf32>
    %391 = vector.extract_strided_slice %376 {offsets = [0, 96], sizes = [2, 32], strides = [1, 1]} : vector<2x128xf32> to vector<2x32xf32>
    %392 = arith.negf %391 : vector<2x32xf32>
    %393 = math.exp %392 : vector<2x32xf32>
    %cst_71 = arith.constant 1.000000e+00 : f32
    %394 = vector.broadcast %cst_71 : f32 to vector<2x32xf32>
    %395 = arith.addf %394, %393 : vector<2x32xf32>
    %396 = arith.divf %394, %395 : vector<2x32xf32>
    %397 = arith.mulf %388, %369 : vector<2x32xf32>
    %398 = arith.mulf %382, %390 : vector<2x32xf32>
    %399 = arith.addf %397, %398 : vector<2x32xf32>
    %400 = math.tanh %399 : vector<2x32xf32>
    %401 = arith.mulf %396, %400 : vector<2x32xf32>
    %402 = vector.extract_strided_slice %279 {offsets = [0, 4, 0], sizes = [2, 1, 128], strides = [1, 1, 1]} : vector<2x8x128xf32> to vector<2x1x128xf32>
    %403 = vector.shape_cast %402 : vector<2x1x128xf32> to vector<2x128xf32>
    %404 = arith.truncf %401 : vector<2x32xf32> to vector<2x32xbf16>
    %cst_72 = arith.constant dense<0.000000e+00> : vector<2x128xf32>
    %405 = tpu.matmul %404, %271, %cst_72 {dimension_numbers = #tpu.dot_dimension_numbers<[1], [0], [0], [1], [0, 0, 1, 1], [], []>} : vector<2x32xbf16>, vector<32x128xbf16>, vector<2x128xf32> -> vector<2x128xf32>
    %406 = arith.addf %403, %405 : vector<2x128xf32>
    %407 = vector.extract_strided_slice %406 {offsets = [0, 0], sizes = [2, 32], strides = [1, 1]} : vector<2x128xf32> to vector<2x32xf32>
    %408 = arith.negf %407 : vector<2x32xf32>
    %409 = math.exp %408 : vector<2x32xf32>
    %cst_73 = arith.constant 1.000000e+00 : f32
    %410 = vector.broadcast %cst_73 : f32 to vector<2x32xf32>
    %411 = arith.addf %410, %409 : vector<2x32xf32>
    %412 = arith.divf %410, %411 : vector<2x32xf32>
    %413 = vector.extract_strided_slice %406 {offsets = [0, 32], sizes = [2, 32], strides = [1, 1]} : vector<2x128xf32> to vector<2x32xf32>
    %414 = arith.negf %413 : vector<2x32xf32>
    %415 = math.exp %414 : vector<2x32xf32>
    %cst_74 = arith.constant 1.000000e+00 : f32
    %416 = vector.broadcast %cst_74 : f32 to vector<2x32xf32>
    %417 = arith.addf %416, %415 : vector<2x32xf32>
    %418 = arith.divf %416, %417 : vector<2x32xf32>
    %419 = vector.extract_strided_slice %406 {offsets = [0, 64], sizes = [2, 32], strides = [1, 1]} : vector<2x128xf32> to vector<2x32xf32>
    %420 = math.tanh %419 : vector<2x32xf32>
    %421 = vector.extract_strided_slice %406 {offsets = [0, 96], sizes = [2, 32], strides = [1, 1]} : vector<2x128xf32> to vector<2x32xf32>
    %422 = arith.negf %421 : vector<2x32xf32>
    %423 = math.exp %422 : vector<2x32xf32>
    %cst_75 = arith.constant 1.000000e+00 : f32
    %424 = vector.broadcast %cst_75 : f32 to vector<2x32xf32>
    %425 = arith.addf %424, %423 : vector<2x32xf32>
    %426 = arith.divf %424, %425 : vector<2x32xf32>
    %427 = arith.mulf %418, %399 : vector<2x32xf32>
    %428 = arith.mulf %412, %420 : vector<2x32xf32>
    %429 = arith.addf %427, %428 : vector<2x32xf32>
    %430 = math.tanh %429 : vector<2x32xf32>
    %431 = arith.mulf %426, %430 : vector<2x32xf32>
    %432 = vector.extract_strided_slice %279 {offsets = [0, 5, 0], sizes = [2, 1, 128], strides = [1, 1, 1]} : vector<2x8x128xf32> to vector<2x1x128xf32>
    %433 = vector.shape_cast %432 : vector<2x1x128xf32> to vector<2x128xf32>
    %434 = arith.truncf %431 : vector<2x32xf32> to vector<2x32xbf16>
    %cst_76 = arith.constant dense<0.000000e+00> : vector<2x128xf32>
    %435 = tpu.matmul %434, %271, %cst_76 {dimension_numbers = #tpu.dot_dimension_numbers<[1], [0], [0], [1], [0, 0, 1, 1], [], []>} : vector<2x32xbf16>, vector<32x128xbf16>, vector<2x128xf32> -> vector<2x128xf32>
    %436 = arith.addf %433, %435 : vector<2x128xf32>
    %437 = vector.extract_strided_slice %436 {offsets = [0, 0], sizes = [2, 32], strides = [1, 1]} : vector<2x128xf32> to vector<2x32xf32>
    %438 = arith.negf %437 : vector<2x32xf32>
    %439 = math.exp %438 : vector<2x32xf32>
    %cst_77 = arith.constant 1.000000e+00 : f32
    %440 = vector.broadcast %cst_77 : f32 to vector<2x32xf32>
    %441 = arith.addf %440, %439 : vector<2x32xf32>
    %442 = arith.divf %440, %441 : vector<2x32xf32>
    %443 = vector.extract_strided_slice %436 {offsets = [0, 32], sizes = [2, 32], strides = [1, 1]} : vector<2x128xf32> to vector<2x32xf32>
    %444 = arith.negf %443 : vector<2x32xf32>
    %445 = math.exp %444 : vector<2x32xf32>
    %cst_78 = arith.constant 1.000000e+00 : f32
    %446 = vector.broadcast %cst_78 : f32 to vector<2x32xf32>
    %447 = arith.addf %446, %445 : vector<2x32xf32>
    %448 = arith.divf %446, %447 : vector<2x32xf32>
    %449 = vector.extract_strided_slice %436 {offsets = [0, 64], sizes = [2, 32], strides = [1, 1]} : vector<2x128xf32> to vector<2x32xf32>
    %450 = math.tanh %449 : vector<2x32xf32>
    %451 = vector.extract_strided_slice %436 {offsets = [0, 96], sizes = [2, 32], strides = [1, 1]} : vector<2x128xf32> to vector<2x32xf32>
    %452 = arith.negf %451 : vector<2x32xf32>
    %453 = math.exp %452 : vector<2x32xf32>
    %cst_79 = arith.constant 1.000000e+00 : f32
    %454 = vector.broadcast %cst_79 : f32 to vector<2x32xf32>
    %455 = arith.addf %454, %453 : vector<2x32xf32>
    %456 = arith.divf %454, %455 : vector<2x32xf32>
    %457 = arith.mulf %448, %429 : vector<2x32xf32>
    %458 = arith.mulf %442, %450 : vector<2x32xf32>
    %459 = arith.addf %457, %458 : vector<2x32xf32>
    %460 = math.tanh %459 : vector<2x32xf32>
    %461 = arith.mulf %456, %460 : vector<2x32xf32>
    %462 = vector.extract_strided_slice %279 {offsets = [0, 6, 0], sizes = [2, 1, 128], strides = [1, 1, 1]} : vector<2x8x128xf32> to vector<2x1x128xf32>
    %463 = vector.shape_cast %462 : vector<2x1x128xf32> to vector<2x128xf32>
    %464 = arith.truncf %461 : vector<2x32xf32> to vector<2x32xbf16>
    %cst_80 = arith.constant dense<0.000000e+00> : vector<2x128xf32>
    %465 = tpu.matmul %464, %271, %cst_80 {dimension_numbers = #tpu.dot_dimension_numbers<[1], [0], [0], [1], [0, 0, 1, 1], [], []>} : vector<2x32xbf16>, vector<32x128xbf16>, vector<2x128xf32> -> vector<2x128xf32>
    %466 = arith.addf %463, %465 : vector<2x128xf32>
    %467 = vector.extract_strided_slice %466 {offsets = [0, 0], sizes = [2, 32], strides = [1, 1]} : vector<2x128xf32> to vector<2x32xf32>
    %468 = arith.negf %467 : vector<2x32xf32>
    %469 = math.exp %468 : vector<2x32xf32>
    %cst_81 = arith.constant 1.000000e+00 : f32
    %470 = vector.broadcast %cst_81 : f32 to vector<2x32xf32>
    %471 = arith.addf %470, %469 : vector<2x32xf32>
    %472 = arith.divf %470, %471 : vector<2x32xf32>
    %473 = vector.extract_strided_slice %466 {offsets = [0, 32], sizes = [2, 32], strides = [1, 1]} : vector<2x128xf32> to vector<2x32xf32>
    %474 = arith.negf %473 : vector<2x32xf32>
    %475 = math.exp %474 : vector<2x32xf32>
    %cst_82 = arith.constant 1.000000e+00 : f32
    %476 = vector.broadcast %cst_82 : f32 to vector<2x32xf32>
    %477 = arith.addf %476, %475 : vector<2x32xf32>
    %478 = arith.divf %476, %477 : vector<2x32xf32>
    %479 = vector.extract_strided_slice %466 {offsets = [0, 64], sizes = [2, 32], strides = [1, 1]} : vector<2x128xf32> to vector<2x32xf32>
    %480 = math.tanh %479 : vector<2x32xf32>
    %481 = vector.extract_strided_slice %466 {offsets = [0, 96], sizes = [2, 32], strides = [1, 1]} : vector<2x128xf32> to vector<2x32xf32>
    %482 = arith.negf %481 : vector<2x32xf32>
    %483 = math.exp %482 : vector<2x32xf32>
    %cst_83 = arith.constant 1.000000e+00 : f32
    %484 = vector.broadcast %cst_83 : f32 to vector<2x32xf32>
    %485 = arith.addf %484, %483 : vector<2x32xf32>
    %486 = arith.divf %484, %485 : vector<2x32xf32>
    %487 = arith.mulf %478, %459 : vector<2x32xf32>
    %488 = arith.mulf %472, %480 : vector<2x32xf32>
    %489 = arith.addf %487, %488 : vector<2x32xf32>
    %490 = math.tanh %489 : vector<2x32xf32>
    %491 = arith.mulf %486, %490 : vector<2x32xf32>
    %492 = vector.extract_strided_slice %279 {offsets = [0, 7, 0], sizes = [2, 1, 128], strides = [1, 1, 1]} : vector<2x8x128xf32> to vector<2x1x128xf32>
    %493 = vector.shape_cast %492 : vector<2x1x128xf32> to vector<2x128xf32>
    %494 = arith.truncf %491 : vector<2x32xf32> to vector<2x32xbf16>
    %cst_84 = arith.constant dense<0.000000e+00> : vector<2x128xf32>
    %495 = tpu.matmul %494, %271, %cst_84 {dimension_numbers = #tpu.dot_dimension_numbers<[1], [0], [0], [1], [0, 0, 1, 1], [], []>} : vector<2x32xbf16>, vector<32x128xbf16>, vector<2x128xf32> -> vector<2x128xf32>
    %496 = arith.addf %493, %495 : vector<2x128xf32>
    %497 = vector.extract_strided_slice %496 {offsets = [0, 0], sizes = [2, 32], strides = [1, 1]} : vector<2x128xf32> to vector<2x32xf32>
    %498 = arith.negf %497 : vector<2x32xf32>
    %499 = math.exp %498 : vector<2x32xf32>
    %cst_85 = arith.constant 1.000000e+00 : f32
    %500 = vector.broadcast %cst_85 : f32 to vector<2x32xf32>
    %501 = arith.addf %500, %499 : vector<2x32xf32>
    %502 = arith.divf %500, %501 : vector<2x32xf32>
    %503 = vector.extract_strided_slice %496 {offsets = [0, 32], sizes = [2, 32], strides = [1, 1]} : vector<2x128xf32> to vector<2x32xf32>
    %504 = arith.negf %503 : vector<2x32xf32>
    %505 = math.exp %504 : vector<2x32xf32>
    %cst_86 = arith.constant 1.000000e+00 : f32
    %506 = vector.broadcast %cst_86 : f32 to vector<2x32xf32>
    %507 = arith.addf %506, %505 : vector<2x32xf32>
    %508 = arith.divf %506, %507 : vector<2x32xf32>
    %509 = vector.extract_strided_slice %496 {offsets = [0, 64], sizes = [2, 32], strides = [1, 1]} : vector<2x128xf32> to vector<2x32xf32>
    %510 = math.tanh %509 : vector<2x32xf32>
    %511 = vector.extract_strided_slice %496 {offsets = [0, 96], sizes = [2, 32], strides = [1, 1]} : vector<2x128xf32> to vector<2x32xf32>
    %512 = arith.negf %511 : vector<2x32xf32>
    %513 = math.exp %512 : vector<2x32xf32>
    %cst_87 = arith.constant 1.000000e+00 : f32
    %514 = vector.broadcast %cst_87 : f32 to vector<2x32xf32>
    %515 = arith.addf %514, %513 : vector<2x32xf32>
    %516 = arith.divf %514, %515 : vector<2x32xf32>
    %517 = arith.mulf %508, %489 : vector<2x32xf32>
    %518 = arith.mulf %502, %510 : vector<2x32xf32>
    %519 = arith.addf %517, %518 : vector<2x32xf32>
    %520 = math.tanh %519 : vector<2x32xf32>
    %521 = arith.mulf %516, %520 : vector<2x32xf32>
    %522 = vector.shape_cast %311 : vector<2x32xf32> to vector<2x1x32xf32>
    %523 = vector.shape_cast %341 : vector<2x32xf32> to vector<2x1x32xf32>
    %524 = vector.shape_cast %371 : vector<2x32xf32> to vector<2x1x32xf32>
    %525 = vector.shape_cast %401 : vector<2x32xf32> to vector<2x1x32xf32>
    %526 = vector.shape_cast %431 : vector<2x32xf32> to vector<2x1x32xf32>
    %527 = vector.shape_cast %461 : vector<2x32xf32> to vector<2x1x32xf32>
    %528 = vector.shape_cast %491 : vector<2x32xf32> to vector<2x1x32xf32>
    %529 = vector.shape_cast %521 : vector<2x32xf32> to vector<2x1x32xf32>
    %530 = tpu.concatenate %522, %523, %524, %525, %526, %527, %528, %529 in 1 : vector<2x1x32xf32>, vector<2x1x32xf32>, vector<2x1x32xf32>, vector<2x1x32xf32>, vector<2x1x32xf32>, vector<2x1x32xf32>, vector<2x1x32xf32>, vector<2x1x32xf32> -> vector<2x8x32xf32>
    %531 = vector.shape_cast %530 : vector<2x8x32xf32> to vector<16x32xf32>
    %c0_88 = arith.constant 0 : index
    %c0_89 = arith.constant 0 : index
    %532 = vector.load %arg6[%c0_88, %c0_89] : memref<32x32xf32, #tpu.memory_space<vmem>>, vector<32x32xf32>
    %533 = arith.truncf %531 : vector<16x32xf32> to vector<16x32xbf16>
    %534 = arith.truncf %532 : vector<32x32xf32> to vector<32x32xbf16>
    %cst_90 = arith.constant dense<0.000000e+00> : vector<16x32xf32>
    %535 = tpu.matmul %533, %534, %cst_90 {dimension_numbers = #tpu.dot_dimension_numbers<[1], [0], [0], [1], [0, 0, 1, 1], [], []>} : vector<16x32xbf16>, vector<32x32xbf16>, vector<16x32xf32> -> vector<16x32xf32>
    %c0_91 = arith.constant 0 : index
    %c0_92 = arith.constant 0 : index
    %536 = vector.load %arg7[%c0_91, %c0_92] : memref<1x32xf32, #tpu.memory_space<vmem>>, vector<1x32xf32>
    %537 = vector.broadcast %536 : vector<1x32xf32> to vector<16x32xf32>
    %538 = arith.addf %535, %537 : vector<16x32xf32>
    %539 = vector.shape_cast %538 : vector<16x32xf32> to vector<2x8x32xf32>
    %c0_93 = arith.constant 0 : index
    %c0_94 = arith.constant 0 : index
    %c0_95 = arith.constant 0 : index
    %540 = vector.load %arg1[%c0_93, %c0_94, %c0_95] : memref<2x8x32xf32, #tpu.memory_space<vmem>>, vector<2x8x32xf32>
    %541 = vector.shape_cast %540 : vector<2x8x32xf32> to vector<16x32xf32>
    %c0_96 = arith.constant 0 : index
    %c0_97 = arith.constant 0 : index
    %542 = vector.load %arg8[%c0_96, %c0_97] : memref<32x64xf32, #tpu.memory_space<vmem>>, vector<32x64xf32>
    %543 = arith.truncf %541 : vector<16x32xf32> to vector<16x32xbf16>
    %544 = arith.truncf %542 : vector<32x64xf32> to vector<32x64xbf16>
    %cst_98 = arith.constant dense<0.000000e+00> : vector<16x64xf32>
    %545 = tpu.matmul %543, %544, %cst_98 {dimension_numbers = #tpu.dot_dimension_numbers<[1], [0], [0], [1], [0, 0, 1, 1], [], []>} : vector<16x32xbf16>, vector<32x64xbf16>, vector<16x64xf32> -> vector<16x64xf32>
    %c0_99 = arith.constant 0 : index
    %c0_100 = arith.constant 0 : index
    %546 = vector.load %arg9[%c0_99, %c0_100] : memref<1x64xf32, #tpu.memory_space<vmem>>, vector<1x64xf32>
    %547 = vector.broadcast %546 : vector<1x64xf32> to vector<16x64xf32>
    %548 = arith.addf %545, %547 : vector<16x64xf32>
    %549 = vector.extract_strided_slice %548 {offsets = [0, 0], sizes = [16, 32], strides = [1, 1]} : vector<16x64xf32> to vector<16x32xf32>
    %550 = vector.shape_cast %549 : vector<16x32xf32> to vector<2x8x32xf32>
    %551 = vector.extract_strided_slice %548 {offsets = [0, 32], sizes = [16, 32], strides = [1, 1]} : vector<16x64xf32> to vector<16x32xf32>
    %552 = vector.shape_cast %551 : vector<16x32xf32> to vector<2x8x32xf32>
    %c0_101 = arith.constant 0 : index
    %c0_102 = arith.constant 0 : index
    %c0_103 = arith.constant 0 : index
    %553 = vector.load %arg2[%c0_101, %c0_102, %c0_103] : memref<2x1x8xf32, #tpu.memory_space<vmem>>, vector<2x1x8xf32>
    %c0_104 = arith.constant 0 : index
    %c0_105 = arith.constant 0 : index
    %554 = vector.load %arg10[%c0_104, %c0_105] : memref<32x32xf32, #tpu.memory_space<vmem>>, vector<32x32xf32>
    %555 = vector.extract_strided_slice %539 {offsets = [0, 0, 0], sizes = [2, 8, 8], strides = [1, 1, 1]} : vector<2x8x32xf32> to vector<2x8x8xf32>
    %cst_106 = arith.constant 0.353553385 : f32
    %556 = vector.broadcast %cst_106 : f32 to vector<2x8x8xf32>
    %557 = arith.mulf %555, %556 : vector<2x8x8xf32>
    %558 = arith.truncf %557 : vector<2x8x8xf32> to vector<2x8x8xbf16>
    %559 = vector.extract_strided_slice %550 {offsets = [0, 0, 0], sizes = [2, 8, 8], strides = [1, 1, 1]} : vector<2x8x32xf32> to vector<2x8x8xf32>
    %560 = arith.truncf %559 : vector<2x8x8xf32> to vector<2x8x8xbf16>
    %561 = vector.extract_strided_slice %552 {offsets = [0, 0, 0], sizes = [2, 8, 8], strides = [1, 1, 1]} : vector<2x8x32xf32> to vector<2x8x8xf32>
    %562 = arith.truncf %561 : vector<2x8x8xf32> to vector<2x8x8xbf16>
    "tpu.trace_start"() <{level = 10 : i32, message = "bqd,bkd->bqk"}> : () -> ()
    %cst_107 = arith.constant dense<0.000000e+00> : vector<2x8x8xf32>
    %563 = tpu.matmul %558, %560, %cst_107 {dimension_numbers = #tpu.dot_dimension_numbers<[2], [2], [1], [1], [0, 0, 0, 1, 1, 1], [0], [0]>} : vector<2x8x8xbf16>, vector<2x8x8xbf16>, vector<2x8x8xf32> -> vector<2x8x8xf32>
    "tpu.trace_stop"() : () -> ()
    %564 = vector.broadcast %553 : vector<2x1x8xf32> to vector<2x8x8xf32>
    %565 = arith.addf %563, %564 : vector<2x8x8xf32>
    %cst_108 = arith.constant dense<0xFF800000> : vector<2x8xf32>
    %566 = vector.multi_reduction <maximumf>, %565, %cst_108 [2] : vector<2x8x8xf32> to vector<2x8xf32>
    %567 = vector.shape_cast %566 : vector<2x8xf32> to vector<2x8x1xf32>
    %568 = vector.broadcast %567 : vector<2x8x1xf32> to vector<2x8x8xf32>
    %569 = arith.subf %565, %568 : vector<2x8x8xf32>
    %570 = math.exp %569 : vector<2x8x8xf32>
    %cst_109 = arith.constant dense<0.000000e+00> : vector<2x8xf32>
    %571 = vector.multi_reduction <add>, %570, %cst_109 [2] : vector<2x8x8xf32> to vector<2x8xf32>
    %572 = vector.shape_cast %571 : vector<2x8xf32> to vector<2x8x1xf32>
    %573 = tpu.reciprocal %572 {approx = true} : vector<2x8x1xf32> -> vector<2x8x1xf32>
    %574 = vector.broadcast %573 : vector<2x8x1xf32> to vector<2x8x8xf32>
    %575 = arith.mulf %570, %574 : vector<2x8x8xf32>
    %576 = arith.truncf %575 : vector<2x8x8xf32> to vector<2x8x8xbf16>
    "tpu.trace_start"() <{level = 10 : i32, message = "bqk,bkd->bqd"}> : () -> ()
    %cst_110 = arith.constant dense<0.000000e+00> : vector<2x8x8xf32>
    %577 = tpu.matmul %576, %562, %cst_110 {dimension_numbers = #tpu.dot_dimension_numbers<[2], [1], [1], [2], [0, 0, 0, 1, 1, 2], [0], [0]>} : vector<2x8x8xbf16>, vector<2x8x8xbf16>, vector<2x8x8xf32> -> vector<2x8x8xf32>
    "tpu.trace_stop"() : () -> ()
    %578 = vector.shape_cast %577 : vector<2x8x8xf32> to vector<16x8xf32>
    %579 = vector.extract_strided_slice %554 {offsets = [0, 0], sizes = [8, 32], strides = [1, 1]} : vector<32x32xf32> to vector<8x32xf32>
    %580 = arith.truncf %578 : vector<16x8xf32> to vector<16x8xbf16>
    %581 = arith.truncf %579 : vector<8x32xf32> to vector<8x32xbf16>
    %cst_111 = arith.constant dense<0.000000e+00> : vector<16x32xf32>
    %582 = tpu.matmul %580, %581, %cst_111 {dimension_numbers = #tpu.dot_dimension_numbers<[1], [0], [0], [1], [0, 0, 1, 1], [], []>} : vector<16x8xbf16>, vector<8x32xbf16>, vector<16x32xf32> -> vector<16x32xf32>
    %583 = vector.extract_strided_slice %539 {offsets = [0, 0, 8], sizes = [2, 8, 8], strides = [1, 1, 1]} : vector<2x8x32xf32> to vector<2x8x8xf32>
    %cst_112 = arith.constant 0.353553385 : f32
    %584 = vector.broadcast %cst_112 : f32 to vector<2x8x8xf32>
    %585 = arith.mulf %583, %584 : vector<2x8x8xf32>
    %586 = arith.truncf %585 : vector<2x8x8xf32> to vector<2x8x8xbf16>
    %587 = vector.extract_strided_slice %550 {offsets = [0, 0, 8], sizes = [2, 8, 8], strides = [1, 1, 1]} : vector<2x8x32xf32> to vector<2x8x8xf32>
    %588 = arith.truncf %587 : vector<2x8x8xf32> to vector<2x8x8xbf16>
    %589 = vector.extract_strided_slice %552 {offsets = [0, 0, 8], sizes = [2, 8, 8], strides = [1, 1, 1]} : vector<2x8x32xf32> to vector<2x8x8xf32>
    %590 = arith.truncf %589 : vector<2x8x8xf32> to vector<2x8x8xbf16>
    "tpu.trace_start"() <{level = 10 : i32, message = "bqd,bkd->bqk"}> : () -> ()
    %cst_113 = arith.constant dense<0.000000e+00> : vector<2x8x8xf32>
    %591 = tpu.matmul %586, %588, %cst_113 {dimension_numbers = #tpu.dot_dimension_numbers<[2], [2], [1], [1], [0, 0, 0, 1, 1, 1], [0], [0]>} : vector<2x8x8xbf16>, vector<2x8x8xbf16>, vector<2x8x8xf32> -> vector<2x8x8xf32>
    "tpu.trace_stop"() : () -> ()
    %592 = vector.broadcast %553 : vector<2x1x8xf32> to vector<2x8x8xf32>
    %593 = arith.addf %591, %592 : vector<2x8x8xf32>
    %cst_114 = arith.constant dense<0xFF800000> : vector<2x8xf32>
    %594 = vector.multi_reduction <maximumf>, %593, %cst_114 [2] : vector<2x8x8xf32> to vector<2x8xf32>
    %595 = vector.shape_cast %594 : vector<2x8xf32> to vector<2x8x1xf32>
    %596 = vector.broadcast %595 : vector<2x8x1xf32> to vector<2x8x8xf32>
    %597 = arith.subf %593, %596 : vector<2x8x8xf32>
    %598 = math.exp %597 : vector<2x8x8xf32>
    %cst_115 = arith.constant dense<0.000000e+00> : vector<2x8xf32>
    %599 = vector.multi_reduction <add>, %598, %cst_115 [2] : vector<2x8x8xf32> to vector<2x8xf32>
    %600 = vector.shape_cast %599 : vector<2x8xf32> to vector<2x8x1xf32>
    %601 = tpu.reciprocal %600 {approx = true} : vector<2x8x1xf32> -> vector<2x8x1xf32>
    %602 = vector.broadcast %601 : vector<2x8x1xf32> to vector<2x8x8xf32>
    %603 = arith.mulf %598, %602 : vector<2x8x8xf32>
    %604 = arith.truncf %603 : vector<2x8x8xf32> to vector<2x8x8xbf16>
    "tpu.trace_start"() <{level = 10 : i32, message = "bqk,bkd->bqd"}> : () -> ()
    %cst_116 = arith.constant dense<0.000000e+00> : vector<2x8x8xf32>
    %605 = tpu.matmul %604, %590, %cst_116 {dimension_numbers = #tpu.dot_dimension_numbers<[2], [1], [1], [2], [0, 0, 0, 1, 1, 2], [0], [0]>} : vector<2x8x8xbf16>, vector<2x8x8xbf16>, vector<2x8x8xf32> -> vector<2x8x8xf32>
    "tpu.trace_stop"() : () -> ()
    %606 = vector.shape_cast %605 : vector<2x8x8xf32> to vector<16x8xf32>
    %607 = vector.extract_strided_slice %554 {offsets = [8, 0], sizes = [8, 32], strides = [1, 1]} : vector<32x32xf32> to vector<8x32xf32>
    %608 = arith.truncf %606 : vector<16x8xf32> to vector<16x8xbf16>
    %609 = arith.truncf %607 : vector<8x32xf32> to vector<8x32xbf16>
    %cst_117 = arith.constant dense<0.000000e+00> : vector<16x32xf32>
    %610 = tpu.matmul %608, %609, %cst_117 {dimension_numbers = #tpu.dot_dimension_numbers<[1], [0], [0], [1], [0, 0, 1, 1], [], []>} : vector<16x8xbf16>, vector<8x32xbf16>, vector<16x32xf32> -> vector<16x32xf32>
    %611 = arith.addf %582, %610 : vector<16x32xf32>
    %612 = vector.extract_strided_slice %539 {offsets = [0, 0, 16], sizes = [2, 8, 8], strides = [1, 1, 1]} : vector<2x8x32xf32> to vector<2x8x8xf32>
    %cst_118 = arith.constant 0.353553385 : f32
    %613 = vector.broadcast %cst_118 : f32 to vector<2x8x8xf32>
    %614 = arith.mulf %612, %613 : vector<2x8x8xf32>
    %615 = arith.truncf %614 : vector<2x8x8xf32> to vector<2x8x8xbf16>
    %616 = vector.extract_strided_slice %550 {offsets = [0, 0, 16], sizes = [2, 8, 8], strides = [1, 1, 1]} : vector<2x8x32xf32> to vector<2x8x8xf32>
    %617 = arith.truncf %616 : vector<2x8x8xf32> to vector<2x8x8xbf16>
    %618 = vector.extract_strided_slice %552 {offsets = [0, 0, 16], sizes = [2, 8, 8], strides = [1, 1, 1]} : vector<2x8x32xf32> to vector<2x8x8xf32>
    %619 = arith.truncf %618 : vector<2x8x8xf32> to vector<2x8x8xbf16>
    "tpu.trace_start"() <{level = 10 : i32, message = "bqd,bkd->bqk"}> : () -> ()
    %cst_119 = arith.constant dense<0.000000e+00> : vector<2x8x8xf32>
    %620 = tpu.matmul %615, %617, %cst_119 {dimension_numbers = #tpu.dot_dimension_numbers<[2], [2], [1], [1], [0, 0, 0, 1, 1, 1], [0], [0]>} : vector<2x8x8xbf16>, vector<2x8x8xbf16>, vector<2x8x8xf32> -> vector<2x8x8xf32>
    "tpu.trace_stop"() : () -> ()
    %621 = vector.broadcast %553 : vector<2x1x8xf32> to vector<2x8x8xf32>
    %622 = arith.addf %620, %621 : vector<2x8x8xf32>
    %cst_120 = arith.constant dense<0xFF800000> : vector<2x8xf32>
    %623 = vector.multi_reduction <maximumf>, %622, %cst_120 [2] : vector<2x8x8xf32> to vector<2x8xf32>
    %624 = vector.shape_cast %623 : vector<2x8xf32> to vector<2x8x1xf32>
    %625 = vector.broadcast %624 : vector<2x8x1xf32> to vector<2x8x8xf32>
    %626 = arith.subf %622, %625 : vector<2x8x8xf32>
    %627 = math.exp %626 : vector<2x8x8xf32>
    %cst_121 = arith.constant dense<0.000000e+00> : vector<2x8xf32>
    %628 = vector.multi_reduction <add>, %627, %cst_121 [2] : vector<2x8x8xf32> to vector<2x8xf32>
    %629 = vector.shape_cast %628 : vector<2x8xf32> to vector<2x8x1xf32>
    %630 = tpu.reciprocal %629 {approx = true} : vector<2x8x1xf32> -> vector<2x8x1xf32>
    %631 = vector.broadcast %630 : vector<2x8x1xf32> to vector<2x8x8xf32>
    %632 = arith.mulf %627, %631 : vector<2x8x8xf32>
    %633 = arith.truncf %632 : vector<2x8x8xf32> to vector<2x8x8xbf16>
    "tpu.trace_start"() <{level = 10 : i32, message = "bqk,bkd->bqd"}> : () -> ()
    %cst_122 = arith.constant dense<0.000000e+00> : vector<2x8x8xf32>
    %634 = tpu.matmul %633, %619, %cst_122 {dimension_numbers = #tpu.dot_dimension_numbers<[2], [1], [1], [2], [0, 0, 0, 1, 1, 2], [0], [0]>} : vector<2x8x8xbf16>, vector<2x8x8xbf16>, vector<2x8x8xf32> -> vector<2x8x8xf32>
    "tpu.trace_stop"() : () -> ()
    %635 = vector.shape_cast %634 : vector<2x8x8xf32> to vector<16x8xf32>
    %636 = vector.extract_strided_slice %554 {offsets = [16, 0], sizes = [8, 32], strides = [1, 1]} : vector<32x32xf32> to vector<8x32xf32>
    %637 = arith.truncf %635 : vector<16x8xf32> to vector<16x8xbf16>
    %638 = arith.truncf %636 : vector<8x32xf32> to vector<8x32xbf16>
    %cst_123 = arith.constant dense<0.000000e+00> : vector<16x32xf32>
    %639 = tpu.matmul %637, %638, %cst_123 {dimension_numbers = #tpu.dot_dimension_numbers<[1], [0], [0], [1], [0, 0, 1, 1], [], []>} : vector<16x8xbf16>, vector<8x32xbf16>, vector<16x32xf32> -> vector<16x32xf32>
    %640 = arith.addf %611, %639 : vector<16x32xf32>
    %641 = vector.extract_strided_slice %539 {offsets = [0, 0, 24], sizes = [2, 8, 8], strides = [1, 1, 1]} : vector<2x8x32xf32> to vector<2x8x8xf32>
    %cst_124 = arith.constant 0.353553385 : f32
    %642 = vector.broadcast %cst_124 : f32 to vector<2x8x8xf32>
    %643 = arith.mulf %641, %642 : vector<2x8x8xf32>
    %644 = arith.truncf %643 : vector<2x8x8xf32> to vector<2x8x8xbf16>
    %645 = vector.extract_strided_slice %550 {offsets = [0, 0, 24], sizes = [2, 8, 8], strides = [1, 1, 1]} : vector<2x8x32xf32> to vector<2x8x8xf32>
    %646 = arith.truncf %645 : vector<2x8x8xf32> to vector<2x8x8xbf16>
    %647 = vector.extract_strided_slice %552 {offsets = [0, 0, 24], sizes = [2, 8, 8], strides = [1, 1, 1]} : vector<2x8x32xf32> to vector<2x8x8xf32>
    %648 = arith.truncf %647 : vector<2x8x8xf32> to vector<2x8x8xbf16>
    "tpu.trace_start"() <{level = 10 : i32, message = "bqd,bkd->bqk"}> : () -> ()
    %cst_125 = arith.constant dense<0.000000e+00> : vector<2x8x8xf32>
    %649 = tpu.matmul %644, %646, %cst_125 {dimension_numbers = #tpu.dot_dimension_numbers<[2], [2], [1], [1], [0, 0, 0, 1, 1, 1], [0], [0]>} : vector<2x8x8xbf16>, vector<2x8x8xbf16>, vector<2x8x8xf32> -> vector<2x8x8xf32>
    "tpu.trace_stop"() : () -> ()
    %650 = vector.broadcast %553 : vector<2x1x8xf32> to vector<2x8x8xf32>
    %651 = arith.addf %649, %650 : vector<2x8x8xf32>
    %cst_126 = arith.constant dense<0xFF800000> : vector<2x8xf32>
    %652 = vector.multi_reduction <maximumf>, %651, %cst_126 [2] : vector<2x8x8xf32> to vector<2x8xf32>
    %653 = vector.shape_cast %652 : vector<2x8xf32> to vector<2x8x1xf32>
    %654 = vector.broadcast %653 : vector<2x8x1xf32> to vector<2x8x8xf32>
    %655 = arith.subf %651, %654 : vector<2x8x8xf32>
    %656 = math.exp %655 : vector<2x8x8xf32>
    %cst_127 = arith.constant dense<0.000000e+00> : vector<2x8xf32>
    %657 = vector.multi_reduction <add>, %656, %cst_127 [2] : vector<2x8x8xf32> to vector<2x8xf32>
    %658 = vector.shape_cast %657 : vector<2x8xf32> to vector<2x8x1xf32>
    %659 = tpu.reciprocal %658 {approx = true} : vector<2x8x1xf32> -> vector<2x8x1xf32>
    %660 = vector.broadcast %659 : vector<2x8x1xf32> to vector<2x8x8xf32>
    %661 = arith.mulf %656, %660 : vector<2x8x8xf32>
    %662 = arith.truncf %661 : vector<2x8x8xf32> to vector<2x8x8xbf16>
    "tpu.trace_start"() <{level = 10 : i32, message = "bqk,bkd->bqd"}> : () -> ()
    %cst_128 = arith.constant dense<0.000000e+00> : vector<2x8x8xf32>
    %663 = tpu.matmul %662, %648, %cst_128 {dimension_numbers = #tpu.dot_dimension_numbers<[2], [1], [1], [2], [0, 0, 0, 1, 1, 2], [0], [0]>} : vector<2x8x8xbf16>, vector<2x8x8xbf16>, vector<2x8x8xf32> -> vector<2x8x8xf32>
    "tpu.trace_stop"() : () -> ()
    %664 = vector.shape_cast %663 : vector<2x8x8xf32> to vector<16x8xf32>
    %665 = vector.extract_strided_slice %554 {offsets = [24, 0], sizes = [8, 32], strides = [1, 1]} : vector<32x32xf32> to vector<8x32xf32>
    %666 = arith.truncf %664 : vector<16x8xf32> to vector<16x8xbf16>
    %667 = arith.truncf %665 : vector<8x32xf32> to vector<8x32xbf16>
    %cst_129 = arith.constant dense<0.000000e+00> : vector<16x32xf32>
    %668 = tpu.matmul %666, %667, %cst_129 {dimension_numbers = #tpu.dot_dimension_numbers<[1], [0], [0], [1], [0, 0, 1, 1], [], []>} : vector<16x8xbf16>, vector<8x32xbf16>, vector<16x32xf32> -> vector<16x32xf32>
    %669 = arith.addf %640, %668 : vector<16x32xf32>
    %c0_130 = arith.constant 0 : index
    %c0_131 = arith.constant 0 : index
    %670 = vector.load %arg11[%c0_130, %c0_131] : memref<1x32xf32, #tpu.memory_space<vmem>>, vector<1x32xf32>
    %671 = vector.broadcast %670 : vector<1x32xf32> to vector<16x32xf32>
    %672 = arith.addf %669, %671 : vector<16x32xf32>
    %c0_132 = arith.constant 0 : index
    %c0_133 = arith.constant 0 : index
    %673 = vector.load %arg12[%c0_132, %c0_133] : memref<32x128xf32, #tpu.memory_space<vmem>>, vector<32x128xf32>
    %674 = arith.truncf %672 : vector<16x32xf32> to vector<16x32xbf16>
    %675 = arith.truncf %673 : vector<32x128xf32> to vector<32x128xbf16>
    %cst_134 = arith.constant dense<0.000000e+00> : vector<16x128xf32>
    %676 = tpu.matmul %674, %675, %cst_134 {dimension_numbers = #tpu.dot_dimension_numbers<[1], [0], [0], [1], [0, 0, 1, 1], [], []>} : vector<16x32xbf16>, vector<32x128xbf16>, vector<16x128xf32> -> vector<16x128xf32>
    %c0_135 = arith.constant 0 : index
    %c0_136 = arith.constant 0 : index
    %677 = vector.load %arg13[%c0_135, %c0_136] : memref<1x128xf32, #tpu.memory_space<vmem>>, vector<1x128xf32>
    %678 = vector.broadcast %677 : vector<1x128xf32> to vector<16x128xf32>
    %679 = arith.addf %676, %678 : vector<16x128xf32>
    %680 = vector.shape_cast %679 : vector<16x128xf32> to vector<2x8x128xf32>
    %c0_137 = arith.constant 0 : index
    %c0_138 = arith.constant 0 : index
    %c0_139 = arith.constant 0 : index
    %681 = vector.load %arg14[%c0_137, %c0_138, %c0_139] : memref<2x8x128xf32, #tpu.memory_space<vmem>>, vector<2x8x128xf32>
    tpu.vector_store %arg14[%c0_137, %c0_138, %c0_139], %680 {strides = array<i32>} : memref<2x8x128xf32, #tpu.memory_space<vmem>>, vector<2x8x128xf32>,
    return
  }
}

</mosaic_0001>

<llo_original>
// kernel: transformer_lstm_forward.2
$region0: #{transformer_lstm_forward.2}
  #allocation0 [shape = 'u32[]', space=smem, size = 0x4, offset = 0x4, fixed_abs, tag = 'smem constant byte address 0x4 - core index']
  #allocation1 [shape = 'u32[144,128]{1,0:T(1,128)}', space=vmem, size = 0x12000, scoped, tag = 'internal scratch']
  %s0 = inlined_call_operand.vmem [shape: f32[2,8,32], index: 0, kind: input, shape index: {}]
  %s1 = inlined_call_operand.vmem [shape: f32[1,8,32], index: 1, kind: input, shape index: {}]
  %s2 = inlined_call_operand.vmem [shape: f32[2,1,8], index: 2, kind: input, shape index: {}]
  %s3 = inlined_call_operand.vmem [shape: f32[2,1,32], index: 3, kind: input, shape index: {}]
  %s4 = inlined_call_operand.vmem [shape: f32[2,1,32], index: 4, kind: input, shape index: {}]
  %s5 = inlined_call_operand.vmem [shape: f32[2,32,96], index: 5, kind: input, shape index: {}]
  %s6 = inlined_call_operand.vmem [shape: f32[2,1,96], index: 6, kind: input, shape index: {}]
  %s7 = inlined_call_operand.vmem [shape: f32[2,32,32], index: 7, kind: input, shape index: {}]
  %s8 = inlined_call_operand.vmem [shape: f32[2,1,32], index: 8, kind: input, shape index: {}]
  %s9 = inlined_call_operand.vmem [shape: f32[2,1,32], index: 9, kind: input, shape index: {}]
  %s10 = inlined_call_operand.vmem [shape: f32[2,1,32], index: 10, kind: input, shape index: {}]
  %s11 = inlined_call_operand.vmem [shape: f32[2,32,64], index: 11, kind: input, shape index: {}]
  %s12 = inlined_call_operand.vmem [shape: f32[2,1,64], index: 12, kind: input, shape index: {}]
  %s13 = inlined_call_operand.vmem [shape: f32[2,64,32], index: 13, kind: input, shape index: {}]
  %s14 = inlined_call_operand.vmem [shape: f32[2,1,32], index: 14, kind: input, shape index: {}]
  %s15 = inlined_call_operand.vmem [shape: f32[1,32], index: 15, kind: input, shape index: {}]
  %s16 = inlined_call_operand.vmem [shape: f32[1,32], index: 16, kind: input, shape index: {}]
  %s17 = inlined_call_operand.vmem [shape: f32[2,8,32], index: 17, kind: output, shape index: {}]
  %s18 = sld [smem:[#allocation0]]
  $region78: #{transformer_lstm_forward.2} parent=0
    _
  %s20 = ssub.s32 1, %s18
  %s21 = scalar_select 0, %s20, %s18
  // Predicated region
  $region2: #{transformer_lstm_forward.2} parent=0 // pred_check
    _
  $region3: #{transformer_lstm_forward.2} parent=0 // pred_check_branch
    %23 = sbr.rel (0) target = $region5
  $region4: #{transformer_lstm_forward.2} parent=0 // pred_region
    _
  $region5: #{transformer_lstm_forward.2} parent=0 // pred_fallthru
    _
  // Predicated region
  $region6: #{transformer_lstm_forward.2} parent=0 // pred_check
    _
  $region7: #{transformer_lstm_forward.2} parent=0 // pred_check_branch
    %25 = sbr.rel (0) target = $region9
  $region8: #{transformer_lstm_forward.2} parent=0 // pred_region
    _
  $region9: #{transformer_lstm_forward.2} parent=0 // pred_fallthru
    _
  // Predicated region
  $region10: #{transformer_lstm_forward.2} parent=0 // pred_check
    _
  $region11: #{transformer_lstm_forward.2} parent=0 // pred_check_branch
    %27 = sbr.rel (0) target = $region13
  $region12: #{transformer_lstm_forward.2} parent=0 // pred_region
    _
  $region13: #{transformer_lstm_forward.2} parent=0 // pred_fallthru
    _
  // Predicated region
  $region14: #{transformer_lstm_forward.2} parent=0 // pred_check
    _
  $region15: #{transformer_lstm_forward.2} parent=0 // pred_check_branch
    %29 = sbr.rel (0) target = $region17
  $region16: #{transformer_lstm_forward.2} parent=0 // pred_region
    _
  $region17: #{transformer_lstm_forward.2} parent=0 // pred_fallthru
    _
  // Predicated region
  $region18: #{transformer_lstm_forward.2} parent=0 // pred_check
    _
  $region19: #{transformer_lstm_forward.2} parent=0 // pred_check_branch
    %31 = sbr.rel (0) target = $region21
  $region20: #{transformer_lstm_forward.2} parent=0 // pred_region
    _
  $region21: #{transformer_lstm_forward.2} parent=0 // pred_fallthru
    _
  // Predicated region
  $region22: #{transformer_lstm_forward.2} parent=0 // pred_check
    _
  $region23: #{transformer_lstm_forward.2} parent=0 // pred_check_branch
    %33 = sbr.rel (0) target = $region25
  $region24: #{transformer_lstm_forward.2} parent=0 // pred_region
    _
  $region25: #{transformer_lstm_forward.2} parent=0 // pred_fallthru
    _
  // Predicated region
  $region26: #{transformer_lstm_forward.2} parent=0 // pred_check
    _
  $region27: #{transformer_lstm_forward.2} parent=0 // pred_check_branch
    %35 = sbr.rel (0) target = $region29
  $region28: #{transformer_lstm_forward.2} parent=0 // pred_region
    _
  $region29: #{transformer_lstm_forward.2} parent=0 // pred_fallthru
    _
  // Predicated region
  $region30: #{transformer_lstm_forward.2} parent=0 // pred_check
    _
  $region31: #{transformer_lstm_forward.2} parent=0 // pred_check_branch
    %37 = sbr.rel (0) target = $region33
  $region32: #{transformer_lstm_forward.2} parent=0 // pred_region
    _
  $region33: #{transformer_lstm_forward.2} parent=0 // pred_fallthru
    _
  // Predicated region
  $region34: #{transformer_lstm_forward.2} parent=0 // pred_check
    _
  $region35: #{transformer_lstm_forward.2} parent=0 // pred_check_branch
    %39 = sbr.rel (0) target = $region37
  $region36: #{transformer_lstm_forward.2} parent=0 // pred_region
    _
  $region37: #{transformer_lstm_forward.2} parent=0 // pred_fallthru
    _
  // Predicated region
  $region38: #{transformer_lstm_forward.2} parent=0 // pred_check
    _
  $region39: #{transformer_lstm_forward.2} parent=0 // pred_check_branch
    %41 = sbr.rel (0) target = $region41
  $region40: #{transformer_lstm_forward.2} parent=0 // pred_region
    _
  $region41: #{transformer_lstm_forward.2} parent=0 // pred_fallthru
    _
  // Predicated region
  $region42: #{transformer_lstm_forward.2} parent=0 // pred_check
    _
  $region43: #{transformer_lstm_forward.2} parent=0 // pred_check_branch
    %43 = sbr.rel (0) target = $region45
  $region44: #{transformer_lstm_forward.2} parent=0 // pred_region
    _
  $region45: #{transformer_lstm_forward.2} parent=0 // pred_fallthru
    _
  // Predicated region
  $region46: #{transformer_lstm_forward.2} parent=0 // pred_check
    _
  $region47: #{transformer_lstm_forward.2} parent=0 // pred_check_branch
    %45 = sbr.rel (0) target = $region49
  $region48: #{transformer_lstm_forward.2} parent=0 // pred_region
    _
  $region49: #{transformer_lstm_forward.2} parent=0 // pred_fallthru
    _
  // Predicated region
  $region50: #{transformer_lstm_forward.2} parent=0 // pred_check
    _
  $region51: #{transformer_lstm_forward.2} parent=0 // pred_check_branch
    %47 = sbr.rel (0) target = $region53
  $region52: #{transformer_lstm_forward.2} parent=0 // pred_region
    _
  $region53: #{transformer_lstm_forward.2} parent=0 // pred_fallthru
    _
  // Predicated region
  $region54: #{transformer_lstm_forward.2} parent=0 // pred_check
    _
  $region55: #{transformer_lstm_forward.2} parent=0 // pred_check_branch
    %49 = sbr.rel (0) target = $region57
  $region56: #{transformer_lstm_forward.2} parent=0 // pred_region
    _
  $region57: #{transformer_lstm_forward.2} parent=0 // pred_fallthru
    _
  // Predicated region
  $region58: #{transformer_lstm_forward.2} parent=0 // pred_check
    _
  $region59: #{transformer_lstm_forward.2} parent=0 // pred_check_branch
    %51 = sbr.rel (0) target = $region61
  $region60: #{transformer_lstm_forward.2} parent=0 // pred_region
    _
  $region61: #{transformer_lstm_forward.2} parent=0 // pred_fallthru
    _
  // Predicated region
  $region62: #{transformer_lstm_forward.2} parent=0 // pred_check
    _
  $region63: #{transformer_lstm_forward.2} parent=0 // pred_check_branch
    %53 = sbr.rel (0) target = $region65
  $region64: #{transformer_lstm_forward.2} parent=0 // pred_region
    _
  $region65: #{transformer_lstm_forward.2} parent=0 // pred_fallthru
    _
  // Predicated region
  $region66: #{transformer_lstm_forward.2} parent=0 // pred_check
    _
  $region67: #{transformer_lstm_forward.2} parent=0 // pred_check_branch
    %55 = sbr.rel (0) target = $region69
  $region68: #{transformer_lstm_forward.2} parent=0 // pred_region
    _
  $region69: #{transformer_lstm_forward.2} parent=0 // pred_fallthru
    _
  %v57 = vld [vmem:[%s2] sm:$0x1]
  %v58 = vld [vmem:[%s2 + $0x1] sm:$0x1]
  %v59 = vld [vmem:[%s0] sm:$0xff]
  %v60 = vld [vmem:[%s0 + $0x8] sm:$0xff]
  %v61 = vmul.f32 %v59, 5.656854
  %v62 = vmul.f32 %v60, 5.656854
  %v63 = vld [vmem:[%s1] sm:$0xff]
  %v64 = vadd.f32 %v61, %v63
  %v65 = vadd.f32 %v62, %v63
  %v66 = vld [vmem:[%s3] sm:$0x1]
  %v67 = vld [vmem:[%s4] sm:$0x1]
  %vm68 = vcmask 261120
  %v69 = vsel %vm68, %v64, 0.0
  %70 = vadd.xlane.f32.xlu0 %v69
  %v71 = vpop.xlane.xlu0 %70
  %v72 = vsel %vm68, %v65, 0.0
  %73 = vadd.xlane.f32.xlu0 %v72
  %v74 = vpop.xlane.xlu0 %73
  %v75 = vrcp.pop 32.0
  %v76 = vmul.f32 %v71, %v75
  %v77 = vmul.f32 %v74, %v75
  %v78 = vsub.f32 %v64, %v76
  %v79 = vsub.f32 %v65, %v77
  %v80 = vmul.f32 %v78, %v78
  %v81 = vmul.f32 %v79, %v79
  %v82 = vsel %vm68, %v80, 0.0
  %83 = vadd.xlane.f32.xlu0 %v82
  %v84 = vpop.xlane.xlu0 %83
  %v85 = vsel %vm68, %v81, 0.0
  %86 = vadd.xlane.f32.xlu0 %v85
  %v87 = vpop.xlane.xlu0 %86
  %v88 = vmul.f32 %v84, %v75
  %v89 = vmul.f32 %v87, %v75
  %v90 = vadd.f32 %v88, 1e-05
  %v91 = vadd.f32 %v89, 1e-05
  %v92 = vrsqrt.pop %v90
  %v93 = vrsqrt.pop %v91
  %v94 = vmul.f32 %v78, %v92
  %v95 = vmul.f32 %v79, %v93
  %v97 = vlaneseq
  %v98 = vshrl.u32 %v97, 7
  %v99 = vsub.s32 0, %v98
  %v100 = vrot.slane %v66, %v99
  %v102 = vmul.f32 %v94, %v100
  %v103 = vmul.f32 %v95, %v100
  %v105 = vlaneseq
  %v106 = vshrl.u32 %v105, 7
  %v107 = vsub.s32 0, %v106
  %v108 = vrot.slane %v67, %v107
  %v110 = vadd.f32 %v102, %v108
  %v111 = vadd.f32 %v103, %v108
  %v112 = vld [vmem:[%s5] sm:$0xff]
  %v113 = vld [vmem:[%s5 + $0x8] sm:$0xff]
  %v114 = vld [vmem:[%s5 + $0x10] sm:$0xff]
  %v115 = vld [vmem:[%s5 + $0x18] sm:$0xff]
  %v116 = vpack.c.bf16 %v111, %v110
  %v117 = vpack.c.bf16 %v113, %v112
  %v118 = vpack.c.bf16 %v115, %v114
  %v119 = vld [vmem:[%s6] sm:$0x1]
  %v121 = vlaneseq
  %v122 = vshrl.u32 %v121, 7
  %v123 = vsub.s32 0, %v122
  %v124 = vrot.slane %v119, %v123
  %v127 = vsel %vm68, %v116, 0
  %129 = vmatprep.subr.bf16.mxu0 0
  %130 = vmatpush1.bf16.msra.mxu0 0
  %131 = vmatprep.subr.bf16.mxu0 0
  %132 = vmatpush1.bf16.msra.mxu0 0
  %133 = vmatprep.subr.bf16.mxu0 0
  %134 = vmatpush1.bf16.msra.mxu0 0
  %135 = vmatprep.subr.bf16.mxu0 0
  %136 = vmatpush1.bf16.msra.mxu0 0
  %137 = vmatprep.subr.bf16.mxu0 0
  %138 = vmatpush1.bf16.msra.mxu0 0
  %139 = vmatprep.subr.bf16.mxu0 0
  %140 = vmatpush1.bf16.msra.mxu0 0
  %141 = vmatprep.subr.bf16.mxu0 0
  %142 = vmatpush1.bf16.msra.mxu0 %v118
  %143 = vmatprep.subr.bf16.mxu0 0
  %144 = vmatpush1.bf16.msra.mxu0 %v117
  %145 = vmatprep.subr.bf16.mxu0 0
  %146 = vmatpush2.bf16.msra.mxu0 0
  %147 = vmatprep.subr.bf16.mxu0 0
  %148 = vmatpush2.bf16.msra.mxu0 0
  %149 = vmatprep.subr.bf16.mxu0 0
  %150 = vmatpush2.bf16.msra.mxu0 0
  %151 = vmatprep.subr.bf16.mxu0 0
  %152 = vmatpush2.bf16.msra.mxu0 0
  %153 = vmatprep.subr.bf16.mxu0 0
  %154 = vmatpush2.bf16.msra.mxu0 0
  %155 = vmatprep.subr.bf16.mxu0 0
  %156 = vmatpush2.bf16.msra.mxu0 0
  %157 = vmatprep.subr.bf16.mxu0 0
  %158 = vmatpush2.bf16.msra.mxu0 0
  %159 = vmatprep.subr.bf16.mxu0 0
  %160 = vmatpush2.bf16.msra.mxu0 0
  %161 = vmatprep.mubr.bf16.mxu0 0
  %162 = vmatmul.mubr.bf16.gmra.mxu0 %v127
  %v163 = vpop.f32.mrf.mxu0
  %v164 = vadd.f32 %v124, %v163
  %v165 = vpop.f32.mrf.mxu0
  %v166 = vpop.f32.mrf.mxu0
  %v167 = vadd.f32 %v124, %v166
  %v168 = vpop.f32.mrf.mxu0
  %169 = vdwg.mxu0
  %v170 = vld [vmem:[%s7] sm:$0xff]
  %v171 = vld [vmem:[%s7 + $0x8] sm:$0xff]
  %v172 = vld [vmem:[%s7 + $0x10] sm:$0xff]
  %v173 = vld [vmem:[%s7 + $0x18] sm:$0xff]
  %v174 = vmul.f32 %v164, 0.35355338
  %v175 = vmul.f32 %v167, 0.35355338
  %v176 = vpack.c.bf16 %v174, %v174
  %v177 = vpack.c.bf16 %v175, %v175
  %v178 = vpack.c.bf16 %v164, %v164
  %v179 = vpack.c.bf16 %v167, %v167
  %v182 = vlaneseq
  %v183 = vshrl.u32 %v182, 7
  %v184 = vsub.s32 0, %v183
  %v185 = vrot.slane %v57, %v184
  %v186 = vlaneseq
  %v187 = vshrl.u32 %v186, 7
  %v188 = vsub.s32 0, %v187
  %v189 = vrot.slane %v58, %v188
  %193 = vrot.lane.b32.xlu0 %v178, 96
  %v194 = vpop.permute.xlu0 %193
  %vm195 = vcmask 64512
  %v197 = vsel %vm195, %v176, 0
  %v200 = vsel %vm195, %v194, 0
  %202 = vmatprep.subr.bf16.mxu0 0
  %203 = vmatpush1.bf16.xpose.msra.mxu0 0
  %204 = vmatprep.subr.bf16.mxu0 0
  %205 = vmatpush1.bf16.xpose.msra.mxu0 0
  %206 = vmatprep.subr.bf16.mxu0 0
  %207 = vmatpush1.bf16.xpose.msra.mxu0 0
  %208 = vmatprep.subr.bf16.mxu0 0
  %209 = vmatpush1.bf16.xpose.msra.mxu0 0
  %210 = vmatprep.subr.bf16.mxu0 0
  %211 = vmatpush1.bf16.xpose.msra.mxu0 0
  %212 = vmatprep.subr.bf16.mxu0 0
  %213 = vmatpush1.bf16.xpose.msra.mxu0 0
  %214 = vmatprep.subr.bf16.mxu0 0
  %215 = vmatpush1.bf16.xpose.msra.mxu0 0
  %216 = vmatprep.subr.bf16.mxu0 0
  %217 = vmatpush1.bf16.xpose.msra.mxu0 %v200
  %218 = vmatprep.subr.bf16.mxu0 0
  %219 = vmatpush2.bf16.xpose.msra.mxu0 0
  %220 = vmatprep.subr.bf16.mxu0 0
  %221 = vmatpush2.bf16.xpose.msra.mxu0 0
  %222 = vmatprep.subr.bf16.mxu0 0
  %223 = vmatpush2.bf16.xpose.msra.mxu0 0
  %224 = vmatprep.subr.bf16.mxu0 0
  %225 = vmatpush2.bf16.xpose.msra.mxu0 0
  %226 = vmatprep.subr.bf16.mxu0 0
  %227 = vmatpush2.bf16.xpose.msra.mxu0 0
  %228 = vmatprep.subr.bf16.mxu0 0
  %229 = vmatpush2.bf16.xpose.msra.mxu0 0
  %230 = vmatprep.subr.bf16.mxu0 0
  %231 = vmatpush2.bf16.xpose.msra.mxu0 0
  %232 = vmatprep.subr.bf16.mxu0 0
  %233 = vmatpush2.bf16.xpose.msra.mxu0 0
  %234 = vmatprep.mubr.bf16.mxu0 0
  %235 = vmatmul.mubr.bf16.gmra.mxu0 %v197
  %v236 = vpop.f32.mrf.mxu0
  %v237 = vadd.f32 %v185, %v236
  %v238 = vpop.f32.mrf.mxu0
  %v239 = vpop.f32.mrf.mxu0
  %v240 = vpop.f32.mrf.mxu0
  %241 = vdwg.mxu0
  %243 = vrot.lane.b32.xlu0 %v179, 96
  %v244 = vpop.permute.xlu0 %243
  %v246 = vsel %vm195, %v177, 0
  %v249 = vsel %vm195, %v244, 0
  %251 = vmatprep.subr.bf16.mxu0 0
  %252 = vmatpush1.bf16.xpose.msra.mxu0 0
  %253 = vmatprep.subr.bf16.mxu0 0
  %254 = vmatpush1.bf16.xpose.msra.mxu0 0
  %255 = vmatprep.subr.bf16.mxu0 0
  %256 = vmatpush1.bf16.xpose.msra.mxu0 0
  %257 = vmatprep.subr.bf16.mxu0 0
  %258 = vmatpush1.bf16.xpose.msra.mxu0 0
  %259 = vmatprep.subr.bf16.mxu0 0
  %260 = vmatpush1.bf16.xpose.msra.mxu0 0
  %261 = vmatprep.subr.bf16.mxu0 0
  %262 = vmatpush1.bf16.xpose.msra.mxu0 0
  %263 = vmatprep.subr.bf16.mxu0 0
  %264 = vmatpush1.bf16.xpose.msra.mxu0 0
  %265 = vmatprep.subr.bf16.mxu0 0
  %266 = vmatpush1.bf16.xpose.msra.mxu0 %v249
  %267 = vmatprep.subr.bf16.mxu0 0
  %268 = vmatpush2.bf16.xpose.msra.mxu0 0
  %269 = vmatprep.subr.bf16.mxu0 0
  %270 = vmatpush2.bf16.xpose.msra.mxu0 0
  %271 = vmatprep.subr.bf16.mxu0 0
  %272 = vmatpush2.bf16.xpose.msra.mxu0 0
  %273 = vmatprep.subr.bf16.mxu0 0
  %274 = vmatpush2.bf16.xpose.msra.mxu0 0
  %275 = vmatprep.subr.bf16.mxu0 0
  %276 = vmatpush2.bf16.xpose.msra.mxu0 0
  %277 = vmatprep.subr.bf16.mxu0 0
  %278 = vmatpush2.bf16.xpose.msra.mxu0 0
  %279 = vmatprep.subr.bf16.mxu0 0
  %280 = vmatpush2.bf16.xpose.msra.mxu0 0
  %281 = vmatprep.subr.bf16.mxu0 0
  %282 = vmatpush2.bf16.xpose.msra.mxu0 0
  %283 = vmatprep.mubr.bf16.mxu0 0
  %284 = vmatmul.mubr.bf16.gmra.mxu0 %v246
  %v285 = vpop.f32.mrf.mxu0
  %v286 = vadd.f32 %v189, %v285
  %v287 = vpop.f32.mrf.mxu0
  %v288 = vpop.f32.mrf.mxu0
  %v289 = vpop.f32.mrf.mxu0
  %290 = vdwg.mxu0
  %v291 = vsel %vm195, %v237, -inf
  %292 = vmax.xlane.f32.xlu0 %v291
  %v293 = vpop.xlane.xlu0 %292
  %v294 = vsel %vm195, %v286, -inf
  %295 = vmax.xlane.f32.xlu0 %v294
  %v296 = vpop.xlane.xlu0 %295
  %v297 = vsub.f32 %v237, %v293
  %v298 = vsub.f32 %v286, %v296
  %v299 = vmul.f32 %v297, 1.442695
  %v300 = vpow.pop %v299
  %v301 = vmul.f32 %v298, 1.442695
  %v302 = vpow.pop %v301
  %v303 = vsel %vm195, %v300, 0.0
  %304 = vadd.xlane.f32.xlu0 %v303
  %v305 = vpop.xlane.xlu0 %304
  %v306 = vsel %vm195, %v302, 0.0
  %307 = vadd.xlane.f32.xlu0 %v306
  %v308 = vpop.xlane.xlu0 %307
  %v309 = vrcp.pop %v305
  %v310 = vrcp.pop %v308
  %v311 = vmul.f32 %v300, %v309
  %v312 = vmul.f32 %v302, %v310
  %v313 = vpack.c.bf16 %v311, %v311
  %v314 = vpack.c.bf16 %v312, %v312
  %315 = vrot.lane.b32.xlu0 %v178, 64
  %v316 = vpop.permute.xlu0 %315
  %v318 = vsel %vm195, %v313, 0
  %vm320 = vcmask 1043456
  %v322 = vsel %vm320, %v316, 0
  %324 = vmatprep.subr.bf16.mxu0 0
  %325 = vmatpush1.bf16.msra.mxu0 0
  %326 = vmatprep.subr.bf16.mxu0 0
  %327 = vmatpush1.bf16.msra.mxu0 0
  %328 = vmatprep.subr.bf16.mxu0 0
  %329 = vmatpush1.bf16.msra.mxu0 0
  %330 = vmatprep.subr.bf16.mxu0 0
  %331 = vmatpush1.bf16.msra.mxu0 0
  %332 = vmatprep.subr.bf16.mxu0 0
  %333 = vmatpush1.bf16.msra.mxu0 0
  %334 = vmatprep.subr.bf16.mxu0 0
  %335 = vmatpush1.bf16.msra.mxu0 0
  %336 = vmatprep.subr.bf16.mxu0 0
  %337 = vmatpush1.bf16.msra.mxu0 0
  %338 = vmatprep.subr.bf16.mxu0 0
  %339 = vmatpush1.bf16.msra.mxu0 %v322
  %340 = vmatprep.subr.bf16.mxu0 0
  %341 = vmatpush2.bf16.msra.mxu0 0
  %342 = vmatprep.subr.bf16.mxu0 0
  %343 = vmatpush2.bf16.msra.mxu0 0
  %344 = vmatprep.subr.bf16.mxu0 0
  %345 = vmatpush2.bf16.msra.mxu0 0
  %346 = vmatprep.subr.bf16.mxu0 0
  %347 = vmatpush2.bf16.msra.mxu0 0
  %348 = vmatprep.subr.bf16.mxu0 0
  %349 = vmatpush2.bf16.msra.mxu0 0
  %350 = vmatprep.subr.bf16.mxu0 0
  %351 = vmatpush2.bf16.msra.mxu0 0
  %352 = vmatprep.subr.bf16.mxu0 0
  %353 = vmatpush2.bf16.msra.mxu0 0
  %354 = vmatprep.subr.bf16.mxu0 0
  %355 = vmatpush2.bf16.msra.mxu0 0
  %356 = vmatprep.mubr.bf16.mxu0 0
  %357 = vmatmul.mubr.bf16.gmra.mxu0 %v318
  %v358 = vpop.f32.mrf.mxu0
  %v359 = vadd.f32 0.0, %v358
  %v360 = vpop.f32.mrf.mxu0
  %v361 = vpop.f32.mrf.mxu0
  %v362 = vpop.f32.mrf.mxu0
  %363 = vdwg.mxu0
  %364 = vrot.lane.b32.xlu0 %v179, 64
  %v365 = vpop.permute.xlu0 %364
  %v367 = vsel %vm195, %v314, 0
  %v370 = vsel %vm320, %v365, 0
  %372 = vmatprep.subr.bf16.mxu0 0
  %373 = vmatpush1.bf16.msra.mxu0 0
  %374 = vmatprep.subr.bf16.mxu0 0
  %375 = vmatpush1.bf16.msra.mxu0 0
  %376 = vmatprep.subr.bf16.mxu0 0
  %377 = vmatpush1.bf16.msra.mxu0 0
  %378 = vmatprep.subr.bf16.mxu0 0
  %379 = vmatpush1.bf16.msra.mxu0 0
  %380 = vmatprep.subr.bf16.mxu0 0
  %381 = vmatpush1.bf16.msra.mxu0 0
  %382 = vmatprep.subr.bf16.mxu0 0
  %383 = vmatpush1.bf16.msra.mxu0 0
  %384 = vmatprep.subr.bf16.mxu0 0
  %385 = vmatpush1.bf16.msra.mxu0 0
  %386 = vmatprep.subr.bf16.mxu0 0
  %387 = vmatpush1.bf16.msra.mxu0 %v370
  %388 = vmatprep.subr.bf16.mxu0 0
  %389 = vmatpush2.bf16.msra.mxu0 0
  %390 = vmatprep.subr.bf16.mxu0 0
  %391 = vmatpush2.bf16.msra.mxu0 0
  %392 = vmatprep.subr.bf16.mxu0 0
  %393 = vmatpush2.bf16.msra.mxu0 0
  %394 = vmatprep.subr.bf16.mxu0 0
  %395 = vmatpush2.bf16.msra.mxu0 0
  %396 = vmatprep.subr.bf16.mxu0 0
  %397 = vmatpush2.bf16.msra.mxu0 0
  %398 = vmatprep.subr.bf16.mxu0 0
  %399 = vmatpush2.bf16.msra.mxu0 0
  %400 = vmatprep.subr.bf16.mxu0 0
  %401 = vmatpush2.bf16.msra.mxu0 0
  %402 = vmatprep.subr.bf16.mxu0 0
  %403 = vmatpush2.bf16.msra.mxu0 0
  %404 = vmatprep.mubr.bf16.mxu0 0
  %405 = vmatmul.mubr.bf16.gmra.mxu0 %v367
  %v406 = vpop.f32.mrf.mxu0
  %v407 = vadd.f32 0.0, %v406
  %v408 = vpop.f32.mrf.mxu0
  %v409 = vpop.f32.mrf.mxu0
  %v410 = vpop.f32.mrf.mxu0
  %411 = vdwg.mxu0
  %v412 = vpack.c.bf16 %v407, %v359
  %v413 = vpack.c.bf16 %v170, %v170
  %415 = vrot.lane.b32.xlu0 %v176, 120
  %v416 = vpop.permute.xlu0 %415
  %417 = vrot.lane.b32.xlu0 %v178, 88
  %v418 = vpop.permute.xlu0 %417
  %v420 = vsel %vm195, %v416, 0
  %v423 = vsel %vm195, %v418, 0
  %425 = vmatprep.subr.bf16.mxu0 0
  %426 = vmatpush1.bf16.xpose.msra.mxu0 0
  %427 = vmatprep.subr.bf16.mxu0 0
  %428 = vmatpush1.bf16.xpose.msra.mxu0 0
  %429 = vmatprep.subr.bf16.mxu0 0
  %430 = vmatpush1.bf16.xpose.msra.mxu0 0
  %431 = vmatprep.subr.bf16.mxu0 0
  %432 = vmatpush1.bf16.xpose.msra.mxu0 0
  %433 = vmatprep.subr.bf16.mxu0 0
  %434 = vmatpush1.bf16.xpose.msra.mxu0 0
  %435 = vmatprep.subr.bf16.mxu0 0
  %436 = vmatpush1.bf16.xpose.msra.mxu0 0
  %437 = vmatprep.subr.bf16.mxu0 0
  %438 = vmatpush1.bf16.xpose.msra.mxu0 0
  %439 = vmatprep.subr.bf16.mxu0 0
  %440 = vmatpush1.bf16.xpose.msra.mxu0 %v423
  %441 = vmatprep.subr.bf16.mxu0 0
  %442 = vmatpush2.bf16.xpose.msra.mxu0 0
  %443 = vmatprep.subr.bf16.mxu0 0
  %444 = vmatpush2.bf16.xpose.msra.mxu0 0
  %445 = vmatprep.subr.bf16.mxu0 0
  %446 = vmatpush2.bf16.xpose.msra.mxu0 0
  %447 = vmatprep.subr.bf16.mxu0 0
  %448 = vmatpush2.bf16.xpose.msra.mxu0 0
  %449 = vmatprep.subr.bf16.mxu0 0
  %450 = vmatpush2.bf16.xpose.msra.mxu0 0
  %451 = vmatprep.subr.bf16.mxu0 0
  %452 = vmatpush2.bf16.xpose.msra.mxu0 0
  %453 = vmatprep.subr.bf16.mxu0 0
  %454 = vmatpush2.bf16.xpose.msra.mxu0 0
  %455 = vmatprep.subr.bf16.mxu0 0
  %456 = vmatpush2.bf16.xpose.msra.mxu0 0
  %457 = vmatprep.mubr.bf16.mxu0 0
  %458 = vmatmul.mubr.bf16.gmra.mxu0 %v420
  %v459 = vpop.f32.mrf.mxu0
  %v460 = vadd.f32 %v185, %v459
  %v461 = vpop.f32.mrf.mxu0
  %v462 = vpop.f32.mrf.mxu0
  %v463 = vpop.f32.mrf.mxu0
  %464 = vdwg.mxu0
  %466 = vrot.lane.b32.xlu0 %v177, 120
  %v467 = vpop.permute.xlu0 %466
  %468 = vrot.lane.b32.xlu0 %v179, 88
  %v469 = vpop.permute.xlu0 %468
  %v471 = vsel %vm195, %v467, 0
  %v474 = vsel %vm195, %v469, 0
  %476 = vmatprep.subr.bf16.mxu0 0
  %477 = vmatpush1.bf16.xpose.msra.mxu0 0
  %478 = vmatprep.subr.bf16.mxu0 0
  %479 = vmatpush1.bf16.xpose.msra.mxu0 0
  %480 = vmatprep.subr.bf16.mxu0 0
  %481 = vmatpush1.bf16.xpose.msra.mxu0 0
  %482 = vmatprep.subr.bf16.mxu0 0
  %483 = vmatpush1.bf16.xpose.msra.mxu0 0
  %484 = vmatprep.subr.bf16.mxu0 0
  %485 = vmatpush1.bf16.xpose.msra.mxu0 0
  %486 = vmatprep.subr.bf16.mxu0 0
  %487 = vmatpush1.bf16.xpose.msra.mxu0 0
  %488 = vmatprep.subr.bf16.mxu0 0
  %489 = vmatpush1.bf16.xpose.msra.mxu0 0
  %490 = vmatprep.subr.bf16.mxu0 0
  %491 = vmatpush1.bf16.xpose.msra.mxu0 %v474
  %492 = vmatprep.subr.bf16.mxu0 0
  %493 = vmatpush2.bf16.xpose.msra.mxu0 0
  %494 = vmatprep.subr.bf16.mxu0 0
  %495 = vmatpush2.bf16.xpose.msra.mxu0 0
  %496 = vmatprep.subr.bf16.mxu0 0
  %497 = vmatpush2.bf16.xpose.msra.mxu0 0
  %498 = vmatprep.subr.bf16.mxu0 0
  %499 = vmatpush2.bf16.xpose.msra.mxu0 0
  %500 = vmatprep.subr.bf16.mxu0 0
  %501 = vmatpush2.bf16.xpose.msra.mxu0 0
  %502 = vmatprep.subr.bf16.mxu0 0
  %503 = vmatpush2.bf16.xpose.msra.mxu0 0
  %504 = vmatprep.subr.bf16.mxu0 0
  %505 = vmatpush2.bf16.xpose.msra.mxu0 0
  %506 = vmatprep.subr.bf16.mxu0 0
  %507 = vmatpush2.bf16.xpose.msra.mxu0 0
  %508 = vmatprep.mubr.bf16.mxu0 0
  %509 = vmatmul.mubr.bf16.gmra.mxu0 %v471
  %v510 = vpop.f32.mrf.mxu0
  %v511 = vadd.f32 %v189, %v510
  %v512 = vpop.f32.mrf.mxu0
  %v513 = vpop.f32.mrf.mxu0
  %v514 = vpop.f32.mrf.mxu0
  %515 = vdwg.mxu0
  %v516 = vsel %vm195, %v460, -inf
  %517 = vmax.xlane.f32.xlu0 %v516
  %v518 = vpop.xlane.xlu0 %517
  %v519 = vsel %vm195, %v511, -inf
  %520 = vmax.xlane.f32.xlu0 %v519
  %v521 = vpop.xlane.xlu0 %520
  %v522 = vsub.f32 %v460, %v518
  %v523 = vsub.f32 %v511, %v521
  %v524 = vmul.f32 %v522, 1.442695
  %v525 = vpow.pop %v524
  %v526 = vmul.f32 %v523, 1.442695
  %v527 = vpow.pop %v526
  %v528 = vsel %vm195, %v525, 0.0
  %529 = vadd.xlane.f32.xlu0 %v528
  %v530 = vpop.xlane.xlu0 %529
  %v531 = vsel %vm195, %v527, 0.0
  %532 = vadd.xlane.f32.xlu0 %v531
  %v533 = vpop.xlane.xlu0 %532
  %v534 = vrcp.pop %v530
  %v535 = vrcp.pop %v533
  %v536 = vmul.f32 %v525, %v534
  %v537 = vmul.f32 %v527, %v535
  %v538 = vpack.c.bf16 %v536, %v536
  %v539 = vpack.c.bf16 %v537, %v537
  %540 = vrot.lane.b32.xlu0 %v178, 56
  %v541 = vpop.permute.xlu0 %540
  %v543 = vsel %vm195, %v538, 0
  %v546 = vsel %vm320, %v541, 0
  %548 = vmatprep.subr.bf16.mxu0 0
  %549 = vmatpush1.bf16.msra.mxu0 0
  %550 = vmatprep.subr.bf16.mxu0 0
  %551 = vmatpush1.bf16.msra.mxu0 0
  %552 = vmatprep.subr.bf16.mxu0 0
  %553 = vmatpush1.bf16.msra.mxu0 0
  %554 = vmatprep.subr.bf16.mxu0 0
  %555 = vmatpush1.bf16.msra.mxu0 0
  %556 = vmatprep.subr.bf16.mxu0 0
  %557 = vmatpush1.bf16.msra.mxu0 0
  %558 = vmatprep.subr.bf16.mxu0 0
  %559 = vmatpush1.bf16.msra.mxu0 0
  %560 = vmatprep.subr.bf16.mxu0 0
  %561 = vmatpush1.bf16.msra.mxu0 0
  %562 = vmatprep.subr.bf16.mxu0 0
  %563 = vmatpush1.bf16.msra.mxu0 %v546
  %564 = vmatprep.subr.bf16.mxu0 0
  %565 = vmatpush2.bf16.msra.mxu0 0
  %566 = vmatprep.subr.bf16.mxu0 0
  %567 = vmatpush2.bf16.msra.mxu0 0
  %568 = vmatprep.subr.bf16.mxu0 0
  %569 = vmatpush2.bf16.msra.mxu0 0
  %570 = vmatprep.subr.bf16.mxu0 0
  %571 = vmatpush2.bf16.msra.mxu0 0
  %572 = vmatprep.subr.bf16.mxu0 0
  %573 = vmatpush2.bf16.msra.mxu0 0
  %574 = vmatprep.subr.bf16.mxu0 0
  %575 = vmatpush2.bf16.msra.mxu0 0
  %576 = vmatprep.subr.bf16.mxu0 0
  %577 = vmatpush2.bf16.msra.mxu0 0
  %578 = vmatprep.subr.bf16.mxu0 0
  %579 = vmatpush2.bf16.msra.mxu0 0
  %580 = vmatprep.mubr.bf16.mxu0 0
  %581 = vmatmul.mubr.bf16.gmra.mxu0 %v543
  %v582 = vpop.f32.mrf.mxu0
  %v583 = vadd.f32 0.0, %v582
  %v584 = vpop.f32.mrf.mxu0
  %v585 = vpop.f32.mrf.mxu0
  %v586 = vpop.f32.mrf.mxu0
  %587 = vdwg.mxu0
  %588 = vrot.lane.b32.xlu0 %v179, 56
  %v589 = vpop.permute.xlu0 %588
  %v591 = vsel %vm195, %v539, 0
  %v594 = vsel %vm320, %v589, 0
  %596 = vmatprep.subr.bf16.mxu0 0
  %597 = vmatpush1.bf16.msra.mxu0 0
  %598 = vmatprep.subr.bf16.mxu0 0
  %599 = vmatpush1.bf16.msra.mxu0 0
  %600 = vmatprep.subr.bf16.mxu0 0
  %601 = vmatpush1.bf16.msra.mxu0 0
  %602 = vmatprep.subr.bf16.mxu0 0
  %603 = vmatpush1.bf16.msra.mxu0 0
  %604 = vmatprep.subr.bf16.mxu0 0
  %605 = vmatpush1.bf16.msra.mxu0 0
  %606 = vmatprep.subr.bf16.mxu0 0
  %607 = vmatpush1.bf16.msra.mxu0 0
  %608 = vmatprep.subr.bf16.mxu0 0
  %609 = vmatpush1.bf16.msra.mxu0 0
  %610 = vmatprep.subr.bf16.mxu0 0
  %611 = vmatpush1.bf16.msra.mxu0 %v594
  %612 = vmatprep.subr.bf16.mxu0 0
  %613 = vmatpush2.bf16.msra.mxu0 0
  %614 = vmatprep.subr.bf16.mxu0 0
  %615 = vmatpush2.bf16.msra.mxu0 0
  %616 = vmatprep.subr.bf16.mxu0 0
  %617 = vmatpush2.bf16.msra.mxu0 0
  %618 = vmatprep.subr.bf16.mxu0 0
  %619 = vmatpush2.bf16.msra.mxu0 0
  %620 = vmatprep.subr.bf16.mxu0 0
  %621 = vmatpush2.bf16.msra.mxu0 0
  %622 = vmatprep.subr.bf16.mxu0 0
  %623 = vmatpush2.bf16.msra.mxu0 0
  %624 = vmatprep.subr.bf16.mxu0 0
  %625 = vmatpush2.bf16.msra.mxu0 0
  %626 = vmatprep.subr.bf16.mxu0 0
  %627 = vmatpush2.bf16.msra.mxu0 0
  %628 = vmatprep.mubr.bf16.mxu0 0
  %629 = vmatmul.mubr.bf16.gmra.mxu0 %v591
  %v630 = vpop.f32.mrf.mxu0
  %v631 = vadd.f32 0.0, %v630
  %v632 = vpop.f32.mrf.mxu0
  %v633 = vpop.f32.mrf.mxu0
  %v634 = vpop.f32.mrf.mxu0
  %635 = vdwg.mxu0
  %v636 = vpack.c.bf16 %v631, %v583
  %v637 = vpack.c.bf16 %v171, %v171
  %v639 = vsel %vm195, %v636, 0
  %v642 = vsel %vm320, %v637, 0
  %644 = vmatprep.subr.bf16.mxu0 0
  %645 = vmatpush1.bf16.msra.mxu0 0
  %646 = vmatprep.subr.bf16.mxu0 0
  %647 = vmatpush1.bf16.msra.mxu0 0
  %648 = vmatprep.subr.bf16.mxu0 0
  %649 = vmatpush1.bf16.msra.mxu0 0
  %650 = vmatprep.subr.bf16.mxu0 0
  %651 = vmatpush1.bf16.msra.mxu0 0
  %652 = vmatprep.subr.bf16.mxu0 0
  %653 = vmatpush1.bf16.msra.mxu0 0
  %654 = vmatprep.subr.bf16.mxu0 0
  %655 = vmatpush1.bf16.msra.mxu0 0
  %656 = vmatprep.subr.bf16.mxu0 0
  %657 = vmatpush1.bf16.msra.mxu0 0
  %658 = vmatprep.subr.bf16.mxu0 0
  %659 = vmatpush1.bf16.msra.mxu0 %v642
  %660 = vmatprep.subr.bf16.mxu0 0
  %661 = vmatpush2.bf16.msra.mxu0 0
  %662 = vmatprep.subr.bf16.mxu0 0
  %663 = vmatpush2.bf16.msra.mxu0 0
  %664 = vmatprep.subr.bf16.mxu0 0
  %665 = vmatpush2.bf16.msra.mxu0 0
  %666 = vmatprep.subr.bf16.mxu0 0
  %667 = vmatpush2.bf16.msra.mxu0 0
  %668 = vmatprep.subr.bf16.mxu0 0
  %669 = vmatpush2.bf16.msra.mxu0 0
  %670 = vmatprep.subr.bf16.mxu0 0
  %671 = vmatpush2.bf16.msra.mxu0 0
  %672 = vmatprep.subr.bf16.mxu0 0
  %673 = vmatpush2.bf16.msra.mxu0 0
  %674 = vmatprep.subr.bf16.mxu0 0
  %675 = vmatpush2.bf16.msra.mxu0 0
  %676 = vmatprep.mubr.bf16.mxu0 0
  %677 = vmatmul.mubr.bf16.gmra.mxu0 %v639
  %v678 = vpop.f32.mrf.mxu0
  %v679 = vadd.f32 0.0, %v678
  %v680 = vpop.f32.mrf.mxu0
  %v681 = vpop.f32.mrf.mxu0
  %v682 = vadd.f32 0.0, %v681
  %v683 = vpop.f32.mrf.mxu0
  %684 = vdwg.mxu0
  %v686 = vsel %vm195, %v412, 0
  %v689 = vsel %vm320, %v413, 0
  %691 = vmatprep.subr.bf16.mxu0 0
  %692 = vmatpush1.bf16.msra.mxu0 0
  %693 = vmatprep.subr.bf16.mxu0 0
  %694 = vmatpush1.bf16.msra.mxu0 0
  %695 = vmatprep.subr.bf16.mxu0 0
  %696 = vmatpush1.bf16.msra.mxu0 0
  %697 = vmatprep.subr.bf16.mxu0 0
  %698 = vmatpush1.bf16.msra.mxu0 0
  %699 = vmatprep.subr.bf16.mxu0 0
  %700 = vmatpush1.bf16.msra.mxu0 0
  %701 = vmatprep.subr.bf16.mxu0 0
  %702 = vmatpush1.bf16.msra.mxu0 0
  %703 = vmatprep.subr.bf16.mxu0 0
  %704 = vmatpush1.bf16.msra.mxu0 0
  %705 = vmatprep.subr.bf16.mxu0 0
  %706 = vmatpush1.bf16.msra.mxu0 %v689
  %707 = vmatprep.subr.bf16.mxu0 0
  %708 = vmatpush2.bf16.msra.mxu0 0
  %709 = vmatprep.subr.bf16.mxu0 0
  %710 = vmatpush2.bf16.msra.mxu0 0
  %711 = vmatprep.subr.bf16.mxu0 0
  %712 = vmatpush2.bf16.msra.mxu0 0
  %713 = vmatprep.subr.bf16.mxu0 0
  %714 = vmatpush2.bf16.msra.mxu0 0
  %715 = vmatprep.subr.bf16.mxu0 0
  %716 = vmatpush2.bf16.msra.mxu0 0
  %717 = vmatprep.subr.bf16.mxu0 0
  %718 = vmatpush2.bf16.msra.mxu0 0
  %719 = vmatprep.subr.bf16.mxu0 0
  %720 = vmatpush2.bf16.msra.mxu0 0
  %721 = vmatprep.subr.bf16.mxu0 0
  %722 = vmatpush2.bf16.msra.mxu0 0
  %723 = vmatprep.mubr.bf16.mxu0 0
  %724 = vmatmul.mubr.bf16.gmra.mxu0 %v686
  %v725 = vpop.f32.mrf.mxu0
  %v726 = vadd.f32 %v679, %v725
  %v727 = vpop.f32.mrf.mxu0
  %v728 = vpop.f32.mrf.mxu0
  %v729 = vadd.f32 %v682, %v728
  %v730 = vpop.f32.mrf.mxu0
  %731 = vdwg.mxu0
  %732 = vrot.lane.b32.xlu0 %v176, 112
  %v733 = vpop.permute.xlu0 %732
  %734 = vrot.lane.b32.xlu0 %v178, 80
  %v735 = vpop.permute.xlu0 %734
  %v737 = vsel %vm195, %v733, 0
  %v740 = vsel %vm195, %v735, 0
  %742 = vmatprep.subr.bf16.mxu0 0
  %743 = vmatpush1.bf16.xpose.msra.mxu0 0
  %744 = vmatprep.subr.bf16.mxu0 0
  %745 = vmatpush1.bf16.xpose.msra.mxu0 0
  %746 = vmatprep.subr.bf16.mxu0 0
  %747 = vmatpush1.bf16.xpose.msra.mxu0 0
  %748 = vmatprep.subr.bf16.mxu0 0
  %749 = vmatpush1.bf16.xpose.msra.mxu0 0
  %750 = vmatprep.subr.bf16.mxu0 0
  %751 = vmatpush1.bf16.xpose.msra.mxu0 0
  %752 = vmatprep.subr.bf16.mxu0 0
  %753 = vmatpush1.bf16.xpose.msra.mxu0 0
  %754 = vmatprep.subr.bf16.mxu0 0
  %755 = vmatpush1.bf16.xpose.msra.mxu0 0
  %756 = vmatprep.subr.bf16.mxu0 0
  %757 = vmatpush1.bf16.xpose.msra.mxu0 %v740
  %758 = vmatprep.subr.bf16.mxu0 0
  %759 = vmatpush2.bf16.xpose.msra.mxu0 0
  %760 = vmatprep.subr.bf16.mxu0 0
  %761 = vmatpush2.bf16.xpose.msra.mxu0 0
  %762 = vmatprep.subr.bf16.mxu0 0
  %763 = vmatpush2.bf16.xpose.msra.mxu0 0
  %764 = vmatprep.subr.bf16.mxu0 0
  %765 = vmatpush2.bf16.xpose.msra.mxu0 0
  %766 = vmatprep.subr.bf16.mxu0 0
  %767 = vmatpush2.bf16.xpose.msra.mxu0 0
  %768 = vmatprep.subr.bf16.mxu0 0
  %769 = vmatpush2.bf16.xpose.msra.mxu0 0
  %770 = vmatprep.subr.bf16.mxu0 0
  %771 = vmatpush2.bf16.xpose.msra.mxu0 0
  %772 = vmatprep.subr.bf16.mxu0 0
  %773 = vmatpush2.bf16.xpose.msra.mxu0 0
  %774 = vmatprep.mubr.bf16.mxu0 0
  %775 = vmatmul.mubr.bf16.gmra.mxu0 %v737
  %v776 = vpop.f32.mrf.mxu0
  %v777 = vadd.f32 %v185, %v776
  %v778 = vpop.f32.mrf.mxu0
  %v779 = vpop.f32.mrf.mxu0
  %v780 = vpop.f32.mrf.mxu0
  %781 = vdwg.mxu0
  %782 = vrot.lane.b32.xlu0 %v177, 112
  %v783 = vpop.permute.xlu0 %782
  %784 = vrot.lane.b32.xlu0 %v179, 80
  %v785 = vpop.permute.xlu0 %784
  %v787 = vsel %vm195, %v783, 0
  %v790 = vsel %vm195, %v785, 0
  %792 = vmatprep.subr.bf16.mxu0 0
  %793 = vmatpush1.bf16.xpose.msra.mxu0 0
  %794 = vmatprep.subr.bf16.mxu0 0
  %795 = vmatpush1.bf16.xpose.msra.mxu0 0
  %796 = vmatprep.subr.bf16.mxu0 0
  %797 = vmatpush1.bf16.xpose.msra.mxu0 0
  %798 = vmatprep.subr.bf16.mxu0 0
  %799 = vmatpush1.bf16.xpose.msra.mxu0 0
  %800 = vmatprep.subr.bf16.mxu0 0
  %801 = vmatpush1.bf16.xpose.msra.mxu0 0
  %802 = vmatprep.subr.bf16.mxu0 0
  %803 = vmatpush1.bf16.xpose.msra.mxu0 0
  %804 = vmatprep.subr.bf16.mxu0 0
  %805 = vmatpush1.bf16.xpose.msra.mxu0 0
  %806 = vmatprep.subr.bf16.mxu0 0
  %807 = vmatpush1.bf16.xpose.msra.mxu0 %v790
  %808 = vmatprep.subr.bf16.mxu0 0
  %809 = vmatpush2.bf16.xpose.msra.mxu0 0
  %810 = vmatprep.subr.bf16.mxu0 0
  %811 = vmatpush2.bf16.xpose.msra.mxu0 0
  %812 = vmatprep.subr.bf16.mxu0 0
  %813 = vmatpush2.bf16.xpose.msra.mxu0 0
  %814 = vmatprep.subr.bf16.mxu0 0
  %815 = vmatpush2.bf16.xpose.msra.mxu0 0
  %816 = vmatprep.subr.bf16.mxu0 0
  %817 = vmatpush2.bf16.xpose.msra.mxu0 0
  %818 = vmatprep.subr.bf16.mxu0 0
  %819 = vmatpush2.bf16.xpose.msra.mxu0 0
  %820 = vmatprep.subr.bf16.mxu0 0
  %821 = vmatpush2.bf16.xpose.msra.mxu0 0
  %822 = vmatprep.subr.bf16.mxu0 0
  %823 = vmatpush2.bf16.xpose.msra.mxu0 0
  %824 = vmatprep.mubr.bf16.mxu0 0
  %825 = vmatmul.mubr.bf16.gmra.mxu0 %v787
  %v826 = vpop.f32.mrf.mxu0
  %v827 = vadd.f32 %v189, %v826
  %v828 = vpop.f32.mrf.mxu0
  %v829 = vpop.f32.mrf.mxu0
  %v830 = vpop.f32.mrf.mxu0
  %831 = vdwg.mxu0
  %v832 = vsel %vm195, %v777, -inf
  %833 = vmax.xlane.f32.xlu0 %v832
  %v834 = vpop.xlane.xlu0 %833
  %v835 = vsel %vm195, %v827, -inf
  %836 = vmax.xlane.f32.xlu0 %v835
  %v837 = vpop.xlane.xlu0 %836
  %v838 = vsub.f32 %v777, %v834
  %v839 = vsub.f32 %v827, %v837
  %v840 = vmul.f32 %v838, 1.442695
  %v841 = vpow.pop %v840
  %v842 = vmul.f32 %v839, 1.442695
  %v843 = vpow.pop %v842
  %v844 = vsel %vm195, %v841, 0.0
  %845 = vadd.xlane.f32.xlu0 %v844
  %v846 = vpop.xlane.xlu0 %845
  %v847 = vsel %vm195, %v843, 0.0
  %848 = vadd.xlane.f32.xlu0 %v847
  %v849 = vpop.xlane.xlu0 %848
  %v850 = vrcp.pop %v846
  %v851 = vrcp.pop %v849
  %v852 = vmul.f32 %v841, %v850
  %v853 = vmul.f32 %v843, %v851
  %v854 = vpack.c.bf16 %v852, %v852
  %v855 = vpack.c.bf16 %v853, %v853
  %856 = vrot.lane.b32.xlu0 %v178, 48
  %v857 = vpop.permute.xlu0 %856
  %v859 = vsel %vm195, %v854, 0
  %v862 = vsel %vm320, %v857, 0
  %864 = vmatprep.subr.bf16.mxu0 0
  %865 = vmatpush1.bf16.msra.mxu0 0
  %866 = vmatprep.subr.bf16.mxu0 0
  %867 = vmatpush1.bf16.msra.mxu0 0
  %868 = vmatprep.subr.bf16.mxu0 0
  %869 = vmatpush1.bf16.msra.mxu0 0
  %870 = vmatprep.subr.bf16.mxu0 0
  %871 = vmatpush1.bf16.msra.mxu0 0
  %872 = vmatprep.subr.bf16.mxu0 0
  %873 = vmatpush1.bf16.msra.mxu0 0
  %874 = vmatprep.subr.bf16.mxu0 0
  %875 = vmatpush1.bf16.msra.mxu0 0
  %876 = vmatprep.subr.bf16.mxu0 0
  %877 = vmatpush1.bf16.msra.mxu0 0
  %878 = vmatprep.subr.bf16.mxu0 0
  %879 = vmatpush1.bf16.msra.mxu0 %v862
  %880 = vmatprep.subr.bf16.mxu0 0
  %881 = vmatpush2.bf16.msra.mxu0 0
  %882 = vmatprep.subr.bf16.mxu0 0
  %883 = vmatpush2.bf16.msra.mxu0 0
  %884 = vmatprep.subr.bf16.mxu0 0
  %885 = vmatpush2.bf16.msra.mxu0 0
  %886 = vmatprep.subr.bf16.mxu0 0
  %887 = vmatpush2.bf16.msra.mxu0 0
  %888 = vmatprep.subr.bf16.mxu0 0
  %889 = vmatpush2.bf16.msra.mxu0 0
  %890 = vmatprep.subr.bf16.mxu0 0
  %891 = vmatpush2.bf16.msra.mxu0 0
  %892 = vmatprep.subr.bf16.mxu0 0
  %893 = vmatpush2.bf16.msra.mxu0 0
  %894 = vmatprep.subr.bf16.mxu0 0
  %895 = vmatpush2.bf16.msra.mxu0 0
  %896 = vmatprep.mubr.bf16.mxu0 0
  %897 = vmatmul.mubr.bf16.gmra.mxu0 %v859
  %v898 = vpop.f32.mrf.mxu0
  %v899 = vadd.f32 0.0, %v898
  %v900 = vpop.f32.mrf.mxu0
  %v901 = vpop.f32.mrf.mxu0
  %v902 = vpop.f32.mrf.mxu0
  %903 = vdwg.mxu0
  %904 = vrot.lane.b32.xlu0 %v179, 48
  %v905 = vpop.permute.xlu0 %904
  %v907 = vsel %vm195, %v855, 0
  %v910 = vsel %vm320, %v905, 0
  %912 = vmatprep.subr.bf16.mxu0 0
  %913 = vmatpush1.bf16.msra.mxu0 0
  %914 = vmatprep.subr.bf16.mxu0 0
  %915 = vmatpush1.bf16.msra.mxu0 0
  %916 = vmatprep.subr.bf16.mxu0 0
  %917 = vmatpush1.bf16.msra.mxu0 0
  %918 = vmatprep.subr.bf16.mxu0 0
  %919 = vmatpush1.bf16.msra.mxu0 0
  %920 = vmatprep.subr.bf16.mxu0 0
  %921 = vmatpush1.bf16.msra.mxu0 0
  %922 = vmatprep.subr.bf16.mxu0 0
  %923 = vmatpush1.bf16.msra.mxu0 0
  %924 = vmatprep.subr.bf16.mxu0 0
  %925 = vmatpush1.bf16.msra.mxu0 0
  %926 = vmatprep.subr.bf16.mxu0 0
  %927 = vmatpush1.bf16.msra.mxu0 %v910
  %928 = vmatprep.subr.bf16.mxu0 0
  %929 = vmatpush2.bf16.msra.mxu0 0
  %930 = vmatprep.subr.bf16.mxu0 0
  %931 = vmatpush2.bf16.msra.mxu0 0
  %932 = vmatprep.subr.bf16.mxu0 0
  %933 = vmatpush2.bf16.msra.mxu0 0
  %934 = vmatprep.subr.bf16.mxu0 0
  %935 = vmatpush2.bf16.msra.mxu0 0
  %936 = vmatprep.subr.bf16.mxu0 0
  %937 = vmatpush2.bf16.msra.mxu0 0
  %938 = vmatprep.subr.bf16.mxu0 0
  %939 = vmatpush2.bf16.msra.mxu0 0
  %940 = vmatprep.subr.bf16.mxu0 0
  %941 = vmatpush2.bf16.msra.mxu0 0
  %942 = vmatprep.subr.bf16.mxu0 0
  %943 = vmatpush2.bf16.msra.mxu0 0
  %944 = vmatprep.mubr.bf16.mxu0 0
  %945 = vmatmul.mubr.bf16.gmra.mxu0 %v907
  %v946 = vpop.f32.mrf.mxu0
  %v947 = vadd.f32 0.0, %v946
  %v948 = vpop.f32.mrf.mxu0
  %v949 = vpop.f32.mrf.mxu0
  %v950 = vpop.f32.mrf.mxu0
  %951 = vdwg.mxu0
  %v952 = vpack.c.bf16 %v947, %v899
  %v953 = vpack.c.bf16 %v172, %v172
  %v955 = vsel %vm195, %v952, 0
  %v958 = vsel %vm320, %v953, 0
  %960 = vmatprep.subr.bf16.mxu0 0
  %961 = vmatpush1.bf16.msra.mxu0 0
  %962 = vmatprep.subr.bf16.mxu0 0
  %963 = vmatpush1.bf16.msra.mxu0 0
  %964 = vmatprep.subr.bf16.mxu0 0
  %965 = vmatpush1.bf16.msra.mxu0 0
  %966 = vmatprep.subr.bf16.mxu0 0
  %967 = vmatpush1.bf16.msra.mxu0 0
  %968 = vmatprep.subr.bf16.mxu0 0
  %969 = vmatpush1.bf16.msra.mxu0 0
  %970 = vmatprep.subr.bf16.mxu0 0
  %971 = vmatpush1.bf16.msra.mxu0 0
  %972 = vmatprep.subr.bf16.mxu0 0
  %973 = vmatpush1.bf16.msra.mxu0 0
  %974 = vmatprep.subr.bf16.mxu0 0
  %975 = vmatpush1.bf16.msra.mxu0 %v958
  %976 = vmatprep.subr.bf16.mxu0 0
  %977 = vmatpush2.bf16.msra.mxu0 0
  %978 = vmatprep.subr.bf16.mxu0 0
  %979 = vmatpush2.bf16.msra.mxu0 0
  %980 = vmatprep.subr.bf16.mxu0 0
  %981 = vmatpush2.bf16.msra.mxu0 0
  %982 = vmatprep.subr.bf16.mxu0 0
  %983 = vmatpush2.bf16.msra.mxu0 0
  %984 = vmatprep.subr.bf16.mxu0 0
  %985 = vmatpush2.bf16.msra.mxu0 0
  %986 = vmatprep.subr.bf16.mxu0 0
  %987 = vmatpush2.bf16.msra.mxu0 0
  %988 = vmatprep.subr.bf16.mxu0 0
  %989 = vmatpush2.bf16.msra.mxu0 0
  %990 = vmatprep.subr.bf16.mxu0 0
  %991 = vmatpush2.bf16.msra.mxu0 0
  %992 = vmatprep.mubr.bf16.mxu0 0
  %993 = vmatmul.mubr.bf16.gmra.mxu0 %v955
  %v994 = vpop.f32.mrf.mxu0
  %v995 = vadd.f32 0.0, %v994
  %v996 = vpop.f32.mrf.mxu0
  %v997 = vpop.f32.mrf.mxu0
  %v998 = vadd.f32 0.0, %v997
  %v999 = vpop.f32.mrf.mxu0
  %1000 = vdwg.mxu0
  %v1001 = vadd.f32 %v726, %v995
  %v1002 = vadd.f32 %v729, %v998
  %1003 = vrot.lane.b32.xlu0 %v176, 104
  %v1004 = vpop.permute.xlu0 %1003
  %1005 = vrot.lane.b32.xlu0 %v178, 72
  %v1006 = vpop.permute.xlu0 %1005
  %v1008 = vsel %vm195, %v1004, 0
  %v1011 = vsel %vm195, %v1006, 0
  %1013 = vmatprep.subr.bf16.mxu0 0
  %1014 = vmatpush1.bf16.xpose.msra.mxu0 0
  %1015 = vmatprep.subr.bf16.mxu0 0
  %1016 = vmatpush1.bf16.xpose.msra.mxu0 0
  %1017 = vmatprep.subr.bf16.mxu0 0
  %1018 = vmatpush1.bf16.xpose.msra.mxu0 0
  %1019 = vmatprep.subr.bf16.mxu0 0
  %1020 = vmatpush1.bf16.xpose.msra.mxu0 0
  %1021 = vmatprep.subr.bf16.mxu0 0
  %1022 = vmatpush1.bf16.xpose.msra.mxu0 0
  %1023 = vmatprep.subr.bf16.mxu0 0
  %1024 = vmatpush1.bf16.xpose.msra.mxu0 0
  %1025 = vmatprep.subr.bf16.mxu0 0
  %1026 = vmatpush1.bf16.xpose.msra.mxu0 0
  %1027 = vmatprep.subr.bf16.mxu0 0
  %1028 = vmatpush1.bf16.xpose.msra.mxu0 %v1011
  %1029 = vmatprep.subr.bf16.mxu0 0
  %1030 = vmatpush2.bf16.xpose.msra.mxu0 0
  %1031 = vmatprep.subr.bf16.mxu0 0
  %1032 = vmatpush2.bf16.xpose.msra.mxu0 0
  %1033 = vmatprep.subr.bf16.mxu0 0
  %1034 = vmatpush2.bf16.xpose.msra.mxu0 0
  %1035 = vmatprep.subr.bf16.mxu0 0
  %1036 = vmatpush2.bf16.xpose.msra.mxu0 0
  %1037 = vmatprep.subr.bf16.mxu0 0
  %1038 = vmatpush2.bf16.xpose.msra.mxu0 0
  %1039 = vmatprep.subr.bf16.mxu0 0
  %1040 = vmatpush2.bf16.xpose.msra.mxu0 0
  %1041 = vmatprep.subr.bf16.mxu0 0
  %1042 = vmatpush2.bf16.xpose.msra.mxu0 0
  %1043 = vmatprep.subr.bf16.mxu0 0
  %1044 = vmatpush2.bf16.xpose.msra.mxu0 0
  %1045 = vmatprep.mubr.bf16.mxu0 0
  %1046 = vmatmul.mubr.bf16.gmra.mxu0 %v1008
  %v1047 = vpop.f32.mrf.mxu0
  %v1048 = vadd.f32 %v185, %v1047
  %v1049 = vpop.f32.mrf.mxu0
  %v1050 = vpop.f32.mrf.mxu0
  %v1051 = vpop.f32.mrf.mxu0
  %1052 = vdwg.mxu0
  %1053 = vrot.lane.b32.xlu0 %v177, 104
  %v1054 = vpop.permute.xlu0 %1053
  %1055 = vrot.lane.b32.xlu0 %v179, 72
  %v1056 = vpop.permute.xlu0 %1055
  %v1058 = vsel %vm195, %v1054, 0
  %v1061 = vsel %vm195, %v1056, 0
  %1063 = vmatprep.subr.bf16.mxu0 0
  %1064 = vmatpush1.bf16.xpose.msra.mxu0 0
  %1065 = vmatprep.subr.bf16.mxu0 0
  %1066 = vmatpush1.bf16.xpose.msra.mxu0 0
  %1067 = vmatprep.subr.bf16.mxu0 0
  %1068 = vmatpush1.bf16.xpose.msra.mxu0 0
  %1069 = vmatprep.subr.bf16.mxu0 0
  %1070 = vmatpush1.bf16.xpose.msra.mxu0 0
  %1071 = vmatprep.subr.bf16.mxu0 0
  %1072 = vmatpush1.bf16.xpose.msra.mxu0 0
  %1073 = vmatprep.subr.bf16.mxu0 0
  %1074 = vmatpush1.bf16.xpose.msra.mxu0 0
  %1075 = vmatprep.subr.bf16.mxu0 0
  %1076 = vmatpush1.bf16.xpose.msra.mxu0 0
  %1077 = vmatprep.subr.bf16.mxu0 0
  %1078 = vmatpush1.bf16.xpose.msra.mxu0 %v1061
  %1079 = vmatprep.subr.bf16.mxu0 0
  %1080 = vmatpush2.bf16.xpose.msra.mxu0 0
  %1081 = vmatprep.subr.bf16.mxu0 0
  %1082 = vmatpush2.bf16.xpose.msra.mxu0 0
  %1083 = vmatprep.subr.bf16.mxu0 0
  %1084 = vmatpush2.bf16.xpose.msra.mxu0 0
  %1085 = vmatprep.subr.bf16.mxu0 0
  %1086 = vmatpush2.bf16.xpose.msra.mxu0 0
  %1087 = vmatprep.subr.bf16.mxu0 0
  %1088 = vmatpush2.bf16.xpose.msra.mxu0 0
  %1089 = vmatprep.subr.bf16.mxu0 0
  %1090 = vmatpush2.bf16.xpose.msra.mxu0 0
  %1091 = vmatprep.subr.bf16.mxu0 0
  %1092 = vmatpush2.bf16.xpose.msra.mxu0 0
  %1093 = vmatprep.subr.bf16.mxu0 0
  %1094 = vmatpush2.bf16.xpose.msra.mxu0 0
  %1095 = vmatprep.mubr.bf16.mxu0 0
  %1096 = vmatmul.mubr.bf16.gmra.mxu0 %v1058
  %v1097 = vpop.f32.mrf.mxu0
  %v1098 = vadd.f32 %v189, %v1097
  %v1099 = vpop.f32.mrf.mxu0
  %v1100 = vpop.f32.mrf.mxu0
  %v1101 = vpop.f32.mrf.mxu0
  %1102 = vdwg.mxu0
  %v1103 = vsel %vm195, %v1048, -inf
  %1104 = vmax.xlane.f32.xlu0 %v1103
  %v1105 = vpop.xlane.xlu0 %1104
  %v1106 = vsel %vm195, %v1098, -inf
  %1107 = vmax.xlane.f32.xlu0 %v1106
  %v1108 = vpop.xlane.xlu0 %1107
  %v1109 = vsub.f32 %v1048, %v1105
  %v1110 = vsub.f32 %v1098, %v1108
  %v1111 = vmul.f32 %v1109, 1.442695
  %v1112 = vpow.pop %v1111
  %v1113 = vmul.f32 %v1110, 1.442695
  %v1114 = vpow.pop %v1113
  %v1115 = vsel %vm195, %v1112, 0.0
  %1116 = vadd.xlane.f32.xlu0 %v1115
  %v1117 = vpop.xlane.xlu0 %1116
  %v1118 = vsel %vm195, %v1114, 0.0
  %1119 = vadd.xlane.f32.xlu0 %v1118
  %v1120 = vpop.xlane.xlu0 %1119
  %v1121 = vrcp.pop %v1117
  %v1122 = vrcp.pop %v1120
  %v1123 = vmul.f32 %v1112, %v1121
  %v1124 = vmul.f32 %v1114, %v1122
  %v1125 = vpack.c.bf16 %v1123, %v1123
  %v1126 = vpack.c.bf16 %v1124, %v1124
  %1127 = vrot.lane.b32.xlu0 %v178, 40
  %v1128 = vpop.permute.xlu0 %1127
  %v1130 = vsel %vm195, %v1125, 0
  %v1133 = vsel %vm320, %v1128, 0
  %1135 = vmatprep.subr.bf16.mxu0 0
  %1136 = vmatpush1.bf16.msra.mxu0 0
  %1137 = vmatprep.subr.bf16.mxu0 0
  %1138 = vmatpush1.bf16.msra.mxu0 0
  %1139 = vmatprep.subr.bf16.mxu0 0
  %1140 = vmatpush1.bf16.msra.mxu0 0
  %1141 = vmatprep.subr.bf16.mxu0 0
  %1142 = vmatpush1.bf16.msra.mxu0 0
  %1143 = vmatprep.subr.bf16.mxu0 0
  %1144 = vmatpush1.bf16.msra.mxu0 0
  %1145 = vmatprep.subr.bf16.mxu0 0
  %1146 = vmatpush1.bf16.msra.mxu0 0
  %1147 = vmatprep.subr.bf16.mxu0 0
  %1148 = vmatpush1.bf16.msra.mxu0 0
  %1149 = vmatprep.subr.bf16.mxu0 0
  %1150 = vmatpush1.bf16.msra.mxu0 %v1133
  %1151 = vmatprep.subr.bf16.mxu0 0
  %1152 = vmatpush2.bf16.msra.mxu0 0
  %1153 = vmatprep.subr.bf16.mxu0 0
  %1154 = vmatpush2.bf16.msra.mxu0 0
  %1155 = vmatprep.subr.bf16.mxu0 0
  %1156 = vmatpush2.bf16.msra.mxu0 0
  %1157 = vmatprep.subr.bf16.mxu0 0
  %1158 = vmatpush2.bf16.msra.mxu0 0
  %1159 = vmatprep.subr.bf16.mxu0 0
  %1160 = vmatpush2.bf16.msra.mxu0 0
  %1161 = vmatprep.subr.bf16.mxu0 0
  %1162 = vmatpush2.bf16.msra.mxu0 0
  %1163 = vmatprep.subr.bf16.mxu0 0
  %1164 = vmatpush2.bf16.msra.mxu0 0
  %1165 = vmatprep.subr.bf16.mxu0 0
  %1166 = vmatpush2.bf16.msra.mxu0 0
  %1167 = vmatprep.mubr.bf16.mxu0 0
  %1168 = vmatmul.mubr.bf16.gmra.mxu0 %v1130
  %v1169 = vpop.f32.mrf.mxu0
  %v1170 = vadd.f32 0.0, %v1169
  %v1171 = vpop.f32.mrf.mxu0
  %v1172 = vpop.f32.mrf.mxu0
  %v1173 = vpop.f32.mrf.mxu0
  %1174 = vdwg.mxu0
  %1175 = vrot.lane.b32.xlu0 %v179, 40
  %v1176 = vpop.permute.xlu0 %1175
  %v1178 = vsel %vm195, %v1126, 0
  %v1181 = vsel %vm320, %v1176, 0
  %1183 = vmatprep.subr.bf16.mxu0 0
  %1184 = vmatpush1.bf16.msra.mxu0 0
  %1185 = vmatprep.subr.bf16.mxu0 0
  %1186 = vmatpush1.bf16.msra.mxu0 0
  %1187 = vmatprep.subr.bf16.mxu0 0
  %1188 = vmatpush1.bf16.msra.mxu0 0
  %1189 = vmatprep.subr.bf16.mxu0 0
  %1190 = vmatpush1.bf16.msra.mxu0 0
  %1191 = vmatprep.subr.bf16.mxu0 0
  %1192 = vmatpush1.bf16.msra.mxu0 0
  %1193 = vmatprep.subr.bf16.mxu0 0
  %1194 = vmatpush1.bf16.msra.mxu0 0
  %1195 = vmatprep.subr.bf16.mxu0 0
  %1196 = vmatpush1.bf16.msra.mxu0 0
  %1197 = vmatprep.subr.bf16.mxu0 0
  %1198 = vmatpush1.bf16.msra.mxu0 %v1181
  %1199 = vmatprep.subr.bf16.mxu0 0
  %1200 = vmatpush2.bf16.msra.mxu0 0
  %1201 = vmatprep.subr.bf16.mxu0 0
  %1202 = vmatpush2.bf16.msra.mxu0 0
  %1203 = vmatprep.subr.bf16.mxu0 0
  %1204 = vmatpush2.bf16.msra.mxu0 0
  %1205 = vmatprep.subr.bf16.mxu0 0
  %1206 = vmatpush2.bf16.msra.mxu0 0
  %1207 = vmatprep.subr.bf16.mxu0 0
  %1208 = vmatpush2.bf16.msra.mxu0 0
  %1209 = vmatprep.subr.bf16.mxu0 0
  %1210 = vmatpush2.bf16.msra.mxu0 0
  %1211 = vmatprep.subr.bf16.mxu0 0
  %1212 = vmatpush2.bf16.msra.mxu0 0
  %1213 = vmatprep.subr.bf16.mxu0 0
  %1214 = vmatpush2.bf16.msra.mxu0 0
  %1215 = vmatprep.mubr.bf16.mxu0 0
  %1216 = vmatmul.mubr.bf16.gmra.mxu0 %v1178
  %v1217 = vpop.f32.mrf.mxu0
  %v1218 = vadd.f32 0.0, %v1217
  %v1219 = vpop.f32.mrf.mxu0
  %v1220 = vpop.f32.mrf.mxu0
  %v1221 = vpop.f32.mrf.mxu0
  %1222 = vdwg.mxu0
  %v1223 = vpack.c.bf16 %v1218, %v1170
  %v1224 = vpack.c.bf16 %v173, %v173
  %v1226 = vsel %vm195, %v1223, 0
  %v1229 = vsel %vm320, %v1224, 0
  %1231 = vmatprep.subr.bf16.mxu0 0
  %1232 = vmatpush1.bf16.msra.mxu0 0
  %1233 = vmatprep.subr.bf16.mxu0 0
  %1234 = vmatpush1.bf16.msra.mxu0 0
  %1235 = vmatprep.subr.bf16.mxu0 0
  %1236 = vmatpush1.bf16.msra.mxu0 0
  %1237 = vmatprep.subr.bf16.mxu0 0
  %1238 = vmatpush1.bf16.msra.mxu0 0
  %1239 = vmatprep.subr.bf16.mxu0 0
  %1240 = vmatpush1.bf16.msra.mxu0 0
  %1241 = vmatprep.subr.bf16.mxu0 0
  %1242 = vmatpush1.bf16.msra.mxu0 0
  %1243 = vmatprep.subr.bf16.mxu0 0
  %1244 = vmatpush1.bf16.msra.mxu0 0
  %1245 = vmatprep.subr.bf16.mxu0 0
  %1246 = vmatpush1.bf16.msra.mxu0 %v1229
  %1247 = vmatprep.subr.bf16.mxu0 0
  %1248 = vmatpush2.bf16.msra.mxu0 0
  %1249 = vmatprep.subr.bf16.mxu0 0
  %1250 = vmatpush2.bf16.msra.mxu0 0
  %1251 = vmatprep.subr.bf16.mxu0 0
  %1252 = vmatpush2.bf16.msra.mxu0 0
  %1253 = vmatprep.subr.bf16.mxu0 0
  %1254 = vmatpush2.bf16.msra.mxu0 0
  %1255 = vmatprep.subr.bf16.mxu0 0
  %1256 = vmatpush2.bf16.msra.mxu0 0
  %1257 = vmatprep.subr.bf16.mxu0 0
  %1258 = vmatpush2.bf16.msra.mxu0 0
  %1259 = vmatprep.subr.bf16.mxu0 0
  %1260 = vmatpush2.bf16.msra.mxu0 0
  %1261 = vmatprep.subr.bf16.mxu0 0
  %1262 = vmatpush2.bf16.msra.mxu0 0
  %1263 = vmatprep.mubr.bf16.mxu0 0
  %1264 = vmatmul.mubr.bf16.gmra.mxu0 %v1226
  %v1265 = vpop.f32.mrf.mxu0
  %v1266 = vadd.f32 0.0, %v1265
  %v1267 = vpop.f32.mrf.mxu0
  %v1268 = vpop.f32.mrf.mxu0
  %v1269 = vadd.f32 0.0, %v1268
  %v1270 = vpop.f32.mrf.mxu0
  %1271 = vdwg.mxu0
  %v1272 = vadd.f32 %v1001, %v1266
  %v1273 = vadd.f32 %v1002, %v1269
  %v1274 = vld [vmem:[%s8] sm:$0x1]
  %v1276 = vlaneseq
  %v1277 = vshrl.u32 %v1276, 7
  %v1278 = vsub.s32 0, %v1277
  %v1279 = vrot.slane %v1274, %v1278
  %v1281 = vadd.f32 %v1272, %v1279
  %v1282 = vadd.f32 %v1273, %v1279
  %v1283 = vadd.f32 %v64, %v1281
  %v1284 = vadd.f32 %v65, %v1282
  %v1285 = vld [vmem:[%s9] sm:$0x1]
  %v1286 = vld [vmem:[%s10] sm:$0x1]
  %v1287 = vsel %vm68, %v1283, 0.0
  %1288 = vadd.xlane.f32.xlu0 %v1287
  %v1289 = vpop.xlane.xlu0 %1288
  %v1290 = vsel %vm68, %v1284, 0.0
  %1291 = vadd.xlane.f32.xlu0 %v1290
  %v1292 = vpop.xlane.xlu0 %1291
  %v1293 = vmul.f32 %v1289, %v75
  %v1294 = vmul.f32 %v1292, %v75
  %v1295 = vsub.f32 %v1283, %v1293
  %v1296 = vsub.f32 %v1284, %v1294
  %v1297 = vmul.f32 %v1295, %v1295
  %v1298 = vmul.f32 %v1296, %v1296
  %v1299 = vsel %vm68, %v1297, 0.0
  %1300 = vadd.xlane.f32.xlu0 %v1299
  %v1301 = vpop.xlane.xlu0 %1300
  %v1302 = vsel %vm68, %v1298, 0.0
  %1303 = vadd.xlane.f32.xlu0 %v1302
  %v1304 = vpop.xlane.xlu0 %1303
  %v1305 = vmul.f32 %v1301, %v75
  %v1306 = vmul.f32 %v1304, %v75
  %v1307 = vadd.f32 %v1305, 1e-05
  %v1308 = vadd.f32 %v1306, 1e-05
  %v1309 = vrsqrt.pop %v1307
  %v1310 = vrsqrt.pop %v1308
  %v1311 = vmul.f32 %v1295, %v1309
  %v1312 = vmul.f32 %v1296, %v1310
  %v1314 = vlaneseq
  %v1315 = vshrl.u32 %v1314, 7
  %v1316 = vsub.s32 0, %v1315
  %v1317 = vrot.slane %v1285, %v1316
  %v1319 = vmul.f32 %v1311, %v1317
  %v1320 = vmul.f32 %v1312, %v1317
  %v1322 = vlaneseq
  %v1323 = vshrl.u32 %v1322, 7
  %v1324 = vsub.s32 0, %v1323
  %v1325 = vrot.slane %v1286, %v1324
  %v1327 = vadd.f32 %v1319, %v1325
  %v1328 = vadd.f32 %v1320, %v1325
  %v1329 = vld [vmem:[%s11] sm:$0xff]
  %v1330 = vld [vmem:[%s11 + $0x8] sm:$0xff]
  %v1331 = vld [vmem:[%s11 + $0x10] sm:$0xff]
  %v1332 = vld [vmem:[%s11 + $0x18] sm:$0xff]
  %v1333 = vpack.c.bf16 %v1328, %v1327
  %v1334 = vpack.c.bf16 %v1330, %v1329
  %v1335 = vpack.c.bf16 %v1332, %v1331
  %v1336 = vld [vmem:[%s12] sm:$0x1]
  %v1338 = vlaneseq
  %v1339 = vshrl.u32 %v1338, 7
  %v1340 = vsub.s32 0, %v1339
  %v1341 = vrot.slane %v1336, %v1340
  %v1344 = vsel %vm68, %v1333, 0
  %1346 = vmatprep.subr.bf16.mxu0 0
  %1347 = vmatpush1.bf16.msra.mxu0 0
  %1348 = vmatprep.subr.bf16.mxu0 0
  %1349 = vmatpush1.bf16.msra.mxu0 0
  %1350 = vmatprep.subr.bf16.mxu0 0
  %1351 = vmatpush1.bf16.msra.mxu0 0
  %1352 = vmatprep.subr.bf16.mxu0 0
  %1353 = vmatpush1.bf16.msra.mxu0 0
  %1354 = vmatprep.subr.bf16.mxu0 0
  %1355 = vmatpush1.bf16.msra.mxu0 0
  %1356 = vmatprep.subr.bf16.mxu0 0
  %1357 = vmatpush1.bf16.msra.mxu0 0
  %1358 = vmatprep.subr.bf16.mxu0 0
  %1359 = vmatpush1.bf16.msra.mxu0 %v1335
  %1360 = vmatprep.subr.bf16.mxu0 0
  %1361 = vmatpush1.bf16.msra.mxu0 %v1334
  %1362 = vmatprep.subr.bf16.mxu0 0
  %1363 = vmatpush2.bf16.msra.mxu0 0
  %1364 = vmatprep.subr.bf16.mxu0 0
  %1365 = vmatpush2.bf16.msra.mxu0 0
  %1366 = vmatprep.subr.bf16.mxu0 0
  %1367 = vmatpush2.bf16.msra.mxu0 0
  %1368 = vmatprep.subr.bf16.mxu0 0
  %1369 = vmatpush2.bf16.msra.mxu0 0
  %1370 = vmatprep.subr.bf16.mxu0 0
  %1371 = vmatpush2.bf16.msra.mxu0 0
  %1372 = vmatprep.subr.bf16.mxu0 0
  %1373 = vmatpush2.bf16.msra.mxu0 0
  %1374 = vmatprep.subr.bf16.mxu0 0
  %1375 = vmatpush2.bf16.msra.mxu0 0
  %1376 = vmatprep.subr.bf16.mxu0 0
  %1377 = vmatpush2.bf16.msra.mxu0 0
  %1378 = vmatprep.mubr.bf16.mxu0 0
  %1379 = vmatmul.mubr.bf16.gmra.mxu0 %v1344
  %v1380 = vpop.f32.mrf.mxu0
  %v1381 = vadd.f32 %v1341, %v1380
  %v1382 = vpop.f32.mrf.mxu0
  %v1383 = vpop.f32.mrf.mxu0
  %v1384 = vadd.f32 %v1341, %v1383
  %v1385 = vpop.f32.mrf.mxu0
  %1386 = vdwg.mxu0
  %v1387 = vmax.f32 %v1381, 0.0
  %v1388 = vmax.f32 %v1384, 0.0
  %v1389 = vld [vmem:[%s13] sm:$0xff]
  %v1390 = vld [vmem:[%s13 + $0x8] sm:$0xff]
  %v1391 = vld [vmem:[%s13 + $0x10] sm:$0xff]
  %v1392 = vld [vmem:[%s13 + $0x18] sm:$0xff]
  %v1393 = vld [vmem:[%s13 + $0x20] sm:$0xff]
  %v1394 = vld [vmem:[%s13 + $0x28] sm:$0xff]
  %v1395 = vld [vmem:[%s13 + $0x30] sm:$0xff]
  %v1396 = vld [vmem:[%s13 + $0x38] sm:$0xff]
  %v1397 = vpack.c.bf16 %v1388, %v1387
  %v1398 = vpack.c.bf16 %v1390, %v1389
  %v1399 = vpack.c.bf16 %v1392, %v1391
  %v1400 = vpack.c.bf16 %v1394, %v1393
  %v1401 = vpack.c.bf16 %v1396, %v1395
  %vm1402 = vcmask 523264
  %v1404 = vsel %vm1402, %v1397, 0
  %1406 = vmatprep.subr.bf16.mxu0 0
  %1407 = vmatpush1.bf16.msra.mxu0 0
  %1408 = vmatprep.subr.bf16.mxu0 0
  %1409 = vmatpush1.bf16.msra.mxu0 0
  %1410 = vmatprep.subr.bf16.mxu0 0
  %1411 = vmatpush1.bf16.msra.mxu0 0
  %1412 = vmatprep.subr.bf16.mxu0 0
  %1413 = vmatpush1.bf16.msra.mxu0 0
  %1414 = vmatprep.subr.bf16.mxu0 0
  %1415 = vmatpush1.bf16.msra.mxu0 %v1401
  %1416 = vmatprep.subr.bf16.mxu0 0
  %1417 = vmatpush1.bf16.msra.mxu0 %v1400
  %1418 = vmatprep.subr.bf16.mxu0 0
  %1419 = vmatpush1.bf16.msra.mxu0 %v1399
  %1420 = vmatprep.subr.bf16.mxu0 0
  %1421 = vmatpush1.bf16.msra.mxu0 %v1398
  %1422 = vmatprep.subr.bf16.mxu0 0
  %1423 = vmatpush2.bf16.msra.mxu0 0
  %1424 = vmatprep.subr.bf16.mxu0 0
  %1425 = vmatpush2.bf16.msra.mxu0 0
  %1426 = vmatprep.subr.bf16.mxu0 0
  %1427 = vmatpush2.bf16.msra.mxu0 0
  %1428 = vmatprep.subr.bf16.mxu0 0
  %1429 = vmatpush2.bf16.msra.mxu0 0
  %1430 = vmatprep.subr.bf16.mxu0 0
  %1431 = vmatpush2.bf16.msra.mxu0 0
  %1432 = vmatprep.subr.bf16.mxu0 0
  %1433 = vmatpush2.bf16.msra.mxu0 0
  %1434 = vmatprep.subr.bf16.mxu0 0
  %1435 = vmatpush2.bf16.msra.mxu0 0
  %1436 = vmatprep.subr.bf16.mxu0 0
  %1437 = vmatpush2.bf16.msra.mxu0 0
  %1438 = vmatprep.mubr.bf16.mxu0 0
  %1439 = vmatmul.mubr.bf16.gmra.mxu0 %v1404
  %v1440 = vpop.f32.mrf.mxu0
  %v1441 = vadd.f32 0.0, %v1440
  %v1442 = vpop.f32.mrf.mxu0
  %v1443 = vpop.f32.mrf.mxu0
  %v1444 = vadd.f32 0.0, %v1443
  %v1445 = vpop.f32.mrf.mxu0
  %1446 = vdwg.mxu0
  %v1447 = vadd.f32 %v1283, %v1441
  %v1448 = vadd.f32 %v1284, %v1444
  %v1449 = vld [vmem:[%s14] sm:$0x1]
  %v1451 = vlaneseq
  %v1452 = vshrl.u32 %v1451, 7
  %v1453 = vsub.s32 0, %v1452
  %v1454 = vrot.slane %v1449, %v1453
  %v1456 = vadd.f32 %v1447, %v1454
  %v1457 = vadd.f32 %v1448, %v1454
  %s1458 = scalar_lea.vmem %s3, 1
  %v1459 = vld [vmem:[%s1458] sm:$0x1]
  %s1460 = scalar_lea.vmem %s4, 1
  %v1461 = vld [vmem:[%s1460] sm:$0x1]
  %v1462 = vsel %vm68, %v1456, 0.0
  %1463 = vadd.xlane.f32.xlu0 %v1462
  %v1464 = vpop.xlane.xlu0 %1463
  %v1465 = vsel %vm68, %v1457, 0.0
  %1466 = vadd.xlane.f32.xlu0 %v1465
  %v1467 = vpop.xlane.xlu0 %1466
  %v1468 = vmul.f32 %v1464, %v75
  %v1469 = vmul.f32 %v1467, %v75
  %v1470 = vsub.f32 %v1456, %v1468
  %v1471 = vsub.f32 %v1457, %v1469
  %v1472 = vmul.f32 %v1470, %v1470
  %v1473 = vmul.f32 %v1471, %v1471
  %v1474 = vsel %vm68, %v1472, 0.0
  %1475 = vadd.xlane.f32.xlu0 %v1474
  %v1476 = vpop.xlane.xlu0 %1475
  %v1477 = vsel %vm68, %v1473, 0.0
  %1478 = vadd.xlane.f32.xlu0 %v1477
  %v1479 = vpop.xlane.xlu0 %1478
  %v1480 = vmul.f32 %v1476, %v75
  %v1481 = vmul.f32 %v1479, %v75
  %v1482 = vadd.f32 %v1480, 1e-05
  %v1483 = vadd.f32 %v1481, 1e-05
  %v1484 = vrsqrt.pop %v1482
  %v1485 = vrsqrt.pop %v1483
  %v1486 = vmul.f32 %v1470, %v1484
  %v1487 = vmul.f32 %v1471, %v1485
  %v1489 = vlaneseq
  %v1490 = vshrl.u32 %v1489, 7
  %v1491 = vsub.s32 0, %v1490
  %v1492 = vrot.slane %v1459, %v1491
  %v1494 = vmul.f32 %v1486, %v1492
  %v1495 = vmul.f32 %v1487, %v1492
  %v1497 = vlaneseq
  %v1498 = vshrl.u32 %v1497, 7
  %v1499 = vsub.s32 0, %v1498
  %v1500 = vrot.slane %v1461, %v1499
  %v1502 = vadd.f32 %v1494, %v1500
  %v1503 = vadd.f32 %v1495, %v1500
  %s1504 = scalar_lea.vmem %s5, 32
  %v1505 = vld [vmem:[%s1504] sm:$0xff]
  %v1506 = vld [vmem:[%s1504 + $0x8] sm:$0xff]
  %v1507 = vld [vmem:[%s1504 + $0x10] sm:$0xff]
  %v1508 = vld [vmem:[%s1504 + $0x18] sm:$0xff]
  %v1509 = vpack.c.bf16 %v1503, %v1502
  %v1510 = vpack.c.bf16 %v1506, %v1505
  %v1511 = vpack.c.bf16 %v1508, %v1507
  %s1512 = scalar_lea.vmem %s6, 1
  %v1513 = vld [vmem:[%s1512] sm:$0x1]
  %v1515 = vlaneseq
  %v1516 = vshrl.u32 %v1515, 7
  %v1517 = vsub.s32 0, %v1516
  %v1518 = vrot.slane %v1513, %v1517
  %v1521 = vsel %vm68, %v1509, 0
  %1523 = vmatprep.subr.bf16.mxu0 0
  %1524 = vmatpush1.bf16.msra.mxu0 0
  %1525 = vmatprep.subr.bf16.mxu0 0
  %1526 = vmatpush1.bf16.msra.mxu0 0
  %1527 = vmatprep.subr.bf16.mxu0 0
  %1528 = vmatpush1.bf16.msra.mxu0 0
  %1529 = vmatprep.subr.bf16.mxu0 0
  %1530 = vmatpush1.bf16.msra.mxu0 0
  %1531 = vmatprep.subr.bf16.mxu0 0
  %1532 = vmatpush1.bf16.msra.mxu0 0
  %1533 = vmatprep.subr.bf16.mxu0 0
  %1534 = vmatpush1.bf16.msra.mxu0 0
  %1535 = vmatprep.subr.bf16.mxu0 0
  %1536 = vmatpush1.bf16.msra.mxu0 %v1511
  %1537 = vmatprep.subr.bf16.mxu0 0
  %1538 = vmatpush1.bf16.msra.mxu0 %v1510
  %1539 = vmatprep.subr.bf16.mxu0 0
  %1540 = vmatpush2.bf16.msra.mxu0 0
  %1541 = vmatprep.subr.bf16.mxu0 0
  %1542 = vmatpush2.bf16.msra.mxu0 0
  %1543 = vmatprep.subr.bf16.mxu0 0
  %1544 = vmatpush2.bf16.msra.mxu0 0
  %1545 = vmatprep.subr.bf16.mxu0 0
  %1546 = vmatpush2.bf16.msra.mxu0 0
  %1547 = vmatprep.subr.bf16.mxu0 0
  %1548 = vmatpush2.bf16.msra.mxu0 0
  %1549 = vmatprep.subr.bf16.mxu0 0
  %1550 = vmatpush2.bf16.msra.mxu0 0
  %1551 = vmatprep.subr.bf16.mxu0 0
  %1552 = vmatpush2.bf16.msra.mxu0 0
  %1553 = vmatprep.subr.bf16.mxu0 0
  %1554 = vmatpush2.bf16.msra.mxu0 0
  %1555 = vmatprep.mubr.bf16.mxu0 0
  %1556 = vmatmul.mubr.bf16.gmra.mxu0 %v1521
  %v1557 = vpop.f32.mrf.mxu0
  %v1558 = vadd.f32 %v1518, %v1557
  %v1559 = vpop.f32.mrf.mxu0
  %v1560 = vpop.f32.mrf.mxu0
  %v1561 = vadd.f32 %v1518, %v1560
  %v1562 = vpop.f32.mrf.mxu0
  %1563 = vdwg.mxu0
  %s1564 = scalar_lea.vmem %s7, 32
  %v1565 = vld [vmem:[%s1564] sm:$0xff]
  %v1566 = vld [vmem:[%s1564 + $0x8] sm:$0xff]
  %v1567 = vld [vmem:[%s1564 + $0x10] sm:$0xff]
  %v1568 = vld [vmem:[%s1564 + $0x18] sm:$0xff]
  %v1569 = vmul.f32 %v1558, 0.35355338
  %v1570 = vmul.f32 %v1561, 0.35355338
  %v1571 = vpack.c.bf16 %v1569, %v1569
  %v1572 = vpack.c.bf16 %v1570, %v1570
  %v1573 = vpack.c.bf16 %v1558, %v1558
  %v1574 = vpack.c.bf16 %v1561, %v1561
  %1576 = vrot.lane.b32.xlu0 %v1573, 96
  %v1577 = vpop.permute.xlu0 %1576
  %v1579 = vsel %vm195, %v1571, 0
  %v1582 = vsel %vm195, %v1577, 0
  %1584 = vmatprep.subr.bf16.mxu0 0
  %1585 = vmatpush1.bf16.xpose.msra.mxu0 0
  %1586 = vmatprep.subr.bf16.mxu0 0
  %1587 = vmatpush1.bf16.xpose.msra.mxu0 0
  %1588 = vmatprep.subr.bf16.mxu0 0
  %1589 = vmatpush1.bf16.xpose.msra.mxu0 0
  %1590 = vmatprep.subr.bf16.mxu0 0
  %1591 = vmatpush1.bf16.xpose.msra.mxu0 0
  %1592 = vmatprep.subr.bf16.mxu0 0
  %1593 = vmatpush1.bf16.xpose.msra.mxu0 0
  %1594 = vmatprep.subr.bf16.mxu0 0
  %1595 = vmatpush1.bf16.xpose.msra.mxu0 0
  %1596 = vmatprep.subr.bf16.mxu0 0
  %1597 = vmatpush1.bf16.xpose.msra.mxu0 0
  %1598 = vmatprep.subr.bf16.mxu0 0
  %1599 = vmatpush1.bf16.xpose.msra.mxu0 %v1582
  %1600 = vmatprep.subr.bf16.mxu0 0
  %1601 = vmatpush2.bf16.xpose.msra.mxu0 0
  %1602 = vmatprep.subr.bf16.mxu0 0
  %1603 = vmatpush2.bf16.xpose.msra.mxu0 0
  %1604 = vmatprep.subr.bf16.mxu0 0
  %1605 = vmatpush2.bf16.xpose.msra.mxu0 0
  %1606 = vmatprep.subr.bf16.mxu0 0
  %1607 = vmatpush2.bf16.xpose.msra.mxu0 0
  %1608 = vmatprep.subr.bf16.mxu0 0
  %1609 = vmatpush2.bf16.xpose.msra.mxu0 0
  %1610 = vmatprep.subr.bf16.mxu0 0
  %1611 = vmatpush2.bf16.xpose.msra.mxu0 0
  %1612 = vmatprep.subr.bf16.mxu0 0
  %1613 = vmatpush2.bf16.xpose.msra.mxu0 0
  %1614 = vmatprep.subr.bf16.mxu0 0
  %1615 = vmatpush2.bf16.xpose.msra.mxu0 0
  %1616 = vmatprep.mubr.bf16.mxu0 0
  %1617 = vmatmul.mubr.bf16.gmra.mxu0 %v1579
  %v1618 = vpop.f32.mrf.mxu0
  %v1619 = vadd.f32 %v185, %v1618
  %v1620 = vpop.f32.mrf.mxu0
  %v1621 = vpop.f32.mrf.mxu0
  %v1622 = vpop.f32.mrf.mxu0
  %1623 = vdwg.mxu0
  %1625 = vrot.lane.b32.xlu0 %v1574, 96
  %v1626 = vpop.permute.xlu0 %1625
  %v1628 = vsel %vm195, %v1572, 0
  %v1631 = vsel %vm195, %v1626, 0
  %1633 = vmatprep.subr.bf16.mxu0 0
  %1634 = vmatpush1.bf16.xpose.msra.mxu0 0
  %1635 = vmatprep.subr.bf16.mxu0 0
  %1636 = vmatpush1.bf16.xpose.msra.mxu0 0
  %1637 = vmatprep.subr.bf16.mxu0 0
  %1638 = vmatpush1.bf16.xpose.msra.mxu0 0
  %1639 = vmatprep.subr.bf16.mxu0 0
  %1640 = vmatpush1.bf16.xpose.msra.mxu0 0
  %1641 = vmatprep.subr.bf16.mxu0 0
  %1642 = vmatpush1.bf16.xpose.msra.mxu0 0
  %1643 = vmatprep.subr.bf16.mxu0 0
  %1644 = vmatpush1.bf16.xpose.msra.mxu0 0
  %1645 = vmatprep.subr.bf16.mxu0 0
  %1646 = vmatpush1.bf16.xpose.msra.mxu0 0
  %1647 = vmatprep.subr.bf16.mxu0 0
  %1648 = vmatpush1.bf16.xpose.msra.mxu0 %v1631
  %1649 = vmatprep.subr.bf16.mxu0 0
  %1650 = vmatpush2.bf16.xpose.msra.mxu0 0
  %1651 = vmatprep.subr.bf16.mxu0 0
  %1652 = vmatpush2.bf16.xpose.msra.mxu0 0
  %1653 = vmatprep.subr.bf16.mxu0 0
  %1654 = vmatpush2.bf16.xpose.msra.mxu0 0
  %1655 = vmatprep.subr.bf16.mxu0 0
  %1656 = vmatpush2.bf16.xpose.msra.mxu0 0
  %1657 = vmatprep.subr.bf16.mxu0 0
  %1658 = vmatpush2.bf16.xpose.msra.mxu0 0
  %1659 = vmatprep.subr.bf16.mxu0 0
  %1660 = vmatpush2.bf16.xpose.msra.mxu0 0
  %1661 = vmatprep.subr.bf16.mxu0 0
  %1662 = vmatpush2.bf16.xpose.msra.mxu0 0
  %1663 = vmatprep.subr.bf16.mxu0 0
  %1664 = vmatpush2.bf16.xpose.msra.mxu0 0
  %1665 = vmatprep.mubr.bf16.mxu0 0
  %1666 = vmatmul.mubr.bf16.gmra.mxu0 %v1628
  %v1667 = vpop.f32.mrf.mxu0
  %v1668 = vadd.f32 %v189, %v1667
  %v1669 = vpop.f32.mrf.mxu0
  %v1670 = vpop.f32.mrf.mxu0
  %v1671 = vpop.f32.mrf.mxu0
  %1672 = vdwg.mxu0
  %v1673 = vsel %vm195, %v1619, -inf
  %1674 = vmax.xlane.f32.xlu0 %v1673
  %v1675 = vpop.xlane.xlu0 %1674
  %v1676 = vsel %vm195, %v1668, -inf
  %1677 = vmax.xlane.f32.xlu0 %v1676
  %v1678 = vpop.xlane.xlu0 %1677
  %v1679 = vsub.f32 %v1619, %v1675
  %v1680 = vsub.f32 %v1668, %v1678
  %v1681 = vmul.f32 %v1679, 1.442695
  %v1682 = vpow.pop %v1681
  %v1683 = vmul.f32 %v1680, 1.442695
  %v1684 = vpow.pop %v1683
  %v1685 = vsel %vm195, %v1682, 0.0
  %1686 = vadd.xlane.f32.xlu0 %v1685
  %v1687 = vpop.xlane.xlu0 %1686
  %v1688 = vsel %vm195, %v1684, 0.0
  %1689 = vadd.xlane.f32.xlu0 %v1688
  %v1690 = vpop.xlane.xlu0 %1689
  %v1691 = vrcp.pop %v1687
  %v1692 = vrcp.pop %v1690
  %v1693 = vmul.f32 %v1682, %v1691
  %v1694 = vmul.f32 %v1684, %v1692
  %v1695 = vpack.c.bf16 %v1693, %v1693
  %v1696 = vpack.c.bf16 %v1694, %v1694
  %1697 = vrot.lane.b32.xlu0 %v1573, 64
  %v1698 = vpop.permute.xlu0 %1697
  %v1700 = vsel %vm195, %v1695, 0
  %v1703 = vsel %vm320, %v1698, 0
  %1705 = vmatprep.subr.bf16.mxu0 0
  %1706 = vmatpush1.bf16.msra.mxu0 0
  %1707 = vmatprep.subr.bf16.mxu0 0
  %1708 = vmatpush1.bf16.msra.mxu0 0
  %1709 = vmatprep.subr.bf16.mxu0 0
  %1710 = vmatpush1.bf16.msra.mxu0 0
  %1711 = vmatprep.subr.bf16.mxu0 0
  %1712 = vmatpush1.bf16.msra.mxu0 0
  %1713 = vmatprep.subr.bf16.mxu0 0
  %1714 = vmatpush1.bf16.msra.mxu0 0
  %1715 = vmatprep.subr.bf16.mxu0 0
  %1716 = vmatpush1.bf16.msra.mxu0 0
  %1717 = vmatprep.subr.bf16.mxu0 0
  %1718 = vmatpush1.bf16.msra.mxu0 0
  %1719 = vmatprep.subr.bf16.mxu0 0
  %1720 = vmatpush1.bf16.msra.mxu0 %v1703
  %1721 = vmatprep.subr.bf16.mxu0 0
  %1722 = vmatpush2.bf16.msra.mxu0 0
  %1723 = vmatprep.subr.bf16.mxu0 0
  %1724 = vmatpush2.bf16.msra.mxu0 0
  %1725 = vmatprep.subr.bf16.mxu0 0
  %1726 = vmatpush2.bf16.msra.mxu0 0
  %1727 = vmatprep.subr.bf16.mxu0 0
  %1728 = vmatpush2.bf16.msra.mxu0 0
  %1729 = vmatprep.subr.bf16.mxu0 0
  %1730 = vmatpush2.bf16.msra.mxu0 0
  %1731 = vmatprep.subr.bf16.mxu0 0
  %1732 = vmatpush2.bf16.msra.mxu0 0
  %1733 = vmatprep.subr.bf16.mxu0 0
  %1734 = vmatpush2.bf16.msra.mxu0 0
  %1735 = vmatprep.subr.bf16.mxu0 0
  %1736 = vmatpush2.bf16.msra.mxu0 0
  %1737 = vmatprep.mubr.bf16.mxu0 0
  %1738 = vmatmul.mubr.bf16.gmra.mxu0 %v1700
  %v1739 = vpop.f32.mrf.mxu0
  %v1740 = vadd.f32 0.0, %v1739
  %v1741 = vpop.f32.mrf.mxu0
  %v1742 = vpop.f32.mrf.mxu0
  %v1743 = vpop.f32.mrf.mxu0
  %1744 = vdwg.mxu0
  %1745 = vrot.lane.b32.xlu0 %v1574, 64
  %v1746 = vpop.permute.xlu0 %1745
  %v1748 = vsel %vm195, %v1696, 0
  %v1751 = vsel %vm320, %v1746, 0
  %1753 = vmatprep.subr.bf16.mxu0 0
  %1754 = vmatpush1.bf16.msra.mxu0 0
  %1755 = vmatprep.subr.bf16.mxu0 0
  %1756 = vmatpush1.bf16.msra.mxu0 0
  %1757 = vmatprep.subr.bf16.mxu0 0
  %1758 = vmatpush1.bf16.msra.mxu0 0
  %1759 = vmatprep.subr.bf16.mxu0 0
  %1760 = vmatpush1.bf16.msra.mxu0 0
  %1761 = vmatprep.subr.bf16.mxu0 0
  %1762 = vmatpush1.bf16.msra.mxu0 0
  %1763 = vmatprep.subr.bf16.mxu0 0
  %1764 = vmatpush1.bf16.msra.mxu0 0
  %1765 = vmatprep.subr.bf16.mxu0 0
  %1766 = vmatpush1.bf16.msra.mxu0 0
  %1767 = vmatprep.subr.bf16.mxu0 0
  %1768 = vmatpush1.bf16.msra.mxu0 %v1751
  %1769 = vmatprep.subr.bf16.mxu0 0
  %1770 = vmatpush2.bf16.msra.mxu0 0
  %1771 = vmatprep.subr.bf16.mxu0 0
  %1772 = vmatpush2.bf16.msra.mxu0 0
  %1773 = vmatprep.subr.bf16.mxu0 0
  %1774 = vmatpush2.bf16.msra.mxu0 0
  %1775 = vmatprep.subr.bf16.mxu0 0
  %1776 = vmatpush2.bf16.msra.mxu0 0
  %1777 = vmatprep.subr.bf16.mxu0 0
  %1778 = vmatpush2.bf16.msra.mxu0 0
  %1779 = vmatprep.subr.bf16.mxu0 0
  %1780 = vmatpush2.bf16.msra.mxu0 0
  %1781 = vmatprep.subr.bf16.mxu0 0
  %1782 = vmatpush2.bf16.msra.mxu0 0
  %1783 = vmatprep.subr.bf16.mxu0 0
  %1784 = vmatpush2.bf16.msra.mxu0 0
  %1785 = vmatprep.mubr.bf16.mxu0 0
  %1786 = vmatmul.mubr.bf16.gmra.mxu0 %v1748
  %v1787 = vpop.f32.mrf.mxu0
  %v1788 = vadd.f32 0.0, %v1787
  %v1789 = vpop.f32.mrf.mxu0
  %v1790 = vpop.f32.mrf.mxu0
  %v1791 = vpop.f32.mrf.mxu0
  %1792 = vdwg.mxu0
  %v1793 = vpack.c.bf16 %v1788, %v1740
  %v1794 = vpack.c.bf16 %v1565, %v1565
  %1796 = vrot.lane.b32.xlu0 %v1571, 120
  %v1797 = vpop.permute.xlu0 %1796
  %1798 = vrot.lane.b32.xlu0 %v1573, 88
  %v1799 = vpop.permute.xlu0 %1798
  %v1801 = vsel %vm195, %v1797, 0
  %v1804 = vsel %vm195, %v1799, 0
  %1806 = vmatprep.subr.bf16.mxu0 0
  %1807 = vmatpush1.bf16.xpose.msra.mxu0 0
  %1808 = vmatprep.subr.bf16.mxu0 0
  %1809 = vmatpush1.bf16.xpose.msra.mxu0 0
  %1810 = vmatprep.subr.bf16.mxu0 0
  %1811 = vmatpush1.bf16.xpose.msra.mxu0 0
  %1812 = vmatprep.subr.bf16.mxu0 0
  %1813 = vmatpush1.bf16.xpose.msra.mxu0 0
  %1814 = vmatprep.subr.bf16.mxu0 0
  %1815 = vmatpush1.bf16.xpose.msra.mxu0 0
  %1816 = vmatprep.subr.bf16.mxu0 0
  %1817 = vmatpush1.bf16.xpose.msra.mxu0 0
  %1818 = vmatprep.subr.bf16.mxu0 0
  %1819 = vmatpush1.bf16.xpose.msra.mxu0 0
  %1820 = vmatprep.subr.bf16.mxu0 0
  %1821 = vmatpush1.bf16.xpose.msra.mxu0 %v1804
  %1822 = vmatprep.subr.bf16.mxu0 0
  %1823 = vmatpush2.bf16.xpose.msra.mxu0 0
  %1824 = vmatprep.subr.bf16.mxu0 0
  %1825 = vmatpush2.bf16.xpose.msra.mxu0 0
  %1826 = vmatprep.subr.bf16.mxu0 0
  %1827 = vmatpush2.bf16.xpose.msra.mxu0 0
  %1828 = vmatprep.subr.bf16.mxu0 0
  %1829 = vmatpush2.bf16.xpose.msra.mxu0 0
  %1830 = vmatprep.subr.bf16.mxu0 0
  %1831 = vmatpush2.bf16.xpose.msra.mxu0 0
  %1832 = vmatprep.subr.bf16.mxu0 0
  %1833 = vmatpush2.bf16.xpose.msra.mxu0 0
  %1834 = vmatprep.subr.bf16.mxu0 0
  %1835 = vmatpush2.bf16.xpose.msra.mxu0 0
  %1836 = vmatprep.subr.bf16.mxu0 0
  %1837 = vmatpush2.bf16.xpose.msra.mxu0 0
  %1838 = vmatprep.mubr.bf16.mxu0 0
  %1839 = vmatmul.mubr.bf16.gmra.mxu0 %v1801
  %v1840 = vpop.f32.mrf.mxu0
  %v1841 = vadd.f32 %v185, %v1840
  %v1842 = vpop.f32.mrf.mxu0
  %v1843 = vpop.f32.mrf.mxu0
  %v1844 = vpop.f32.mrf.mxu0
  %1845 = vdwg.mxu0
  %1847 = vrot.lane.b32.xlu0 %v1572, 120
  %v1848 = vpop.permute.xlu0 %1847
  %1849 = vrot.lane.b32.xlu0 %v1574, 88
  %v1850 = vpop.permute.xlu0 %1849
  %v1852 = vsel %vm195, %v1848, 0
  %v1855 = vsel %vm195, %v1850, 0
  %1857 = vmatprep.subr.bf16.mxu0 0
  %1858 = vmatpush1.bf16.xpose.msra.mxu0 0
  %1859 = vmatprep.subr.bf16.mxu0 0
  %1860 = vmatpush1.bf16.xpose.msra.mxu0 0
  %1861 = vmatprep.subr.bf16.mxu0 0
  %1862 = vmatpush1.bf16.xpose.msra.mxu0 0
  %1863 = vmatprep.subr.bf16.mxu0 0
  %1864 = vmatpush1.bf16.xpose.msra.mxu0 0
  %1865 = vmatprep.subr.bf16.mxu0 0
  %1866 = vmatpush1.bf16.xpose.msra.mxu0 0
  %1867 = vmatprep.subr.bf16.mxu0 0
  %1868 = vmatpush1.bf16.xpose.msra.mxu0 0
  %1869 = vmatprep.subr.bf16.mxu0 0
  %1870 = vmatpush1.bf16.xpose.msra.mxu0 0
  %1871 = vmatprep.subr.bf16.mxu0 0
  %1872 = vmatpush1.bf16.xpose.msra.mxu0 %v1855
  %1873 = vmatprep.subr.bf16.mxu0 0
  %1874 = vmatpush2.bf16.xpose.msra.mxu0 0
  %1875 = vmatprep.subr.bf16.mxu0 0
  %1876 = vmatpush2.bf16.xpose.msra.mxu0 0
  %1877 = vmatprep.subr.bf16.mxu0 0
  %1878 = vmatpush2.bf16.xpose.msra.mxu0 0
  %1879 = vmatprep.subr.bf16.mxu0 0
  %1880 = vmatpush2.bf16.xpose.msra.mxu0 0
  %1881 = vmatprep.subr.bf16.mxu0 0
  %1882 = vmatpush2.bf16.xpose.msra.mxu0 0
  %1883 = vmatprep.subr.bf16.mxu0 0
  %1884 = vmatpush2.bf16.xpose.msra.mxu0 0
  %1885 = vmatprep.subr.bf16.mxu0 0
  %1886 = vmatpush2.bf16.xpose.msra.mxu0 0
  %1887 = vmatprep.subr.bf16.mxu0 0
  %1888 = vmatpush2.bf16.xpose.msra.mxu0 0
  %1889 = vmatprep.mubr.bf16.mxu0 0
  %1890 = vmatmul.mubr.bf16.gmra.mxu0 %v1852
  %v1891 = vpop.f32.mrf.mxu0
  %v1892 = vadd.f32 %v189, %v1891
  %v1893 = vpop.f32.mrf.mxu0
  %v1894 = vpop.f32.mrf.mxu0
  %v1895 = vpop.f32.mrf.mxu0
  %1896 = vdwg.mxu0
  %v1897 = vsel %vm195, %v1841, -inf
  %1898 = vmax.xlane.f32.xlu0 %v1897
  %v1899 = vpop.xlane.xlu0 %1898
  %v1900 = vsel %vm195, %v1892, -inf
  %1901 = vmax.xlane.f32.xlu0 %v1900
  %v1902 = vpop.xlane.xlu0 %1901
  %v1903 = vsub.f32 %v1841, %v1899
  %v1904 = vsub.f32 %v1892, %v1902
  %v1905 = vmul.f32 %v1903, 1.442695
  %v1906 = vpow.pop %v1905
  %v1907 = vmul.f32 %v1904, 1.442695
  %v1908 = vpow.pop %v1907
  %v1909 = vsel %vm195, %v1906, 0.0
  %1910 = vadd.xlane.f32.xlu0 %v1909
  %v1911 = vpop.xlane.xlu0 %1910
  %v1912 = vsel %vm195, %v1908, 0.0
  %1913 = vadd.xlane.f32.xlu0 %v1912
  %v1914 = vpop.xlane.xlu0 %1913
  %v1915 = vrcp.pop %v1911
  %v1916 = vrcp.pop %v1914
  %v1917 = vmul.f32 %v1906, %v1915
  %v1918 = vmul.f32 %v1908, %v1916
  %v1919 = vpack.c.bf16 %v1917, %v1917
  %v1920 = vpack.c.bf16 %v1918, %v1918
  %1921 = vrot.lane.b32.xlu0 %v1573, 56
  %v1922 = vpop.permute.xlu0 %1921
  %v1924 = vsel %vm195, %v1919, 0
  %v1927 = vsel %vm320, %v1922, 0
  %1929 = vmatprep.subr.bf16.mxu0 0
  %1930 = vmatpush1.bf16.msra.mxu0 0
  %1931 = vmatprep.subr.bf16.mxu0 0
  %1932 = vmatpush1.bf16.msra.mxu0 0
  %1933 = vmatprep.subr.bf16.mxu0 0
  %1934 = vmatpush1.bf16.msra.mxu0 0
  %1935 = vmatprep.subr.bf16.mxu0 0
  %1936 = vmatpush1.bf16.msra.mxu0 0
  %1937 = vmatprep.subr.bf16.mxu0 0
  %1938 = vmatpush1.bf16.msra.mxu0 0
  %1939 = vmatprep.subr.bf16.mxu0 0
  %1940 = vmatpush1.bf16.msra.mxu0 0
  %1941 = vmatprep.subr.bf16.mxu0 0
  %1942 = vmatpush1.bf16.msra.mxu0 0
  %1943 = vmatprep.subr.bf16.mxu0 0
  %1944 = vmatpush1.bf16.msra.mxu0 %v1927
  %1945 = vmatprep.subr.bf16.mxu0 0
  %1946 = vmatpush2.bf16.msra.mxu0 0
  %1947 = vmatprep.subr.bf16.mxu0 0
  %1948 = vmatpush2.bf16.msra.mxu0 0
  %1949 = vmatprep.subr.bf16.mxu0 0
  %1950 = vmatpush2.bf16.msra.mxu0 0
  %1951 = vmatprep.subr.bf16.mxu0 0
  %1952 = vmatpush2.bf16.msra.mxu0 0
  %1953 = vmatprep.subr.bf16.mxu0 0
  %1954 = vmatpush2.bf16.msra.mxu0 0
  %1955 = vmatprep.subr.bf16.mxu0 0
  %1956 = vmatpush2.bf16.msra.mxu0 0
  %1957 = vmatprep.subr.bf16.mxu0 0
  %1958 = vmatpush2.bf16.msra.mxu0 0
  %1959 = vmatprep.subr.bf16.mxu0 0
  %1960 = vmatpush2.bf16.msra.mxu0 0
  %1961 = vmatprep.mubr.bf16.mxu0 0
  %1962 = vmatmul.mubr.bf16.gmra.mxu0 %v1924
  %v1963 = vpop.f32.mrf.mxu0
  %v1964 = vadd.f32 0.0, %v1963
  %v1965 = vpop.f32.mrf.mxu0
  %v1966 = vpop.f32.mrf.mxu0
  %v1967 = vpop.f32.mrf.mxu0
  %1968 = vdwg.mxu0
  %1969 = vrot.lane.b32.xlu0 %v1574, 56
  %v1970 = vpop.permute.xlu0 %1969
  %v1972 = vsel %vm195, %v1920, 0
  %v1975 = vsel %vm320, %v1970, 0
  %1977 = vmatprep.subr.bf16.mxu0 0
  %1978 = vmatpush1.bf16.msra.mxu0 0
  %1979 = vmatprep.subr.bf16.mxu0 0
  %1980 = vmatpush1.bf16.msra.mxu0 0
  %1981 = vmatprep.subr.bf16.mxu0 0
  %1982 = vmatpush1.bf16.msra.mxu0 0
  %1983 = vmatprep.subr.bf16.mxu0 0
  %1984 = vmatpush1.bf16.msra.mxu0 0
  %1985 = vmatprep.subr.bf16.mxu0 0
  %1986 = vmatpush1.bf16.msra.mxu0 0
  %1987 = vmatprep.subr.bf16.mxu0 0
  %1988 = vmatpush1.bf16.msra.mxu0 0
  %1989 = vmatprep.subr.bf16.mxu0 0
  %1990 = vmatpush1.bf16.msra.mxu0 0
  %1991 = vmatprep.subr.bf16.mxu0 0
  %1992 = vmatpush1.bf16.msra.mxu0 %v1975
  %1993 = vmatprep.subr.bf16.mxu0 0
  %1994 = vmatpush2.bf16.msra.mxu0 0
  %1995 = vmatprep.subr.bf16.mxu0 0
  %1996 = vmatpush2.bf16.msra.mxu0 0
  %1997 = vmatprep.subr.bf16.mxu0 0
  %1998 = vmatpush2.bf16.msra.mxu0 0
  %1999 = vmatprep.subr.bf16.mxu0 0
  %2000 = vmatpush2.bf16.msra.mxu0 0
  %2001 = vmatprep.subr.bf16.mxu0 0
  %2002 = vmatpush2.bf16.msra.mxu0 0
  %2003 = vmatprep.subr.bf16.mxu0 0
  %2004 = vmatpush2.bf16.msra.mxu0 0
  %2005 = vmatprep.subr.bf16.mxu0 0
  %2006 = vmatpush2.bf16.msra.mxu0 0
  %2007 = vmatprep.subr.bf16.mxu0 0
  %2008 = vmatpush2.bf16.msra.mxu0 0
  %2009 = vmatprep.mubr.bf16.mxu0 0
  %2010 = vmatmul.mubr.bf16.gmra.mxu0 %v1972
  %v2011 = vpop.f32.mrf.mxu0
  %v2012 = vadd.f32 0.0, %v2011
  %v2013 = vpop.f32.mrf.mxu0
  %v2014 = vpop.f32.mrf.mxu0
  %v2015 = vpop.f32.mrf.mxu0
  %2016 = vdwg.mxu0
  %v2017 = vpack.c.bf16 %v2012, %v1964
  %v2018 = vpack.c.bf16 %v1566, %v1566
  %v2020 = vsel %vm195, %v2017, 0
  %v2023 = vsel %vm320, %v2018, 0
  %2025 = vmatprep.subr.bf16.mxu0 0
  %2026 = vmatpush1.bf16.msra.mxu0 0
  %2027 = vmatprep.subr.bf16.mxu0 0
  %2028 = vmatpush1.bf16.msra.mxu0 0
  %2029 = vmatprep.subr.bf16.mxu0 0
  %2030 = vmatpush1.bf16.msra.mxu0 0
  %2031 = vmatprep.subr.bf16.mxu0 0
  %2032 = vmatpush1.bf16.msra.mxu0 0
  %2033 = vmatprep.subr.bf16.mxu0 0
  %2034 = vmatpush1.bf16.msra.mxu0 0
  %2035 = vmatprep.subr.bf16.mxu0 0
  %2036 = vmatpush1.bf16.msra.mxu0 0
  %2037 = vmatprep.subr.bf16.mxu0 0
  %2038 = vmatpush1.bf16.msra.mxu0 0
  %2039 = vmatprep.subr.bf16.mxu0 0
  %2040 = vmatpush1.bf16.msra.mxu0 %v2023
  %2041 = vmatprep.subr.bf16.mxu0 0
  %2042 = vmatpush2.bf16.msra.mxu0 0
  %2043 = vmatprep.subr.bf16.mxu0 0
  %2044 = vmatpush2.bf16.msra.mxu0 0
  %2045 = vmatprep.subr.bf16.mxu0 0
  %2046 = vmatpush2.bf16.msra.mxu0 0
  %2047 = vmatprep.subr.bf16.mxu0 0
  %2048 = vmatpush2.bf16.msra.mxu0 0
  %2049 = vmatprep.subr.bf16.mxu0 0
  %2050 = vmatpush2.bf16.msra.mxu0 0
  %2051 = vmatprep.subr.bf16.mxu0 0
  %2052 = vmatpush2.bf16.msra.mxu0 0
  %2053 = vmatprep.subr.bf16.mxu0 0
  %2054 = vmatpush2.bf16.msra.mxu0 0
  %2055 = vmatprep.subr.bf16.mxu0 0
  %2056 = vmatpush2.bf16.msra.mxu0 0
  %2057 = vmatprep.mubr.bf16.mxu0 0
  %2058 = vmatmul.mubr.bf16.gmra.mxu0 %v2020
  %v2059 = vpop.f32.mrf.mxu0
  %v2060 = vadd.f32 0.0, %v2059
  %v2061 = vpop.f32.mrf.mxu0
  %v2062 = vpop.f32.mrf.mxu0
  %v2063 = vadd.f32 0.0, %v2062
  %v2064 = vpop.f32.mrf.mxu0
  %2065 = vdwg.mxu0
  %v2067 = vsel %vm195, %v1793, 0
  %v2070 = vsel %vm320, %v1794, 0
  %2072 = vmatprep.subr.bf16.mxu0 0
  %2073 = vmatpush1.bf16.msra.mxu0 0
  %2074 = vmatprep.subr.bf16.mxu0 0
  %2075 = vmatpush1.bf16.msra.mxu0 0
  %2076 = vmatprep.subr.bf16.mxu0 0
  %2077 = vmatpush1.bf16.msra.mxu0 0
  %2078 = vmatprep.subr.bf16.mxu0 0
  %2079 = vmatpush1.bf16.msra.mxu0 0
  %2080 = vmatprep.subr.bf16.mxu0 0
  %2081 = vmatpush1.bf16.msra.mxu0 0
  %2082 = vmatprep.subr.bf16.mxu0 0
  %2083 = vmatpush1.bf16.msra.mxu0 0
  %2084 = vmatprep.subr.bf16.mxu0 0
  %2085 = vmatpush1.bf16.msra.mxu0 0
  %2086 = vmatprep.subr.bf16.mxu0 0
  %2087 = vmatpush1.bf16.msra.mxu0 %v2070
  %2088 = vmatprep.subr.bf16.mxu0 0
  %2089 = vmatpush2.bf16.msra.mxu0 0
  %2090 = vmatprep.subr.bf16.mxu0 0
  %2091 = vmatpush2.bf16.msra.mxu0 0
  %2092 = vmatprep.subr.bf16.mxu0 0
  %2093 = vmatpush2.bf16.msra.mxu0 0
  %2094 = vmatprep.subr.bf16.mxu0 0
  %2095 = vmatpush2.bf16.msra.mxu0 0
  %2096 = vmatprep.subr.bf16.mxu0 0
  %2097 = vmatpush2.bf16.msra.mxu0 0
  %2098 = vmatprep.subr.bf16.mxu0 0
  %2099 = vmatpush2.bf16.msra.mxu0 0
  %2100 = vmatprep.subr.bf16.mxu0 0
  %2101 = vmatpush2.bf16.msra.mxu0 0
  %2102 = vmatprep.subr.bf16.mxu0 0
  %2103 = vmatpush2.bf16.msra.mxu0 0
  %2104 = vmatprep.mubr.bf16.mxu0 0
  %2105 = vmatmul.mubr.bf16.gmra.mxu0 %v2067
  %v2106 = vpop.f32.mrf.mxu0
  %v2107 = vadd.f32 %v2060, %v2106
  %v2108 = vpop.f32.mrf.mxu0
  %v2109 = vpop.f32.mrf.mxu0
  %v2110 = vadd.f32 %v2063, %v2109
  %v2111 = vpop.f32.mrf.mxu0
  %2112 = vdwg.mxu0
  %2113 = vrot.lane.b32.xlu0 %v1571, 112
  %v2114 = vpop.permute.xlu0 %2113
  %2115 = vrot.lane.b32.xlu0 %v1573, 80
  %v2116 = vpop.permute.xlu0 %2115
  %v2118 = vsel %vm195, %v2114, 0
  %v2121 = vsel %vm195, %v2116, 0
  %2123 = vmatprep.subr.bf16.mxu0 0
  %2124 = vmatpush1.bf16.xpose.msra.mxu0 0
  %2125 = vmatprep.subr.bf16.mxu0 0
  %2126 = vmatpush1.bf16.xpose.msra.mxu0 0
  %2127 = vmatprep.subr.bf16.mxu0 0
  %2128 = vmatpush1.bf16.xpose.msra.mxu0 0
  %2129 = vmatprep.subr.bf16.mxu0 0
  %2130 = vmatpush1.bf16.xpose.msra.mxu0 0
  %2131 = vmatprep.subr.bf16.mxu0 0
  %2132 = vmatpush1.bf16.xpose.msra.mxu0 0
  %2133 = vmatprep.subr.bf16.mxu0 0
  %2134 = vmatpush1.bf16.xpose.msra.mxu0 0
  %2135 = vmatprep.subr.bf16.mxu0 0
  %2136 = vmatpush1.bf16.xpose.msra.mxu0 0
  %2137 = vmatprep.subr.bf16.mxu0 0
  %2138 = vmatpush1.bf16.xpose.msra.mxu0 %v2121
  %2139 = vmatprep.subr.bf16.mxu0 0
  %2140 = vmatpush2.bf16.xpose.msra.mxu0 0
  %2141 = vmatprep.subr.bf16.mxu0 0
  %2142 = vmatpush2.bf16.xpose.msra.mxu0 0
  %2143 = vmatprep.subr.bf16.mxu0 0
  %2144 = vmatpush2.bf16.xpose.msra.mxu0 0
  %2145 = vmatprep.subr.bf16.mxu0 0
  %2146 = vmatpush2.bf16.xpose.msra.mxu0 0
  %2147 = vmatprep.subr.bf16.mxu0 0
  %2148 = vmatpush2.bf16.xpose.msra.mxu0 0
  %2149 = vmatprep.subr.bf16.mxu0 0
  %2150 = vmatpush2.bf16.xpose.msra.mxu0 0
  %2151 = vmatprep.subr.bf16.mxu0 0
  %2152 = vmatpush2.bf16.xpose.msra.mxu0 0
  %2153 = vmatprep.subr.bf16.mxu0 0
  %2154 = vmatpush2.bf16.xpose.msra.mxu0 0
  %2155 = vmatprep.mubr.bf16.mxu0 0
  %2156 = vmatmul.mubr.bf16.gmra.mxu0 %v2118
  %v2157 = vpop.f32.mrf.mxu0
  %v2158 = vadd.f32 %v185, %v2157
  %v2159 = vpop.f32.mrf.mxu0
  %v2160 = vpop.f32.mrf.mxu0
  %v2161 = vpop.f32.mrf.mxu0
  %2162 = vdwg.mxu0
  %2163 = vrot.lane.b32.xlu0 %v1572, 112
  %v2164 = vpop.permute.xlu0 %2163
  %2165 = vrot.lane.b32.xlu0 %v1574, 80
  %v2166 = vpop.permute.xlu0 %2165
  %v2168 = vsel %vm195, %v2164, 0
  %v2171 = vsel %vm195, %v2166, 0
  %2173 = vmatprep.subr.bf16.mxu0 0
  %2174 = vmatpush1.bf16.xpose.msra.mxu0 0
  %2175 = vmatprep.subr.bf16.mxu0 0
  %2176 = vmatpush1.bf16.xpose.msra.mxu0 0
  %2177 = vmatprep.subr.bf16.mxu0 0
  %2178 = vmatpush1.bf16.xpose.msra.mxu0 0
  %2179 = vmatprep.subr.bf16.mxu0 0
  %2180 = vmatpush1.bf16.xpose.msra.mxu0 0
  %2181 = vmatprep.subr.bf16.mxu0 0
  %2182 = vmatpush1.bf16.xpose.msra.mxu0 0
  %2183 = vmatprep.subr.bf16.mxu0 0
  %2184 = vmatpush1.bf16.xpose.msra.mxu0 0
  %2185 = vmatprep.subr.bf16.mxu0 0
  %2186 = vmatpush1.bf16.xpose.msra.mxu0 0
  %2187 = vmatprep.subr.bf16.mxu0 0
  %2188 = vmatpush1.bf16.xpose.msra.mxu0 %v2171
  %2189 = vmatprep.subr.bf16.mxu0 0
  %2190 = vmatpush2.bf16.xpose.msra.mxu0 0
  %2191 = vmatprep.subr.bf16.mxu0 0
  %2192 = vmatpush2.bf16.xpose.msra.mxu0 0
  %2193 = vmatprep.subr.bf16.mxu0 0
  %2194 = vmatpush2.bf16.xpose.msra.mxu0 0
  %2195 = vmatprep.subr.bf16.mxu0 0
  %2196 = vmatpush2.bf16.xpose.msra.mxu0 0
  %2197 = vmatprep.subr.bf16.mxu0 0
  %2198 = vmatpush2.bf16.xpose.msra.mxu0 0
  %2199 = vmatprep.subr.bf16.mxu0 0
  %2200 = vmatpush2.bf16.xpose.msra.mxu0 0
  %2201 = vmatprep.subr.bf16.mxu0 0
  %2202 = vmatpush2.bf16.xpose.msra.mxu0 0
  %2203 = vmatprep.subr.bf16.mxu0 0
  %2204 = vmatpush2.bf16.xpose.msra.mxu0 0
  %2205 = vmatprep.mubr.bf16.mxu0 0
  %2206 = vmatmul.mubr.bf16.gmra.mxu0 %v2168
  %v2207 = vpop.f32.mrf.mxu0
  %v2208 = vadd.f32 %v189, %v2207
  %v2209 = vpop.f32.mrf.mxu0
  %v2210 = vpop.f32.mrf.mxu0
  %v2211 = vpop.f32.mrf.mxu0
  %2212 = vdwg.mxu0
  %v2213 = vsel %vm195, %v2158, -inf
  %2214 = vmax.xlane.f32.xlu0 %v2213
  %v2215 = vpop.xlane.xlu0 %2214
  %v2216 = vsel %vm195, %v2208, -inf
  %2217 = vmax.xlane.f32.xlu0 %v2216
  %v2218 = vpop.xlane.xlu0 %2217
  %v2219 = vsub.f32 %v2158, %v2215
  %v2220 = vsub.f32 %v2208, %v2218
  %v2221 = vmul.f32 %v2219, 1.442695
  %v2222 = vpow.pop %v2221
  %v2223 = vmul.f32 %v2220, 1.442695
  %v2224 = vpow.pop %v2223
  %v2225 = vsel %vm195, %v2222, 0.0
  %2226 = vadd.xlane.f32.xlu0 %v2225
  %v2227 = vpop.xlane.xlu0 %2226
  %v2228 = vsel %vm195, %v2224, 0.0
  %2229 = vadd.xlane.f32.xlu0 %v2228
  %v2230 = vpop.xlane.xlu0 %2229
  %v2231 = vrcp.pop %v2227
  %v2232 = vrcp.pop %v2230
  %v2233 = vmul.f32 %v2222, %v2231
  %v2234 = vmul.f32 %v2224, %v2232
  %v2235 = vpack.c.bf16 %v2233, %v2233
  %v2236 = vpack.c.bf16 %v2234, %v2234
  %2237 = vrot.lane.b32.xlu0 %v1573, 48
  %v2238 = vpop.permute.xlu0 %2237
  %v2240 = vsel %vm195, %v2235, 0
  %v2243 = vsel %vm320, %v2238, 0
  %2245 = vmatprep.subr.bf16.mxu0 0
  %2246 = vmatpush1.bf16.msra.mxu0 0
  %2247 = vmatprep.subr.bf16.mxu0 0
  %2248 = vmatpush1.bf16.msra.mxu0 0
  %2249 = vmatprep.subr.bf16.mxu0 0
  %2250 = vmatpush1.bf16.msra.mxu0 0
  %2251 = vmatprep.subr.bf16.mxu0 0
  %2252 = vmatpush1.bf16.msra.mxu0 0
  %2253 = vmatprep.subr.bf16.mxu0 0
  %2254 = vmatpush1.bf16.msra.mxu0 0
  %2255 = vmatprep.subr.bf16.mxu0 0
  %2256 = vmatpush1.bf16.msra.mxu0 0
  %2257 = vmatprep.subr.bf16.mxu0 0
  %2258 = vmatpush1.bf16.msra.mxu0 0
  %2259 = vmatprep.subr.bf16.mxu0 0
  %2260 = vmatpush1.bf16.msra.mxu0 %v2243
  %2261 = vmatprep.subr.bf16.mxu0 0
  %2262 = vmatpush2.bf16.msra.mxu0 0
  %2263 = vmatprep.subr.bf16.mxu0 0
  %2264 = vmatpush2.bf16.msra.mxu0 0
  %2265 = vmatprep.subr.bf16.mxu0 0
  %2266 = vmatpush2.bf16.msra.mxu0 0
  %2267 = vmatprep.subr.bf16.mxu0 0
  %2268 = vmatpush2.bf16.msra.mxu0 0
  %2269 = vmatprep.subr.bf16.mxu0 0
  %2270 = vmatpush2.bf16.msra.mxu0 0
  %2271 = vmatprep.subr.bf16.mxu0 0
  %2272 = vmatpush2.bf16.msra.mxu0 0
  %2273 = vmatprep.subr.bf16.mxu0 0
  %2274 = vmatpush2.bf16.msra.mxu0 0
  %2275 = vmatprep.subr.bf16.mxu0 0
  %2276 = vmatpush2.bf16.msra.mxu0 0
  %2277 = vmatprep.mubr.bf16.mxu0 0
  %2278 = vmatmul.mubr.bf16.gmra.mxu0 %v2240
  %v2279 = vpop.f32.mrf.mxu0
  %v2280 = vadd.f32 0.0, %v2279
  %v2281 = vpop.f32.mrf.mxu0
  %v2282 = vpop.f32.mrf.mxu0
  %v2283 = vpop.f32.mrf.mxu0
  %2284 = vdwg.mxu0
  %2285 = vrot.lane.b32.xlu0 %v1574, 48
  %v2286 = vpop.permute.xlu0 %2285
  %v2288 = vsel %vm195, %v2236, 0
  %v2291 = vsel %vm320, %v2286, 0
  %2293 = vmatprep.subr.bf16.mxu0 0
  %2294 = vmatpush1.bf16.msra.mxu0 0
  %2295 = vmatprep.subr.bf16.mxu0 0
  %2296 = vmatpush1.bf16.msra.mxu0 0
  %2297 = vmatprep.subr.bf16.mxu0 0
  %2298 = vmatpush1.bf16.msra.mxu0 0
  %2299 = vmatprep.subr.bf16.mxu0 0
  %2300 = vmatpush1.bf16.msra.mxu0 0
  %2301 = vmatprep.subr.bf16.mxu0 0
  %2302 = vmatpush1.bf16.msra.mxu0 0
  %2303 = vmatprep.subr.bf16.mxu0 0
  %2304 = vmatpush1.bf16.msra.mxu0 0
  %2305 = vmatprep.subr.bf16.mxu0 0
  %2306 = vmatpush1.bf16.msra.mxu0 0
  %2307 = vmatprep.subr.bf16.mxu0 0
  %2308 = vmatpush1.bf16.msra.mxu0 %v2291
  %2309 = vmatprep.subr.bf16.mxu0 0
  %2310 = vmatpush2.bf16.msra.mxu0 0
  %2311 = vmatprep.subr.bf16.mxu0 0
  %2312 = vmatpush2.bf16.msra.mxu0 0
  %2313 = vmatprep.subr.bf16.mxu0 0
  %2314 = vmatpush2.bf16.msra.mxu0 0
  %2315 = vmatprep.subr.bf16.mxu0 0
  %2316 = vmatpush2.bf16.msra.mxu0 0
  %2317 = vmatprep.subr.bf16.mxu0 0
  %2318 = vmatpush2.bf16.msra.mxu0 0
  %2319 = vmatprep.subr.bf16.mxu0 0
  %2320 = vmatpush2.bf16.msra.mxu0 0
  %2321 = vmatprep.subr.bf16.mxu0 0
  %2322 = vmatpush2.bf16.msra.mxu0 0
  %2323 = vmatprep.subr.bf16.mxu0 0
  %2324 = vmatpush2.bf16.msra.mxu0 0
  %2325 = vmatprep.mubr.bf16.mxu0 0
  %2326 = vmatmul.mubr.bf16.gmra.mxu0 %v2288
  %v2327 = vpop.f32.mrf.mxu0
  %v2328 = vadd.f32 0.0, %v2327
  %v2329 = vpop.f32.mrf.mxu0
  %v2330 = vpop.f32.mrf.mxu0
  %v2331 = vpop.f32.mrf.mxu0
  %2332 = vdwg.mxu0
  %v2333 = vpack.c.bf16 %v2328, %v2280
  %v2334 = vpack.c.bf16 %v1567, %v1567
  %v2336 = vsel %vm195, %v2333, 0
  %v2339 = vsel %vm320, %v2334, 0
  %2341 = vmatprep.subr.bf16.mxu0 0
  %2342 = vmatpush1.bf16.msra.mxu0 0
  %2343 = vmatprep.subr.bf16.mxu0 0
  %2344 = vmatpush1.bf16.msra.mxu0 0
  %2345 = vmatprep.subr.bf16.mxu0 0
  %2346 = vmatpush1.bf16.msra.mxu0 0
  %2347 = vmatprep.subr.bf16.mxu0 0
  %2348 = vmatpush1.bf16.msra.mxu0 0
  %2349 = vmatprep.subr.bf16.mxu0 0
  %2350 = vmatpush1.bf16.msra.mxu0 0
  %2351 = vmatprep.subr.bf16.mxu0 0
  %2352 = vmatpush1.bf16.msra.mxu0 0
  %2353 = vmatprep.subr.bf16.mxu0 0
  %2354 = vmatpush1.bf16.msra.mxu0 0
  %2355 = vmatprep.subr.bf16.mxu0 0
  %2356 = vmatpush1.bf16.msra.mxu0 %v2339
  %2357 = vmatprep.subr.bf16.mxu0 0
  %2358 = vmatpush2.bf16.msra.mxu0 0
  %2359 = vmatprep.subr.bf16.mxu0 0
  %2360 = vmatpush2.bf16.msra.mxu0 0
  %2361 = vmatprep.subr.bf16.mxu0 0
  %2362 = vmatpush2.bf16.msra.mxu0 0
  %2363 = vmatprep.subr.bf16.mxu0 0
  %2364 = vmatpush2.bf16.msra.mxu0 0
  %2365 = vmatprep.subr.bf16.mxu0 0
  %2366 = vmatpush2.bf16.msra.mxu0 0
  %2367 = vmatprep.subr.bf16.mxu0 0
  %2368 = vmatpush2.bf16.msra.mxu0 0
  %2369 = vmatprep.subr.bf16.mxu0 0
  %2370 = vmatpush2.bf16.msra.mxu0 0
  %2371 = vmatprep.subr.bf16.mxu0 0
  %2372 = vmatpush2.bf16.msra.mxu0 0
  %2373 = vmatprep.mubr.bf16.mxu0 0
  %2374 = vmatmul.mubr.bf16.gmra.mxu0 %v2336
  %v2375 = vpop.f32.mrf.mxu0
  %v2376 = vadd.f32 0.0, %v2375
  %v2377 = vpop.f32.mrf.mxu0
  %v2378 = vpop.f32.mrf.mxu0
  %v2379 = vadd.f32 0.0, %v2378
  %v2380 = vpop.f32.mrf.mxu0
  %2381 = vdwg.mxu0
  %v2382 = vadd.f32 %v2107, %v2376
  %v2383 = vadd.f32 %v2110, %v2379
  %2384 = vrot.lane.b32.xlu0 %v1571, 104
  %v2385 = vpop.permute.xlu0 %2384
  %2386 = vrot.lane.b32.xlu0 %v1573, 72
  %v2387 = vpop.permute.xlu0 %2386
  %v2389 = vsel %vm195, %v2385, 0
  %v2392 = vsel %vm195, %v2387, 0
  %2394 = vmatprep.subr.bf16.mxu0 0
  %2395 = vmatpush1.bf16.xpose.msra.mxu0 0
  %2396 = vmatprep.subr.bf16.mxu0 0
  %2397 = vmatpush1.bf16.xpose.msra.mxu0 0
  %2398 = vmatprep.subr.bf16.mxu0 0
  %2399 = vmatpush1.bf16.xpose.msra.mxu0 0
  %2400 = vmatprep.subr.bf16.mxu0 0
  %2401 = vmatpush1.bf16.xpose.msra.mxu0 0
  %2402 = vmatprep.subr.bf16.mxu0 0
  %2403 = vmatpush1.bf16.xpose.msra.mxu0 0
  %2404 = vmatprep.subr.bf16.mxu0 0
  %2405 = vmatpush1.bf16.xpose.msra.mxu0 0
  %2406 = vmatprep.subr.bf16.mxu0 0
  %2407 = vmatpush1.bf16.xpose.msra.mxu0 0
  %2408 = vmatprep.subr.bf16.mxu0 0
  %2409 = vmatpush1.bf16.xpose.msra.mxu0 %v2392
  %2410 = vmatprep.subr.bf16.mxu0 0
  %2411 = vmatpush2.bf16.xpose.msra.mxu0 0
  %2412 = vmatprep.subr.bf16.mxu0 0
  %2413 = vmatpush2.bf16.xpose.msra.mxu0 0
  %2414 = vmatprep.subr.bf16.mxu0 0
  %2415 = vmatpush2.bf16.xpose.msra.mxu0 0
  %2416 = vmatprep.subr.bf16.mxu0 0
  %2417 = vmatpush2.bf16.xpose.msra.mxu0 0
  %2418 = vmatprep.subr.bf16.mxu0 0
  %2419 = vmatpush2.bf16.xpose.msra.mxu0 0
  %2420 = vmatprep.subr.bf16.mxu0 0
  %2421 = vmatpush2.bf16.xpose.msra.mxu0 0
  %2422 = vmatprep.subr.bf16.mxu0 0
  %2423 = vmatpush2.bf16.xpose.msra.mxu0 0
  %2424 = vmatprep.subr.bf16.mxu0 0
  %2425 = vmatpush2.bf16.xpose.msra.mxu0 0
  %2426 = vmatprep.mubr.bf16.mxu0 0
  %2427 = vmatmul.mubr.bf16.gmra.mxu0 %v2389
  %v2428 = vpop.f32.mrf.mxu0
  %v2429 = vadd.f32 %v185, %v2428
  %v2430 = vpop.f32.mrf.mxu0
  %v2431 = vpop.f32.mrf.mxu0
  %v2432 = vpop.f32.mrf.mxu0
  %2433 = vdwg.mxu0
  %2434 = vrot.lane.b32.xlu0 %v1572, 104
  %v2435 = vpop.permute.xlu0 %2434
  %2436 = vrot.lane.b32.xlu0 %v1574, 72
  %v2437 = vpop.permute.xlu0 %2436
  %v2439 = vsel %vm195, %v2435, 0
  %v2442 = vsel %vm195, %v2437, 0
  %2444 = vmatprep.subr.bf16.mxu0 0
  %2445 = vmatpush1.bf16.xpose.msra.mxu0 0
  %2446 = vmatprep.subr.bf16.mxu0 0
  %2447 = vmatpush1.bf16.xpose.msra.mxu0 0
  %2448 = vmatprep.subr.bf16.mxu0 0
  %2449 = vmatpush1.bf16.xpose.msra.mxu0 0
  %2450 = vmatprep.subr.bf16.mxu0 0
  %2451 = vmatpush1.bf16.xpose.msra.mxu0 0
  %2452 = vmatprep.subr.bf16.mxu0 0
  %2453 = vmatpush1.bf16.xpose.msra.mxu0 0
  %2454 = vmatprep.subr.bf16.mxu0 0
  %2455 = vmatpush1.bf16.xpose.msra.mxu0 0
  %2456 = vmatprep.subr.bf16.mxu0 0
  %2457 = vmatpush1.bf16.xpose.msra.mxu0 0
  %2458 = vmatprep.subr.bf16.mxu0 0
  %2459 = vmatpush1.bf16.xpose.msra.mxu0 %v2442
  %2460 = vmatprep.subr.bf16.mxu0 0
  %2461 = vmatpush2.bf16.xpose.msra.mxu0 0
  %2462 = vmatprep.subr.bf16.mxu0 0
  %2463 = vmatpush2.bf16.xpose.msra.mxu0 0
  %2464 = vmatprep.subr.bf16.mxu0 0
  %2465 = vmatpush2.bf16.xpose.msra.mxu0 0
  %2466 = vmatprep.subr.bf16.mxu0 0
  %2467 = vmatpush2.bf16.xpose.msra.mxu0 0
  %2468 = vmatprep.subr.bf16.mxu0 0
  %2469 = vmatpush2.bf16.xpose.msra.mxu0 0
  %2470 = vmatprep.subr.bf16.mxu0 0
  %2471 = vmatpush2.bf16.xpose.msra.mxu0 0
  %2472 = vmatprep.subr.bf16.mxu0 0
  %2473 = vmatpush2.bf16.xpose.msra.mxu0 0
  %2474 = vmatprep.subr.bf16.mxu0 0
  %2475 = vmatpush2.bf16.xpose.msra.mxu0 0
  %2476 = vmatprep.mubr.bf16.mxu0 0
  %2477 = vmatmul.mubr.bf16.gmra.mxu0 %v2439
  %v2478 = vpop.f32.mrf.mxu0
  %v2479 = vadd.f32 %v189, %v2478
  %v2480 = vpop.f32.mrf.mxu0
  %v2481 = vpop.f32.mrf.mxu0
  %v2482 = vpop.f32.mrf.mxu0
  %2483 = vdwg.mxu0
  %v2484 = vsel %vm195, %v2429, -inf
  %2485 = vmax.xlane.f32.xlu0 %v2484
  %v2486 = vpop.xlane.xlu0 %2485
  %v2487 = vsel %vm195, %v2479, -inf
  %2488 = vmax.xlane.f32.xlu0 %v2487
  %v2489 = vpop.xlane.xlu0 %2488
  %v2490 = vsub.f32 %v2429, %v2486
  %v2491 = vsub.f32 %v2479, %v2489
  %v2492 = vmul.f32 %v2490, 1.442695
  %v2493 = vpow.pop %v2492
  %v2494 = vmul.f32 %v2491, 1.442695
  %v2495 = vpow.pop %v2494
  %v2496 = vsel %vm195, %v2493, 0.0
  %2497 = vadd.xlane.f32.xlu0 %v2496
  %v2498 = vpop.xlane.xlu0 %2497
  %v2499 = vsel %vm195, %v2495, 0.0
  %2500 = vadd.xlane.f32.xlu0 %v2499
  %v2501 = vpop.xlane.xlu0 %2500
  %v2502 = vrcp.pop %v2498
  %v2503 = vrcp.pop %v2501
  %v2504 = vmul.f32 %v2493, %v2502
  %v2505 = vmul.f32 %v2495, %v2503
  %v2506 = vpack.c.bf16 %v2504, %v2504
  %v2507 = vpack.c.bf16 %v2505, %v2505
  %2508 = vrot.lane.b32.xlu0 %v1573, 40
  %v2509 = vpop.permute.xlu0 %2508
  %v2511 = vsel %vm195, %v2506, 0
  %v2514 = vsel %vm320, %v2509, 0
  %2516 = vmatprep.subr.bf16.mxu0 0
  %2517 = vmatpush1.bf16.msra.mxu0 0
  %2518 = vmatprep.subr.bf16.mxu0 0
  %2519 = vmatpush1.bf16.msra.mxu0 0
  %2520 = vmatprep.subr.bf16.mxu0 0
  %2521 = vmatpush1.bf16.msra.mxu0 0
  %2522 = vmatprep.subr.bf16.mxu0 0
  %2523 = vmatpush1.bf16.msra.mxu0 0
  %2524 = vmatprep.subr.bf16.mxu0 0
  %2525 = vmatpush1.bf16.msra.mxu0 0
  %2526 = vmatprep.subr.bf16.mxu0 0
  %2527 = vmatpush1.bf16.msra.mxu0 0
  %2528 = vmatprep.subr.bf16.mxu0 0
  %2529 = vmatpush1.bf16.msra.mxu0 0
  %2530 = vmatprep.subr.bf16.mxu0 0
  %2531 = vmatpush1.bf16.msra.mxu0 %v2514
  %2532 = vmatprep.subr.bf16.mxu0 0
  %2533 = vmatpush2.bf16.msra.mxu0 0
  %2534 = vmatprep.subr.bf16.mxu0 0
  %2535 = vmatpush2.bf16.msra.mxu0 0
  %2536 = vmatprep.subr.bf16.mxu0 0
  %2537 = vmatpush2.bf16.msra.mxu0 0
  %2538 = vmatprep.subr.bf16.mxu0 0
  %2539 = vmatpush2.bf16.msra.mxu0 0
  %2540 = vmatprep.subr.bf16.mxu0 0
  %2541 = vmatpush2.bf16.msra.mxu0 0
  %2542 = vmatprep.subr.bf16.mxu0 0
  %2543 = vmatpush2.bf16.msra.mxu0 0
  %2544 = vmatprep.subr.bf16.mxu0 0
  %2545 = vmatpush2.bf16.msra.mxu0 0
  %2546 = vmatprep.subr.bf16.mxu0 0
  %2547 = vmatpush2.bf16.msra.mxu0 0
  %2548 = vmatprep.mubr.bf16.mxu0 0
  %2549 = vmatmul.mubr.bf16.gmra.mxu0 %v2511
  %v2550 = vpop.f32.mrf.mxu0
  %v2551 = vadd.f32 0.0, %v2550
  %v2552 = vpop.f32.mrf.mxu0
  %v2553 = vpop.f32.mrf.mxu0
  %v2554 = vpop.f32.mrf.mxu0
  %2555 = vdwg.mxu0
  %2556 = vrot.lane.b32.xlu0 %v1574, 40
  %v2557 = vpop.permute.xlu0 %2556
  %v2559 = vsel %vm195, %v2507, 0
  %v2562 = vsel %vm320, %v2557, 0
  %2564 = vmatprep.subr.bf16.mxu0 0
  %2565 = vmatpush1.bf16.msra.mxu0 0
  %2566 = vmatprep.subr.bf16.mxu0 0
  %2567 = vmatpush1.bf16.msra.mxu0 0
  %2568 = vmatprep.subr.bf16.mxu0 0
  %2569 = vmatpush1.bf16.msra.mxu0 0
  %2570 = vmatprep.subr.bf16.mxu0 0
  %2571 = vmatpush1.bf16.msra.mxu0 0
  %2572 = vmatprep.subr.bf16.mxu0 0
  %2573 = vmatpush1.bf16.msra.mxu0 0
  %2574 = vmatprep.subr.bf16.mxu0 0
  %2575 = vmatpush1.bf16.msra.mxu0 0
  %2576 = vmatprep.subr.bf16.mxu0 0
  %2577 = vmatpush1.bf16.msra.mxu0 0
  %2578 = vmatprep.subr.bf16.mxu0 0
  %2579 = vmatpush1.bf16.msra.mxu0 %v2562
  %2580 = vmatprep.subr.bf16.mxu0 0
  %2581 = vmatpush2.bf16.msra.mxu0 0
  %2582 = vmatprep.subr.bf16.mxu0 0
  %2583 = vmatpush2.bf16.msra.mxu0 0
  %2584 = vmatprep.subr.bf16.mxu0 0
  %2585 = vmatpush2.bf16.msra.mxu0 0
  %2586 = vmatprep.subr.bf16.mxu0 0
  %2587 = vmatpush2.bf16.msra.mxu0 0
  %2588 = vmatprep.subr.bf16.mxu0 0
  %2589 = vmatpush2.bf16.msra.mxu0 0
  %2590 = vmatprep.subr.bf16.mxu0 0
  %2591 = vmatpush2.bf16.msra.mxu0 0
  %2592 = vmatprep.subr.bf16.mxu0 0
  %2593 = vmatpush2.bf16.msra.mxu0 0
  %2594 = vmatprep.subr.bf16.mxu0 0
  %2595 = vmatpush2.bf16.msra.mxu0 0
  %2596 = vmatprep.mubr.bf16.mxu0 0
  %2597 = vmatmul.mubr.bf16.gmra.mxu0 %v2559
  %v2598 = vpop.f32.mrf.mxu0
  %v2599 = vadd.f32 0.0, %v2598
  %v2600 = vpop.f32.mrf.mxu0
  %v2601 = vpop.f32.mrf.mxu0
  %v2602 = vpop.f32.mrf.mxu0
  %2603 = vdwg.mxu0
  %v2604 = vpack.c.bf16 %v2599, %v2551
  %v2605 = vpack.c.bf16 %v1568, %v1568
  %v2607 = vsel %vm195, %v2604, 0
  %v2610 = vsel %vm320, %v2605, 0
  %2612 = vmatprep.subr.bf16.mxu0 0
  %2613 = vmatpush1.bf16.msra.mxu0 0
  %2614 = vmatprep.subr.bf16.mxu0 0
  %2615 = vmatpush1.bf16.msra.mxu0 0
  %2616 = vmatprep.subr.bf16.mxu0 0
  %2617 = vmatpush1.bf16.msra.mxu0 0
  %2618 = vmatprep.subr.bf16.mxu0 0
  %2619 = vmatpush1.bf16.msra.mxu0 0
  %2620 = vmatprep.subr.bf16.mxu0 0
  %2621 = vmatpush1.bf16.msra.mxu0 0
  %2622 = vmatprep.subr.bf16.mxu0 0
  %2623 = vmatpush1.bf16.msra.mxu0 0
  %2624 = vmatprep.subr.bf16.mxu0 0
  %2625 = vmatpush1.bf16.msra.mxu0 0
  %2626 = vmatprep.subr.bf16.mxu0 0
  %2627 = vmatpush1.bf16.msra.mxu0 %v2610
  %2628 = vmatprep.subr.bf16.mxu0 0
  %2629 = vmatpush2.bf16.msra.mxu0 0
  %2630 = vmatprep.subr.bf16.mxu0 0
  %2631 = vmatpush2.bf16.msra.mxu0 0
  %2632 = vmatprep.subr.bf16.mxu0 0
  %2633 = vmatpush2.bf16.msra.mxu0 0
  %2634 = vmatprep.subr.bf16.mxu0 0
  %2635 = vmatpush2.bf16.msra.mxu0 0
  %2636 = vmatprep.subr.bf16.mxu0 0
  %2637 = vmatpush2.bf16.msra.mxu0 0
  %2638 = vmatprep.subr.bf16.mxu0 0
  %2639 = vmatpush2.bf16.msra.mxu0 0
  %2640 = vmatprep.subr.bf16.mxu0 0
  %2641 = vmatpush2.bf16.msra.mxu0 0
  %2642 = vmatprep.subr.bf16.mxu0 0
  %2643 = vmatpush2.bf16.msra.mxu0 0
  %2644 = vmatprep.mubr.bf16.mxu0 0
  %2645 = vmatmul.mubr.bf16.gmra.mxu0 %v2607
  %v2646 = vpop.f32.mrf.mxu0
  %v2647 = vadd.f32 0.0, %v2646
  %v2648 = vpop.f32.mrf.mxu0
  %v2649 = vpop.f32.mrf.mxu0
  %v2650 = vadd.f32 0.0, %v2649
  %v2651 = vpop.f32.mrf.mxu0
  %2652 = vdwg.mxu0
  %v2653 = vadd.f32 %v2382, %v2647
  %v2654 = vadd.f32 %v2383, %v2650
  %s2655 = scalar_lea.vmem %s8, 1
  %v2656 = vld [vmem:[%s2655] sm:$0x1]
  %v2658 = vlaneseq
  %v2659 = vshrl.u32 %v2658, 7
  %v2660 = vsub.s32 0, %v2659
  %v2661 = vrot.slane %v2656, %v2660
  %v2663 = vadd.f32 %v2653, %v2661
  %v2664 = vadd.f32 %v2654, %v2661
  %v2665 = vadd.f32 %v1456, %v2663
  %v2666 = vadd.f32 %v1457, %v2664
  %s2667 = scalar_lea.vmem %s9, 1
  %v2668 = vld [vmem:[%s2667] sm:$0x1]
  %s2669 = scalar_lea.vmem %s10, 1
  %v2670 = vld [vmem:[%s2669] sm:$0x1]
  %v2671 = vsel %vm68, %v2665, 0.0
  %2672 = vadd.xlane.f32.xlu0 %v2671
  %v2673 = vpop.xlane.xlu0 %2672
  %v2674 = vsel %vm68, %v2666, 0.0
  %2675 = vadd.xlane.f32.xlu0 %v2674
  %v2676 = vpop.xlane.xlu0 %2675
  %v2677 = vmul.f32 %v2673, %v75
  %v2678 = vmul.f32 %v2676, %v75
  %v2679 = vsub.f32 %v2665, %v2677
  %v2680 = vsub.f32 %v2666, %v2678
  %v2681 = vmul.f32 %v2679, %v2679
  %v2682 = vmul.f32 %v2680, %v2680
  %v2683 = vsel %vm68, %v2681, 0.0
  %2684 = vadd.xlane.f32.xlu0 %v2683
  %v2685 = vpop.xlane.xlu0 %2684
  %v2686 = vsel %vm68, %v2682, 0.0
  %2687 = vadd.xlane.f32.xlu0 %v2686
  %v2688 = vpop.xlane.xlu0 %2687
  %v2689 = vmul.f32 %v2685, %v75
  %v2690 = vmul.f32 %v2688, %v75
  %v2691 = vadd.f32 %v2689, 1e-05
  %v2692 = vadd.f32 %v2690, 1e-05
  %v2693 = vrsqrt.pop %v2691
  %v2694 = vrsqrt.pop %v2692
  %v2695 = vmul.f32 %v2679, %v2693
  %v2696 = vmul.f32 %v2680, %v2694
  %v2698 = vlaneseq
  %v2699 = vshrl.u32 %v2698, 7
  %v2700 = vsub.s32 0, %v2699
  %v2701 = vrot.slane %v2668, %v2700
  %v2703 = vmul.f32 %v2695, %v2701
  %v2704 = vmul.f32 %v2696, %v2701
  %v2706 = vlaneseq
  %v2707 = vshrl.u32 %v2706, 7
  %v2708 = vsub.s32 0, %v2707
  %v2709 = vrot.slane %v2670, %v2708
  %v2711 = vadd.f32 %v2703, %v2709
  %v2712 = vadd.f32 %v2704, %v2709
  %s2713 = scalar_lea.vmem %s11, 32
  %v2714 = vld [vmem:[%s2713] sm:$0xff]
  %v2715 = vld [vmem:[%s2713 + $0x8] sm:$0xff]
  %v2716 = vld [vmem:[%s2713 + $0x10] sm:$0xff]
  %v2717 = vld [vmem:[%s2713 + $0x18] sm:$0xff]
  %v2718 = vpack.c.bf16 %v2712, %v2711
  %v2719 = vpack.c.bf16 %v2715, %v2714
  %v2720 = vpack.c.bf16 %v2717, %v2716
  %s2721 = scalar_lea.vmem %s12, 1
  %v2722 = vld [vmem:[%s2721] sm:$0x1]
  %v2724 = vlaneseq
  %v2725 = vshrl.u32 %v2724, 7
  %v2726 = vsub.s32 0, %v2725
  %v2727 = vrot.slane %v2722, %v2726
  %v2730 = vsel %vm68, %v2718, 0
  %2732 = vmatprep.subr.bf16.mxu0 0
  %2733 = vmatpush1.bf16.msra.mxu0 0
  %2734 = vmatprep.subr.bf16.mxu0 0
  %2735 = vmatpush1.bf16.msra.mxu0 0
  %2736 = vmatprep.subr.bf16.mxu0 0
  %2737 = vmatpush1.bf16.msra.mxu0 0
  %2738 = vmatprep.subr.bf16.mxu0 0
  %2739 = vmatpush1.bf16.msra.mxu0 0
  %2740 = vmatprep.subr.bf16.mxu0 0
  %2741 = vmatpush1.bf16.msra.mxu0 0
  %2742 = vmatprep.subr.bf16.mxu0 0
  %2743 = vmatpush1.bf16.msra.mxu0 0
  %2744 = vmatprep.subr.bf16.mxu0 0
  %2745 = vmatpush1.bf16.msra.mxu0 %v2720
  %2746 = vmatprep.subr.bf16.mxu0 0
  %2747 = vmatpush1.bf16.msra.mxu0 %v2719
  %2748 = vmatprep.subr.bf16.mxu0 0
  %2749 = vmatpush2.bf16.msra.mxu0 0
  %2750 = vmatprep.subr.bf16.mxu0 0
  %2751 = vmatpush2.bf16.msra.mxu0 0
  %2752 = vmatprep.subr.bf16.mxu0 0
  %2753 = vmatpush2.bf16.msra.mxu0 0
  %2754 = vmatprep.subr.bf16.mxu0 0
  %2755 = vmatpush2.bf16.msra.mxu0 0
  %2756 = vmatprep.subr.bf16.mxu0 0
  %2757 = vmatpush2.bf16.msra.mxu0 0
  %2758 = vmatprep.subr.bf16.mxu0 0
  %2759 = vmatpush2.bf16.msra.mxu0 0
  %2760 = vmatprep.subr.bf16.mxu0 0
  %2761 = vmatpush2.bf16.msra.mxu0 0
  %2762 = vmatprep.subr.bf16.mxu0 0
  %2763 = vmatpush2.bf16.msra.mxu0 0
  %2764 = vmatprep.mubr.bf16.mxu0 0
  %2765 = vmatmul.mubr.bf16.gmra.mxu0 %v2730
  %v2766 = vpop.f32.mrf.mxu0
  %v2767 = vadd.f32 %v2727, %v2766
  %v2768 = vpop.f32.mrf.mxu0
  %v2769 = vpop.f32.mrf.mxu0
  %v2770 = vadd.f32 %v2727, %v2769
  %v2771 = vpop.f32.mrf.mxu0
  %2772 = vdwg.mxu0
  %v2773 = vmax.f32 %v2767, 0.0
  %v2774 = vmax.f32 %v2770, 0.0
  %s2775 = scalar_lea.vmem %s13, 64
  %v2776 = vld [vmem:[%s2775] sm:$0xff]
  %v2777 = vld [vmem:[%s2775 + $0x8] sm:$0xff]
  %v2778 = vld [vmem:[%s2775 + $0x10] sm:$0xff]
  %v2779 = vld [vmem:[%s2775 + $0x18] sm:$0xff]
  %v2780 = vld [vmem:[%s2775 + $0x20] sm:$0xff]
  %v2781 = vld [vmem:[%s2775 + $0x28] sm:$0xff]
  %v2782 = vld [vmem:[%s2775 + $0x30] sm:$0xff]
  %v2783 = vld [vmem:[%s2775 + $0x38] sm:$0xff]
  %v2784 = vpack.c.bf16 %v2774, %v2773
  %v2785 = vpack.c.bf16 %v2777, %v2776
  %v2786 = vpack.c.bf16 %v2779, %v2778
  %v2787 = vpack.c.bf16 %v2781, %v2780
  %v2788 = vpack.c.bf16 %v2783, %v2782
  %v2790 = vsel %vm1402, %v2784, 0
  %2792 = vmatprep.subr.bf16.mxu0 0
  %2793 = vmatpush1.bf16.msra.mxu0 0
  %2794 = vmatprep.subr.bf16.mxu0 0
  %2795 = vmatpush1.bf16.msra.mxu0 0
  %2796 = vmatprep.subr.bf16.mxu0 0
  %2797 = vmatpush1.bf16.msra.mxu0 0
  %2798 = vmatprep.subr.bf16.mxu0 0
  %2799 = vmatpush1.bf16.msra.mxu0 0
  %2800 = vmatprep.subr.bf16.mxu0 0
  %2801 = vmatpush1.bf16.msra.mxu0 %v2788
  %2802 = vmatprep.subr.bf16.mxu0 0
  %2803 = vmatpush1.bf16.msra.mxu0 %v2787
  %2804 = vmatprep.subr.bf16.mxu0 0
  %2805 = vmatpush1.bf16.msra.mxu0 %v2786
  %2806 = vmatprep.subr.bf16.mxu0 0
  %2807 = vmatpush1.bf16.msra.mxu0 %v2785
  %2808 = vmatprep.subr.bf16.mxu0 0
  %2809 = vmatpush2.bf16.msra.mxu0 0
  %2810 = vmatprep.subr.bf16.mxu0 0
  %2811 = vmatpush2.bf16.msra.mxu0 0
  %2812 = vmatprep.subr.bf16.mxu0 0
  %2813 = vmatpush2.bf16.msra.mxu0 0
  %2814 = vmatprep.subr.bf16.mxu0 0
  %2815 = vmatpush2.bf16.msra.mxu0 0
  %2816 = vmatprep.subr.bf16.mxu0 0
  %2817 = vmatpush2.bf16.msra.mxu0 0
  %2818 = vmatprep.subr.bf16.mxu0 0
  %2819 = vmatpush2.bf16.msra.mxu0 0
  %2820 = vmatprep.subr.bf16.mxu0 0
  %2821 = vmatpush2.bf16.msra.mxu0 0
  %2822 = vmatprep.subr.bf16.mxu0 0
  %2823 = vmatpush2.bf16.msra.mxu0 0
  %2824 = vmatprep.mubr.bf16.mxu0 0
  %2825 = vmatmul.mubr.bf16.gmra.mxu0 %v2790
  %v2826 = vpop.f32.mrf.mxu0
  %v2827 = vadd.f32 0.0, %v2826
  %v2828 = vpop.f32.mrf.mxu0
  %v2829 = vpop.f32.mrf.mxu0
  %v2830 = vadd.f32 0.0, %v2829
  %v2831 = vpop.f32.mrf.mxu0
  %2832 = vdwg.mxu0
  %v2833 = vadd.f32 %v2665, %v2827
  %v2834 = vadd.f32 %v2666, %v2830
  %s2835 = scalar_lea.vmem %s14, 1
  %v2836 = vld [vmem:[%s2835] sm:$0x1]
  %v2838 = vlaneseq
  %v2839 = vshrl.u32 %v2838, 7
  %v2840 = vsub.s32 0, %v2839
  %v2841 = vrot.slane %v2836, %v2840
  %v2843 = vadd.f32 %v2833, %v2841
  %v2844 = vadd.f32 %v2834, %v2841
  %v2845 = vld [vmem:[%s15] sm:$0x1]
  %v2846 = vld [vmem:[%s16] sm:$0x1]
  %v2847 = vsel %vm68, %v2843, 0.0
  %2848 = vadd.xlane.f32.xlu0 %v2847
  %v2849 = vpop.xlane.xlu0 %2848
  %v2850 = vsel %vm68, %v2844, 0.0
  %2851 = vadd.xlane.f32.xlu0 %v2850
  %v2852 = vpop.xlane.xlu0 %2851
  %v2853 = vmul.f32 %v2849, %v75
  %v2854 = vmul.f32 %v2852, %v75
  %v2855 = vsub.f32 %v2843, %v2853
  %v2856 = vsub.f32 %v2844, %v2854
  %v2857 = vmul.f32 %v2855, %v2855
  %v2858 = vmul.f32 %v2856, %v2856
  %v2859 = vsel %vm68, %v2857, 0.0
  %2860 = vadd.xlane.f32.xlu0 %v2859
  %v2861 = vpop.xlane.xlu0 %2860
  %v2862 = vsel %vm68, %v2858, 0.0
  %2863 = vadd.xlane.f32.xlu0 %v2862
  %v2864 = vpop.xlane.xlu0 %2863
  %v2865 = vmul.f32 %v2861, %v75
  %v2866 = vmul.f32 %v2864, %v75
  %v2867 = vadd.f32 %v2865, 1e-05
  %v2868 = vadd.f32 %v2866, 1e-05
  %v2869 = vrsqrt.pop %v2867
  %v2870 = vrsqrt.pop %v2868
  %v2871 = vmul.f32 %v2855, %v2869
  %v2872 = vmul.f32 %v2856, %v2870
  %v2874 = vlaneseq
  %v2875 = vshrl.u32 %v2874, 7
  %v2876 = vsub.s32 0, %v2875
  %v2877 = vrot.slane %v2845, %v2876
  %v2879 = vmul.f32 %v2871, %v2877
  %v2880 = vmul.f32 %v2872, %v2877
  %v2882 = vlaneseq
  %v2883 = vshrl.u32 %v2882, 7
  %v2884 = vsub.s32 0, %v2883
  %v2885 = vrot.slane %v2846, %v2884
  %v2887 = vadd.f32 %v2879, %v2885
  %v2888 = vadd.f32 %v2880, %v2885
  %2889 = vst.msk [vmem:[%s17] sm:$0xff] %vm68, %v2887
  %2890 = vst.msk [vmem:[%s17 + $0x8] sm:$0xff] %vm68, %v2888
  // Predicated region
  $region70: #{transformer_lstm_forward.2} parent=0 // pred_check
    _
  $region71: #{transformer_lstm_forward.2} parent=0 // pred_check_branch
    %2892 = sbr.rel (0) target = $region73
  $region72: #{transformer_lstm_forward.2} parent=0 // pred_region
    _
  $region73: #{transformer_lstm_forward.2} parent=0 // pred_fallthru
    _
  // Predicated region
  $region74: #{transformer_lstm_forward.2} parent=0 // pred_check
    _
  $region75: #{transformer_lstm_forward.2} parent=0 // pred_check_branch
    %2894 = sbr.rel (0) target = $region77
  $region76: #{transformer_lstm_forward.2} parent=0 // pred_region
    _
  $region77: #{transformer_lstm_forward.2} parent=0 // pred_fallthru
    _

// kernel: transformer_lstm_forward.3
$region0: #{transformer_lstm_forward.3}
  #allocation0 [shape = 'u32[]', space=smem, size = 0x4, offset = 0x4, fixed_abs, tag = 'smem constant byte address 0x4 - core index']
  #allocation1 [shape = 'u32[144,128]{1,0:T(1,128)}', space=vmem, size = 0x12000, scoped, tag = 'internal scratch']
  %s0 = inlined_call_operand.vmem [shape: f32[2,8,32], index: 0, kind: input, shape index: {}]
  %s1 = inlined_call_operand.vmem [shape: f32[2,8,32], index: 1, kind: input, shape index: {}]
  %s2 = inlined_call_operand.vmem [shape: f32[2,1,8], index: 2, kind: input, shape index: {}]
  %s3 = inlined_call_operand.vmem [shape: f32[2,32,128], index: 3, kind: input, shape index: {}]
  %s4 = inlined_call_operand.vmem [shape: f32[2,32,128], index: 4, kind: input, shape index: {}]
  %s5 = inlined_call_operand.vmem [shape: f32[2,1,128], index: 5, kind: input, shape index: {}]
  %s6 = inlined_call_operand.vmem [shape: f32[32,32], index: 6, kind: input, shape index: {}]
  %s7 = inlined_call_operand.vmem [shape: f32[1,32], index: 7, kind: input, shape index: {}]
  %s8 = inlined_call_operand.vmem [shape: f32[32,64], index: 8, kind: input, shape index: {}]
  %s9 = inlined_call_operand.vmem [shape: f32[1,64], index: 9, kind: input, shape index: {}]
  %s10 = inlined_call_operand.vmem [shape: f32[32,32], index: 10, kind: input, shape index: {}]
  %s11 = inlined_call_operand.vmem [shape: f32[1,32], index: 11, kind: input, shape index: {}]
  %s12 = inlined_call_operand.vmem [shape: f32[32,128], index: 12, kind: input, shape index: {}]
  %s13 = inlined_call_operand.vmem [shape: f32[1,128], index: 13, kind: input, shape index: {}]
  %s14 = inlined_call_operand.hbm [shape: f32[2,8,128], index: 14, kind: output, shape index: {}]
  %s15 = sld [smem:[#allocation0]]
  $region66: #{transformer_lstm_forward.3} parent=0
    _
  %s17 = ssub.s32 1, %s15
  %s18 = scalar_select 0, %s17, %s15
  $region1: #{transformer_lstm_forward.3} parent=0
    #allocation2 [shape = 'u8[8192]{0}', space=vmem, size = 0x2000, scoped, tag = 'output window, operand 0, single buffered']
    #allocation3 [shape = 's32[1]{0}', space=sflag, size = 0x4, scoped, tag = 'scoped memory for transformer_lstm_forward.3']
    %19 = vsyncpa [#allocation3], 0
    // Predicated region
    $region2: #{transformer_lstm_forward.3} parent=1 // pred_check
      _
    $region3: #{transformer_lstm_forward.3} parent=1 // pred_check_branch
      %21 = sbr.rel (0) target = $region5
    $region4: #{transformer_lstm_forward.3} parent=1 // pred_region
      _
    $region5: #{transformer_lstm_forward.3} parent=1 // pred_fallthru
      _
    // Predicated region
    $region6: #{transformer_lstm_forward.3} parent=1 // pred_check
      _
    $region7: #{transformer_lstm_forward.3} parent=1 // pred_check_branch
      %23 = sbr.rel (0) target = $region9
    $region8: #{transformer_lstm_forward.3} parent=1 // pred_region
      _
    $region9: #{transformer_lstm_forward.3} parent=1 // pred_fallthru
      _
    // Predicated region
    $region10: #{transformer_lstm_forward.3} parent=1 // pred_check
      _
    $region11: #{transformer_lstm_forward.3} parent=1 // pred_check_branch
      %25 = sbr.rel (0) target = $region13
    $region12: #{transformer_lstm_forward.3} parent=1 // pred_region
      _
    $region13: #{transformer_lstm_forward.3} parent=1 // pred_fallthru
      _
    // Predicated region
    $region14: #{transformer_lstm_forward.3} parent=1 // pred_check
      _
    $region15: #{transformer_lstm_forward.3} parent=1 // pred_check_branch
      %27 = sbr.rel (0) target = $region17
    $region16: #{transformer_lstm_forward.3} parent=1 // pred_region
      _
    $region17: #{transformer_lstm_forward.3} parent=1 // pred_fallthru
      _
    // Predicated region
    $region18: #{transformer_lstm_forward.3} parent=1 // pred_check
      _
    $region19: #{transformer_lstm_forward.3} parent=1 // pred_check_branch
      %29 = sbr.rel (0) target = $region21
    $region20: #{transformer_lstm_forward.3} parent=1 // pred_region
      _
    $region21: #{transformer_lstm_forward.3} parent=1 // pred_fallthru
      _
    // Predicated region
    $region22: #{transformer_lstm_forward.3} parent=1 // pred_check
      _
    $region23: #{transformer_lstm_forward.3} parent=1 // pred_check_branch
      %31 = sbr.rel (0) target = $region25
    $region24: #{transformer_lstm_forward.3} parent=1 // pred_region
      _
    $region25: #{transformer_lstm_forward.3} parent=1 // pred_fallthru
      _
    // Predicated region
    $region26: #{transformer_lstm_forward.3} parent=1 // pred_check
      _
    $region27: #{transformer_lstm_forward.3} parent=1 // pred_check_branch
      %33 = sbr.rel (0) target = $region29
    $region28: #{transformer_lstm_forward.3} parent=1 // pred_region
      _
    $region29: #{transformer_lstm_forward.3} parent=1 // pred_fallthru
      _
    // Predicated region
    $region30: #{transformer_lstm_forward.3} parent=1 // pred_check
      _
    $region31: #{transformer_lstm_forward.3} parent=1 // pred_check_branch
      %35 = sbr.rel (0) target = $region33
    $region32: #{transformer_lstm_forward.3} parent=1 // pred_region
      _
    $region33: #{transformer_lstm_forward.3} parent=1 // pred_fallthru
      _
    // Predicated region
    $region34: #{transformer_lstm_forward.3} parent=1 // pred_check
      _
    $region35: #{transformer_lstm_forward.3} parent=1 // pred_check_branch
      %37 = sbr.rel (0) target = $region37
    $region36: #{transformer_lstm_forward.3} parent=1 // pred_region
      _
    $region37: #{transformer_lstm_forward.3} parent=1 // pred_fallthru
      _
    // Predicated region
    $region38: #{transformer_lstm_forward.3} parent=1 // pred_check
      _
    $region39: #{transformer_lstm_forward.3} parent=1 // pred_check_branch
      %39 = sbr.rel (0) target = $region41
    $region40: #{transformer_lstm_forward.3} parent=1 // pred_region
      _
    $region41: #{transformer_lstm_forward.3} parent=1 // pred_fallthru
      _
    // Predicated region
    $region42: #{transformer_lstm_forward.3} parent=1 // pred_check
      _
    $region43: #{transformer_lstm_forward.3} parent=1 // pred_check_branch
      %41 = sbr.rel (0) target = $region45
    $region44: #{transformer_lstm_forward.3} parent=1 // pred_region
      _
    $region45: #{transformer_lstm_forward.3} parent=1 // pred_fallthru
      _
    // Predicated region
    $region46: #{transformer_lstm_forward.3} parent=1 // pred_check
      _
    $region47: #{transformer_lstm_forward.3} parent=1 // pred_check_branch
      %43 = sbr.rel (0) target = $region49
    $region48: #{transformer_lstm_forward.3} parent=1 // pred_region
      _
    $region49: #{transformer_lstm_forward.3} parent=1 // pred_fallthru
      _
    // Predicated region
    $region50: #{transformer_lstm_forward.3} parent=1 // pred_check
      _
    $region51: #{transformer_lstm_forward.3} parent=1 // pred_check_branch
      %45 = sbr.rel (0) target = $region53
    $region52: #{transformer_lstm_forward.3} parent=1 // pred_region
      _
    $region53: #{transformer_lstm_forward.3} parent=1 // pred_fallthru
      _
    // Predicated region
    $region54: #{transformer_lstm_forward.3} parent=1 // pred_check
      _
    $region55: #{transformer_lstm_forward.3} parent=1 // pred_check_branch
      %47 = sbr.rel (0) target = $region57
    $region56: #{transformer_lstm_forward.3} parent=1 // pred_region
      _
    $region57: #{transformer_lstm_forward.3} parent=1 // pred_fallthru
      _
    %v49 = vld [vmem:[%s0] sm:$0xff]
    %v50 = vld [vmem:[%s0 + $0x8] sm:$0xff]
    %v51 = vld [vmem:[%s3] sm:$0xff]
    %v52 = vld [vmem:[%s3 + $0x8] sm:$0xff]
    %v53 = vld [vmem:[%s3 + $0x10] sm:$0xff]
    %v54 = vld [vmem:[%s3 + $0x18] sm:$0xff]
    %v55 = vpack.c.bf16 %v52, %v51
    %v56 = vpack.c.bf16 %v54, %v53
    %v57 = vld [vmem:[%s4] sm:$0xff]
    %v58 = vld [vmem:[%s4 + $0x8] sm:$0xff]
    %v59 = vld [vmem:[%s4 + $0x10] sm:$0xff]
    %v60 = vld [vmem:[%s4 + $0x18] sm:$0xff]
    %v61 = vpack.c.bf16 %v58, %v57
    %v62 = vpack.c.bf16 %v60, %v59
    %v63 = vpack.c.bf16 %v50, %v49
    %v64 = vld [vmem:[%s5] sm:$0x1]
    %v66 = vlaneseq
    %v67 = vshrl.u32 %v66, 7
    %v68 = vsub.s32 0, %v67
    %v69 = vrot.slane %v64, %v68
    %vm71 = vcmask 261120
    %v73 = vsel %vm71, %v63, 0
    %75 = vmatprep.subr.bf16.mxu0 0
    %76 = vmatpush1.bf16.msra.mxu0 0
    %77 = vmatprep.subr.bf16.mxu0 0
    %78 = vmatpush1.bf16.msra.mxu0 0
    %79 = vmatprep.subr.bf16.mxu0 0
    %80 = vmatpush1.bf16.msra.mxu0 0
    %81 = vmatprep.subr.bf16.mxu0 0
    %82 = vmatpush1.bf16.msra.mxu0 0
    %83 = vmatprep.subr.bf16.mxu0 0
    %84 = vmatpush1.bf16.msra.mxu0 0
    %85 = vmatprep.subr.bf16.mxu0 0
    %86 = vmatpush1.bf16.msra.mxu0 0
    %87 = vmatprep.subr.bf16.mxu0 0
    %88 = vmatpush1.bf16.msra.mxu0 %v56
    %89 = vmatprep.subr.bf16.mxu0 0
    %90 = vmatpush1.bf16.msra.mxu0 %v55
    %91 = vmatprep.subr.bf16.mxu0 0
    %92 = vmatpush2.bf16.msra.mxu0 0
    %93 = vmatprep.subr.bf16.mxu0 0
    %94 = vmatpush2.bf16.msra.mxu0 0
    %95 = vmatprep.subr.bf16.mxu0 0
    %96 = vmatpush2.bf16.msra.mxu0 0
    %97 = vmatprep.subr.bf16.mxu0 0
    %98 = vmatpush2.bf16.msra.mxu0 0
    %99 = vmatprep.subr.bf16.mxu0 0
    %100 = vmatpush2.bf16.msra.mxu0 0
    %101 = vmatprep.subr.bf16.mxu0 0
    %102 = vmatpush2.bf16.msra.mxu0 0
    %103 = vmatprep.subr.bf16.mxu0 0
    %104 = vmatpush2.bf16.msra.mxu0 0
    %105 = vmatprep.subr.bf16.mxu0 0
    %106 = vmatpush2.bf16.msra.mxu0 0
    %107 = vmatprep.mubr.bf16.mxu0 0
    %108 = vmatmul.mubr.bf16.gmra.mxu0 %v73
    %v109 = vpop.f32.mrf.mxu0
    %v110 = vadd.f32 %v69, %v109
    %v111 = vpop.f32.mrf.mxu0
    %v112 = vpop.f32.mrf.mxu0
    %v113 = vadd.f32 %v69, %v112
    %v114 = vpop.f32.mrf.mxu0
    %115 = vdwg.mxu0
    %v117 = vsel %vm71, 0, 0
    %119 = vmatprep.subr.bf16.mxu0 0
    %120 = vmatpush1.bf16.msra.mxu0 0
    %121 = vmatprep.subr.bf16.mxu0 0
    %122 = vmatpush1.bf16.msra.mxu0 0
    %123 = vmatprep.subr.bf16.mxu0 0
    %124 = vmatpush1.bf16.msra.mxu0 0
    %125 = vmatprep.subr.bf16.mxu0 0
    %126 = vmatpush1.bf16.msra.mxu0 0
    %127 = vmatprep.subr.bf16.mxu0 0
    %128 = vmatpush1.bf16.msra.mxu0 0
    %129 = vmatprep.subr.bf16.mxu0 0
    %130 = vmatpush1.bf16.msra.mxu0 0
    %131 = vmatprep.subr.bf16.mxu0 0
    %132 = vmatpush1.bf16.msra.mxu0 %v62
    %133 = vmatprep.subr.bf16.mxu0 0
    %134 = vmatpush1.bf16.msra.mxu0 %v61
    %135 = vmatprep.subr.bf16.mxu0 0
    %136 = vmatpush2.bf16.msra.mxu0 0
    %137 = vmatprep.subr.bf16.mxu0 0
    %138 = vmatpush2.bf16.msra.mxu0 0
    %139 = vmatprep.subr.bf16.mxu0 0
    %140 = vmatpush2.bf16.msra.mxu0 0
    %141 = vmatprep.subr.bf16.mxu0 0
    %142 = vmatpush2.bf16.msra.mxu0 0
    %143 = vmatprep.subr.bf16.mxu0 0
    %144 = vmatpush2.bf16.msra.mxu0 0
    %145 = vmatprep.subr.bf16.mxu0 0
    %146 = vmatpush2.bf16.msra.mxu0 0
    %147 = vmatprep.subr.bf16.mxu0 0
    %148 = vmatpush2.bf16.msra.mxu0 0
    %149 = vmatprep.subr.bf16.mxu0 0
    %150 = vmatpush2.bf16.msra.mxu0 0
    %151 = vmatprep.mubr.bf16.mxu0 0
    %152 = vmatmul.mubr.bf16.gmra.mxu0 %v117
    %v153 = vpop.f32.mrf.mxu0
    %v154 = vadd.f32 0.0, %v153
    %v155 = vpop.f32.mrf.mxu0
    %v156 = vpop.f32.mrf.mxu0
    %v157 = vpop.f32.mrf.mxu0
    %158 = vdwg.mxu0
    %v160 = vrot.slane %v154, 1
    %v163 = vadd.f32 %v110, %v154
    %v164 = vadd.f32 %v113, %v160
    %v165 = vxor.u32 %v163, 2147483648
    %v166 = vxor.u32 %v164, 2147483648
    %v167 = vmul.f32 %v165, 1.442695
    %v168 = vpow.pop %v167
    %v169 = vmul.f32 %v166, 1.442695
    %v170 = vpow.pop %v169
    %v171 = vadd.f32 %v168, 1.0
    %v172 = vadd.f32 %v170, 1.0
    %v173 = vrcp.pop %v171
    %v174 = vmul.f32 1.0, %v173
    %v175 = vrcp.pop %v172
    %v176 = vmul.f32 1.0, %v175
    %v177 = vtanh.pop %v163
    %v178 = vtanh.pop %v164
    %v179 = vmul.f32 %v174, 0.0
    %v180 = vmul.f32 %v176, 0.0
    %183 = vrot.lane.b32.xlu0 %v177, 64
    %v184 = vpop.permute.xlu0 %183
    %185 = vrot.lane.b32.xlu0 %v178, 64
    %v186 = vpop.permute.xlu0 %185
    %v189 = vmul.f32 %v174, %v184
    %v190 = vmul.f32 %v176, %v186
    %193 = vrot.lane.b32.xlu0 %v189, 32
    %v194 = vpop.permute.xlu0 %193
    %195 = vrot.lane.b32.xlu0 %v190, 32
    %v196 = vpop.permute.xlu0 %195
    %v199 = vadd.f32 %v179, %v194
    %v200 = vadd.f32 %v180, %v196
    %v201 = vtanh.pop %v199
    %v202 = vtanh.pop %v200
    %205 = vrot.lane.b32.xlu0 %v201, 64
    %v206 = vpop.permute.xlu0 %205
    %207 = vrot.lane.b32.xlu0 %v202, 64
    %v208 = vpop.permute.xlu0 %207
    %v211 = vmul.f32 %v174, %v206
    %v212 = vmul.f32 %v176, %v208
    %v213 = vpack.c.bf16 %v211, %v211
    %v214 = vpack.c.bf16 %v212, %v212
    %v217 = vunpack.c.l.b16 %v213
    %v218 = vunpack.c.l.b16 %v214
    %v219 = vrot.slane %v218, 7
    %vm220 = vcmask 1041409
    %v221 = vsel %vm220, %v219, %v217
    %v222 = vpack.c.b16 %v221, %v221
    %223 = vrot.lane.b32.xlu0 %v222, 32
    %v224 = vpop.permute.xlu0 %223
    %v226 = vsel %vm71, %v224, 0
    %228 = vmatprep.subr.bf16.mxu0 0
    %229 = vmatpush1.bf16.msra.mxu0 0
    %230 = vmatprep.subr.bf16.mxu0 0
    %231 = vmatpush1.bf16.msra.mxu0 0
    %232 = vmatprep.subr.bf16.mxu0 0
    %233 = vmatpush1.bf16.msra.mxu0 0
    %234 = vmatprep.subr.bf16.mxu0 0
    %235 = vmatpush1.bf16.msra.mxu0 0
    %236 = vmatprep.subr.bf16.mxu0 0
    %237 = vmatpush1.bf16.msra.mxu0 0
    %238 = vmatprep.subr.bf16.mxu0 0
    %239 = vmatpush1.bf16.msra.mxu0 0
    %240 = vmatprep.subr.bf16.mxu0 0
    %241 = vmatpush1.bf16.msra.mxu0 %v62
    %242 = vmatprep.subr.bf16.mxu0 0
    %243 = vmatpush1.bf16.msra.mxu0 %v61
    %244 = vmatprep.subr.bf16.mxu0 0
    %245 = vmatpush2.bf16.msra.mxu0 0
    %246 = vmatprep.subr.bf16.mxu0 0
    %247 = vmatpush2.bf16.msra.mxu0 0
    %248 = vmatprep.subr.bf16.mxu0 0
    %249 = vmatpush2.bf16.msra.mxu0 0
    %250 = vmatprep.subr.bf16.mxu0 0
    %251 = vmatpush2.bf16.msra.mxu0 0
    %252 = vmatprep.subr.bf16.mxu0 0
    %253 = vmatpush2.bf16.msra.mxu0 0
    %254 = vmatprep.subr.bf16.mxu0 0
    %255 = vmatpush2.bf16.msra.mxu0 0
    %256 = vmatprep.subr.bf16.mxu0 0
    %257 = vmatpush2.bf16.msra.mxu0 0
    %258 = vmatprep.subr.bf16.mxu0 0
    %259 = vmatpush2.bf16.msra.mxu0 0
    %260 = vmatprep.mubr.bf16.mxu0 0
    %261 = vmatmul.mubr.bf16.gmra.mxu0 %v226
    %v262 = vpop.f32.mrf.mxu0
    %v263 = vadd.f32 0.0, %v262
    %v264 = vpop.f32.mrf.mxu0
    %v265 = vpop.f32.mrf.mxu0
    %v266 = vpop.f32.mrf.mxu0
    %267 = vdwg.mxu0
    %v269 = vrot.slane %v263, 7
    %v272 = vadd.f32 %v110, %v269
    %v273 = vadd.f32 %v113, %v263
    %v274 = vxor.u32 %v272, 2147483648
    %v275 = vxor.u32 %v273, 2147483648
    %v276 = vmul.f32 %v274, 1.442695
    %v277 = vpow.pop %v276
    %v278 = vmul.f32 %v275, 1.442695
    %v279 = vpow.pop %v278
    %v280 = vadd.f32 %v277, 1.0
    %v281 = vadd.f32 %v279, 1.0
    %v282 = vrcp.pop %v280
    %v283 = vmul.f32 1.0, %v282
    %v284 = vrcp.pop %v281
    %v285 = vmul.f32 1.0, %v284
    %v286 = vtanh.pop %v272
    %v287 = vtanh.pop %v273
    %v290 = vrot.slane %v199, 7
    %v291 = vrot.slane %v200, 7
    %v294 = vmul.f32 %v283, %v290
    %v295 = vmul.f32 %v285, %v291
    %298 = vrot.lane.b32.xlu0 %v286, 64
    %v299 = vpop.permute.xlu0 %298
    %300 = vrot.lane.b32.xlu0 %v287, 64
    %v301 = vpop.permute.xlu0 %300
    %v304 = vmul.f32 %v283, %v299
    %v305 = vmul.f32 %v285, %v301
    %308 = vrot.lane.b32.xlu0 %v304, 32
    %v309 = vpop.permute.xlu0 %308
    %310 = vrot.lane.b32.xlu0 %v305, 32
    %v311 = vpop.permute.xlu0 %310
    %v314 = vadd.f32 %v294, %v309
    %v315 = vadd.f32 %v295, %v311
    %v316 = vtanh.pop %v314
    %v317 = vtanh.pop %v315
    %320 = vrot.lane.b32.xlu0 %v316, 64
    %v321 = vpop.permute.xlu0 %320
    %322 = vrot.lane.b32.xlu0 %v317, 64
    %v323 = vpop.permute.xlu0 %322
    %v326 = vmul.f32 %v283, %v321
    %v327 = vmul.f32 %v285, %v323
    %v328 = vpack.c.bf16 %v326, %v326
    %v329 = vpack.c.bf16 %v327, %v327
    %v332 = vunpack.c.l.b16 %v328
    %v333 = vunpack.c.l.b16 %v329
    %v334 = vrot.slane %v332, 1
    %v335 = vsel %vm220, %v333, %v334
    %v336 = vpack.c.b16 %v335, %v335
    %337 = vrot.lane.b32.xlu0 %v336, 32
    %v338 = vpop.permute.xlu0 %337
    %v340 = vsel %vm71, %v338, 0
    %342 = vmatprep.subr.bf16.mxu0 0
    %343 = vmatpush1.bf16.msra.mxu0 0
    %344 = vmatprep.subr.bf16.mxu0 0
    %345 = vmatpush1.bf16.msra.mxu0 0
    %346 = vmatprep.subr.bf16.mxu0 0
    %347 = vmatpush1.bf16.msra.mxu0 0
    %348 = vmatprep.subr.bf16.mxu0 0
    %349 = vmatpush1.bf16.msra.mxu0 0
    %350 = vmatprep.subr.bf16.mxu0 0
    %351 = vmatpush1.bf16.msra.mxu0 0
    %352 = vmatprep.subr.bf16.mxu0 0
    %353 = vmatpush1.bf16.msra.mxu0 0
    %354 = vmatprep.subr.bf16.mxu0 0
    %355 = vmatpush1.bf16.msra.mxu0 %v62
    %356 = vmatprep.subr.bf16.mxu0 0
    %357 = vmatpush1.bf16.msra.mxu0 %v61
    %358 = vmatprep.subr.bf16.mxu0 0
    %359 = vmatpush2.bf16.msra.mxu0 0
    %360 = vmatprep.subr.bf16.mxu0 0
    %361 = vmatpush2.bf16.msra.mxu0 0
    %362 = vmatprep.subr.bf16.mxu0 0
    %363 = vmatpush2.bf16.msra.mxu0 0
    %364 = vmatprep.subr.bf16.mxu0 0
    %365 = vmatpush2.bf16.msra.mxu0 0
    %366 = vmatprep.subr.bf16.mxu0 0
    %367 = vmatpush2.bf16.msra.mxu0 0
    %368 = vmatprep.subr.bf16.mxu0 0
    %369 = vmatpush2.bf16.msra.mxu0 0
    %370 = vmatprep.subr.bf16.mxu0 0
    %371 = vmatpush2.bf16.msra.mxu0 0
    %372 = vmatprep.subr.bf16.mxu0 0
    %373 = vmatpush2.bf16.msra.mxu0 0
    %374 = vmatprep.mubr.bf16.mxu0 0
    %375 = vmatmul.mubr.bf16.gmra.mxu0 %v340
    %v376 = vpop.f32.mrf.mxu0
    %v377 = vadd.f32 0.0, %v376
    %v378 = vpop.f32.mrf.mxu0
    %v379 = vpop.f32.mrf.mxu0
    %v380 = vpop.f32.mrf.mxu0
    %381 = vdwg.mxu0
    %v383 = vrot.slane %v377, 6
    %v384 = vrot.slane %v377, 7
    %v387 = vadd.f32 %v110, %v383
    %v388 = vadd.f32 %v113, %v384
    %v389 = vxor.u32 %v387, 2147483648
    %v390 = vxor.u32 %v388, 2147483648
    %v391 = vmul.f32 %v389, 1.442695
    %v392 = vpow.pop %v391
    %v393 = vmul.f32 %v390, 1.442695
    %v394 = vpow.pop %v393
    %v395 = vadd.f32 %v392, 1.0
    %v396 = vadd.f32 %v394, 1.0
    %v397 = vrcp.pop %v395
    %v398 = vmul.f32 1.0, %v397
    %v399 = vrcp.pop %v396
    %v400 = vmul.f32 1.0, %v399
    %v401 = vtanh.pop %v387
    %v402 = vtanh.pop %v388
    %v405 = vrot.slane %v314, 7
    %v406 = vrot.slane %v315, 7
    %v409 = vmul.f32 %v398, %v405
    %v410 = vmul.f32 %v400, %v406
    %413 = vrot.lane.b32.xlu0 %v401, 64
    %v414 = vpop.permute.xlu0 %413
    %415 = vrot.lane.b32.xlu0 %v402, 64
    %v416 = vpop.permute.xlu0 %415
    %v419 = vmul.f32 %v398, %v414
    %v420 = vmul.f32 %v400, %v416
    %423 = vrot.lane.b32.xlu0 %v419, 32
    %v424 = vpop.permute.xlu0 %423
    %425 = vrot.lane.b32.xlu0 %v420, 32
    %v426 = vpop.permute.xlu0 %425
    %v429 = vadd.f32 %v409, %v424
    %v430 = vadd.f32 %v410, %v426
    %v431 = vtanh.pop %v429
    %v432 = vtanh.pop %v430
    %435 = vrot.lane.b32.xlu0 %v431, 64
    %v436 = vpop.permute.xlu0 %435
    %437 = vrot.lane.b32.xlu0 %v432, 64
    %v438 = vpop.permute.xlu0 %437
    %v441 = vmul.f32 %v398, %v436
    %v442 = vmul.f32 %v400, %v438
    %v443 = vpack.c.bf16 %v441, %v441
    %v444 = vpack.c.bf16 %v442, %v442
    %v447 = vunpack.c.l.b16 %v443
    %v448 = vunpack.c.l.b16 %v444
    %v449 = vrot.slane %v447, 2
    %v450 = vrot.slane %v448, 1
    %v451 = vsel %vm220, %v450, %v449
    %v452 = vpack.c.b16 %v451, %v451
    %453 = vrot.lane.b32.xlu0 %v452, 32
    %v454 = vpop.permute.xlu0 %453
    %v456 = vsel %vm71, %v454, 0
    %458 = vmatprep.subr.bf16.mxu0 0
    %459 = vmatpush1.bf16.msra.mxu0 0
    %460 = vmatprep.subr.bf16.mxu0 0
    %461 = vmatpush1.bf16.msra.mxu0 0
    %462 = vmatprep.subr.bf16.mxu0 0
    %463 = vmatpush1.bf16.msra.mxu0 0
    %464 = vmatprep.subr.bf16.mxu0 0
    %465 = vmatpush1.bf16.msra.mxu0 0
    %466 = vmatprep.subr.bf16.mxu0 0
    %467 = vmatpush1.bf16.msra.mxu0 0
    %468 = vmatprep.subr.bf16.mxu0 0
    %469 = vmatpush1.bf16.msra.mxu0 0
    %470 = vmatprep.subr.bf16.mxu0 0
    %471 = vmatpush1.bf16.msra.mxu0 %v62
    %472 = vmatprep.subr.bf16.mxu0 0
    %473 = vmatpush1.bf16.msra.mxu0 %v61
    %474 = vmatprep.subr.bf16.mxu0 0
    %475 = vmatpush2.bf16.msra.mxu0 0
    %476 = vmatprep.subr.bf16.mxu0 0
    %477 = vmatpush2.bf16.msra.mxu0 0
    %478 = vmatprep.subr.bf16.mxu0 0
    %479 = vmatpush2.bf16.msra.mxu0 0
    %480 = vmatprep.subr.bf16.mxu0 0
    %481 = vmatpush2.bf16.msra.mxu0 0
    %482 = vmatprep.subr.bf16.mxu0 0
    %483 = vmatpush2.bf16.msra.mxu0 0
    %484 = vmatprep.subr.bf16.mxu0 0
    %485 = vmatpush2.bf16.msra.mxu0 0
    %486 = vmatprep.subr.bf16.mxu0 0
    %487 = vmatpush2.bf16.msra.mxu0 0
    %488 = vmatprep.subr.bf16.mxu0 0
    %489 = vmatpush2.bf16.msra.mxu0 0
    %490 = vmatprep.mubr.bf16.mxu0 0
    %491 = vmatmul.mubr.bf16.gmra.mxu0 %v456
    %v492 = vpop.f32.mrf.mxu0
    %v493 = vadd.f32 0.0, %v492
    %v494 = vpop.f32.mrf.mxu0
    %v495 = vpop.f32.mrf.mxu0
    %v496 = vpop.f32.mrf.mxu0
    %497 = vdwg.mxu0
    %v499 = vrot.slane %v493, 5
    %v500 = vrot.slane %v493, 6
    %v503 = vadd.f32 %v110, %v499
    %v504 = vadd.f32 %v113, %v500
    %v505 = vxor.u32 %v503, 2147483648
    %v506 = vxor.u32 %v504, 2147483648
    %v507 = vmul.f32 %v505, 1.442695
    %v508 = vpow.pop %v507
    %v509 = vmul.f32 %v506, 1.442695
    %v510 = vpow.pop %v509
    %v511 = vadd.f32 %v508, 1.0
    %v512 = vadd.f32 %v510, 1.0
    %v513 = vrcp.pop %v511
    %v514 = vmul.f32 1.0, %v513
    %v515 = vrcp.pop %v512
    %v516 = vmul.f32 1.0, %v515
    %v517 = vtanh.pop %v503
    %v518 = vtanh.pop %v504
    %v521 = vrot.slane %v429, 7
    %v522 = vrot.slane %v430, 7
    %v525 = vmul.f32 %v514, %v521
    %v526 = vmul.f32 %v516, %v522
    %529 = vrot.lane.b32.xlu0 %v517, 64
    %v530 = vpop.permute.xlu0 %529
    %531 = vrot.lane.b32.xlu0 %v518, 64
    %v532 = vpop.permute.xlu0 %531
    %v535 = vmul.f32 %v514, %v530
    %v536 = vmul.f32 %v516, %v532
    %539 = vrot.lane.b32.xlu0 %v535, 32
    %v540 = vpop.permute.xlu0 %539
    %541 = vrot.lane.b32.xlu0 %v536, 32
    %v542 = vpop.permute.xlu0 %541
    %v545 = vadd.f32 %v525, %v540
    %v546 = vadd.f32 %v526, %v542
    %v547 = vtanh.pop %v545
    %v548 = vtanh.pop %v546
    %551 = vrot.lane.b32.xlu0 %v547, 64
    %v552 = vpop.permute.xlu0 %551
    %553 = vrot.lane.b32.xlu0 %v548, 64
    %v554 = vpop.permute.xlu0 %553
    %v557 = vmul.f32 %v514, %v552
    %v558 = vmul.f32 %v516, %v554
    %v559 = vpack.c.bf16 %v557, %v557
    %v560 = vpack.c.bf16 %v558, %v558
    %v563 = vunpack.c.l.b16 %v559
    %v564 = vunpack.c.l.b16 %v560
    %v565 = vrot.slane %v563, 3
    %v566 = vrot.slane %v564, 2
    %v567 = vsel %vm220, %v566, %v565
    %v568 = vpack.c.b16 %v567, %v567
    %569 = vrot.lane.b32.xlu0 %v568, 32
    %v570 = vpop.permute.xlu0 %569
    %v572 = vsel %vm71, %v570, 0
    %574 = vmatprep.subr.bf16.mxu0 0
    %575 = vmatpush1.bf16.msra.mxu0 0
    %576 = vmatprep.subr.bf16.mxu0 0
    %577 = vmatpush1.bf16.msra.mxu0 0
    %578 = vmatprep.subr.bf16.mxu0 0
    %579 = vmatpush1.bf16.msra.mxu0 0
    %580 = vmatprep.subr.bf16.mxu0 0
    %581 = vmatpush1.bf16.msra.mxu0 0
    %582 = vmatprep.subr.bf16.mxu0 0
    %583 = vmatpush1.bf16.msra.mxu0 0
    %584 = vmatprep.subr.bf16.mxu0 0
    %585 = vmatpush1.bf16.msra.mxu0 0
    %586 = vmatprep.subr.bf16.mxu0 0
    %587 = vmatpush1.bf16.msra.mxu0 %v62
    %588 = vmatprep.subr.bf16.mxu0 0
    %589 = vmatpush1.bf16.msra.mxu0 %v61
    %590 = vmatprep.subr.bf16.mxu0 0
    %591 = vmatpush2.bf16.msra.mxu0 0
    %592 = vmatprep.subr.bf16.mxu0 0
    %593 = vmatpush2.bf16.msra.mxu0 0
    %594 = vmatprep.subr.bf16.mxu0 0
    %595 = vmatpush2.bf16.msra.mxu0 0
    %596 = vmatprep.subr.bf16.mxu0 0
    %597 = vmatpush2.bf16.msra.mxu0 0
    %598 = vmatprep.subr.bf16.mxu0 0
    %599 = vmatpush2.bf16.msra.mxu0 0
    %600 = vmatprep.subr.bf16.mxu0 0
    %601 = vmatpush2.bf16.msra.mxu0 0
    %602 = vmatprep.subr.bf16.mxu0 0
    %603 = vmatpush2.bf16.msra.mxu0 0
    %604 = vmatprep.subr.bf16.mxu0 0
    %605 = vmatpush2.bf16.msra.mxu0 0
    %606 = vmatprep.mubr.bf16.mxu0 0
    %607 = vmatmul.mubr.bf16.gmra.mxu0 %v572
    %v608 = vpop.f32.mrf.mxu0
    %v609 = vadd.f32 0.0, %v608
    %v610 = vpop.f32.mrf.mxu0
    %v611 = vpop.f32.mrf.mxu0
    %v612 = vpop.f32.mrf.mxu0
    %613 = vdwg.mxu0
    %v615 = vrot.slane %v609, 4
    %v616 = vrot.slane %v609, 5
    %v619 = vadd.f32 %v110, %v615
    %v620 = vadd.f32 %v113, %v616
    %v621 = vxor.u32 %v619, 2147483648
    %v622 = vxor.u32 %v620, 2147483648
    %v623 = vmul.f32 %v621, 1.442695
    %v624 = vpow.pop %v623
    %v625 = vmul.f32 %v622, 1.442695
    %v626 = vpow.pop %v625
    %v627 = vadd.f32 %v624, 1.0
    %v628 = vadd.f32 %v626, 1.0
    %v629 = vrcp.pop %v627
    %v630 = vmul.f32 1.0, %v629
    %v631 = vrcp.pop %v628
    %v632 = vmul.f32 1.0, %v631
    %v633 = vtanh.pop %v619
    %v634 = vtanh.pop %v620
    %v637 = vrot.slane %v545, 7
    %v638 = vrot.slane %v546, 7
    %v641 = vmul.f32 %v630, %v637
    %v642 = vmul.f32 %v632, %v638
    %645 = vrot.lane.b32.xlu0 %v633, 64
    %v646 = vpop.permute.xlu0 %645
    %647 = vrot.lane.b32.xlu0 %v634, 64
    %v648 = vpop.permute.xlu0 %647
    %v651 = vmul.f32 %v630, %v646
    %v652 = vmul.f32 %v632, %v648
    %655 = vrot.lane.b32.xlu0 %v651, 32
    %v656 = vpop.permute.xlu0 %655
    %657 = vrot.lane.b32.xlu0 %v652, 32
    %v658 = vpop.permute.xlu0 %657
    %v661 = vadd.f32 %v641, %v656
    %v662 = vadd.f32 %v642, %v658
    %v663 = vtanh.pop %v661
    %v664 = vtanh.pop %v662
    %667 = vrot.lane.b32.xlu0 %v663, 64
    %v668 = vpop.permute.xlu0 %667
    %669 = vrot.lane.b32.xlu0 %v664, 64
    %v670 = vpop.permute.xlu0 %669
    %v673 = vmul.f32 %v630, %v668
    %v674 = vmul.f32 %v632, %v670
    %v675 = vpack.c.bf16 %v673, %v673
    %v676 = vpack.c.bf16 %v674, %v674
    %v679 = vunpack.c.l.b16 %v675
    %v680 = vunpack.c.l.b16 %v676
    %v681 = vrot.slane %v679, 4
    %v682 = vrot.slane %v680, 3
    %v683 = vsel %vm220, %v682, %v681
    %v684 = vpack.c.b16 %v683, %v683
    %685 = vrot.lane.b32.xlu0 %v684, 32
    %v686 = vpop.permute.xlu0 %685
    %v688 = vsel %vm71, %v686, 0
    %690 = vmatprep.subr.bf16.mxu0 0
    %691 = vmatpush1.bf16.msra.mxu0 0
    %692 = vmatprep.subr.bf16.mxu0 0
    %693 = vmatpush1.bf16.msra.mxu0 0
    %694 = vmatprep.subr.bf16.mxu0 0
    %695 = vmatpush1.bf16.msra.mxu0 0
    %696 = vmatprep.subr.bf16.mxu0 0
    %697 = vmatpush1.bf16.msra.mxu0 0
    %698 = vmatprep.subr.bf16.mxu0 0
    %699 = vmatpush1.bf16.msra.mxu0 0
    %700 = vmatprep.subr.bf16.mxu0 0
    %701 = vmatpush1.bf16.msra.mxu0 0
    %702 = vmatprep.subr.bf16.mxu0 0
    %703 = vmatpush1.bf16.msra.mxu0 %v62
    %704 = vmatprep.subr.bf16.mxu0 0
    %705 = vmatpush1.bf16.msra.mxu0 %v61
    %706 = vmatprep.subr.bf16.mxu0 0
    %707 = vmatpush2.bf16.msra.mxu0 0
    %708 = vmatprep.subr.bf16.mxu0 0
    %709 = vmatpush2.bf16.msra.mxu0 0
    %710 = vmatprep.subr.bf16.mxu0 0
    %711 = vmatpush2.bf16.msra.mxu0 0
    %712 = vmatprep.subr.bf16.mxu0 0
    %713 = vmatpush2.bf16.msra.mxu0 0
    %714 = vmatprep.subr.bf16.mxu0 0
    %715 = vmatpush2.bf16.msra.mxu0 0
    %716 = vmatprep.subr.bf16.mxu0 0
    %717 = vmatpush2.bf16.msra.mxu0 0
    %718 = vmatprep.subr.bf16.mxu0 0
    %719 = vmatpush2.bf16.msra.mxu0 0
    %720 = vmatprep.subr.bf16.mxu0 0
    %721 = vmatpush2.bf16.msra.mxu0 0
    %722 = vmatprep.mubr.bf16.mxu0 0
    %723 = vmatmul.mubr.bf16.gmra.mxu0 %v688
    %v724 = vpop.f32.mrf.mxu0
    %v725 = vadd.f32 0.0, %v724
    %v726 = vpop.f32.mrf.mxu0
    %v727 = vpop.f32.mrf.mxu0
    %v728 = vpop.f32.mrf.mxu0
    %729 = vdwg.mxu0
    %v731 = vrot.slane %v725, 3
    %v732 = vrot.slane %v725, 4
    %v735 = vadd.f32 %v110, %v731
    %v736 = vadd.f32 %v113, %v732
    %v737 = vxor.u32 %v735, 2147483648
    %v738 = vxor.u32 %v736, 2147483648
    %v739 = vmul.f32 %v737, 1.442695
    %v740 = vpow.pop %v739
    %v741 = vmul.f32 %v738, 1.442695
    %v742 = vpow.pop %v741
    %v743 = vadd.f32 %v740, 1.0
    %v744 = vadd.f32 %v742, 1.0
    %v745 = vrcp.pop %v743
    %v746 = vmul.f32 1.0, %v745
    %v747 = vrcp.pop %v744
    %v748 = vmul.f32 1.0, %v747
    %v749 = vtanh.pop %v735
    %v750 = vtanh.pop %v736
    %v753 = vrot.slane %v661, 7
    %v754 = vrot.slane %v662, 7
    %v757 = vmul.f32 %v746, %v753
    %v758 = vmul.f32 %v748, %v754
    %761 = vrot.lane.b32.xlu0 %v749, 64
    %v762 = vpop.permute.xlu0 %761
    %763 = vrot.lane.b32.xlu0 %v750, 64
    %v764 = vpop.permute.xlu0 %763
    %v767 = vmul.f32 %v746, %v762
    %v768 = vmul.f32 %v748, %v764
    %771 = vrot.lane.b32.xlu0 %v767, 32
    %v772 = vpop.permute.xlu0 %771
    %773 = vrot.lane.b32.xlu0 %v768, 32
    %v774 = vpop.permute.xlu0 %773
    %v777 = vadd.f32 %v757, %v772
    %v778 = vadd.f32 %v758, %v774
    %v779 = vtanh.pop %v777
    %v780 = vtanh.pop %v778
    %783 = vrot.lane.b32.xlu0 %v779, 64
    %v784 = vpop.permute.xlu0 %783
    %785 = vrot.lane.b32.xlu0 %v780, 64
    %v786 = vpop.permute.xlu0 %785
    %v789 = vmul.f32 %v746, %v784
    %v790 = vmul.f32 %v748, %v786
    %v791 = vpack.c.bf16 %v789, %v789
    %v792 = vpack.c.bf16 %v790, %v790
    %v795 = vunpack.c.l.b16 %v791
    %v796 = vunpack.c.l.b16 %v792
    %v797 = vrot.slane %v795, 5
    %v798 = vrot.slane %v796, 4
    %v799 = vsel %vm220, %v798, %v797
    %v800 = vpack.c.b16 %v799, %v799
    %801 = vrot.lane.b32.xlu0 %v800, 32
    %v802 = vpop.permute.xlu0 %801
    %v804 = vsel %vm71, %v802, 0
    %806 = vmatprep.subr.bf16.mxu0 0
    %807 = vmatpush1.bf16.msra.mxu0 0
    %808 = vmatprep.subr.bf16.mxu0 0
    %809 = vmatpush1.bf16.msra.mxu0 0
    %810 = vmatprep.subr.bf16.mxu0 0
    %811 = vmatpush1.bf16.msra.mxu0 0
    %812 = vmatprep.subr.bf16.mxu0 0
    %813 = vmatpush1.bf16.msra.mxu0 0
    %814 = vmatprep.subr.bf16.mxu0 0
    %815 = vmatpush1.bf16.msra.mxu0 0
    %816 = vmatprep.subr.bf16.mxu0 0
    %817 = vmatpush1.bf16.msra.mxu0 0
    %818 = vmatprep.subr.bf16.mxu0 0
    %819 = vmatpush1.bf16.msra.mxu0 %v62
    %820 = vmatprep.subr.bf16.mxu0 0
    %821 = vmatpush1.bf16.msra.mxu0 %v61
    %822 = vmatprep.subr.bf16.mxu0 0
    %823 = vmatpush2.bf16.msra.mxu0 0
    %824 = vmatprep.subr.bf16.mxu0 0
    %825 = vmatpush2.bf16.msra.mxu0 0
    %826 = vmatprep.subr.bf16.mxu0 0
    %827 = vmatpush2.bf16.msra.mxu0 0
    %828 = vmatprep.subr.bf16.mxu0 0
    %829 = vmatpush2.bf16.msra.mxu0 0
    %830 = vmatprep.subr.bf16.mxu0 0
    %831 = vmatpush2.bf16.msra.mxu0 0
    %832 = vmatprep.subr.bf16.mxu0 0
    %833 = vmatpush2.bf16.msra.mxu0 0
    %834 = vmatprep.subr.bf16.mxu0 0
    %835 = vmatpush2.bf16.msra.mxu0 0
    %836 = vmatprep.subr.bf16.mxu0 0
    %837 = vmatpush2.bf16.msra.mxu0 0
    %838 = vmatprep.mubr.bf16.mxu0 0
    %839 = vmatmul.mubr.bf16.gmra.mxu0 %v804
    %v840 = vpop.f32.mrf.mxu0
    %v841 = vadd.f32 0.0, %v840
    %v842 = vpop.f32.mrf.mxu0
    %v843 = vpop.f32.mrf.mxu0
    %v844 = vpop.f32.mrf.mxu0
    %845 = vdwg.mxu0
    %v847 = vrot.slane %v841, 2
    %v848 = vrot.slane %v841, 3
    %v851 = vadd.f32 %v110, %v847
    %v852 = vadd.f32 %v113, %v848
    %v853 = vxor.u32 %v851, 2147483648
    %v854 = vxor.u32 %v852, 2147483648
    %v855 = vmul.f32 %v853, 1.442695
    %v856 = vpow.pop %v855
    %v857 = vmul.f32 %v854, 1.442695
    %v858 = vpow.pop %v857
    %v859 = vadd.f32 %v856, 1.0
    %v860 = vadd.f32 %v858, 1.0
    %v861 = vrcp.pop %v859
    %v862 = vmul.f32 1.0, %v861
    %v863 = vrcp.pop %v860
    %v864 = vmul.f32 1.0, %v863
    %v865 = vtanh.pop %v851
    %v866 = vtanh.pop %v852
    %v869 = vrot.slane %v777, 7
    %v870 = vrot.slane %v778, 7
    %v873 = vmul.f32 %v862, %v869
    %v874 = vmul.f32 %v864, %v870
    %877 = vrot.lane.b32.xlu0 %v865, 64
    %v878 = vpop.permute.xlu0 %877
    %879 = vrot.lane.b32.xlu0 %v866, 64
    %v880 = vpop.permute.xlu0 %879
    %v883 = vmul.f32 %v862, %v878
    %v884 = vmul.f32 %v864, %v880
    %887 = vrot.lane.b32.xlu0 %v883, 32
    %v888 = vpop.permute.xlu0 %887
    %889 = vrot.lane.b32.xlu0 %v884, 32
    %v890 = vpop.permute.xlu0 %889
    %v893 = vadd.f32 %v873, %v888
    %v894 = vadd.f32 %v874, %v890
    %v895 = vtanh.pop %v893
    %v896 = vtanh.pop %v894
    %899 = vrot.lane.b32.xlu0 %v895, 64
    %v900 = vpop.permute.xlu0 %899
    %901 = vrot.lane.b32.xlu0 %v896, 64
    %v902 = vpop.permute.xlu0 %901
    %v905 = vmul.f32 %v862, %v900
    %v906 = vmul.f32 %v864, %v902
    %v907 = vpack.c.bf16 %v905, %v905
    %v908 = vpack.c.bf16 %v906, %v906
    %v911 = vunpack.c.l.b16 %v907
    %v912 = vunpack.c.l.b16 %v908
    %v913 = vrot.slane %v911, 6
    %v914 = vrot.slane %v912, 5
    %v915 = vsel %vm220, %v914, %v913
    %v916 = vpack.c.b16 %v915, %v915
    %917 = vrot.lane.b32.xlu0 %v916, 32
    %v918 = vpop.permute.xlu0 %917
    %v920 = vsel %vm71, %v918, 0
    %922 = vmatprep.subr.bf16.mxu0 0
    %923 = vmatpush1.bf16.msra.mxu0 0
    %924 = vmatprep.subr.bf16.mxu0 0
    %925 = vmatpush1.bf16.msra.mxu0 0
    %926 = vmatprep.subr.bf16.mxu0 0
    %927 = vmatpush1.bf16.msra.mxu0 0
    %928 = vmatprep.subr.bf16.mxu0 0
    %929 = vmatpush1.bf16.msra.mxu0 0
    %930 = vmatprep.subr.bf16.mxu0 0
    %931 = vmatpush1.bf16.msra.mxu0 0
    %932 = vmatprep.subr.bf16.mxu0 0
    %933 = vmatpush1.bf16.msra.mxu0 0
    %934 = vmatprep.subr.bf16.mxu0 0
    %935 = vmatpush1.bf16.msra.mxu0 %v62
    %936 = vmatprep.subr.bf16.mxu0 0
    %937 = vmatpush1.bf16.msra.mxu0 %v61
    %938 = vmatprep.subr.bf16.mxu0 0
    %939 = vmatpush2.bf16.msra.mxu0 0
    %940 = vmatprep.subr.bf16.mxu0 0
    %941 = vmatpush2.bf16.msra.mxu0 0
    %942 = vmatprep.subr.bf16.mxu0 0
    %943 = vmatpush2.bf16.msra.mxu0 0
    %944 = vmatprep.subr.bf16.mxu0 0
    %945 = vmatpush2.bf16.msra.mxu0 0
    %946 = vmatprep.subr.bf16.mxu0 0
    %947 = vmatpush2.bf16.msra.mxu0 0
    %948 = vmatprep.subr.bf16.mxu0 0
    %949 = vmatpush2.bf16.msra.mxu0 0
    %950 = vmatprep.subr.bf16.mxu0 0
    %951 = vmatpush2.bf16.msra.mxu0 0
    %952 = vmatprep.subr.bf16.mxu0 0
    %953 = vmatpush2.bf16.msra.mxu0 0
    %954 = vmatprep.mubr.bf16.mxu0 0
    %955 = vmatmul.mubr.bf16.gmra.mxu0 %v920
    %v956 = vpop.f32.mrf.mxu0
    %v957 = vadd.f32 0.0, %v956
    %v958 = vpop.f32.mrf.mxu0
    %v959 = vpop.f32.mrf.mxu0
    %v960 = vpop.f32.mrf.mxu0
    %961 = vdwg.mxu0
    %v963 = vrot.slane %v957, 1
    %v964 = vrot.slane %v957, 2
    %v967 = vadd.f32 %v110, %v963
    %v968 = vadd.f32 %v113, %v964
    %v969 = vxor.u32 %v967, 2147483648
    %v970 = vxor.u32 %v968, 2147483648
    %v971 = vmul.f32 %v969, 1.442695
    %v972 = vpow.pop %v971
    %v973 = vmul.f32 %v970, 1.442695
    %v974 = vpow.pop %v973
    %v975 = vadd.f32 %v972, 1.0
    %v976 = vadd.f32 %v974, 1.0
    %v977 = vrcp.pop %v975
    %v978 = vmul.f32 1.0, %v977
    %v979 = vrcp.pop %v976
    %v980 = vmul.f32 1.0, %v979
    %v981 = vtanh.pop %v967
    %v982 = vtanh.pop %v968
    %v985 = vrot.slane %v893, 7
    %v986 = vrot.slane %v894, 7
    %v989 = vmul.f32 %v978, %v985
    %v990 = vmul.f32 %v980, %v986
    %993 = vrot.lane.b32.xlu0 %v981, 64
    %v994 = vpop.permute.xlu0 %993
    %995 = vrot.lane.b32.xlu0 %v982, 64
    %v996 = vpop.permute.xlu0 %995
    %v999 = vmul.f32 %v978, %v994
    %v1000 = vmul.f32 %v980, %v996
    %1003 = vrot.lane.b32.xlu0 %v999, 32
    %v1004 = vpop.permute.xlu0 %1003
    %1005 = vrot.lane.b32.xlu0 %v1000, 32
    %v1006 = vpop.permute.xlu0 %1005
    %v1009 = vadd.f32 %v989, %v1004
    %v1010 = vadd.f32 %v990, %v1006
    %v1011 = vtanh.pop %v1009
    %v1012 = vtanh.pop %v1010
    %1015 = vrot.lane.b32.xlu0 %v1011, 64
    %v1016 = vpop.permute.xlu0 %1015
    %1017 = vrot.lane.b32.xlu0 %v1012, 64
    %v1018 = vpop.permute.xlu0 %1017
    %v1021 = vmul.f32 %v978, %v1016
    %v1022 = vmul.f32 %v980, %v1018
    %vm1023 = vcmask 1040384
    %v1024 = vsel %vm1023, %v211, %v326
    %v1025 = vsel %vm1023, %v212, %v327
    %vm1026 = vcmask 1041408
    %v1027 = vsel %vm1026, %v1024, %v441
    %v1028 = vsel %vm1026, %v1025, %v442
    %vm1029 = vcmask 1042432
    %v1030 = vsel %vm1029, %v1027, %v557
    %v1031 = vsel %vm1029, %v1028, %v558
    %vm1032 = vcmask 1043456
    %v1033 = vsel %vm1032, %v1030, %v673
    %v1034 = vsel %vm1032, %v1031, %v674
    %vm1035 = vcmask 1044480
    %v1036 = vsel %vm1035, %v1033, %v789
    %v1037 = vsel %vm1035, %v1034, %v790
    %vm1038 = vcmask 1045504
    %v1039 = vsel %vm1038, %v1036, %v905
    %v1040 = vsel %vm1038, %v1037, %v906
    %vm1041 = vcmask 1046528
    %v1042 = vsel %vm1041, %v1039, %v1021
    %v1043 = vsel %vm1041, %v1040, %v1022
    %s1044 = scalar_lea.vmem %s3, 32
    %v1045 = vld [vmem:[%s1044] sm:$0xff]
    %v1046 = vld [vmem:[%s1044 + $0x8] sm:$0xff]
    %v1047 = vld [vmem:[%s1044 + $0x10] sm:$0xff]
    %v1048 = vld [vmem:[%s1044 + $0x18] sm:$0xff]
    %v1049 = vpack.c.bf16 %v1046, %v1045
    %v1050 = vpack.c.bf16 %v1048, %v1047
    %s1051 = scalar_lea.vmem %s4, 32
    %v1052 = vld [vmem:[%s1051] sm:$0xff]
    %v1053 = vld [vmem:[%s1051 + $0x8] sm:$0xff]
    %v1054 = vld [vmem:[%s1051 + $0x10] sm:$0xff]
    %v1055 = vld [vmem:[%s1051 + $0x18] sm:$0xff]
    %v1056 = vpack.c.bf16 %v1053, %v1052
    %v1057 = vpack.c.bf16 %v1055, %v1054
    %v1058 = vpack.c.bf16 %v1043, %v1042
    %s1059 = scalar_lea.vmem %s5, 1
    %v1060 = vld [vmem:[%s1059] sm:$0x1]
    %v1062 = vlaneseq
    %v1063 = vshrl.u32 %v1062, 7
    %v1064 = vsub.s32 0, %v1063
    %v1065 = vrot.slane %v1060, %v1064
    %1068 = vrot.lane.b32.xlu0 %v1058, 32
    %v1069 = vpop.permute.xlu0 %1068
    %v1071 = vsel %vm71, %v1069, 0
    %1073 = vmatprep.subr.bf16.mxu0 0
    %1074 = vmatpush1.bf16.msra.mxu0 0
    %1075 = vmatprep.subr.bf16.mxu0 0
    %1076 = vmatpush1.bf16.msra.mxu0 0
    %1077 = vmatprep.subr.bf16.mxu0 0
    %1078 = vmatpush1.bf16.msra.mxu0 0
    %1079 = vmatprep.subr.bf16.mxu0 0
    %1080 = vmatpush1.bf16.msra.mxu0 0
    %1081 = vmatprep.subr.bf16.mxu0 0
    %1082 = vmatpush1.bf16.msra.mxu0 0
    %1083 = vmatprep.subr.bf16.mxu0 0
    %1084 = vmatpush1.bf16.msra.mxu0 0
    %1085 = vmatprep.subr.bf16.mxu0 0
    %1086 = vmatpush1.bf16.msra.mxu0 %v1050
    %1087 = vmatprep.subr.bf16.mxu0 0
    %1088 = vmatpush1.bf16.msra.mxu0 %v1049
    %1089 = vmatprep.subr.bf16.mxu0 0
    %1090 = vmatpush2.bf16.msra.mxu0 0
    %1091 = vmatprep.subr.bf16.mxu0 0
    %1092 = vmatpush2.bf16.msra.mxu0 0
    %1093 = vmatprep.subr.bf16.mxu0 0
    %1094 = vmatpush2.bf16.msra.mxu0 0
    %1095 = vmatprep.subr.bf16.mxu0 0
    %1096 = vmatpush2.bf16.msra.mxu0 0
    %1097 = vmatprep.subr.bf16.mxu0 0
    %1098 = vmatpush2.bf16.msra.mxu0 0
    %1099 = vmatprep.subr.bf16.mxu0 0
    %1100 = vmatpush2.bf16.msra.mxu0 0
    %1101 = vmatprep.subr.bf16.mxu0 0
    %1102 = vmatpush2.bf16.msra.mxu0 0
    %1103 = vmatprep.subr.bf16.mxu0 0
    %1104 = vmatpush2.bf16.msra.mxu0 0
    %1105 = vmatprep.mubr.bf16.mxu0 0
    %1106 = vmatmul.mubr.bf16.gmra.mxu0 %v1071
    %v1107 = vpop.f32.mrf.mxu0
    %v1108 = vadd.f32 %v1065, %v1107
    %v1109 = vpop.f32.mrf.mxu0
    %v1110 = vpop.f32.mrf.mxu0
    %v1111 = vadd.f32 %v1065, %v1110
    %v1112 = vpop.f32.mrf.mxu0
    %1113 = vdwg.mxu0
    %1114 = vmatprep.subr.bf16.mxu0 0
    %1115 = vmatpush1.bf16.msra.mxu0 0
    %1116 = vmatprep.subr.bf16.mxu0 0
    %1117 = vmatpush1.bf16.msra.mxu0 0
    %1118 = vmatprep.subr.bf16.mxu0 0
    %1119 = vmatpush1.bf16.msra.mxu0 0
    %1120 = vmatprep.subr.bf16.mxu0 0
    %1121 = vmatpush1.bf16.msra.mxu0 0
    %1122 = vmatprep.subr.bf16.mxu0 0
    %1123 = vmatpush1.bf16.msra.mxu0 0
    %1124 = vmatprep.subr.bf16.mxu0 0
    %1125 = vmatpush1.bf16.msra.mxu0 0
    %1126 = vmatprep.subr.bf16.mxu0 0
    %1127 = vmatpush1.bf16.msra.mxu0 %v1057
    %1128 = vmatprep.subr.bf16.mxu0 0
    %1129 = vmatpush1.bf16.msra.mxu0 %v1056
    %1130 = vmatprep.subr.bf16.mxu0 0
    %1131 = vmatpush2.bf16.msra.mxu0 0
    %1132 = vmatprep.subr.bf16.mxu0 0
    %1133 = vmatpush2.bf16.msra.mxu0 0
    %1134 = vmatprep.subr.bf16.mxu0 0
    %1135 = vmatpush2.bf16.msra.mxu0 0
    %1136 = vmatprep.subr.bf16.mxu0 0
    %1137 = vmatpush2.bf16.msra.mxu0 0
    %1138 = vmatprep.subr.bf16.mxu0 0
    %1139 = vmatpush2.bf16.msra.mxu0 0
    %1140 = vmatprep.subr.bf16.mxu0 0
    %1141 = vmatpush2.bf16.msra.mxu0 0
    %1142 = vmatprep.subr.bf16.mxu0 0
    %1143 = vmatpush2.bf16.msra.mxu0 0
    %1144 = vmatprep.subr.bf16.mxu0 0
    %1145 = vmatpush2.bf16.msra.mxu0 0
    %1146 = vmatprep.mubr.bf16.mxu0 0
    %1147 = vmatmul.mubr.bf16.gmra.mxu0 %v117
    %v1148 = vpop.f32.mrf.mxu0
    %v1149 = vadd.f32 0.0, %v1148
    %v1150 = vpop.f32.mrf.mxu0
    %v1151 = vpop.f32.mrf.mxu0
    %v1152 = vpop.f32.mrf.mxu0
    %1153 = vdwg.mxu0
    %v1155 = vrot.slane %v1149, 1
    %v1158 = vadd.f32 %v1108, %v1149
    %v1159 = vadd.f32 %v1111, %v1155
    %v1160 = vxor.u32 %v1158, 2147483648
    %v1161 = vxor.u32 %v1159, 2147483648
    %v1162 = vmul.f32 %v1160, 1.442695
    %v1163 = vpow.pop %v1162
    %v1164 = vmul.f32 %v1161, 1.442695
    %v1165 = vpow.pop %v1164
    %v1166 = vadd.f32 %v1163, 1.0
    %v1167 = vadd.f32 %v1165, 1.0
    %v1168 = vrcp.pop %v1166
    %v1169 = vmul.f32 1.0, %v1168
    %v1170 = vrcp.pop %v1167
    %v1171 = vmul.f32 1.0, %v1170
    %v1172 = vtanh.pop %v1158
    %v1173 = vtanh.pop %v1159
    %v1174 = vmul.f32 %v1169, 0.0
    %v1175 = vmul.f32 %v1171, 0.0
    %1178 = vrot.lane.b32.xlu0 %v1172, 64
    %v1179 = vpop.permute.xlu0 %1178
    %1180 = vrot.lane.b32.xlu0 %v1173, 64
    %v1181 = vpop.permute.xlu0 %1180
    %v1184 = vmul.f32 %v1169, %v1179
    %v1185 = vmul.f32 %v1171, %v1181
    %1188 = vrot.lane.b32.xlu0 %v1184, 32
    %v1189 = vpop.permute.xlu0 %1188
    %1190 = vrot.lane.b32.xlu0 %v1185, 32
    %v1191 = vpop.permute.xlu0 %1190
    %v1194 = vadd.f32 %v1174, %v1189
    %v1195 = vadd.f32 %v1175, %v1191
    %v1196 = vtanh.pop %v1194
    %v1197 = vtanh.pop %v1195
    %1200 = vrot.lane.b32.xlu0 %v1196, 64
    %v1201 = vpop.permute.xlu0 %1200
    %1202 = vrot.lane.b32.xlu0 %v1197, 64
    %v1203 = vpop.permute.xlu0 %1202
    %v1206 = vmul.f32 %v1169, %v1201
    %v1207 = vmul.f32 %v1171, %v1203
    %v1208 = vpack.c.bf16 %v1206, %v1206
    %v1209 = vpack.c.bf16 %v1207, %v1207
    %v1212 = vunpack.c.l.b16 %v1208
    %v1213 = vunpack.c.l.b16 %v1209
    %v1214 = vrot.slane %v1213, 7
    %v1215 = vsel %vm220, %v1214, %v1212
    %v1216 = vpack.c.b16 %v1215, %v1215
    %1217 = vrot.lane.b32.xlu0 %v1216, 32
    %v1218 = vpop.permute.xlu0 %1217
    %v1220 = vsel %vm71, %v1218, 0
    %1222 = vmatprep.subr.bf16.mxu0 0
    %1223 = vmatpush1.bf16.msra.mxu0 0
    %1224 = vmatprep.subr.bf16.mxu0 0
    %1225 = vmatpush1.bf16.msra.mxu0 0
    %1226 = vmatprep.subr.bf16.mxu0 0
    %1227 = vmatpush1.bf16.msra.mxu0 0
    %1228 = vmatprep.subr.bf16.mxu0 0
    %1229 = vmatpush1.bf16.msra.mxu0 0
    %1230 = vmatprep.subr.bf16.mxu0 0
    %1231 = vmatpush1.bf16.msra.mxu0 0
    %1232 = vmatprep.subr.bf16.mxu0 0
    %1233 = vmatpush1.bf16.msra.mxu0 0
    %1234 = vmatprep.subr.bf16.mxu0 0
    %1235 = vmatpush1.bf16.msra.mxu0 %v1057
    %1236 = vmatprep.subr.bf16.mxu0 0
    %1237 = vmatpush1.bf16.msra.mxu0 %v1056
    %1238 = vmatprep.subr.bf16.mxu0 0
    %1239 = vmatpush2.bf16.msra.mxu0 0
    %1240 = vmatprep.subr.bf16.mxu0 0
    %1241 = vmatpush2.bf16.msra.mxu0 0
    %1242 = vmatprep.subr.bf16.mxu0 0
    %1243 = vmatpush2.bf16.msra.mxu0 0
    %1244 = vmatprep.subr.bf16.mxu0 0
    %1245 = vmatpush2.bf16.msra.mxu0 0
    %1246 = vmatprep.subr.bf16.mxu0 0
    %1247 = vmatpush2.bf16.msra.mxu0 0
    %1248 = vmatprep.subr.bf16.mxu0 0
    %1249 = vmatpush2.bf16.msra.mxu0 0
    %1250 = vmatprep.subr.bf16.mxu0 0
    %1251 = vmatpush2.bf16.msra.mxu0 0
    %1252 = vmatprep.subr.bf16.mxu0 0
    %1253 = vmatpush2.bf16.msra.mxu0 0
    %1254 = vmatprep.mubr.bf16.mxu0 0
    %1255 = vmatmul.mubr.bf16.gmra.mxu0 %v1220
    %v1256 = vpop.f32.mrf.mxu0
    %v1257 = vadd.f32 0.0, %v1256
    %v1258 = vpop.f32.mrf.mxu0
    %v1259 = vpop.f32.mrf.mxu0
    %v1260 = vpop.f32.mrf.mxu0
    %1261 = vdwg.mxu0
    %v1263 = vrot.slane %v1257, 7
    %v1266 = vadd.f32 %v1108, %v1263
    %v1267 = vadd.f32 %v1111, %v1257
    %v1268 = vxor.u32 %v1266, 2147483648
    %v1269 = vxor.u32 %v1267, 2147483648
    %v1270 = vmul.f32 %v1268, 1.442695
    %v1271 = vpow.pop %v1270
    %v1272 = vmul.f32 %v1269, 1.442695
    %v1273 = vpow.pop %v1272
    %v1274 = vadd.f32 %v1271, 1.0
    %v1275 = vadd.f32 %v1273, 1.0
    %v1276 = vrcp.pop %v1274
    %v1277 = vmul.f32 1.0, %v1276
    %v1278 = vrcp.pop %v1275
    %v1279 = vmul.f32 1.0, %v1278
    %v1280 = vtanh.pop %v1266
    %v1281 = vtanh.pop %v1267
    %v1284 = vrot.slane %v1194, 7
    %v1285 = vrot.slane %v1195, 7
    %v1288 = vmul.f32 %v1277, %v1284
    %v1289 = vmul.f32 %v1279, %v1285
    %1292 = vrot.lane.b32.xlu0 %v1280, 64
    %v1293 = vpop.permute.xlu0 %1292
    %1294 = vrot.lane.b32.xlu0 %v1281, 64
    %v1295 = vpop.permute.xlu0 %1294
    %v1298 = vmul.f32 %v1277, %v1293
    %v1299 = vmul.f32 %v1279, %v1295
    %1302 = vrot.lane.b32.xlu0 %v1298, 32
    %v1303 = vpop.permute.xlu0 %1302
    %1304 = vrot.lane.b32.xlu0 %v1299, 32
    %v1305 = vpop.permute.xlu0 %1304
    %v1308 = vadd.f32 %v1288, %v1303
    %v1309 = vadd.f32 %v1289, %v1305
    %v1310 = vtanh.pop %v1308
    %v1311 = vtanh.pop %v1309
    %1314 = vrot.lane.b32.xlu0 %v1310, 64
    %v1315 = vpop.permute.xlu0 %1314
    %1316 = vrot.lane.b32.xlu0 %v1311, 64
    %v1317 = vpop.permute.xlu0 %1316
    %v1320 = vmul.f32 %v1277, %v1315
    %v1321 = vmul.f32 %v1279, %v1317
    %v1322 = vpack.c.bf16 %v1320, %v1320
    %v1323 = vpack.c.bf16 %v1321, %v1321
    %v1326 = vunpack.c.l.b16 %v1322
    %v1327 = vunpack.c.l.b16 %v1323
    %v1328 = vrot.slane %v1326, 1
    %v1329 = vsel %vm220, %v1327, %v1328
    %v1330 = vpack.c.b16 %v1329, %v1329
    %1331 = vrot.lane.b32.xlu0 %v1330, 32
    %v1332 = vpop.permute.xlu0 %1331
    %v1334 = vsel %vm71, %v1332, 0
    %1336 = vmatprep.subr.bf16.mxu0 0
    %1337 = vmatpush1.bf16.msra.mxu0 0
    %1338 = vmatprep.subr.bf16.mxu0 0
    %1339 = vmatpush1.bf16.msra.mxu0 0
    %1340 = vmatprep.subr.bf16.mxu0 0
    %1341 = vmatpush1.bf16.msra.mxu0 0
    %1342 = vmatprep.subr.bf16.mxu0 0
    %1343 = vmatpush1.bf16.msra.mxu0 0
    %1344 = vmatprep.subr.bf16.mxu0 0
    %1345 = vmatpush1.bf16.msra.mxu0 0
    %1346 = vmatprep.subr.bf16.mxu0 0
    %1347 = vmatpush1.bf16.msra.mxu0 0
    %1348 = vmatprep.subr.bf16.mxu0 0
    %1349 = vmatpush1.bf16.msra.mxu0 %v1057
    %1350 = vmatprep.subr.bf16.mxu0 0
    %1351 = vmatpush1.bf16.msra.mxu0 %v1056
    %1352 = vmatprep.subr.bf16.mxu0 0
    %1353 = vmatpush2.bf16.msra.mxu0 0
    %1354 = vmatprep.subr.bf16.mxu0 0
    %1355 = vmatpush2.bf16.msra.mxu0 0
    %1356 = vmatprep.subr.bf16.mxu0 0
    %1357 = vmatpush2.bf16.msra.mxu0 0
    %1358 = vmatprep.subr.bf16.mxu0 0
    %1359 = vmatpush2.bf16.msra.mxu0 0
    %1360 = vmatprep.subr.bf16.mxu0 0
    %1361 = vmatpush2.bf16.msra.mxu0 0
    %1362 = vmatprep.subr.bf16.mxu0 0
    %1363 = vmatpush2.bf16.msra.mxu0 0
    %1364 = vmatprep.subr.bf16.mxu0 0
    %1365 = vmatpush2.bf16.msra.mxu0 0
    %1366 = vmatprep.subr.bf16.mxu0 0
    %1367 = vmatpush2.bf16.msra.mxu0 0
    %1368 = vmatprep.mubr.bf16.mxu0 0
    %1369 = vmatmul.mubr.bf16.gmra.mxu0 %v1334
    %v1370 = vpop.f32.mrf.mxu0
    %v1371 = vadd.f32 0.0, %v1370
    %v1372 = vpop.f32.mrf.mxu0
    %v1373 = vpop.f32.mrf.mxu0
    %v1374 = vpop.f32.mrf.mxu0
    %1375 = vdwg.mxu0
    %v1377 = vrot.slane %v1371, 6
    %v1378 = vrot.slane %v1371, 7
    %v1381 = vadd.f32 %v1108, %v1377
    %v1382 = vadd.f32 %v1111, %v1378
    %v1383 = vxor.u32 %v1381, 2147483648
    %v1384 = vxor.u32 %v1382, 2147483648
    %v1385 = vmul.f32 %v1383, 1.442695
    %v1386 = vpow.pop %v1385
    %v1387 = vmul.f32 %v1384, 1.442695
    %v1388 = vpow.pop %v1387
    %v1389 = vadd.f32 %v1386, 1.0
    %v1390 = vadd.f32 %v1388, 1.0
    %v1391 = vrcp.pop %v1389
    %v1392 = vmul.f32 1.0, %v1391
    %v1393 = vrcp.pop %v1390
    %v1394 = vmul.f32 1.0, %v1393
    %v1395 = vtanh.pop %v1381
    %v1396 = vtanh.pop %v1382
    %v1399 = vrot.slane %v1308, 7
    %v1400 = vrot.slane %v1309, 7
    %v1403 = vmul.f32 %v1392, %v1399
    %v1404 = vmul.f32 %v1394, %v1400
    %1407 = vrot.lane.b32.xlu0 %v1395, 64
    %v1408 = vpop.permute.xlu0 %1407
    %1409 = vrot.lane.b32.xlu0 %v1396, 64
    %v1410 = vpop.permute.xlu0 %1409
    %v1413 = vmul.f32 %v1392, %v1408
    %v1414 = vmul.f32 %v1394, %v1410
    %1417 = vrot.lane.b32.xlu0 %v1413, 32
    %v1418 = vpop.permute.xlu0 %1417
    %1419 = vrot.lane.b32.xlu0 %v1414, 32
    %v1420 = vpop.permute.xlu0 %1419
    %v1423 = vadd.f32 %v1403, %v1418
    %v1424 = vadd.f32 %v1404, %v1420
    %v1425 = vtanh.pop %v1423
    %v1426 = vtanh.pop %v1424
    %1429 = vrot.lane.b32.xlu0 %v1425, 64
    %v1430 = vpop.permute.xlu0 %1429
    %1431 = vrot.lane.b32.xlu0 %v1426, 64
    %v1432 = vpop.permute.xlu0 %1431
    %v1435 = vmul.f32 %v1392, %v1430
    %v1436 = vmul.f32 %v1394, %v1432
    %v1437 = vpack.c.bf16 %v1435, %v1435
    %v1438 = vpack.c.bf16 %v1436, %v1436
    %v1441 = vunpack.c.l.b16 %v1437
    %v1442 = vunpack.c.l.b16 %v1438
    %v1443 = vrot.slane %v1441, 2
    %v1444 = vrot.slane %v1442, 1
    %v1445 = vsel %vm220, %v1444, %v1443
    %v1446 = vpack.c.b16 %v1445, %v1445
    %1447 = vrot.lane.b32.xlu0 %v1446, 32
    %v1448 = vpop.permute.xlu0 %1447
    %v1450 = vsel %vm71, %v1448, 0
    %1452 = vmatprep.subr.bf16.mxu0 0
    %1453 = vmatpush1.bf16.msra.mxu0 0
    %1454 = vmatprep.subr.bf16.mxu0 0
    %1455 = vmatpush1.bf16.msra.mxu0 0
    %1456 = vmatprep.subr.bf16.mxu0 0
    %1457 = vmatpush1.bf16.msra.mxu0 0
    %1458 = vmatprep.subr.bf16.mxu0 0
    %1459 = vmatpush1.bf16.msra.mxu0 0
    %1460 = vmatprep.subr.bf16.mxu0 0
    %1461 = vmatpush1.bf16.msra.mxu0 0
    %1462 = vmatprep.subr.bf16.mxu0 0
    %1463 = vmatpush1.bf16.msra.mxu0 0
    %1464 = vmatprep.subr.bf16.mxu0 0
    %1465 = vmatpush1.bf16.msra.mxu0 %v1057
    %1466 = vmatprep.subr.bf16.mxu0 0
    %1467 = vmatpush1.bf16.msra.mxu0 %v1056
    %1468 = vmatprep.subr.bf16.mxu0 0
    %1469 = vmatpush2.bf16.msra.mxu0 0
    %1470 = vmatprep.subr.bf16.mxu0 0
    %1471 = vmatpush2.bf16.msra.mxu0 0
    %1472 = vmatprep.subr.bf16.mxu0 0
    %1473 = vmatpush2.bf16.msra.mxu0 0
    %1474 = vmatprep.subr.bf16.mxu0 0
    %1475 = vmatpush2.bf16.msra.mxu0 0
    %1476 = vmatprep.subr.bf16.mxu0 0
    %1477 = vmatpush2.bf16.msra.mxu0 0
    %1478 = vmatprep.subr.bf16.mxu0 0
    %1479 = vmatpush2.bf16.msra.mxu0 0
    %1480 = vmatprep.subr.bf16.mxu0 0
    %1481 = vmatpush2.bf16.msra.mxu0 0
    %1482 = vmatprep.subr.bf16.mxu0 0
    %1483 = vmatpush2.bf16.msra.mxu0 0
    %1484 = vmatprep.mubr.bf16.mxu0 0
    %1485 = vmatmul.mubr.bf16.gmra.mxu0 %v1450
    %v1486 = vpop.f32.mrf.mxu0
    %v1487 = vadd.f32 0.0, %v1486
    %v1488 = vpop.f32.mrf.mxu0
    %v1489 = vpop.f32.mrf.mxu0
    %v1490 = vpop.f32.mrf.mxu0
    %1491 = vdwg.mxu0
    %v1493 = vrot.slane %v1487, 5
    %v1494 = vrot.slane %v1487, 6
    %v1497 = vadd.f32 %v1108, %v1493
    %v1498 = vadd.f32 %v1111, %v1494
    %v1499 = vxor.u32 %v1497, 2147483648
    %v1500 = vxor.u32 %v1498, 2147483648
    %v1501 = vmul.f32 %v1499, 1.442695
    %v1502 = vpow.pop %v1501
    %v1503 = vmul.f32 %v1500, 1.442695
    %v1504 = vpow.pop %v1503
    %v1505 = vadd.f32 %v1502, 1.0
    %v1506 = vadd.f32 %v1504, 1.0
    %v1507 = vrcp.pop %v1505
    %v1508 = vmul.f32 1.0, %v1507
    %v1509 = vrcp.pop %v1506
    %v1510 = vmul.f32 1.0, %v1509
    %v1511 = vtanh.pop %v1497
    %v1512 = vtanh.pop %v1498
    %v1515 = vrot.slane %v1423, 7
    %v1516 = vrot.slane %v1424, 7
    %v1519 = vmul.f32 %v1508, %v1515
    %v1520 = vmul.f32 %v1510, %v1516
    %1523 = vrot.lane.b32.xlu0 %v1511, 64
    %v1524 = vpop.permute.xlu0 %1523
    %1525 = vrot.lane.b32.xlu0 %v1512, 64
    %v1526 = vpop.permute.xlu0 %1525
    %v1529 = vmul.f32 %v1508, %v1524
    %v1530 = vmul.f32 %v1510, %v1526
    %1533 = vrot.lane.b32.xlu0 %v1529, 32
    %v1534 = vpop.permute.xlu0 %1533
    %1535 = vrot.lane.b32.xlu0 %v1530, 32
    %v1536 = vpop.permute.xlu0 %1535
    %v1539 = vadd.f32 %v1519, %v1534
    %v1540 = vadd.f32 %v1520, %v1536
    %v1541 = vtanh.pop %v1539
    %v1542 = vtanh.pop %v1540
    %1545 = vrot.lane.b32.xlu0 %v1541, 64
    %v1546 = vpop.permute.xlu0 %1545
    %1547 = vrot.lane.b32.xlu0 %v1542, 64
    %v1548 = vpop.permute.xlu0 %1547
    %v1551 = vmul.f32 %v1508, %v1546
    %v1552 = vmul.f32 %v1510, %v1548
    %v1553 = vpack.c.bf16 %v1551, %v1551
    %v1554 = vpack.c.bf16 %v1552, %v1552
    %v1557 = vunpack.c.l.b16 %v1553
    %v1558 = vunpack.c.l.b16 %v1554
    %v1559 = vrot.slane %v1557, 3
    %v1560 = vrot.slane %v1558, 2
    %v1561 = vsel %vm220, %v1560, %v1559
    %v1562 = vpack.c.b16 %v1561, %v1561
    %1563 = vrot.lane.b32.xlu0 %v1562, 32
    %v1564 = vpop.permute.xlu0 %1563
    %v1566 = vsel %vm71, %v1564, 0
    %1568 = vmatprep.subr.bf16.mxu0 0
    %1569 = vmatpush1.bf16.msra.mxu0 0
    %1570 = vmatprep.subr.bf16.mxu0 0
    %1571 = vmatpush1.bf16.msra.mxu0 0
    %1572 = vmatprep.subr.bf16.mxu0 0
    %1573 = vmatpush1.bf16.msra.mxu0 0
    %1574 = vmatprep.subr.bf16.mxu0 0
    %1575 = vmatpush1.bf16.msra.mxu0 0
    %1576 = vmatprep.subr.bf16.mxu0 0
    %1577 = vmatpush1.bf16.msra.mxu0 0
    %1578 = vmatprep.subr.bf16.mxu0 0
    %1579 = vmatpush1.bf16.msra.mxu0 0
    %1580 = vmatprep.subr.bf16.mxu0 0
    %1581 = vmatpush1.bf16.msra.mxu0 %v1057
    %1582 = vmatprep.subr.bf16.mxu0 0
    %1583 = vmatpush1.bf16.msra.mxu0 %v1056
    %1584 = vmatprep.subr.bf16.mxu0 0
    %1585 = vmatpush2.bf16.msra.mxu0 0
    %1586 = vmatprep.subr.bf16.mxu0 0
    %1587 = vmatpush2.bf16.msra.mxu0 0
    %1588 = vmatprep.subr.bf16.mxu0 0
    %1589 = vmatpush2.bf16.msra.mxu0 0
    %1590 = vmatprep.subr.bf16.mxu0 0
    %1591 = vmatpush2.bf16.msra.mxu0 0
    %1592 = vmatprep.subr.bf16.mxu0 0
    %1593 = vmatpush2.bf16.msra.mxu0 0
    %1594 = vmatprep.subr.bf16.mxu0 0
    %1595 = vmatpush2.bf16.msra.mxu0 0
    %1596 = vmatprep.subr.bf16.mxu0 0
    %1597 = vmatpush2.bf16.msra.mxu0 0
    %1598 = vmatprep.subr.bf16.mxu0 0
    %1599 = vmatpush2.bf16.msra.mxu0 0
    %1600 = vmatprep.mubr.bf16.mxu0 0
    %1601 = vmatmul.mubr.bf16.gmra.mxu0 %v1566
    %v1602 = vpop.f32.mrf.mxu0
    %v1603 = vadd.f32 0.0, %v1602
    %v1604 = vpop.f32.mrf.mxu0
    %v1605 = vpop.f32.mrf.mxu0
    %v1606 = vpop.f32.mrf.mxu0
    %1607 = vdwg.mxu0
    %v1609 = vrot.slane %v1603, 4
    %v1610 = vrot.slane %v1603, 5
    %v1613 = vadd.f32 %v1108, %v1609
    %v1614 = vadd.f32 %v1111, %v1610
    %v1615 = vxor.u32 %v1613, 2147483648
    %v1616 = vxor.u32 %v1614, 2147483648
    %v1617 = vmul.f32 %v1615, 1.442695
    %v1618 = vpow.pop %v1617
    %v1619 = vmul.f32 %v1616, 1.442695
    %v1620 = vpow.pop %v1619
    %v1621 = vadd.f32 %v1618, 1.0
    %v1622 = vadd.f32 %v1620, 1.0
    %v1623 = vrcp.pop %v1621
    %v1624 = vmul.f32 1.0, %v1623
    %v1625 = vrcp.pop %v1622
    %v1626 = vmul.f32 1.0, %v1625
    %v1627 = vtanh.pop %v1613
    %v1628 = vtanh.pop %v1614
    %v1631 = vrot.slane %v1539, 7
    %v1632 = vrot.slane %v1540, 7
    %v1635 = vmul.f32 %v1624, %v1631
    %v1636 = vmul.f32 %v1626, %v1632
    %1639 = vrot.lane.b32.xlu0 %v1627, 64
    %v1640 = vpop.permute.xlu0 %1639
    %1641 = vrot.lane.b32.xlu0 %v1628, 64
    %v1642 = vpop.permute.xlu0 %1641
    %v1645 = vmul.f32 %v1624, %v1640
    %v1646 = vmul.f32 %v1626, %v1642
    %1649 = vrot.lane.b32.xlu0 %v1645, 32
    %v1650 = vpop.permute.xlu0 %1649
    %1651 = vrot.lane.b32.xlu0 %v1646, 32
    %v1652 = vpop.permute.xlu0 %1651
    %v1655 = vadd.f32 %v1635, %v1650
    %v1656 = vadd.f32 %v1636, %v1652
    %v1657 = vtanh.pop %v1655
    %v1658 = vtanh.pop %v1656
    %1661 = vrot.lane.b32.xlu0 %v1657, 64
    %v1662 = vpop.permute.xlu0 %1661
    %1663 = vrot.lane.b32.xlu0 %v1658, 64
    %v1664 = vpop.permute.xlu0 %1663
    %v1667 = vmul.f32 %v1624, %v1662
    %v1668 = vmul.f32 %v1626, %v1664
    %v1669 = vpack.c.bf16 %v1667, %v1667
    %v1670 = vpack.c.bf16 %v1668, %v1668
    %v1673 = vunpack.c.l.b16 %v1669
    %v1674 = vunpack.c.l.b16 %v1670
    %v1675 = vrot.slane %v1673, 4
    %v1676 = vrot.slane %v1674, 3
    %v1677 = vsel %vm220, %v1676, %v1675
    %v1678 = vpack.c.b16 %v1677, %v1677
    %1679 = vrot.lane.b32.xlu0 %v1678, 32
    %v1680 = vpop.permute.xlu0 %1679
    %v1682 = vsel %vm71, %v1680, 0
    %1684 = vmatprep.subr.bf16.mxu0 0
    %1685 = vmatpush1.bf16.msra.mxu0 0
    %1686 = vmatprep.subr.bf16.mxu0 0
    %1687 = vmatpush1.bf16.msra.mxu0 0
    %1688 = vmatprep.subr.bf16.mxu0 0
    %1689 = vmatpush1.bf16.msra.mxu0 0
    %1690 = vmatprep.subr.bf16.mxu0 0
    %1691 = vmatpush1.bf16.msra.mxu0 0
    %1692 = vmatprep.subr.bf16.mxu0 0
    %1693 = vmatpush1.bf16.msra.mxu0 0
    %1694 = vmatprep.subr.bf16.mxu0 0
    %1695 = vmatpush1.bf16.msra.mxu0 0
    %1696 = vmatprep.subr.bf16.mxu0 0
    %1697 = vmatpush1.bf16.msra.mxu0 %v1057
    %1698 = vmatprep.subr.bf16.mxu0 0
    %1699 = vmatpush1.bf16.msra.mxu0 %v1056
    %1700 = vmatprep.subr.bf16.mxu0 0
    %1701 = vmatpush2.bf16.msra.mxu0 0
    %1702 = vmatprep.subr.bf16.mxu0 0
    %1703 = vmatpush2.bf16.msra.mxu0 0
    %1704 = vmatprep.subr.bf16.mxu0 0
    %1705 = vmatpush2.bf16.msra.mxu0 0
    %1706 = vmatprep.subr.bf16.mxu0 0
    %1707 = vmatpush2.bf16.msra.mxu0 0
    %1708 = vmatprep.subr.bf16.mxu0 0
    %1709 = vmatpush2.bf16.msra.mxu0 0
    %1710 = vmatprep.subr.bf16.mxu0 0
    %1711 = vmatpush2.bf16.msra.mxu0 0
    %1712 = vmatprep.subr.bf16.mxu0 0
    %1713 = vmatpush2.bf16.msra.mxu0 0
    %1714 = vmatprep.subr.bf16.mxu0 0
    %1715 = vmatpush2.bf16.msra.mxu0 0
    %1716 = vmatprep.mubr.bf16.mxu0 0
    %1717 = vmatmul.mubr.bf16.gmra.mxu0 %v1682
    %v1718 = vpop.f32.mrf.mxu0
    %v1719 = vadd.f32 0.0, %v1718
    %v1720 = vpop.f32.mrf.mxu0
    %v1721 = vpop.f32.mrf.mxu0
    %v1722 = vpop.f32.mrf.mxu0
    %1723 = vdwg.mxu0
    %v1725 = vrot.slane %v1719, 3
    %v1726 = vrot.slane %v1719, 4
    %v1729 = vadd.f32 %v1108, %v1725
    %v1730 = vadd.f32 %v1111, %v1726
    %v1731 = vxor.u32 %v1729, 2147483648
    %v1732 = vxor.u32 %v1730, 2147483648
    %v1733 = vmul.f32 %v1731, 1.442695
    %v1734 = vpow.pop %v1733
    %v1735 = vmul.f32 %v1732, 1.442695
    %v1736 = vpow.pop %v1735
    %v1737 = vadd.f32 %v1734, 1.0
    %v1738 = vadd.f32 %v1736, 1.0
    %v1739 = vrcp.pop %v1737
    %v1740 = vmul.f32 1.0, %v1739
    %v1741 = vrcp.pop %v1738
    %v1742 = vmul.f32 1.0, %v1741
    %v1743 = vtanh.pop %v1729
    %v1744 = vtanh.pop %v1730
    %v1747 = vrot.slane %v1655, 7
    %v1748 = vrot.slane %v1656, 7
    %v1751 = vmul.f32 %v1740, %v1747
    %v1752 = vmul.f32 %v1742, %v1748
    %1755 = vrot.lane.b32.xlu0 %v1743, 64
    %v1756 = vpop.permute.xlu0 %1755
    %1757 = vrot.lane.b32.xlu0 %v1744, 64
    %v1758 = vpop.permute.xlu0 %1757
    %v1761 = vmul.f32 %v1740, %v1756
    %v1762 = vmul.f32 %v1742, %v1758
    %1765 = vrot.lane.b32.xlu0 %v1761, 32
    %v1766 = vpop.permute.xlu0 %1765
    %1767 = vrot.lane.b32.xlu0 %v1762, 32
    %v1768 = vpop.permute.xlu0 %1767
    %v1771 = vadd.f32 %v1751, %v1766
    %v1772 = vadd.f32 %v1752, %v1768
    %v1773 = vtanh.pop %v1771
    %v1774 = vtanh.pop %v1772
    %1777 = vrot.lane.b32.xlu0 %v1773, 64
    %v1778 = vpop.permute.xlu0 %1777
    %1779 = vrot.lane.b32.xlu0 %v1774, 64
    %v1780 = vpop.permute.xlu0 %1779
    %v1783 = vmul.f32 %v1740, %v1778
    %v1784 = vmul.f32 %v1742, %v1780
    %v1785 = vpack.c.bf16 %v1783, %v1783
    %v1786 = vpack.c.bf16 %v1784, %v1784
    %v1789 = vunpack.c.l.b16 %v1785
    %v1790 = vunpack.c.l.b16 %v1786
    %v1791 = vrot.slane %v1789, 5
    %v1792 = vrot.slane %v1790, 4
    %v1793 = vsel %vm220, %v1792, %v1791
    %v1794 = vpack.c.b16 %v1793, %v1793
    %1795 = vrot.lane.b32.xlu0 %v1794, 32
    %v1796 = vpop.permute.xlu0 %1795
    %v1798 = vsel %vm71, %v1796, 0
    %1800 = vmatprep.subr.bf16.mxu0 0
    %1801 = vmatpush1.bf16.msra.mxu0 0
    %1802 = vmatprep.subr.bf16.mxu0 0
    %1803 = vmatpush1.bf16.msra.mxu0 0
    %1804 = vmatprep.subr.bf16.mxu0 0
    %1805 = vmatpush1.bf16.msra.mxu0 0
    %1806 = vmatprep.subr.bf16.mxu0 0
    %1807 = vmatpush1.bf16.msra.mxu0 0
    %1808 = vmatprep.subr.bf16.mxu0 0
    %1809 = vmatpush1.bf16.msra.mxu0 0
    %1810 = vmatprep.subr.bf16.mxu0 0
    %1811 = vmatpush1.bf16.msra.mxu0 0
    %1812 = vmatprep.subr.bf16.mxu0 0
    %1813 = vmatpush1.bf16.msra.mxu0 %v1057
    %1814 = vmatprep.subr.bf16.mxu0 0
    %1815 = vmatpush1.bf16.msra.mxu0 %v1056
    %1816 = vmatprep.subr.bf16.mxu0 0
    %1817 = vmatpush2.bf16.msra.mxu0 0
    %1818 = vmatprep.subr.bf16.mxu0 0
    %1819 = vmatpush2.bf16.msra.mxu0 0
    %1820 = vmatprep.subr.bf16.mxu0 0
    %1821 = vmatpush2.bf16.msra.mxu0 0
    %1822 = vmatprep.subr.bf16.mxu0 0
    %1823 = vmatpush2.bf16.msra.mxu0 0
    %1824 = vmatprep.subr.bf16.mxu0 0
    %1825 = vmatpush2.bf16.msra.mxu0 0
    %1826 = vmatprep.subr.bf16.mxu0 0
    %1827 = vmatpush2.bf16.msra.mxu0 0
    %1828 = vmatprep.subr.bf16.mxu0 0
    %1829 = vmatpush2.bf16.msra.mxu0 0
    %1830 = vmatprep.subr.bf16.mxu0 0
    %1831 = vmatpush2.bf16.msra.mxu0 0
    %1832 = vmatprep.mubr.bf16.mxu0 0
    %1833 = vmatmul.mubr.bf16.gmra.mxu0 %v1798
    %v1834 = vpop.f32.mrf.mxu0
    %v1835 = vadd.f32 0.0, %v1834
    %v1836 = vpop.f32.mrf.mxu0
    %v1837 = vpop.f32.mrf.mxu0
    %v1838 = vpop.f32.mrf.mxu0
    %1839 = vdwg.mxu0
    %v1841 = vrot.slane %v1835, 2
    %v1842 = vrot.slane %v1835, 3
    %v1845 = vadd.f32 %v1108, %v1841
    %v1846 = vadd.f32 %v1111, %v1842
    %v1847 = vxor.u32 %v1845, 2147483648
    %v1848 = vxor.u32 %v1846, 2147483648
    %v1849 = vmul.f32 %v1847, 1.442695
    %v1850 = vpow.pop %v1849
    %v1851 = vmul.f32 %v1848, 1.442695
    %v1852 = vpow.pop %v1851
    %v1853 = vadd.f32 %v1850, 1.0
    %v1854 = vadd.f32 %v1852, 1.0
    %v1855 = vrcp.pop %v1853
    %v1856 = vmul.f32 1.0, %v1855
    %v1857 = vrcp.pop %v1854
    %v1858 = vmul.f32 1.0, %v1857
    %v1859 = vtanh.pop %v1845
    %v1860 = vtanh.pop %v1846
    %v1863 = vrot.slane %v1771, 7
    %v1864 = vrot.slane %v1772, 7
    %v1867 = vmul.f32 %v1856, %v1863
    %v1868 = vmul.f32 %v1858, %v1864
    %1871 = vrot.lane.b32.xlu0 %v1859, 64
    %v1872 = vpop.permute.xlu0 %1871
    %1873 = vrot.lane.b32.xlu0 %v1860, 64
    %v1874 = vpop.permute.xlu0 %1873
    %v1877 = vmul.f32 %v1856, %v1872
    %v1878 = vmul.f32 %v1858, %v1874
    %1881 = vrot.lane.b32.xlu0 %v1877, 32
    %v1882 = vpop.permute.xlu0 %1881
    %1883 = vrot.lane.b32.xlu0 %v1878, 32
    %v1884 = vpop.permute.xlu0 %1883
    %v1887 = vadd.f32 %v1867, %v1882
    %v1888 = vadd.f32 %v1868, %v1884
    %v1889 = vtanh.pop %v1887
    %v1890 = vtanh.pop %v1888
    %1893 = vrot.lane.b32.xlu0 %v1889, 64
    %v1894 = vpop.permute.xlu0 %1893
    %1895 = vrot.lane.b32.xlu0 %v1890, 64
    %v1896 = vpop.permute.xlu0 %1895
    %v1899 = vmul.f32 %v1856, %v1894
    %v1900 = vmul.f32 %v1858, %v1896
    %v1901 = vpack.c.bf16 %v1899, %v1899
    %v1902 = vpack.c.bf16 %v1900, %v1900
    %v1905 = vunpack.c.l.b16 %v1901
    %v1906 = vunpack.c.l.b16 %v1902
    %v1907 = vrot.slane %v1905, 6
    %v1908 = vrot.slane %v1906, 5
    %v1909 = vsel %vm220, %v1908, %v1907
    %v1910 = vpack.c.b16 %v1909, %v1909
    %1911 = vrot.lane.b32.xlu0 %v1910, 32
    %v1912 = vpop.permute.xlu0 %1911
    %v1914 = vsel %vm71, %v1912, 0
    %1916 = vmatprep.subr.bf16.mxu0 0
    %1917 = vmatpush1.bf16.msra.mxu0 0
    %1918 = vmatprep.subr.bf16.mxu0 0
    %1919 = vmatpush1.bf16.msra.mxu0 0
    %1920 = vmatprep.subr.bf16.mxu0 0
    %1921 = vmatpush1.bf16.msra.mxu0 0
    %1922 = vmatprep.subr.bf16.mxu0 0
    %1923 = vmatpush1.bf16.msra.mxu0 0
    %1924 = vmatprep.subr.bf16.mxu0 0
    %1925 = vmatpush1.bf16.msra.mxu0 0
    %1926 = vmatprep.subr.bf16.mxu0 0
    %1927 = vmatpush1.bf16.msra.mxu0 0
    %1928 = vmatprep.subr.bf16.mxu0 0
    %1929 = vmatpush1.bf16.msra.mxu0 %v1057
    %1930 = vmatprep.subr.bf16.mxu0 0
    %1931 = vmatpush1.bf16.msra.mxu0 %v1056
    %1932 = vmatprep.subr.bf16.mxu0 0
    %1933 = vmatpush2.bf16.msra.mxu0 0
    %1934 = vmatprep.subr.bf16.mxu0 0
    %1935 = vmatpush2.bf16.msra.mxu0 0
    %1936 = vmatprep.subr.bf16.mxu0 0
    %1937 = vmatpush2.bf16.msra.mxu0 0
    %1938 = vmatprep.subr.bf16.mxu0 0
    %1939 = vmatpush2.bf16.msra.mxu0 0
    %1940 = vmatprep.subr.bf16.mxu0 0
    %1941 = vmatpush2.bf16.msra.mxu0 0
    %1942 = vmatprep.subr.bf16.mxu0 0
    %1943 = vmatpush2.bf16.msra.mxu0 0
    %1944 = vmatprep.subr.bf16.mxu0 0
    %1945 = vmatpush2.bf16.msra.mxu0 0
    %1946 = vmatprep.subr.bf16.mxu0 0
    %1947 = vmatpush2.bf16.msra.mxu0 0
    %1948 = vmatprep.mubr.bf16.mxu0 0
    %1949 = vmatmul.mubr.bf16.gmra.mxu0 %v1914
    %v1950 = vpop.f32.mrf.mxu0
    %v1951 = vadd.f32 0.0, %v1950
    %v1952 = vpop.f32.mrf.mxu0
    %v1953 = vpop.f32.mrf.mxu0
    %v1954 = vpop.f32.mrf.mxu0
    %1955 = vdwg.mxu0
    %v1957 = vrot.slane %v1951, 1
    %v1958 = vrot.slane %v1951, 2
    %v1961 = vadd.f32 %v1108, %v1957
    %v1962 = vadd.f32 %v1111, %v1958
    %v1963 = vxor.u32 %v1961, 2147483648
    %v1964 = vxor.u32 %v1962, 2147483648
    %v1965 = vmul.f32 %v1963, 1.442695
    %v1966 = vpow.pop %v1965
    %v1967 = vmul.f32 %v1964, 1.442695
    %v1968 = vpow.pop %v1967
    %v1969 = vadd.f32 %v1966, 1.0
    %v1970 = vadd.f32 %v1968, 1.0
    %v1971 = vrcp.pop %v1969
    %v1972 = vmul.f32 1.0, %v1971
    %v1973 = vrcp.pop %v1970
    %v1974 = vmul.f32 1.0, %v1973
    %v1975 = vtanh.pop %v1961
    %v1976 = vtanh.pop %v1962
    %v1979 = vrot.slane %v1887, 7
    %v1980 = vrot.slane %v1888, 7
    %v1983 = vmul.f32 %v1972, %v1979
    %v1984 = vmul.f32 %v1974, %v1980
    %1987 = vrot.lane.b32.xlu0 %v1975, 64
    %v1988 = vpop.permute.xlu0 %1987
    %1989 = vrot.lane.b32.xlu0 %v1976, 64
    %v1990 = vpop.permute.xlu0 %1989
    %v1993 = vmul.f32 %v1972, %v1988
    %v1994 = vmul.f32 %v1974, %v1990
    %1997 = vrot.lane.b32.xlu0 %v1993, 32
    %v1998 = vpop.permute.xlu0 %1997
    %1999 = vrot.lane.b32.xlu0 %v1994, 32
    %v2000 = vpop.permute.xlu0 %1999
    %v2003 = vadd.f32 %v1983, %v1998
    %v2004 = vadd.f32 %v1984, %v2000
    %v2005 = vtanh.pop %v2003
    %v2006 = vtanh.pop %v2004
    %2009 = vrot.lane.b32.xlu0 %v2005, 64
    %v2010 = vpop.permute.xlu0 %2009
    %2011 = vrot.lane.b32.xlu0 %v2006, 64
    %v2012 = vpop.permute.xlu0 %2011
    %v2015 = vmul.f32 %v1972, %v2010
    %v2016 = vmul.f32 %v1974, %v2012
    %v2017 = vsel %vm1023, %v1206, %v1320
    %v2018 = vsel %vm1023, %v1207, %v1321
    %v2019 = vsel %vm1026, %v2017, %v1435
    %v2020 = vsel %vm1026, %v2018, %v1436
    %v2021 = vsel %vm1029, %v2019, %v1551
    %v2022 = vsel %vm1029, %v2020, %v1552
    %v2023 = vsel %vm1032, %v2021, %v1667
    %v2024 = vsel %vm1032, %v2022, %v1668
    %v2025 = vsel %vm1035, %v2023, %v1783
    %v2026 = vsel %vm1035, %v2024, %v1784
    %v2027 = vsel %vm1038, %v2025, %v1899
    %v2028 = vsel %vm1038, %v2026, %v1900
    %v2029 = vsel %vm1041, %v2027, %v2015
    %v2030 = vsel %vm1041, %v2028, %v2016
    %v2031 = vld [vmem:[%s6] sm:$0xff]
    %v2032 = vld [vmem:[%s6 + $0x8] sm:$0xff]
    %v2033 = vld [vmem:[%s6 + $0x10] sm:$0xff]
    %v2034 = vld [vmem:[%s6 + $0x18] sm:$0xff]
    %v2035 = vpack.c.bf16 %v2030, %v2029
    %v2036 = vpack.c.bf16 %v2032, %v2031
    %v2037 = vpack.c.bf16 %v2034, %v2033
    %v2038 = vld [vmem:[%s7] sm:$0x1]
    %v2040 = vlaneseq
    %v2041 = vshrl.u32 %v2040, 7
    %v2042 = vsub.s32 0, %v2041
    %v2043 = vrot.slane %v2038, %v2042
    %2046 = vrot.lane.b32.xlu0 %v2035, 32
    %v2047 = vpop.permute.xlu0 %2046
    %v2049 = vsel %vm71, %v2047, 0
    %2051 = vmatprep.subr.bf16.mxu0 0
    %2052 = vmatpush1.bf16.msra.mxu0 0
    %2053 = vmatprep.subr.bf16.mxu0 0
    %2054 = vmatpush1.bf16.msra.mxu0 0
    %2055 = vmatprep.subr.bf16.mxu0 0
    %2056 = vmatpush1.bf16.msra.mxu0 0
    %2057 = vmatprep.subr.bf16.mxu0 0
    %2058 = vmatpush1.bf16.msra.mxu0 0
    %2059 = vmatprep.subr.bf16.mxu0 0
    %2060 = vmatpush1.bf16.msra.mxu0 0
    %2061 = vmatprep.subr.bf16.mxu0 0
    %2062 = vmatpush1.bf16.msra.mxu0 0
    %2063 = vmatprep.subr.bf16.mxu0 0
    %2064 = vmatpush1.bf16.msra.mxu0 %v2037
    %2065 = vmatprep.subr.bf16.mxu0 0
    %2066 = vmatpush1.bf16.msra.mxu0 %v2036
    %2067 = vmatprep.subr.bf16.mxu0 0
    %2068 = vmatpush2.bf16.msra.mxu0 0
    %2069 = vmatprep.subr.bf16.mxu0 0
    %2070 = vmatpush2.bf16.msra.mxu0 0
    %2071 = vmatprep.subr.bf16.mxu0 0
    %2072 = vmatpush2.bf16.msra.mxu0 0
    %2073 = vmatprep.subr.bf16.mxu0 0
    %2074 = vmatpush2.bf16.msra.mxu0 0
    %2075 = vmatprep.subr.bf16.mxu0 0
    %2076 = vmatpush2.bf16.msra.mxu0 0
    %2077 = vmatprep.subr.bf16.mxu0 0
    %2078 = vmatpush2.bf16.msra.mxu0 0
    %2079 = vmatprep.subr.bf16.mxu0 0
    %2080 = vmatpush2.bf16.msra.mxu0 0
    %2081 = vmatprep.subr.bf16.mxu0 0
    %2082 = vmatpush2.bf16.msra.mxu0 0
    %2083 = vmatprep.mubr.bf16.mxu0 0
    %2084 = vmatmul.mubr.bf16.gmra.mxu0 %v2049
    %v2085 = vpop.f32.mrf.mxu0
    %v2086 = vadd.f32 %v2043, %v2085
    %v2087 = vpop.f32.mrf.mxu0
    %v2088 = vpop.f32.mrf.mxu0
    %v2089 = vadd.f32 %v2043, %v2088
    %v2090 = vpop.f32.mrf.mxu0
    %2091 = vdwg.mxu0
    %v2092 = vld [vmem:[%s1] sm:$0xff]
    %v2093 = vld [vmem:[%s1 + $0x8] sm:$0xff]
    %v2094 = vld [vmem:[%s8] sm:$0xff]
    %v2095 = vld [vmem:[%s8 + $0x8] sm:$0xff]
    %v2096 = vld [vmem:[%s8 + $0x10] sm:$0xff]
    %v2097 = vld [vmem:[%s8 + $0x18] sm:$0xff]
    %v2098 = vpack.c.bf16 %v2093, %v2092
    %v2099 = vpack.c.bf16 %v2095, %v2094
    %v2100 = vpack.c.bf16 %v2097, %v2096
    %v2101 = vld [vmem:[%s9] sm:$0x1]
    %v2103 = vlaneseq
    %v2104 = vshrl.u32 %v2103, 7
    %v2105 = vsub.s32 0, %v2104
    %v2106 = vrot.slane %v2101, %v2105
    %v2109 = vsel %vm71, %v2098, 0
    %2111 = vmatprep.subr.bf16.mxu0 0
    %2112 = vmatpush1.bf16.msra.mxu0 0
    %2113 = vmatprep.subr.bf16.mxu0 0
    %2114 = vmatpush1.bf16.msra.mxu0 0
    %2115 = vmatprep.subr.bf16.mxu0 0
    %2116 = vmatpush1.bf16.msra.mxu0 0
    %2117 = vmatprep.subr.bf16.mxu0 0
    %2118 = vmatpush1.bf16.msra.mxu0 0
    %2119 = vmatprep.subr.bf16.mxu0 0
    %2120 = vmatpush1.bf16.msra.mxu0 0
    %2121 = vmatprep.subr.bf16.mxu0 0
    %2122 = vmatpush1.bf16.msra.mxu0 0
    %2123 = vmatprep.subr.bf16.mxu0 0
    %2124 = vmatpush1.bf16.msra.mxu0 %v2100
    %2125 = vmatprep.subr.bf16.mxu0 0
    %2126 = vmatpush1.bf16.msra.mxu0 %v2099
    %2127 = vmatprep.subr.bf16.mxu0 0
    %2128 = vmatpush2.bf16.msra.mxu0 0
    %2129 = vmatprep.subr.bf16.mxu0 0
    %2130 = vmatpush2.bf16.msra.mxu0 0
    %2131 = vmatprep.subr.bf16.mxu0 0
    %2132 = vmatpush2.bf16.msra.mxu0 0
    %2133 = vmatprep.subr.bf16.mxu0 0
    %2134 = vmatpush2.bf16.msra.mxu0 0
    %2135 = vmatprep.subr.bf16.mxu0 0
    %2136 = vmatpush2.bf16.msra.mxu0 0
    %2137 = vmatprep.subr.bf16.mxu0 0
    %2138 = vmatpush2.bf16.msra.mxu0 0
    %2139 = vmatprep.subr.bf16.mxu0 0
    %2140 = vmatpush2.bf16.msra.mxu0 0
    %2141 = vmatprep.subr.bf16.mxu0 0
    %2142 = vmatpush2.bf16.msra.mxu0 0
    %2143 = vmatprep.mubr.bf16.mxu0 0
    %2144 = vmatmul.mubr.bf16.gmra.mxu0 %v2109
    %v2145 = vpop.f32.mrf.mxu0
    %v2146 = vadd.f32 %v2106, %v2145
    %v2147 = vpop.f32.mrf.mxu0
    %v2148 = vpop.f32.mrf.mxu0
    %v2149 = vadd.f32 %v2106, %v2148
    %v2150 = vpop.f32.mrf.mxu0
    %2151 = vdwg.mxu0
    %v2152 = vld [vmem:[%s2] sm:$0x1]
    %v2153 = vld [vmem:[%s2 + $0x1] sm:$0x1]
    %v2154 = vld [vmem:[%s10] sm:$0xff]
    %v2155 = vld [vmem:[%s10 + $0x8] sm:$0xff]
    %v2156 = vld [vmem:[%s10 + $0x10] sm:$0xff]
    %v2157 = vld [vmem:[%s10 + $0x18] sm:$0xff]
    %v2158 = vmul.f32 %v2086, 0.35355338
    %v2159 = vmul.f32 %v2089, 0.35355338
    %v2160 = vpack.c.bf16 %v2158, %v2158
    %v2161 = vpack.c.bf16 %v2159, %v2159
    %v2162 = vpack.c.bf16 %v2146, %v2146
    %v2163 = vpack.c.bf16 %v2149, %v2149
    %v2166 = vlaneseq
    %v2167 = vshrl.u32 %v2166, 7
    %v2168 = vsub.s32 0, %v2167
    %v2169 = vrot.slane %v2152, %v2168
    %v2170 = vlaneseq
    %v2171 = vshrl.u32 %v2170, 7
    %v2172 = vsub.s32 0, %v2171
    %v2173 = vrot.slane %v2153, %v2172
    %vm2176 = vcmask 64512
    %v2178 = vsel %vm2176, %v2160, 0
    %v2181 = vsel %vm2176, %v2162, 0
    %2183 = vmatprep.subr.bf16.mxu0 0
    %2184 = vmatpush1.bf16.xpose.msra.mxu0 0
    %2185 = vmatprep.subr.bf16.mxu0 0
    %2186 = vmatpush1.bf16.xpose.msra.mxu0 0
    %2187 = vmatprep.subr.bf16.mxu0 0
    %2188 = vmatpush1.bf16.xpose.msra.mxu0 0
    %2189 = vmatprep.subr.bf16.mxu0 0
    %2190 = vmatpush1.bf16.xpose.msra.mxu0 0
    %2191 = vmatprep.subr.bf16.mxu0 0
    %2192 = vmatpush1.bf16.xpose.msra.mxu0 0
    %2193 = vmatprep.subr.bf16.mxu0 0
    %2194 = vmatpush1.bf16.xpose.msra.mxu0 0
    %2195 = vmatprep.subr.bf16.mxu0 0
    %2196 = vmatpush1.bf16.xpose.msra.mxu0 0
    %2197 = vmatprep.subr.bf16.mxu0 0
    %2198 = vmatpush1.bf16.xpose.msra.mxu0 %v2181
    %2199 = vmatprep.subr.bf16.mxu0 0
    %2200 = vmatpush2.bf16.xpose.msra.mxu0 0
    %2201 = vmatprep.subr.bf16.mxu0 0
    %2202 = vmatpush2.bf16.xpose.msra.mxu0 0
    %2203 = vmatprep.subr.bf16.mxu0 0
    %2204 = vmatpush2.bf16.xpose.msra.mxu0 0
    %2205 = vmatprep.subr.bf16.mxu0 0
    %2206 = vmatpush2.bf16.xpose.msra.mxu0 0
    %2207 = vmatprep.subr.bf16.mxu0 0
    %2208 = vmatpush2.bf16.xpose.msra.mxu0 0
    %2209 = vmatprep.subr.bf16.mxu0 0
    %2210 = vmatpush2.bf16.xpose.msra.mxu0 0
    %2211 = vmatprep.subr.bf16.mxu0 0
    %2212 = vmatpush2.bf16.xpose.msra.mxu0 0
    %2213 = vmatprep.subr.bf16.mxu0 0
    %2214 = vmatpush2.bf16.xpose.msra.mxu0 0
    %2215 = vmatprep.mubr.bf16.mxu0 0
    %2216 = vmatmul.mubr.bf16.gmra.mxu0 %v2178
    %v2217 = vpop.f32.mrf.mxu0
    %v2218 = vadd.f32 %v2169, %v2217
    %v2219 = vpop.f32.mrf.mxu0
    %v2220 = vpop.f32.mrf.mxu0
    %v2221 = vpop.f32.mrf.mxu0
    %2222 = vdwg.mxu0
    %v2224 = vsel %vm2176, %v2161, 0
    %v2227 = vsel %vm2176, %v2163, 0
    %2229 = vmatprep.subr.bf16.mxu0 0
    %2230 = vmatpush1.bf16.xpose.msra.mxu0 0
    %2231 = vmatprep.subr.bf16.mxu0 0
    %2232 = vmatpush1.bf16.xpose.msra.mxu0 0
    %2233 = vmatprep.subr.bf16.mxu0 0
    %2234 = vmatpush1.bf16.xpose.msra.mxu0 0
    %2235 = vmatprep.subr.bf16.mxu0 0
    %2236 = vmatpush1.bf16.xpose.msra.mxu0 0
    %2237 = vmatprep.subr.bf16.mxu0 0
    %2238 = vmatpush1.bf16.xpose.msra.mxu0 0
    %2239 = vmatprep.subr.bf16.mxu0 0
    %2240 = vmatpush1.bf16.xpose.msra.mxu0 0
    %2241 = vmatprep.subr.bf16.mxu0 0
    %2242 = vmatpush1.bf16.xpose.msra.mxu0 0
    %2243 = vmatprep.subr.bf16.mxu0 0
    %2244 = vmatpush1.bf16.xpose.msra.mxu0 %v2227
    %2245 = vmatprep.subr.bf16.mxu0 0
    %2246 = vmatpush2.bf16.xpose.msra.mxu0 0
    %2247 = vmatprep.subr.bf16.mxu0 0
    %2248 = vmatpush2.bf16.xpose.msra.mxu0 0
    %2249 = vmatprep.subr.bf16.mxu0 0
    %2250 = vmatpush2.bf16.xpose.msra.mxu0 0
    %2251 = vmatprep.subr.bf16.mxu0 0
    %2252 = vmatpush2.bf16.xpose.msra.mxu0 0
    %2253 = vmatprep.subr.bf16.mxu0 0
    %2254 = vmatpush2.bf16.xpose.msra.mxu0 0
    %2255 = vmatprep.subr.bf16.mxu0 0
    %2256 = vmatpush2.bf16.xpose.msra.mxu0 0
    %2257 = vmatprep.subr.bf16.mxu0 0
    %2258 = vmatpush2.bf16.xpose.msra.mxu0 0
    %2259 = vmatprep.subr.bf16.mxu0 0
    %2260 = vmatpush2.bf16.xpose.msra.mxu0 0
    %2261 = vmatprep.mubr.bf16.mxu0 0
    %2262 = vmatmul.mubr.bf16.gmra.mxu0 %v2224
    %v2263 = vpop.f32.mrf.mxu0
    %v2264 = vadd.f32 %v2173, %v2263
    %v2265 = vpop.f32.mrf.mxu0
    %v2266 = vpop.f32.mrf.mxu0
    %v2267 = vpop.f32.mrf.mxu0
    %2268 = vdwg.mxu0
    %v2269 = vsel %vm2176, %v2218, -inf
    %2270 = vmax.xlane.f32.xlu0 %v2269
    %v2271 = vpop.xlane.xlu0 %2270
    %v2272 = vsel %vm2176, %v2264, -inf
    %2273 = vmax.xlane.f32.xlu0 %v2272
    %v2274 = vpop.xlane.xlu0 %2273
    %v2275 = vsub.f32 %v2218, %v2271
    %v2276 = vsub.f32 %v2264, %v2274
    %v2277 = vmul.f32 %v2275, 1.442695
    %v2278 = vpow.pop %v2277
    %v2279 = vmul.f32 %v2276, 1.442695
    %v2280 = vpow.pop %v2279
    %v2281 = vsel %vm2176, %v2278, 0.0
    %2282 = vadd.xlane.f32.xlu0 %v2281
    %v2283 = vpop.xlane.xlu0 %2282
    %v2284 = vsel %vm2176, %v2280, 0.0
    %2285 = vadd.xlane.f32.xlu0 %v2284
    %v2286 = vpop.xlane.xlu0 %2285
    %v2287 = vrcp.pop %v2283
    %v2288 = vrcp.pop %v2286
    %v2289 = vmul.f32 %v2278, %v2287
    %v2290 = vmul.f32 %v2280, %v2288
    %v2291 = vpack.c.bf16 %v2289, %v2289
    %v2292 = vpack.c.bf16 %v2290, %v2290
    %2294 = vrot.lane.b32.xlu0 %v2162, 96
    %v2295 = vpop.permute.xlu0 %2294
    %v2297 = vsel %vm2176, %v2291, 0
    %v2300 = vsel %vm1032, %v2295, 0
    %2302 = vmatprep.subr.bf16.mxu0 0
    %2303 = vmatpush1.bf16.msra.mxu0 0
    %2304 = vmatprep.subr.bf16.mxu0 0
    %2305 = vmatpush1.bf16.msra.mxu0 0
    %2306 = vmatprep.subr.bf16.mxu0 0
    %2307 = vmatpush1.bf16.msra.mxu0 0
    %2308 = vmatprep.subr.bf16.mxu0 0
    %2309 = vmatpush1.bf16.msra.mxu0 0
    %2310 = vmatprep.subr.bf16.mxu0 0
    %2311 = vmatpush1.bf16.msra.mxu0 0
    %2312 = vmatprep.subr.bf16.mxu0 0
    %2313 = vmatpush1.bf16.msra.mxu0 0
    %2314 = vmatprep.subr.bf16.mxu0 0
    %2315 = vmatpush1.bf16.msra.mxu0 0
    %2316 = vmatprep.subr.bf16.mxu0 0
    %2317 = vmatpush1.bf16.msra.mxu0 %v2300
    %2318 = vmatprep.subr.bf16.mxu0 0
    %2319 = vmatpush2.bf16.msra.mxu0 0
    %2320 = vmatprep.subr.bf16.mxu0 0
    %2321 = vmatpush2.bf16.msra.mxu0 0
    %2322 = vmatprep.subr.bf16.mxu0 0
    %2323 = vmatpush2.bf16.msra.mxu0 0
    %2324 = vmatprep.subr.bf16.mxu0 0
    %2325 = vmatpush2.bf16.msra.mxu0 0
    %2326 = vmatprep.subr.bf16.mxu0 0
    %2327 = vmatpush2.bf16.msra.mxu0 0
    %2328 = vmatprep.subr.bf16.mxu0 0
    %2329 = vmatpush2.bf16.msra.mxu0 0
    %2330 = vmatprep.subr.bf16.mxu0 0
    %2331 = vmatpush2.bf16.msra.mxu0 0
    %2332 = vmatprep.subr.bf16.mxu0 0
    %2333 = vmatpush2.bf16.msra.mxu0 0
    %2334 = vmatprep.mubr.bf16.mxu0 0
    %2335 = vmatmul.mubr.bf16.gmra.mxu0 %v2297
    %v2336 = vpop.f32.mrf.mxu0
    %v2337 = vadd.f32 0.0, %v2336
    %v2338 = vpop.f32.mrf.mxu0
    %v2339 = vpop.f32.mrf.mxu0
    %v2340 = vpop.f32.mrf.mxu0
    %2341 = vdwg.mxu0
    %2343 = vrot.lane.b32.xlu0 %v2163, 96
    %v2344 = vpop.permute.xlu0 %2343
    %v2346 = vsel %vm2176, %v2292, 0
    %v2349 = vsel %vm1032, %v2344, 0
    %2351 = vmatprep.subr.bf16.mxu0 0
    %2352 = vmatpush1.bf16.msra.mxu0 0
    %2353 = vmatprep.subr.bf16.mxu0 0
    %2354 = vmatpush1.bf16.msra.mxu0 0
    %2355 = vmatprep.subr.bf16.mxu0 0
    %2356 = vmatpush1.bf16.msra.mxu0 0
    %2357 = vmatprep.subr.bf16.mxu0 0
    %2358 = vmatpush1.bf16.msra.mxu0 0
    %2359 = vmatprep.subr.bf16.mxu0 0
    %2360 = vmatpush1.bf16.msra.mxu0 0
    %2361 = vmatprep.subr.bf16.mxu0 0
    %2362 = vmatpush1.bf16.msra.mxu0 0
    %2363 = vmatprep.subr.bf16.mxu0 0
    %2364 = vmatpush1.bf16.msra.mxu0 0
    %2365 = vmatprep.subr.bf16.mxu0 0
    %2366 = vmatpush1.bf16.msra.mxu0 %v2349
    %2367 = vmatprep.subr.bf16.mxu0 0
    %2368 = vmatpush2.bf16.msra.mxu0 0
    %2369 = vmatprep.subr.bf16.mxu0 0
    %2370 = vmatpush2.bf16.msra.mxu0 0
    %2371 = vmatprep.subr.bf16.mxu0 0
    %2372 = vmatpush2.bf16.msra.mxu0 0
    %2373 = vmatprep.subr.bf16.mxu0 0
    %2374 = vmatpush2.bf16.msra.mxu0 0
    %2375 = vmatprep.subr.bf16.mxu0 0
    %2376 = vmatpush2.bf16.msra.mxu0 0
    %2377 = vmatprep.subr.bf16.mxu0 0
    %2378 = vmatpush2.bf16.msra.mxu0 0
    %2379 = vmatprep.subr.bf16.mxu0 0
    %2380 = vmatpush2.bf16.msra.mxu0 0
    %2381 = vmatprep.subr.bf16.mxu0 0
    %2382 = vmatpush2.bf16.msra.mxu0 0
    %2383 = vmatprep.mubr.bf16.mxu0 0
    %2384 = vmatmul.mubr.bf16.gmra.mxu0 %v2346
    %v2385 = vpop.f32.mrf.mxu0
    %v2386 = vadd.f32 0.0, %v2385
    %v2387 = vpop.f32.mrf.mxu0
    %v2388 = vpop.f32.mrf.mxu0
    %v2389 = vpop.f32.mrf.mxu0
    %2390 = vdwg.mxu0
    %v2391 = vpack.c.bf16 %v2386, %v2337
    %v2392 = vpack.c.bf16 %v2154, %v2154
    %2394 = vrot.lane.b32.xlu0 %v2160, 120
    %v2395 = vpop.permute.xlu0 %2394
    %2396 = vrot.lane.b32.xlu0 %v2162, 120
    %v2397 = vpop.permute.xlu0 %2396
    %v2399 = vsel %vm2176, %v2395, 0
    %v2402 = vsel %vm2176, %v2397, 0
    %2404 = vmatprep.subr.bf16.mxu0 0
    %2405 = vmatpush1.bf16.xpose.msra.mxu0 0
    %2406 = vmatprep.subr.bf16.mxu0 0
    %2407 = vmatpush1.bf16.xpose.msra.mxu0 0
    %2408 = vmatprep.subr.bf16.mxu0 0
    %2409 = vmatpush1.bf16.xpose.msra.mxu0 0
    %2410 = vmatprep.subr.bf16.mxu0 0
    %2411 = vmatpush1.bf16.xpose.msra.mxu0 0
    %2412 = vmatprep.subr.bf16.mxu0 0
    %2413 = vmatpush1.bf16.xpose.msra.mxu0 0
    %2414 = vmatprep.subr.bf16.mxu0 0
    %2415 = vmatpush1.bf16.xpose.msra.mxu0 0
    %2416 = vmatprep.subr.bf16.mxu0 0
    %2417 = vmatpush1.bf16.xpose.msra.mxu0 0
    %2418 = vmatprep.subr.bf16.mxu0 0
    %2419 = vmatpush1.bf16.xpose.msra.mxu0 %v2402
    %2420 = vmatprep.subr.bf16.mxu0 0
    %2421 = vmatpush2.bf16.xpose.msra.mxu0 0
    %2422 = vmatprep.subr.bf16.mxu0 0
    %2423 = vmatpush2.bf16.xpose.msra.mxu0 0
    %2424 = vmatprep.subr.bf16.mxu0 0
    %2425 = vmatpush2.bf16.xpose.msra.mxu0 0
    %2426 = vmatprep.subr.bf16.mxu0 0
    %2427 = vmatpush2.bf16.xpose.msra.mxu0 0
    %2428 = vmatprep.subr.bf16.mxu0 0
    %2429 = vmatpush2.bf16.xpose.msra.mxu0 0
    %2430 = vmatprep.subr.bf16.mxu0 0
    %2431 = vmatpush2.bf16.xpose.msra.mxu0 0
    %2432 = vmatprep.subr.bf16.mxu0 0
    %2433 = vmatpush2.bf16.xpose.msra.mxu0 0
    %2434 = vmatprep.subr.bf16.mxu0 0
    %2435 = vmatpush2.bf16.xpose.msra.mxu0 0
    %2436 = vmatprep.mubr.bf16.mxu0 0
    %2437 = vmatmul.mubr.bf16.gmra.mxu0 %v2399
    %v2438 = vpop.f32.mrf.mxu0
    %v2439 = vadd.f32 %v2169, %v2438
    %v2440 = vpop.f32.mrf.mxu0
    %v2441 = vpop.f32.mrf.mxu0
    %v2442 = vpop.f32.mrf.mxu0
    %2443 = vdwg.mxu0
    %2445 = vrot.lane.b32.xlu0 %v2161, 120
    %v2446 = vpop.permute.xlu0 %2445
    %2447 = vrot.lane.b32.xlu0 %v2163, 120
    %v2448 = vpop.permute.xlu0 %2447
    %v2450 = vsel %vm2176, %v2446, 0
    %v2453 = vsel %vm2176, %v2448, 0
    %2455 = vmatprep.subr.bf16.mxu0 0
    %2456 = vmatpush1.bf16.xpose.msra.mxu0 0
    %2457 = vmatprep.subr.bf16.mxu0 0
    %2458 = vmatpush1.bf16.xpose.msra.mxu0 0
    %2459 = vmatprep.subr.bf16.mxu0 0
    %2460 = vmatpush1.bf16.xpose.msra.mxu0 0
    %2461 = vmatprep.subr.bf16.mxu0 0
    %2462 = vmatpush1.bf16.xpose.msra.mxu0 0
    %2463 = vmatprep.subr.bf16.mxu0 0
    %2464 = vmatpush1.bf16.xpose.msra.mxu0 0
    %2465 = vmatprep.subr.bf16.mxu0 0
    %2466 = vmatpush1.bf16.xpose.msra.mxu0 0
    %2467 = vmatprep.subr.bf16.mxu0 0
    %2468 = vmatpush1.bf16.xpose.msra.mxu0 0
    %2469 = vmatprep.subr.bf16.mxu0 0
    %2470 = vmatpush1.bf16.xpose.msra.mxu0 %v2453
    %2471 = vmatprep.subr.bf16.mxu0 0
    %2472 = vmatpush2.bf16.xpose.msra.mxu0 0
    %2473 = vmatprep.subr.bf16.mxu0 0
    %2474 = vmatpush2.bf16.xpose.msra.mxu0 0
    %2475 = vmatprep.subr.bf16.mxu0 0
    %2476 = vmatpush2.bf16.xpose.msra.mxu0 0
    %2477 = vmatprep.subr.bf16.mxu0 0
    %2478 = vmatpush2.bf16.xpose.msra.mxu0 0
    %2479 = vmatprep.subr.bf16.mxu0 0
    %2480 = vmatpush2.bf16.xpose.msra.mxu0 0
    %2481 = vmatprep.subr.bf16.mxu0 0
    %2482 = vmatpush2.bf16.xpose.msra.mxu0 0
    %2483 = vmatprep.subr.bf16.mxu0 0
    %2484 = vmatpush2.bf16.xpose.msra.mxu0 0
    %2485 = vmatprep.subr.bf16.mxu0 0
    %2486 = vmatpush2.bf16.xpose.msra.mxu0 0
    %2487 = vmatprep.mubr.bf16.mxu0 0
    %2488 = vmatmul.mubr.bf16.gmra.mxu0 %v2450
    %v2489 = vpop.f32.mrf.mxu0
    %v2490 = vadd.f32 %v2173, %v2489
    %v2491 = vpop.f32.mrf.mxu0
    %v2492 = vpop.f32.mrf.mxu0
    %v2493 = vpop.f32.mrf.mxu0
    %2494 = vdwg.mxu0
    %v2495 = vsel %vm2176, %v2439, -inf
    %2496 = vmax.xlane.f32.xlu0 %v2495
    %v2497 = vpop.xlane.xlu0 %2496
    %v2498 = vsel %vm2176, %v2490, -inf
    %2499 = vmax.xlane.f32.xlu0 %v2498
    %v2500 = vpop.xlane.xlu0 %2499
    %v2501 = vsub.f32 %v2439, %v2497
    %v2502 = vsub.f32 %v2490, %v2500
    %v2503 = vmul.f32 %v2501, 1.442695
    %v2504 = vpow.pop %v2503
    %v2505 = vmul.f32 %v2502, 1.442695
    %v2506 = vpow.pop %v2505
    %v2507 = vsel %vm2176, %v2504, 0.0
    %2508 = vadd.xlane.f32.xlu0 %v2507
    %v2509 = vpop.xlane.xlu0 %2508
    %v2510 = vsel %vm2176, %v2506, 0.0
    %2511 = vadd.xlane.f32.xlu0 %v2510
    %v2512 = vpop.xlane.xlu0 %2511
    %v2513 = vrcp.pop %v2509
    %v2514 = vrcp.pop %v2512
    %v2515 = vmul.f32 %v2504, %v2513
    %v2516 = vmul.f32 %v2506, %v2514
    %v2517 = vpack.c.bf16 %v2515, %v2515
    %v2518 = vpack.c.bf16 %v2516, %v2516
    %2519 = vrot.lane.b32.xlu0 %v2162, 88
    %v2520 = vpop.permute.xlu0 %2519
    %v2522 = vsel %vm2176, %v2517, 0
    %v2525 = vsel %vm1032, %v2520, 0
    %2527 = vmatprep.subr.bf16.mxu0 0
    %2528 = vmatpush1.bf16.msra.mxu0 0
    %2529 = vmatprep.subr.bf16.mxu0 0
    %2530 = vmatpush1.bf16.msra.mxu0 0
    %2531 = vmatprep.subr.bf16.mxu0 0
    %2532 = vmatpush1.bf16.msra.mxu0 0
    %2533 = vmatprep.subr.bf16.mxu0 0
    %2534 = vmatpush1.bf16.msra.mxu0 0
    %2535 = vmatprep.subr.bf16.mxu0 0
    %2536 = vmatpush1.bf16.msra.mxu0 0
    %2537 = vmatprep.subr.bf16.mxu0 0
    %2538 = vmatpush1.bf16.msra.mxu0 0
    %2539 = vmatprep.subr.bf16.mxu0 0
    %2540 = vmatpush1.bf16.msra.mxu0 0
    %2541 = vmatprep.subr.bf16.mxu0 0
    %2542 = vmatpush1.bf16.msra.mxu0 %v2525
    %2543 = vmatprep.subr.bf16.mxu0 0
    %2544 = vmatpush2.bf16.msra.mxu0 0
    %2545 = vmatprep.subr.bf16.mxu0 0
    %2546 = vmatpush2.bf16.msra.mxu0 0
    %2547 = vmatprep.subr.bf16.mxu0 0
    %2548 = vmatpush2.bf16.msra.mxu0 0
    %2549 = vmatprep.subr.bf16.mxu0 0
    %2550 = vmatpush2.bf16.msra.mxu0 0
    %2551 = vmatprep.subr.bf16.mxu0 0
    %2552 = vmatpush2.bf16.msra.mxu0 0
    %2553 = vmatprep.subr.bf16.mxu0 0
    %2554 = vmatpush2.bf16.msra.mxu0 0
    %2555 = vmatprep.subr.bf16.mxu0 0
    %2556 = vmatpush2.bf16.msra.mxu0 0
    %2557 = vmatprep.subr.bf16.mxu0 0
    %2558 = vmatpush2.bf16.msra.mxu0 0
    %2559 = vmatprep.mubr.bf16.mxu0 0
    %2560 = vmatmul.mubr.bf16.gmra.mxu0 %v2522
    %v2561 = vpop.f32.mrf.mxu0
    %v2562 = vadd.f32 0.0, %v2561
    %v2563 = vpop.f32.mrf.mxu0
    %v2564 = vpop.f32.mrf.mxu0
    %v2565 = vpop.f32.mrf.mxu0
    %2566 = vdwg.mxu0
    %2567 = vrot.lane.b32.xlu0 %v2163, 88
    %v2568 = vpop.permute.xlu0 %2567
    %v2570 = vsel %vm2176, %v2518, 0
    %v2573 = vsel %vm1032, %v2568, 0
    %2575 = vmatprep.subr.bf16.mxu0 0
    %2576 = vmatpush1.bf16.msra.mxu0 0
    %2577 = vmatprep.subr.bf16.mxu0 0
    %2578 = vmatpush1.bf16.msra.mxu0 0
    %2579 = vmatprep.subr.bf16.mxu0 0
    %2580 = vmatpush1.bf16.msra.mxu0 0
    %2581 = vmatprep.subr.bf16.mxu0 0
    %2582 = vmatpush1.bf16.msra.mxu0 0
    %2583 = vmatprep.subr.bf16.mxu0 0
    %2584 = vmatpush1.bf16.msra.mxu0 0
    %2585 = vmatprep.subr.bf16.mxu0 0
    %2586 = vmatpush1.bf16.msra.mxu0 0
    %2587 = vmatprep.subr.bf16.mxu0 0
    %2588 = vmatpush1.bf16.msra.mxu0 0
    %2589 = vmatprep.subr.bf16.mxu0 0
    %2590 = vmatpush1.bf16.msra.mxu0 %v2573
    %2591 = vmatprep.subr.bf16.mxu0 0
    %2592 = vmatpush2.bf16.msra.mxu0 0
    %2593 = vmatprep.subr.bf16.mxu0 0
    %2594 = vmatpush2.bf16.msra.mxu0 0
    %2595 = vmatprep.subr.bf16.mxu0 0
    %2596 = vmatpush2.bf16.msra.mxu0 0
    %2597 = vmatprep.subr.bf16.mxu0 0
    %2598 = vmatpush2.bf16.msra.mxu0 0
    %2599 = vmatprep.subr.bf16.mxu0 0
    %2600 = vmatpush2.bf16.msra.mxu0 0
    %2601 = vmatprep.subr.bf16.mxu0 0
    %2602 = vmatpush2.bf16.msra.mxu0 0
    %2603 = vmatprep.subr.bf16.mxu0 0
    %2604 = vmatpush2.bf16.msra.mxu0 0
    %2605 = vmatprep.subr.bf16.mxu0 0
    %2606 = vmatpush2.bf16.msra.mxu0 0
    %2607 = vmatprep.mubr.bf16.mxu0 0
    %2608 = vmatmul.mubr.bf16.gmra.mxu0 %v2570
    %v2609 = vpop.f32.mrf.mxu0
    %v2610 = vadd.f32 0.0, %v2609
    %v2611 = vpop.f32.mrf.mxu0
    %v2612 = vpop.f32.mrf.mxu0
    %v2613 = vpop.f32.mrf.mxu0
    %2614 = vdwg.mxu0
    %v2615 = vpack.c.bf16 %v2610, %v2562
    %v2616 = vpack.c.bf16 %v2155, %v2155
    %v2618 = vsel %vm2176, %v2615, 0
    %v2621 = vsel %vm1032, %v2616, 0
    %2623 = vmatprep.subr.bf16.mxu0 0
    %2624 = vmatpush1.bf16.msra.mxu0 0
    %2625 = vmatprep.subr.bf16.mxu0 0
    %2626 = vmatpush1.bf16.msra.mxu0 0
    %2627 = vmatprep.subr.bf16.mxu0 0
    %2628 = vmatpush1.bf16.msra.mxu0 0
    %2629 = vmatprep.subr.bf16.mxu0 0
    %2630 = vmatpush1.bf16.msra.mxu0 0
    %2631 = vmatprep.subr.bf16.mxu0 0
    %2632 = vmatpush1.bf16.msra.mxu0 0
    %2633 = vmatprep.subr.bf16.mxu0 0
    %2634 = vmatpush1.bf16.msra.mxu0 0
    %2635 = vmatprep.subr.bf16.mxu0 0
    %2636 = vmatpush1.bf16.msra.mxu0 0
    %2637 = vmatprep.subr.bf16.mxu0 0
    %2638 = vmatpush1.bf16.msra.mxu0 %v2621
    %2639 = vmatprep.subr.bf16.mxu0 0
    %2640 = vmatpush2.bf16.msra.mxu0 0
    %2641 = vmatprep.subr.bf16.mxu0 0
    %2642 = vmatpush2.bf16.msra.mxu0 0
    %2643 = vmatprep.subr.bf16.mxu0 0
    %2644 = vmatpush2.bf16.msra.mxu0 0
    %2645 = vmatprep.subr.bf16.mxu0 0
    %2646 = vmatpush2.bf16.msra.mxu0 0
    %2647 = vmatprep.subr.bf16.mxu0 0
    %2648 = vmatpush2.bf16.msra.mxu0 0
    %2649 = vmatprep.subr.bf16.mxu0 0
    %2650 = vmatpush2.bf16.msra.mxu0 0
    %2651 = vmatprep.subr.bf16.mxu0 0
    %2652 = vmatpush2.bf16.msra.mxu0 0
    %2653 = vmatprep.subr.bf16.mxu0 0
    %2654 = vmatpush2.bf16.msra.mxu0 0
    %2655 = vmatprep.mubr.bf16.mxu0 0
    %2656 = vmatmul.mubr.bf16.gmra.mxu0 %v2618
    %v2657 = vpop.f32.mrf.mxu0
    %v2658 = vadd.f32 0.0, %v2657
    %v2659 = vpop.f32.mrf.mxu0
    %v2660 = vpop.f32.mrf.mxu0
    %v2661 = vadd.f32 0.0, %v2660
    %v2662 = vpop.f32.mrf.mxu0
    %2663 = vdwg.mxu0
    %v2665 = vsel %vm2176, %v2391, 0
    %v2668 = vsel %vm1032, %v2392, 0
    %2670 = vmatprep.subr.bf16.mxu0 0
    %2671 = vmatpush1.bf16.msra.mxu0 0
    %2672 = vmatprep.subr.bf16.mxu0 0
    %2673 = vmatpush1.bf16.msra.mxu0 0
    %2674 = vmatprep.subr.bf16.mxu0 0
    %2675 = vmatpush1.bf16.msra.mxu0 0
    %2676 = vmatprep.subr.bf16.mxu0 0
    %2677 = vmatpush1.bf16.msra.mxu0 0
    %2678 = vmatprep.subr.bf16.mxu0 0
    %2679 = vmatpush1.bf16.msra.mxu0 0
    %2680 = vmatprep.subr.bf16.mxu0 0
    %2681 = vmatpush1.bf16.msra.mxu0 0
    %2682 = vmatprep.subr.bf16.mxu0 0
    %2683 = vmatpush1.bf16.msra.mxu0 0
    %2684 = vmatprep.subr.bf16.mxu0 0
    %2685 = vmatpush1.bf16.msra.mxu0 %v2668
    %2686 = vmatprep.subr.bf16.mxu0 0
    %2687 = vmatpush2.bf16.msra.mxu0 0
    %2688 = vmatprep.subr.bf16.mxu0 0
    %2689 = vmatpush2.bf16.msra.mxu0 0
    %2690 = vmatprep.subr.bf16.mxu0 0
    %2691 = vmatpush2.bf16.msra.mxu0 0
    %2692 = vmatprep.subr.bf16.mxu0 0
    %2693 = vmatpush2.bf16.msra.mxu0 0
    %2694 = vmatprep.subr.bf16.mxu0 0
    %2695 = vmatpush2.bf16.msra.mxu0 0
    %2696 = vmatprep.subr.bf16.mxu0 0
    %2697 = vmatpush2.bf16.msra.mxu0 0
    %2698 = vmatprep.subr.bf16.mxu0 0
    %2699 = vmatpush2.bf16.msra.mxu0 0
    %2700 = vmatprep.subr.bf16.mxu0 0
    %2701 = vmatpush2.bf16.msra.mxu0 0
    %2702 = vmatprep.mubr.bf16.mxu0 0
    %2703 = vmatmul.mubr.bf16.gmra.mxu0 %v2665
    %v2704 = vpop.f32.mrf.mxu0
    %v2705 = vadd.f32 %v2658, %v2704
    %v2706 = vpop.f32.mrf.mxu0
    %v2707 = vpop.f32.mrf.mxu0
    %v2708 = vadd.f32 %v2661, %v2707
    %v2709 = vpop.f32.mrf.mxu0
    %2710 = vdwg.mxu0
    %2711 = vrot.lane.b32.xlu0 %v2160, 112
    %v2712 = vpop.permute.xlu0 %2711
    %2713 = vrot.lane.b32.xlu0 %v2162, 112
    %v2714 = vpop.permute.xlu0 %2713
    %v2716 = vsel %vm2176, %v2712, 0
    %v2719 = vsel %vm2176, %v2714, 0
    %2721 = vmatprep.subr.bf16.mxu0 0
    %2722 = vmatpush1.bf16.xpose.msra.mxu0 0
    %2723 = vmatprep.subr.bf16.mxu0 0
    %2724 = vmatpush1.bf16.xpose.msra.mxu0 0
    %2725 = vmatprep.subr.bf16.mxu0 0
    %2726 = vmatpush1.bf16.xpose.msra.mxu0 0
    %2727 = vmatprep.subr.bf16.mxu0 0
    %2728 = vmatpush1.bf16.xpose.msra.mxu0 0
    %2729 = vmatprep.subr.bf16.mxu0 0
    %2730 = vmatpush1.bf16.xpose.msra.mxu0 0
    %2731 = vmatprep.subr.bf16.mxu0 0
    %2732 = vmatpush1.bf16.xpose.msra.mxu0 0
    %2733 = vmatprep.subr.bf16.mxu0 0
    %2734 = vmatpush1.bf16.xpose.msra.mxu0 0
    %2735 = vmatprep.subr.bf16.mxu0 0
    %2736 = vmatpush1.bf16.xpose.msra.mxu0 %v2719
    %2737 = vmatprep.subr.bf16.mxu0 0
    %2738 = vmatpush2.bf16.xpose.msra.mxu0 0
    %2739 = vmatprep.subr.bf16.mxu0 0
    %2740 = vmatpush2.bf16.xpose.msra.mxu0 0
    %2741 = vmatprep.subr.bf16.mxu0 0
    %2742 = vmatpush2.bf16.xpose.msra.mxu0 0
    %2743 = vmatprep.subr.bf16.mxu0 0
    %2744 = vmatpush2.bf16.xpose.msra.mxu0 0
    %2745 = vmatprep.subr.bf16.mxu0 0
    %2746 = vmatpush2.bf16.xpose.msra.mxu0 0
    %2747 = vmatprep.subr.bf16.mxu0 0
    %2748 = vmatpush2.bf16.xpose.msra.mxu0 0
    %2749 = vmatprep.subr.bf16.mxu0 0
    %2750 = vmatpush2.bf16.xpose.msra.mxu0 0
    %2751 = vmatprep.subr.bf16.mxu0 0
    %2752 = vmatpush2.bf16.xpose.msra.mxu0 0
    %2753 = vmatprep.mubr.bf16.mxu0 0
    %2754 = vmatmul.mubr.bf16.gmra.mxu0 %v2716
    %v2755 = vpop.f32.mrf.mxu0
    %v2756 = vadd.f32 %v2169, %v2755
    %v2757 = vpop.f32.mrf.mxu0
    %v2758 = vpop.f32.mrf.mxu0
    %v2759 = vpop.f32.mrf.mxu0
    %2760 = vdwg.mxu0
    %2761 = vrot.lane.b32.xlu0 %v2161, 112
    %v2762 = vpop.permute.xlu0 %2761
    %2763 = vrot.lane.b32.xlu0 %v2163, 112
    %v2764 = vpop.permute.xlu0 %2763
    %v2766 = vsel %vm2176, %v2762, 0
    %v2769 = vsel %vm2176, %v2764, 0
    %2771 = vmatprep.subr.bf16.mxu0 0
    %2772 = vmatpush1.bf16.xpose.msra.mxu0 0
    %2773 = vmatprep.subr.bf16.mxu0 0
    %2774 = vmatpush1.bf16.xpose.msra.mxu0 0
    %2775 = vmatprep.subr.bf16.mxu0 0
    %2776 = vmatpush1.bf16.xpose.msra.mxu0 0
    %2777 = vmatprep.subr.bf16.mxu0 0
    %2778 = vmatpush1.bf16.xpose.msra.mxu0 0
    %2779 = vmatprep.subr.bf16.mxu0 0
    %2780 = vmatpush1.bf16.xpose.msra.mxu0 0
    %2781 = vmatprep.subr.bf16.mxu0 0
    %2782 = vmatpush1.bf16.xpose.msra.mxu0 0
    %2783 = vmatprep.subr.bf16.mxu0 0
    %2784 = vmatpush1.bf16.xpose.msra.mxu0 0
    %2785 = vmatprep.subr.bf16.mxu0 0
    %2786 = vmatpush1.bf16.xpose.msra.mxu0 %v2769
    %2787 = vmatprep.subr.bf16.mxu0 0
    %2788 = vmatpush2.bf16.xpose.msra.mxu0 0
    %2789 = vmatprep.subr.bf16.mxu0 0
    %2790 = vmatpush2.bf16.xpose.msra.mxu0 0
    %2791 = vmatprep.subr.bf16.mxu0 0
    %2792 = vmatpush2.bf16.xpose.msra.mxu0 0
    %2793 = vmatprep.subr.bf16.mxu0 0
    %2794 = vmatpush2.bf16.xpose.msra.mxu0 0
    %2795 = vmatprep.subr.bf16.mxu0 0
    %2796 = vmatpush2.bf16.xpose.msra.mxu0 0
    %2797 = vmatprep.subr.bf16.mxu0 0
    %2798 = vmatpush2.bf16.xpose.msra.mxu0 0
    %2799 = vmatprep.subr.bf16.mxu0 0
    %2800 = vmatpush2.bf16.xpose.msra.mxu0 0
    %2801 = vmatprep.subr.bf16.mxu0 0
    %2802 = vmatpush2.bf16.xpose.msra.mxu0 0
    %2803 = vmatprep.mubr.bf16.mxu0 0
    %2804 = vmatmul.mubr.bf16.gmra.mxu0 %v2766
    %v2805 = vpop.f32.mrf.mxu0
    %v2806 = vadd.f32 %v2173, %v2805
    %v2807 = vpop.f32.mrf.mxu0
    %v2808 = vpop.f32.mrf.mxu0
    %v2809 = vpop.f32.mrf.mxu0
    %2810 = vdwg.mxu0
    %v2811 = vsel %vm2176, %v2756, -inf
    %2812 = vmax.xlane.f32.xlu0 %v2811
    %v2813 = vpop.xlane.xlu0 %2812
    %v2814 = vsel %vm2176, %v2806, -inf
    %2815 = vmax.xlane.f32.xlu0 %v2814
    %v2816 = vpop.xlane.xlu0 %2815
    %v2817 = vsub.f32 %v2756, %v2813
    %v2818 = vsub.f32 %v2806, %v2816
    %v2819 = vmul.f32 %v2817, 1.442695
    %v2820 = vpow.pop %v2819
    %v2821 = vmul.f32 %v2818, 1.442695
    %v2822 = vpow.pop %v2821
    %v2823 = vsel %vm2176, %v2820, 0.0
    %2824 = vadd.xlane.f32.xlu0 %v2823
    %v2825 = vpop.xlane.xlu0 %2824
    %v2826 = vsel %vm2176, %v2822, 0.0
    %2827 = vadd.xlane.f32.xlu0 %v2826
    %v2828 = vpop.xlane.xlu0 %2827
    %v2829 = vrcp.pop %v2825
    %v2830 = vrcp.pop %v2828
    %v2831 = vmul.f32 %v2820, %v2829
    %v2832 = vmul.f32 %v2822, %v2830
    %v2833 = vpack.c.bf16 %v2831, %v2831
    %v2834 = vpack.c.bf16 %v2832, %v2832
    %2835 = vrot.lane.b32.xlu0 %v2162, 80
    %v2836 = vpop.permute.xlu0 %2835
    %v2838 = vsel %vm2176, %v2833, 0
    %v2841 = vsel %vm1032, %v2836, 0
    %2843 = vmatprep.subr.bf16.mxu0 0
    %2844 = vmatpush1.bf16.msra.mxu0 0
    %2845 = vmatprep.subr.bf16.mxu0 0
    %2846 = vmatpush1.bf16.msra.mxu0 0
    %2847 = vmatprep.subr.bf16.mxu0 0
    %2848 = vmatpush1.bf16.msra.mxu0 0
    %2849 = vmatprep.subr.bf16.mxu0 0
    %2850 = vmatpush1.bf16.msra.mxu0 0
    %2851 = vmatprep.subr.bf16.mxu0 0
    %2852 = vmatpush1.bf16.msra.mxu0 0
    %2853 = vmatprep.subr.bf16.mxu0 0
    %2854 = vmatpush1.bf16.msra.mxu0 0
    %2855 = vmatprep.subr.bf16.mxu0 0
    %2856 = vmatpush1.bf16.msra.mxu0 0
    %2857 = vmatprep.subr.bf16.mxu0 0
    %2858 = vmatpush1.bf16.msra.mxu0 %v2841
    %2859 = vmatprep.subr.bf16.mxu0 0
    %2860 = vmatpush2.bf16.msra.mxu0 0
    %2861 = vmatprep.subr.bf16.mxu0 0
    %2862 = vmatpush2.bf16.msra.mxu0 0
    %2863 = vmatprep.subr.bf16.mxu0 0
    %2864 = vmatpush2.bf16.msra.mxu0 0
    %2865 = vmatprep.subr.bf16.mxu0 0
    %2866 = vmatpush2.bf16.msra.mxu0 0
    %2867 = vmatprep.subr.bf16.mxu0 0
    %2868 = vmatpush2.bf16.msra.mxu0 0
    %2869 = vmatprep.subr.bf16.mxu0 0
    %2870 = vmatpush2.bf16.msra.mxu0 0
    %2871 = vmatprep.subr.bf16.mxu0 0
    %2872 = vmatpush2.bf16.msra.mxu0 0
    %2873 = vmatprep.subr.bf16.mxu0 0
    %2874 = vmatpush2.bf16.msra.mxu0 0
    %2875 = vmatprep.mubr.bf16.mxu0 0
    %2876 = vmatmul.mubr.bf16.gmra.mxu0 %v2838
    %v2877 = vpop.f32.mrf.mxu0
    %v2878 = vadd.f32 0.0, %v2877
    %v2879 = vpop.f32.mrf.mxu0
    %v2880 = vpop.f32.mrf.mxu0
    %v2881 = vpop.f32.mrf.mxu0
    %2882 = vdwg.mxu0
    %2883 = vrot.lane.b32.xlu0 %v2163, 80
    %v2884 = vpop.permute.xlu0 %2883
    %v2886 = vsel %vm2176, %v2834, 0
    %v2889 = vsel %vm1032, %v2884, 0
    %2891 = vmatprep.subr.bf16.mxu0 0
    %2892 = vmatpush1.bf16.msra.mxu0 0
    %2893 = vmatprep.subr.bf16.mxu0 0
    %2894 = vmatpush1.bf16.msra.mxu0 0
    %2895 = vmatprep.subr.bf16.mxu0 0
    %2896 = vmatpush1.bf16.msra.mxu0 0
    %2897 = vmatprep.subr.bf16.mxu0 0
    %2898 = vmatpush1.bf16.msra.mxu0 0
    %2899 = vmatprep.subr.bf16.mxu0 0
    %2900 = vmatpush1.bf16.msra.mxu0 0
    %2901 = vmatprep.subr.bf16.mxu0 0
    %2902 = vmatpush1.bf16.msra.mxu0 0
    %2903 = vmatprep.subr.bf16.mxu0 0
    %2904 = vmatpush1.bf16.msra.mxu0 0
    %2905 = vmatprep.subr.bf16.mxu0 0
    %2906 = vmatpush1.bf16.msra.mxu0 %v2889
    %2907 = vmatprep.subr.bf16.mxu0 0
    %2908 = vmatpush2.bf16.msra.mxu0 0
    %2909 = vmatprep.subr.bf16.mxu0 0
    %2910 = vmatpush2.bf16.msra.mxu0 0
    %2911 = vmatprep.subr.bf16.mxu0 0
    %2912 = vmatpush2.bf16.msra.mxu0 0
    %2913 = vmatprep.subr.bf16.mxu0 0
    %2914 = vmatpush2.bf16.msra.mxu0 0
    %2915 = vmatprep.subr.bf16.mxu0 0
    %2916 = vmatpush2.bf16.msra.mxu0 0
    %2917 = vmatprep.subr.bf16.mxu0 0
    %2918 = vmatpush2.bf16.msra.mxu0 0
    %2919 = vmatprep.subr.bf16.mxu0 0
    %2920 = vmatpush2.bf16.msra.mxu0 0
    %2921 = vmatprep.subr.bf16.mxu0 0
    %2922 = vmatpush2.bf16.msra.mxu0 0
    %2923 = vmatprep.mubr.bf16.mxu0 0
    %2924 = vmatmul.mubr.bf16.gmra.mxu0 %v2886
    %v2925 = vpop.f32.mrf.mxu0
    %v2926 = vadd.f32 0.0, %v2925
    %v2927 = vpop.f32.mrf.mxu0
    %v2928 = vpop.f32.mrf.mxu0
    %v2929 = vpop.f32.mrf.mxu0
    %2930 = vdwg.mxu0
    %v2931 = vpack.c.bf16 %v2926, %v2878
    %v2932 = vpack.c.bf16 %v2156, %v2156
    %v2934 = vsel %vm2176, %v2931, 0
    %v2937 = vsel %vm1032, %v2932, 0
    %2939 = vmatprep.subr.bf16.mxu0 0
    %2940 = vmatpush1.bf16.msra.mxu0 0
    %2941 = vmatprep.subr.bf16.mxu0 0
    %2942 = vmatpush1.bf16.msra.mxu0 0
    %2943 = vmatprep.subr.bf16.mxu0 0
    %2944 = vmatpush1.bf16.msra.mxu0 0
    %2945 = vmatprep.subr.bf16.mxu0 0
    %2946 = vmatpush1.bf16.msra.mxu0 0
    %2947 = vmatprep.subr.bf16.mxu0 0
    %2948 = vmatpush1.bf16.msra.mxu0 0
    %2949 = vmatprep.subr.bf16.mxu0 0
    %2950 = vmatpush1.bf16.msra.mxu0 0
    %2951 = vmatprep.subr.bf16.mxu0 0
    %2952 = vmatpush1.bf16.msra.mxu0 0
    %2953 = vmatprep.subr.bf16.mxu0 0
    %2954 = vmatpush1.bf16.msra.mxu0 %v2937
    %2955 = vmatprep.subr.bf16.mxu0 0
    %2956 = vmatpush2.bf16.msra.mxu0 0
    %2957 = vmatprep.subr.bf16.mxu0 0
    %2958 = vmatpush2.bf16.msra.mxu0 0
    %2959 = vmatprep.subr.bf16.mxu0 0
    %2960 = vmatpush2.bf16.msra.mxu0 0
    %2961 = vmatprep.subr.bf16.mxu0 0
    %2962 = vmatpush2.bf16.msra.mxu0 0
    %2963 = vmatprep.subr.bf16.mxu0 0
    %2964 = vmatpush2.bf16.msra.mxu0 0
    %2965 = vmatprep.subr.bf16.mxu0 0
    %2966 = vmatpush2.bf16.msra.mxu0 0
    %2967 = vmatprep.subr.bf16.mxu0 0
    %2968 = vmatpush2.bf16.msra.mxu0 0
    %2969 = vmatprep.subr.bf16.mxu0 0
    %2970 = vmatpush2.bf16.msra.mxu0 0
    %2971 = vmatprep.mubr.bf16.mxu0 0
    %2972 = vmatmul.mubr.bf16.gmra.mxu0 %v2934
    %v2973 = vpop.f32.mrf.mxu0
    %v2974 = vadd.f32 0.0, %v2973
    %v2975 = vpop.f32.mrf.mxu0
    %v2976 = vpop.f32.mrf.mxu0
    %v2977 = vadd.f32 0.0, %v2976
    %v2978 = vpop.f32.mrf.mxu0
    %2979 = vdwg.mxu0
    %v2980 = vadd.f32 %v2705, %v2974
    %v2981 = vadd.f32 %v2708, %v2977
    %2982 = vrot.lane.b32.xlu0 %v2160, 104
    %v2983 = vpop.permute.xlu0 %2982
    %2984 = vrot.lane.b32.xlu0 %v2162, 104
    %v2985 = vpop.permute.xlu0 %2984
    %v2987 = vsel %vm2176, %v2983, 0
    %v2990 = vsel %vm2176, %v2985, 0
    %2992 = vmatprep.subr.bf16.mxu0 0
    %2993 = vmatpush1.bf16.xpose.msra.mxu0 0
    %2994 = vmatprep.subr.bf16.mxu0 0
    %2995 = vmatpush1.bf16.xpose.msra.mxu0 0
    %2996 = vmatprep.subr.bf16.mxu0 0
    %2997 = vmatpush1.bf16.xpose.msra.mxu0 0
    %2998 = vmatprep.subr.bf16.mxu0 0
    %2999 = vmatpush1.bf16.xpose.msra.mxu0 0
    %3000 = vmatprep.subr.bf16.mxu0 0
    %3001 = vmatpush1.bf16.xpose.msra.mxu0 0
    %3002 = vmatprep.subr.bf16.mxu0 0
    %3003 = vmatpush1.bf16.xpose.msra.mxu0 0
    %3004 = vmatprep.subr.bf16.mxu0 0
    %3005 = vmatpush1.bf16.xpose.msra.mxu0 0
    %3006 = vmatprep.subr.bf16.mxu0 0
    %3007 = vmatpush1.bf16.xpose.msra.mxu0 %v2990
    %3008 = vmatprep.subr.bf16.mxu0 0
    %3009 = vmatpush2.bf16.xpose.msra.mxu0 0
    %3010 = vmatprep.subr.bf16.mxu0 0
    %3011 = vmatpush2.bf16.xpose.msra.mxu0 0
    %3012 = vmatprep.subr.bf16.mxu0 0
    %3013 = vmatpush2.bf16.xpose.msra.mxu0 0
    %3014 = vmatprep.subr.bf16.mxu0 0
    %3015 = vmatpush2.bf16.xpose.msra.mxu0 0
    %3016 = vmatprep.subr.bf16.mxu0 0
    %3017 = vmatpush2.bf16.xpose.msra.mxu0 0
    %3018 = vmatprep.subr.bf16.mxu0 0
    %3019 = vmatpush2.bf16.xpose.msra.mxu0 0
    %3020 = vmatprep.subr.bf16.mxu0 0
    %3021 = vmatpush2.bf16.xpose.msra.mxu0 0
    %3022 = vmatprep.subr.bf16.mxu0 0
    %3023 = vmatpush2.bf16.xpose.msra.mxu0 0
    %3024 = vmatprep.mubr.bf16.mxu0 0
    %3025 = vmatmul.mubr.bf16.gmra.mxu0 %v2987
    %v3026 = vpop.f32.mrf.mxu0
    %v3027 = vadd.f32 %v2169, %v3026
    %v3028 = vpop.f32.mrf.mxu0
    %v3029 = vpop.f32.mrf.mxu0
    %v3030 = vpop.f32.mrf.mxu0
    %3031 = vdwg.mxu0
    %3032 = vrot.lane.b32.xlu0 %v2161, 104
    %v3033 = vpop.permute.xlu0 %3032
    %3034 = vrot.lane.b32.xlu0 %v2163, 104
    %v3035 = vpop.permute.xlu0 %3034
    %v3037 = vsel %vm2176, %v3033, 0
    %v3040 = vsel %vm2176, %v3035, 0
    %3042 = vmatprep.subr.bf16.mxu0 0
    %3043 = vmatpush1.bf16.xpose.msra.mxu0 0
    %3044 = vmatprep.subr.bf16.mxu0 0
    %3045 = vmatpush1.bf16.xpose.msra.mxu0 0
    %3046 = vmatprep.subr.bf16.mxu0 0
    %3047 = vmatpush1.bf16.xpose.msra.mxu0 0
    %3048 = vmatprep.subr.bf16.mxu0 0
    %3049 = vmatpush1.bf16.xpose.msra.mxu0 0
    %3050 = vmatprep.subr.bf16.mxu0 0
    %3051 = vmatpush1.bf16.xpose.msra.mxu0 0
    %3052 = vmatprep.subr.bf16.mxu0 0
    %3053 = vmatpush1.bf16.xpose.msra.mxu0 0
    %3054 = vmatprep.subr.bf16.mxu0 0
    %3055 = vmatpush1.bf16.xpose.msra.mxu0 0
    %3056 = vmatprep.subr.bf16.mxu0 0
    %3057 = vmatpush1.bf16.xpose.msra.mxu0 %v3040
    %3058 = vmatprep.subr.bf16.mxu0 0
    %3059 = vmatpush2.bf16.xpose.msra.mxu0 0
    %3060 = vmatprep.subr.bf16.mxu0 0
    %3061 = vmatpush2.bf16.xpose.msra.mxu0 0
    %3062 = vmatprep.subr.bf16.mxu0 0
    %3063 = vmatpush2.bf16.xpose.msra.mxu0 0
    %3064 = vmatprep.subr.bf16.mxu0 0
    %3065 = vmatpush2.bf16.xpose.msra.mxu0 0
    %3066 = vmatprep.subr.bf16.mxu0 0
    %3067 = vmatpush2.bf16.xpose.msra.mxu0 0
    %3068 = vmatprep.subr.bf16.mxu0 0
    %3069 = vmatpush2.bf16.xpose.msra.mxu0 0
    %3070 = vmatprep.subr.bf16.mxu0 0
    %3071 = vmatpush2.bf16.xpose.msra.mxu0 0
    %3072 = vmatprep.subr.bf16.mxu0 0
    %3073 = vmatpush2.bf16.xpose.msra.mxu0 0
    %3074 = vmatprep.mubr.bf16.mxu0 0
    %3075 = vmatmul.mubr.bf16.gmra.mxu0 %v3037
    %v3076 = vpop.f32.mrf.mxu0
    %v3077 = vadd.f32 %v2173, %v3076
    %v3078 = vpop.f32.mrf.mxu0
    %v3079 = vpop.f32.mrf.mxu0
    %v3080 = vpop.f32.mrf.mxu0
    %3081 = vdwg.mxu0
    %v3082 = vsel %vm2176, %v3027, -inf
    %3083 = vmax.xlane.f32.xlu0 %v3082
    %v3084 = vpop.xlane.xlu0 %3083
    %v3085 = vsel %vm2176, %v3077, -inf
    %3086 = vmax.xlane.f32.xlu0 %v3085
    %v3087 = vpop.xlane.xlu0 %3086
    %v3088 = vsub.f32 %v3027, %v3084
    %v3089 = vsub.f32 %v3077, %v3087
    %v3090 = vmul.f32 %v3088, 1.442695
    %v3091 = vpow.pop %v3090
    %v3092 = vmul.f32 %v3089, 1.442695
    %v3093 = vpow.pop %v3092
    %v3094 = vsel %vm2176, %v3091, 0.0
    %3095 = vadd.xlane.f32.xlu0 %v3094
    %v3096 = vpop.xlane.xlu0 %3095
    %v3097 = vsel %vm2176, %v3093, 0.0
    %3098 = vadd.xlane.f32.xlu0 %v3097
    %v3099 = vpop.xlane.xlu0 %3098
    %v3100 = vrcp.pop %v3096
    %v3101 = vrcp.pop %v3099
    %v3102 = vmul.f32 %v3091, %v3100
    %v3103 = vmul.f32 %v3093, %v3101
    %v3104 = vpack.c.bf16 %v3102, %v3102
    %v3105 = vpack.c.bf16 %v3103, %v3103
    %3106 = vrot.lane.b32.xlu0 %v2162, 72
    %v3107 = vpop.permute.xlu0 %3106
    %v3109 = vsel %vm2176, %v3104, 0
    %v3112 = vsel %vm1032, %v3107, 0
    %3114 = vmatprep.subr.bf16.mxu0 0
    %3115 = vmatpush1.bf16.msra.mxu0 0
    %3116 = vmatprep.subr.bf16.mxu0 0
    %3117 = vmatpush1.bf16.msra.mxu0 0
    %3118 = vmatprep.subr.bf16.mxu0 0
    %3119 = vmatpush1.bf16.msra.mxu0 0
    %3120 = vmatprep.subr.bf16.mxu0 0
    %3121 = vmatpush1.bf16.msra.mxu0 0
    %3122 = vmatprep.subr.bf16.mxu0 0
    %3123 = vmatpush1.bf16.msra.mxu0 0
    %3124 = vmatprep.subr.bf16.mxu0 0
    %3125 = vmatpush1.bf16.msra.mxu0 0
    %3126 = vmatprep.subr.bf16.mxu0 0
    %3127 = vmatpush1.bf16.msra.mxu0 0
    %3128 = vmatprep.subr.bf16.mxu0 0
    %3129 = vmatpush1.bf16.msra.mxu0 %v3112
    %3130 = vmatprep.subr.bf16.mxu0 0
    %3131 = vmatpush2.bf16.msra.mxu0 0
    %3132 = vmatprep.subr.bf16.mxu0 0
    %3133 = vmatpush2.bf16.msra.mxu0 0
    %3134 = vmatprep.subr.bf16.mxu0 0
    %3135 = vmatpush2.bf16.msra.mxu0 0
    %3136 = vmatprep.subr.bf16.mxu0 0
    %3137 = vmatpush2.bf16.msra.mxu0 0
    %3138 = vmatprep.subr.bf16.mxu0 0
    %3139 = vmatpush2.bf16.msra.mxu0 0
    %3140 = vmatprep.subr.bf16.mxu0 0
    %3141 = vmatpush2.bf16.msra.mxu0 0
    %3142 = vmatprep.subr.bf16.mxu0 0
    %3143 = vmatpush2.bf16.msra.mxu0 0
    %3144 = vmatprep.subr.bf16.mxu0 0
    %3145 = vmatpush2.bf16.msra.mxu0 0
    %3146 = vmatprep.mubr.bf16.mxu0 0
    %3147 = vmatmul.mubr.bf16.gmra.mxu0 %v3109
    %v3148 = vpop.f32.mrf.mxu0
    %v3149 = vadd.f32 0.0, %v3148
    %v3150 = vpop.f32.mrf.mxu0
    %v3151 = vpop.f32.mrf.mxu0
    %v3152 = vpop.f32.mrf.mxu0
    %3153 = vdwg.mxu0
    %3154 = vrot.lane.b32.xlu0 %v2163, 72
    %v3155 = vpop.permute.xlu0 %3154
    %v3157 = vsel %vm2176, %v3105, 0
    %v3160 = vsel %vm1032, %v3155, 0
    %3162 = vmatprep.subr.bf16.mxu0 0
    %3163 = vmatpush1.bf16.msra.mxu0 0
    %3164 = vmatprep.subr.bf16.mxu0 0
    %3165 = vmatpush1.bf16.msra.mxu0 0
    %3166 = vmatprep.subr.bf16.mxu0 0
    %3167 = vmatpush1.bf16.msra.mxu0 0
    %3168 = vmatprep.subr.bf16.mxu0 0
    %3169 = vmatpush1.bf16.msra.mxu0 0
    %3170 = vmatprep.subr.bf16.mxu0 0
    %3171 = vmatpush1.bf16.msra.mxu0 0
    %3172 = vmatprep.subr.bf16.mxu0 0
    %3173 = vmatpush1.bf16.msra.mxu0 0
    %3174 = vmatprep.subr.bf16.mxu0 0
    %3175 = vmatpush1.bf16.msra.mxu0 0
    %3176 = vmatprep.subr.bf16.mxu0 0
    %3177 = vmatpush1.bf16.msra.mxu0 %v3160
    %3178 = vmatprep.subr.bf16.mxu0 0
    %3179 = vmatpush2.bf16.msra.mxu0 0
    %3180 = vmatprep.subr.bf16.mxu0 0
    %3181 = vmatpush2.bf16.msra.mxu0 0
    %3182 = vmatprep.subr.bf16.mxu0 0
    %3183 = vmatpush2.bf16.msra.mxu0 0
    %3184 = vmatprep.subr.bf16.mxu0 0
    %3185 = vmatpush2.bf16.msra.mxu0 0
    %3186 = vmatprep.subr.bf16.mxu0 0
    %3187 = vmatpush2.bf16.msra.mxu0 0
    %3188 = vmatprep.subr.bf16.mxu0 0
    %3189 = vmatpush2.bf16.msra.mxu0 0
    %3190 = vmatprep.subr.bf16.mxu0 0
    %3191 = vmatpush2.bf16.msra.mxu0 0
    %3192 = vmatprep.subr.bf16.mxu0 0
    %3193 = vmatpush2.bf16.msra.mxu0 0
    %3194 = vmatprep.mubr.bf16.mxu0 0
    %3195 = vmatmul.mubr.bf16.gmra.mxu0 %v3157
    %v3196 = vpop.f32.mrf.mxu0
    %v3197 = vadd.f32 0.0, %v3196
    %v3198 = vpop.f32.mrf.mxu0
    %v3199 = vpop.f32.mrf.mxu0
    %v3200 = vpop.f32.mrf.mxu0
    %3201 = vdwg.mxu0
    %v3202 = vpack.c.bf16 %v3197, %v3149
    %v3203 = vpack.c.bf16 %v2157, %v2157
    %v3205 = vsel %vm2176, %v3202, 0
    %v3208 = vsel %vm1032, %v3203, 0
    %3210 = vmatprep.subr.bf16.mxu0 0
    %3211 = vmatpush1.bf16.msra.mxu0 0
    %3212 = vmatprep.subr.bf16.mxu0 0
    %3213 = vmatpush1.bf16.msra.mxu0 0
    %3214 = vmatprep.subr.bf16.mxu0 0
    %3215 = vmatpush1.bf16.msra.mxu0 0
    %3216 = vmatprep.subr.bf16.mxu0 0
    %3217 = vmatpush1.bf16.msra.mxu0 0
    %3218 = vmatprep.subr.bf16.mxu0 0
    %3219 = vmatpush1.bf16.msra.mxu0 0
    %3220 = vmatprep.subr.bf16.mxu0 0
    %3221 = vmatpush1.bf16.msra.mxu0 0
    %3222 = vmatprep.subr.bf16.mxu0 0
    %3223 = vmatpush1.bf16.msra.mxu0 0
    %3224 = vmatprep.subr.bf16.mxu0 0
    %3225 = vmatpush1.bf16.msra.mxu0 %v3208
    %3226 = vmatprep.subr.bf16.mxu0 0
    %3227 = vmatpush2.bf16.msra.mxu0 0
    %3228 = vmatprep.subr.bf16.mxu0 0
    %3229 = vmatpush2.bf16.msra.mxu0 0
    %3230 = vmatprep.subr.bf16.mxu0 0
    %3231 = vmatpush2.bf16.msra.mxu0 0
    %3232 = vmatprep.subr.bf16.mxu0 0
    %3233 = vmatpush2.bf16.msra.mxu0 0
    %3234 = vmatprep.subr.bf16.mxu0 0
    %3235 = vmatpush2.bf16.msra.mxu0 0
    %3236 = vmatprep.subr.bf16.mxu0 0
    %3237 = vmatpush2.bf16.msra.mxu0 0
    %3238 = vmatprep.subr.bf16.mxu0 0
    %3239 = vmatpush2.bf16.msra.mxu0 0
    %3240 = vmatprep.subr.bf16.mxu0 0
    %3241 = vmatpush2.bf16.msra.mxu0 0
    %3242 = vmatprep.mubr.bf16.mxu0 0
    %3243 = vmatmul.mubr.bf16.gmra.mxu0 %v3205
    %v3244 = vpop.f32.mrf.mxu0
    %v3245 = vadd.f32 0.0, %v3244
    %v3246 = vpop.f32.mrf.mxu0
    %v3247 = vpop.f32.mrf.mxu0
    %v3248 = vadd.f32 0.0, %v3247
    %v3249 = vpop.f32.mrf.mxu0
    %3250 = vdwg.mxu0
    %v3251 = vadd.f32 %v2980, %v3245
    %v3252 = vadd.f32 %v2981, %v3248
    %v3253 = vld [vmem:[%s11] sm:$0x1]
    %v3255 = vlaneseq
    %v3256 = vshrl.u32 %v3255, 7
    %v3257 = vsub.s32 0, %v3256
    %v3258 = vrot.slane %v3253, %v3257
    %v3260 = vadd.f32 %v3251, %v3258
    %v3261 = vadd.f32 %v3252, %v3258
    %v3262 = vld [vmem:[%s12] sm:$0xff]
    %v3263 = vld [vmem:[%s12 + $0x8] sm:$0xff]
    %v3264 = vld [vmem:[%s12 + $0x10] sm:$0xff]
    %v3265 = vld [vmem:[%s12 + $0x18] sm:$0xff]
    %v3266 = vpack.c.bf16 %v3261, %v3260
    %v3267 = vpack.c.bf16 %v3263, %v3262
    %v3268 = vpack.c.bf16 %v3265, %v3264
    %v3269 = vld [vmem:[%s13] sm:$0x1]
    %v3271 = vlaneseq
    %v3272 = vshrl.u32 %v3271, 7
    %v3273 = vsub.s32 0, %v3272
    %v3274 = vrot.slane %v3269, %v3273
    %v3277 = vsel %vm71, %v3266, 0
    %3279 = vmatprep.subr.bf16.mxu0 0
    %3280 = vmatpush1.bf16.msra.mxu0 0
    %3281 = vmatprep.subr.bf16.mxu0 0
    %3282 = vmatpush1.bf16.msra.mxu0 0
    %3283 = vmatprep.subr.bf16.mxu0 0
    %3284 = vmatpush1.bf16.msra.mxu0 0
    %3285 = vmatprep.subr.bf16.mxu0 0
    %3286 = vmatpush1.bf16.msra.mxu0 0
    %3287 = vmatprep.subr.bf16.mxu0 0
    %3288 = vmatpush1.bf16.msra.mxu0 0
    %3289 = vmatprep.subr.bf16.mxu0 0
    %3290 = vmatpush1.bf16.msra.mxu0 0
    %3291 = vmatprep.subr.bf16.mxu0 0
    %3292 = vmatpush1.bf16.msra.mxu0 %v3268
    %3293 = vmatprep.subr.bf16.mxu0 0
    %3294 = vmatpush1.bf16.msra.mxu0 %v3267
    %3295 = vmatprep.subr.bf16.mxu0 0
    %3296 = vmatpush2.bf16.msra.mxu0 0
    %3297 = vmatprep.subr.bf16.mxu0 0
    %3298 = vmatpush2.bf16.msra.mxu0 0
    %3299 = vmatprep.subr.bf16.mxu0 0
    %3300 = vmatpush2.bf16.msra.mxu0 0
    %3301 = vmatprep.subr.bf16.mxu0 0
    %3302 = vmatpush2.bf16.msra.mxu0 0
    %3303 = vmatprep.subr.bf16.mxu0 0
    %3304 = vmatpush2.bf16.msra.mxu0 0
    %3305 = vmatprep.subr.bf16.mxu0 0
    %3306 = vmatpush2.bf16.msra.mxu0 0
    %3307 = vmatprep.subr.bf16.mxu0 0
    %3308 = vmatpush2.bf16.msra.mxu0 0
    %3309 = vmatprep.subr.bf16.mxu0 0
    %3310 = vmatpush2.bf16.msra.mxu0 0
    %3311 = vmatprep.mubr.bf16.mxu0 0
    %3312 = vmatmul.mubr.bf16.gmra.mxu0 %v3277
    %v3313 = vpop.f32.mrf.mxu0
    %v3314 = vadd.f32 %v3274, %v3313
    %v3315 = vpop.f32.mrf.mxu0
    %v3316 = vpop.f32.mrf.mxu0
    %v3317 = vadd.f32 %v3274, %v3316
    %v3318 = vpop.f32.mrf.mxu0
    %3319 = vdwg.mxu0
    %3320 = vst [vmem:[#allocation2] sm:$0xff] %v3314
    %3321 = vst [vmem:[#allocation2 + $0x8] sm:$0xff] %v3317
    // Predicated region
    $region58: #{transformer_lstm_forward.3} parent=1 // pred_check
      _
    $region59: #{transformer_lstm_forward.3} parent=1 // pred_check_branch
      %3323 = sbr.rel (0) target = $region61
    $region60: #{transformer_lstm_forward.3} parent=1 // pred_region
      %s3325 = ssub.s32 256, 256
      %3326 = vsyncadd [#allocation3], %s3325
      %s3327 = sshll.u32 [#allocation2], 4
      %s3328 = int_to_ptr.vmem [resolvable:$true] %s3327
      %3333 = dma.vmem_to_hbm [thread:$0]  %s3328, 256, %s14, [#allocation3], 128, 128, 8
    $region61: #{transformer_lstm_forward.3} parent=1 // pred_fallthru
      _
    // Predicated region
    $region62: #{transformer_lstm_forward.3} parent=1 // pred_check
      _
    $region63: #{transformer_lstm_forward.3} parent=1 // pred_check_branch
      %3335 = sbr.rel (0) target = $region65
    $region64: #{transformer_lstm_forward.3} parent=1 // pred_region
      %3336 = dma.done [#allocation3], 256
    $region65: #{transformer_lstm_forward.3} parent=1 // pred_fallthru
      _
    %3337 = vsyncpa [#allocation3], 1

</llo_original>
